<compile_context>
chip_gen: v5e
topology: v5e:2x2
jax: 0.10.0
libtpu: 0.0.40
codegen_flags: <defaults>
</compile_context>

<pallas_src>
import jax
import jax.numpy as jnp
from jax.experimental import pallas as pl
from jax.experimental.pallas import tpu as pltpu

LANE = 128
SUBLANE_BF16 = 16  # bf16 packs 16 rows per vreg


def _round_up(n, m):
    return (n + m - 1) // m * m


def _tpu_generation():
    """Best-effort TPU generation (5, 6, 7, ...); defaults to 6 on failure."""
    try:
        kind = jax.devices()[0].device_kind.lower()
    except Exception:
        return 6
    for g in (7, 6, 5, 4, 3, 2):
        if f"v{g}" in kind or f"tpu{g}" in kind:
            return g
    return 6


def _make_mlp_kernel(tanh_dtype):
    """Fused 5-layer MLP on one batch tile.

    x / W* are bf16 (MXU-native); accumulation and bias add are f32; tanh runs
    in `tanh_dtype` (bf16 on v6e/v7x, f32 on v5e); hidden activations feed the
    next matmul as bf16; logits are stored in f32.
    """
    def mlp_kernel(x_ref,
                   w1_ref, b1_ref,
                   w2_ref, b2_ref,
                   w3_ref, b3_ref,
                   w4_ref, b4_ref,
                   w5_ref, b5_ref,
                   o_ref):
        def affine(h, w_ref, b_ref):
            return jnp.dot(h, w_ref[...],
                           preferred_element_type=jnp.float32) + b_ref[...]

        def hidden(h, w_ref, b_ref):
            return jnp.tanh(affine(h, w_ref, b_ref).astype(tanh_dtype)
                            ).astype(jnp.bfloat16)

        h = x_ref[...]                                  # bf16 batch tile
        h = hidden(h, w1_ref, b1_ref)
        h = hidden(h, w2_ref, b2_ref)
        h = hidden(h, w3_ref, b3_ref)
        h = hidden(h, w4_ref, b4_ref)
        o_ref[...] = affine(h, w5_ref, b5_ref).astype(o_ref.dtype)

    return mlp_kernel


def prepare_params(params):
    """One-time pad + cast of params (hoisted out of the forward path).

    params: list of (W (in,out) f32, b (1,out) f32), pre-transposed vs
    PyTorch's (out,in) Linear layout. Returns a dict with padded bf16 weights,
    f32 biases, block shapes, and cost-estimate metadata.
    """
    n_layers = len(params)
    num_features = params[0][0].shape[0]
    num_classes = params[-1][0].shape[1]
    F_pad = _round_up(num_features, LANE)
    C_pad = _round_up(num_classes, LANE)

    flat, shapes = [], []
    flops_per_row = 0
    trans_per_row = 0
    weight_bytes = 0
    for idx, (W, b) in enumerate(params):
        d_in, d_out = W.shape
        d_in_p = F_pad if idx == 0 else _round_up(d_in, LANE)
        d_out_p = C_pad if idx == n_layers - 1 else _round_up(d_out, LANE)
        Wp = jnp.zeros((d_in_p, d_out_p), jnp.bfloat16).at[:d_in, :d_out].set(
            W.astype(jnp.bfloat16))
        bp = jnp.zeros((1, d_out_p), jnp.float32).at[:, :d_out].set(
            b.astype(jnp.float32))
        flat += [Wp, bp]
        shapes += [Wp.shape, bp.shape]
        flops_per_row += 2 * d_in_p * d_out_p
        if idx < n_layers - 1:
            trans_per_row += d_out_p
        weight_bytes += Wp.size * 2 + bp.size * 4

    return dict(flat=tuple(flat), shapes=tuple(shapes),
                num_features=num_features, F_pad=F_pad,
                num_classes=num_classes, C_pad=C_pad,
                flops_per_row=flops_per_row,
                transcendentals_per_row=trans_per_row,
                weight_bytes=weight_bytes)


def tabular_classifier_forward(x, prepared, *, batch_tile=None):
    """x: (B, num_features) f32. prepared: output of prepare_params().

    Returns f32 logits of shape (B, num_classes).
    """
    B, F = x.shape
    assert F == prepared["num_features"]
    F_pad, C_pad = prepared["F_pad"], prepared["C_pad"]
    num_classes = prepared["num_classes"]

    gen = _tpu_generation()

    # ---- MXU-aligned, generation-aware batch tiling --------------------------
    if batch_tile is None:
        if B <= 256:
            # Small batch: one grid step, no per-step pipeline overhead.
            batch_tile = _round_up(max(B, SUBLANE_BF16), SUBLANE_BF16)
        else:
            # 128-row tiles on v5e (4x128^2 MXU), 256-row on v6e/v7x (2x256^2).
            batch_tile = 128 if gen <= 5 else 256
    batch_tile = _round_up(batch_tile, SUBLANE_BF16)
    B_pad = _round_up(B, batch_tile)
    grid_steps = B_pad // batch_tile

    # Only the (small) activation input is padded/cast per call; weights were
    # padded/cast once in prepare_params().
    x_p = jnp.zeros((B_pad, F_pad), jnp.bfloat16).at[:B, :F].set(
        x.astype(jnp.bfloat16))

    # v5e has no bf16 VPU/EUP -> keep tanh in f32 there; bf16 tanh on v6e/v7x.
    tanh_dtype = jnp.float32 if gen <= 5 else jnp.bfloat16
    kernel = _make_mlp_kernel(tanh_dtype)

    cost = pl.CostEstimate(
        flops=prepared["flops_per_row"] * B_pad,
        transcendentals=prepared["transcendentals_per_row"] * B_pad,
        bytes_accessed=prepared["weight_bytes"] + x_p.size * 2 + B_pad * C_pad * 4,
    )

    def build_and_run(single_buffer_weights):
        weight_specs = []
        for shape in prepared["shapes"]:
            if single_buffer_weights:
                # Constant (0,0) block index: the block never changes across the
                # grid, so a single buffer suffices (saves ~2.7 MB VMEM).
                spec = pl.BlockSpec(shape, lambda i: (0, 0),
                                    pipeline_mode=pl.Buffered(1))
            else:
                spec = pl.BlockSpec(shape, lambda i: (0, 0))
            weight_specs.append(spec)

        return pl.pallas_call(
            kernel,
            out_shape=jax.ShapeDtypeStruct((B_pad, C_pad), jnp.float32),
            grid_spec=pltpu.PrefetchScalarGridSpec(
                num_scalar_prefetch=0,
                grid=(grid_steps,),
                in_specs=[pl.BlockSpec((batch_tile, F_pad), lambda i: (i, 0))]
                         + weight_specs,
                out_specs=pl.BlockSpec((batch_tile, C_pad), lambda i: (i, 0)),
            ),
            compiler_params=pltpu.CompilerParams(
                # Split across v7x's 2 TCs only when each core gets >= 2 tiles;
                # otherwise the duplicated weight DMA outweighs the compute win.
                dimension_semantics=("parallel",) if grid_steps >= 4
                                    else ("arbitrary",),
                # bf16 weights (~2.7 MB, single-buffered) + bf16 x tile + f32
                # output tile + activations stay well under 32 MiB, even on v7x.
                vmem_limit_bytes=32 << 20,
            ),
            cost_estimate=cost,
        )(x_p, *prepared["flat"])

    # Note: with one grid step the weight DMA is fully exposed before the body
    # runs; a manual make_async_copy overlap of W2..W5 would recover ~15-20% at
    # B~256 but is negligible at the HBM-weight-fetch floor for tiny batches.
    try:
        out_padded = jax.block_until_ready(build_and_run(True))
    except Exception:
        # Fallback if this JAX version rejects single-buffered BlockSpecs.
        out_padded = build_and_run(False)

    # Drop batch / class padding.
    return out_padded[:B, :num_classes]


def reference_forward(x, params):
    h = x
    for (W, b) in params[:-1]:
        h = jnp.tanh(h @ W + b)
    W, b = params[-1]
    return h @ W + b


def init_params(key, num_features=600, num_classes=100):
    dims = [num_features, 1024, 512, 256, 128, num_classes]
    params = []
    for i in range(len(dims) - 1):
        key, kw, kb = jax.random.split(key, 3)
        fan_in = dims[i]
        bound = 1.0 / jnp.sqrt(fan_in)
        # (in, out) layout -- pre-transposed relative to PyTorch's (out, in).
        W = jax.random.uniform(kw, (dims[i], dims[i + 1]),
                               minval=-bound, maxval=bound, dtype=jnp.float32)
        b = jax.random.uniform(kb, (1, dims[i + 1]),
                               minval=-bound, maxval=bound, dtype=jnp.float32)
        params.append((W, b))
    return params


if __name__ == "__main__":
    num_features = 600
    num_classes = 100
    batch = 16

    key = jax.random.PRNGKey(0)
    key_x, key_p = jax.random.split(key)

    x = jax.random.normal(key_x, (batch, num_features), dtype=jnp.float32)
    params = init_params(key_p, num_features=num_features, num_classes=num_classes)

    # One-time weight pad / bf16 cast (hoisted out of the forward path).
    prepared = prepare_params(params)
    prepared["flat"] = jax.block_until_ready(prepared["flat"])

    out = tabular_classifier_forward(x, prepared)
    out = jax.block_until_ready(out)

    ref = reference_forward(x, params)
    assert out.shape == (batch, num_classes)
    # bf16 weights/activations (f32 accumulation) vs the pure-f32 reference.
    assert jnp.allclose(out, ref, atol=5e-2, rtol=5e-2), "mismatch vs reference"

    print("KERNEL_OK")
</pallas_src>

<mosaic_0001>
module attributes {stable_mosaic.version = 11 : i64} {
  func.func @mlp_kernel(%arg0: i32, %arg1: memref<16x640xbf16, #tpu.memory_space<vmem>>, %arg2: memref<640x1024xbf16, #tpu.memory_space<vmem>>, %arg3: memref<1x1024xf32, #tpu.memory_space<vmem>>, %arg4: memref<1024x512xbf16, #tpu.memory_space<vmem>>, %arg5: memref<1x512xf32, #tpu.memory_space<vmem>>, %arg6: memref<512x256xbf16, #tpu.memory_space<vmem>>, %arg7: memref<1x256xf32, #tpu.memory_space<vmem>>, %arg8: memref<256x128xbf16, #tpu.memory_space<vmem>>, %arg9: memref<1x128xf32, #tpu.memory_space<vmem>>, %arg10: memref<128x128xbf16, #tpu.memory_space<vmem>>, %arg11: memref<1x128xf32, #tpu.memory_space<vmem>>, %arg12: memref<16x128xf32, #tpu.memory_space<vmem>>) attributes {dimension_semantics = [#tpu.dimension_semantics<arbitrary>], iteration_bounds = array<i64: 1>, scalar_prefetch = 0 : i64, scratch_operands = 0 : i64, tpu.core_type = #tpu.core_type<tc>, window_params = [{transform_indices = @transform_0, window_bounds = array<i64: 16, 640>}, {pipeline_mode = #tpu.pipeline_mode<synchronous>, transform_indices = @transform_1, window_bounds = array<i64: 640, 1024>}, {pipeline_mode = #tpu.pipeline_mode<synchronous>, transform_indices = @transform_2, window_bounds = array<i64: 1, 1024>}, {pipeline_mode = #tpu.pipeline_mode<synchronous>, transform_indices = @transform_3, window_bounds = array<i64: 1024, 512>}, {pipeline_mode = #tpu.pipeline_mode<synchronous>, transform_indices = @transform_4, window_bounds = array<i64: 1, 512>}, {pipeline_mode = #tpu.pipeline_mode<synchronous>, transform_indices = @transform_5, window_bounds = array<i64: 512, 256>}, {pipeline_mode = #tpu.pipeline_mode<synchronous>, transform_indices = @transform_6, window_bounds = array<i64: 1, 256>}, {pipeline_mode = #tpu.pipeline_mode<synchronous>, transform_indices = @transform_7, window_bounds = array<i64: 256, 128>}, {pipeline_mode = #tpu.pipeline_mode<synchronous>, transform_indices = @transform_8, window_bounds = array<i64: 1, 128>}, {pipeline_mode = #tpu.pipeline_mode<synchronous>, transform_indices = @transform_9, window_bounds = array<i64: 128, 128>}, {pipeline_mode = #tpu.pipeline_mode<synchronous>, transform_indices = @transform_10, window_bounds = array<i64: 1, 128>}, {transform_indices = @transform_11, window_bounds = array<i64: 16, 128>}]} {
    %c0 = arith.constant 0 : index
    %c0_0 = arith.constant 0 : index
    %0 = vector.load %arg1[%c0, %c0_0] : memref<16x640xbf16, #tpu.memory_space<vmem>>, vector<16x640xbf16>
    %c0_1 = arith.constant 0 : index
    %c0_2 = arith.constant 0 : index
    %1 = vector.load %arg2[%c0_1, %c0_2] : memref<640x1024xbf16, #tpu.memory_space<vmem>>, vector<640x1024xbf16>
    %cst = arith.constant dense<0.000000e+00> : vector<16x1024xf32>
    %2 = tpu.matmul %0, %1, %cst {dimension_numbers = #tpu.dot_dimension_numbers<[1], [0], [0], [1], [0, 0, 1, 1], [], []>} : vector<16x640xbf16>, vector<640x1024xbf16>, vector<16x1024xf32> -> vector<16x1024xf32>
    %c0_3 = arith.constant 0 : index
    %c0_4 = arith.constant 0 : index
    %3 = vector.load %arg3[%c0_3, %c0_4] : memref<1x1024xf32, #tpu.memory_space<vmem>>, vector<1x1024xf32>
    %4 = vector.broadcast %3 : vector<1x1024xf32> to vector<16x1024xf32>
    %5 = arith.addf %2, %4 : vector<16x1024xf32>
    %6 = arith.truncf %5 : vector<16x1024xf32> to vector<16x1024xbf16>
    %7 = math.tanh %6 : vector<16x1024xbf16>
    %c0_5 = arith.constant 0 : index
    %c0_6 = arith.constant 0 : index
    %8 = vector.load %arg4[%c0_5, %c0_6] : memref<1024x512xbf16, #tpu.memory_space<vmem>>, vector<1024x512xbf16>
    %cst_7 = arith.constant dense<0.000000e+00> : vector<16x512xf32>
    %9 = tpu.matmul %7, %8, %cst_7 {dimension_numbers = #tpu.dot_dimension_numbers<[1], [0], [0], [1], [0, 0, 1, 1], [], []>} : vector<16x1024xbf16>, vector<1024x512xbf16>, vector<16x512xf32> -> vector<16x512xf32>
    %c0_8 = arith.constant 0 : index
    %c0_9 = arith.constant 0 : index
    %10 = vector.load %arg5[%c0_8, %c0_9] : memref<1x512xf32, #tpu.memory_space<vmem>>, vector<1x512xf32>
    %11 = vector.broadcast %10 : vector<1x512xf32> to vector<16x512xf32>
    %12 = arith.addf %9, %11 : vector<16x512xf32>
    %13 = arith.truncf %12 : vector<16x512xf32> to vector<16x512xbf16>
    %14 = math.tanh %13 : vector<16x512xbf16>
    %c0_10 = arith.constant 0 : index
    %c0_11 = arith.constant 0 : index
    %15 = vector.load %arg6[%c0_10, %c0_11] : memref<512x256xbf16, #tpu.memory_space<vmem>>, vector<512x256xbf16>
    %cst_12 = arith.constant dense<0.000000e+00> : vector<16x256xf32>
    %16 = tpu.matmul %14, %15, %cst_12 {dimension_numbers = #tpu.dot_dimension_numbers<[1], [0], [0], [1], [0, 0, 1, 1], [], []>} : vector<16x512xbf16>, vector<512x256xbf16>, vector<16x256xf32> -> vector<16x256xf32>
    %c0_13 = arith.constant 0 : index
    %c0_14 = arith.constant 0 : index
    %17 = vector.load %arg7[%c0_13, %c0_14] : memref<1x256xf32, #tpu.memory_space<vmem>>, vector<1x256xf32>
    %18 = vector.broadcast %17 : vector<1x256xf32> to vector<16x256xf32>
    %19 = arith.addf %16, %18 : vector<16x256xf32>
    %20 = arith.truncf %19 : vector<16x256xf32> to vector<16x256xbf16>
    %21 = math.tanh %20 : vector<16x256xbf16>
    %c0_15 = arith.constant 0 : index
    %c0_16 = arith.constant 0 : index
    %22 = vector.load %arg8[%c0_15, %c0_16] : memref<256x128xbf16, #tpu.memory_space<vmem>>, vector<256x128xbf16>
    %cst_17 = arith.constant dense<0.000000e+00> : vector<16x128xf32>
    %23 = tpu.matmul %21, %22, %cst_17 {dimension_numbers = #tpu.dot_dimension_numbers<[1], [0], [0], [1], [0, 0, 1, 1], [], []>} : vector<16x256xbf16>, vector<256x128xbf16>, vector<16x128xf32> -> vector<16x128xf32>
    %c0_18 = arith.constant 0 : index
    %c0_19 = arith.constant 0 : index
    %24 = vector.load %arg9[%c0_18, %c0_19] : memref<1x128xf32, #tpu.memory_space<vmem>>, vector<1x128xf32>
    %25 = vector.broadcast %24 : vector<1x128xf32> to vector<16x128xf32>
    %26 = arith.addf %23, %25 : vector<16x128xf32>
    %27 = arith.truncf %26 : vector<16x128xf32> to vector<16x128xbf16>
    %28 = math.tanh %27 : vector<16x128xbf16>
    %c0_20 = arith.constant 0 : index
    %c0_21 = arith.constant 0 : index
    %29 = vector.load %arg10[%c0_20, %c0_21] : memref<128x128xbf16, #tpu.memory_space<vmem>>, vector<128x128xbf16>
    %cst_22 = arith.constant dense<0.000000e+00> : vector<16x128xf32>
    %30 = tpu.matmul %28, %29, %cst_22 {dimension_numbers = #tpu.dot_dimension_numbers<[1], [0], [0], [1], [0, 0, 1, 1], [], []>} : vector<16x128xbf16>, vector<128x128xbf16>, vector<16x128xf32> -> vector<16x128xf32>
    %c0_23 = arith.constant 0 : index
    %c0_24 = arith.constant 0 : index
    %31 = vector.load %arg11[%c0_23, %c0_24] : memref<1x128xf32, #tpu.memory_space<vmem>>, vector<1x128xf32>
    %32 = vector.broadcast %31 : vector<1x128xf32> to vector<16x128xf32>
    %33 = arith.addf %30, %32 : vector<16x128xf32>
    %c0_25 = arith.constant 0 : index
    %c0_26 = arith.constant 0 : index
    %34 = vector.load %arg12[%c0_25, %c0_26] : memref<16x128xf32, #tpu.memory_space<vmem>>, vector<16x128xf32>
    tpu.vector_store %arg12[%c0_25, %c0_26], %33 {strides = array<i32>} : memref<16x128xf32, #tpu.memory_space<vmem>>, vector<16x128xf32>,
    return
  }
  func.func @transform_0(%arg0: i32) -> (i32, i32) {
    %c0_i32 = arith.constant 0 : i32
    %c0_i32_0 = arith.constant 0 : i32
    return %arg0, %c0_i32 : i32, i32
  }
  func.func @transform_1(%arg0: i32) -> (i32, i32) {
    %c0_i32 = arith.constant 0 : i32
    %c0_i32_0 = arith.constant 0 : i32
    %c0_i32_1 = arith.constant 0 : i32
    return %c0_i32, %c0_i32_0 : i32, i32
  }
  func.func @transform_2(%arg0: i32) -> (i32, i32) {
    %c0_i32 = arith.constant 0 : i32
    %c0_i32_0 = arith.constant 0 : i32
    %c0_i32_1 = arith.constant 0 : i32
    return %c0_i32, %c0_i32_0 : i32, i32
  }
  func.func @transform_3(%arg0: i32) -> (i32, i32) {
    %c0_i32 = arith.constant 0 : i32
    %c0_i32_0 = arith.constant 0 : i32
    %c0_i32_1 = arith.constant 0 : i32
    return %c0_i32, %c0_i32_0 : i32, i32
  }
  func.func @transform_4(%arg0: i32) -> (i32, i32) {
    %c0_i32 = arith.constant 0 : i32
    %c0_i32_0 = arith.constant 0 : i32
    %c0_i32_1 = arith.constant 0 : i32
    return %c0_i32, %c0_i32_0 : i32, i32
  }
  func.func @transform_5(%arg0: i32) -> (i32, i32) {
    %c0_i32 = arith.constant 0 : i32
    %c0_i32_0 = arith.constant 0 : i32
    %c0_i32_1 = arith.constant 0 : i32
    return %c0_i32, %c0_i32_0 : i32, i32
  }
  func.func @transform_6(%arg0: i32) -> (i32, i32) {
    %c0_i32 = arith.constant 0 : i32
    %c0_i32_0 = arith.constant 0 : i32
    %c0_i32_1 = arith.constant 0 : i32
    return %c0_i32, %c0_i32_0 : i32, i32
  }
  func.func @transform_7(%arg0: i32) -> (i32, i32) {
    %c0_i32 = arith.constant 0 : i32
    %c0_i32_0 = arith.constant 0 : i32
    %c0_i32_1 = arith.constant 0 : i32
    return %c0_i32, %c0_i32_0 : i32, i32
  }
  func.func @transform_8(%arg0: i32) -> (i32, i32) {
    %c0_i32 = arith.constant 0 : i32
    %c0_i32_0 = arith.constant 0 : i32
    %c0_i32_1 = arith.constant 0 : i32
    return %c0_i32, %c0_i32_0 : i32, i32
  }
  func.func @transform_9(%arg0: i32) -> (i32, i32) {
    %c0_i32 = arith.constant 0 : i32
    %c0_i32_0 = arith.constant 0 : i32
    %c0_i32_1 = arith.constant 0 : i32
    return %c0_i32, %c0_i32_0 : i32, i32
  }
  func.func @transform_10(%arg0: i32) -> (i32, i32) {
    %c0_i32 = arith.constant 0 : i32
    %c0_i32_0 = arith.constant 0 : i32
    %c0_i32_1 = arith.constant 0 : i32
    return %c0_i32, %c0_i32_0 : i32, i32
  }
  func.func @transform_11(%arg0: i32) -> (i32, i32) {
    %c0_i32 = arith.constant 0 : i32
    %c0_i32_0 = arith.constant 0 : i32
    return %arg0, %c0_i32 : i32, i32
  }
}

module attributes {stable_mosaic.version = 11 : i64} {
  func.func @mlp_kernel(%arg0: i32, %arg1: memref<16x640xbf16, #tpu.memory_space<vmem>>, %arg2: memref<640x1024xbf16, #tpu.memory_space<vmem>>, %arg3: memref<1x1024xf32, #tpu.memory_space<vmem>>, %arg4: memref<1024x512xbf16, #tpu.memory_space<vmem>>, %arg5: memref<1x512xf32, #tpu.memory_space<vmem>>, %arg6: memref<512x256xbf16, #tpu.memory_space<vmem>>, %arg7: memref<1x256xf32, #tpu.memory_space<vmem>>, %arg8: memref<256x128xbf16, #tpu.memory_space<vmem>>, %arg9: memref<1x128xf32, #tpu.memory_space<vmem>>, %arg10: memref<128x128xbf16, #tpu.memory_space<vmem>>, %arg11: memref<1x128xf32, #tpu.memory_space<vmem>>, %arg12: memref<16x128xf32, #tpu.memory_space<vmem>>) attributes {dimension_semantics = [#tpu.dimension_semantics<arbitrary>], iteration_bounds = array<i64: 1>, scalar_prefetch = 0 : i64, scratch_operands = 0 : i64, tpu.core_type = #tpu.core_type<tc>, window_params = [{transform_indices = @transform_0, window_bounds = array<i64: 16, 640>}, {pipeline_mode = #tpu.pipeline_mode<synchronous>, transform_indices = @transform_1, window_bounds = array<i64: 640, 1024>}, {pipeline_mode = #tpu.pipeline_mode<synchronous>, transform_indices = @transform_2, window_bounds = array<i64: 1, 1024>}, {pipeline_mode = #tpu.pipeline_mode<synchronous>, transform_indices = @transform_3, window_bounds = array<i64: 1024, 512>}, {pipeline_mode = #tpu.pipeline_mode<synchronous>, transform_indices = @transform_4, window_bounds = array<i64: 1, 512>}, {pipeline_mode = #tpu.pipeline_mode<synchronous>, transform_indices = @transform_5, window_bounds = array<i64: 512, 256>}, {pipeline_mode = #tpu.pipeline_mode<synchronous>, transform_indices = @transform_6, window_bounds = array<i64: 1, 256>}, {pipeline_mode = #tpu.pipeline_mode<synchronous>, transform_indices = @transform_7, window_bounds = array<i64: 256, 128>}, {pipeline_mode = #tpu.pipeline_mode<synchronous>, transform_indices = @transform_8, window_bounds = array<i64: 1, 128>}, {pipeline_mode = #tpu.pipeline_mode<synchronous>, transform_indices = @transform_9, window_bounds = array<i64: 128, 128>}, {pipeline_mode = #tpu.pipeline_mode<synchronous>, transform_indices = @transform_10, window_bounds = array<i64: 1, 128>}, {transform_indices = @transform_11, window_bounds = array<i64: 16, 128>}]} {
    %c0 = arith.constant 0 : index
    %c0_0 = arith.constant 0 : index
    %0 = vector.load %arg1[%c0, %c0_0] : memref<16x640xbf16, #tpu.memory_space<vmem>>, vector<16x640xbf16>
    %c0_1 = arith.constant 0 : index
    %c0_2 = arith.constant 0 : index
    %1 = vector.load %arg2[%c0_1, %c0_2] : memref<640x1024xbf16, #tpu.memory_space<vmem>>, vector<640x1024xbf16>
    %cst = arith.constant dense<0.000000e+00> : vector<16x1024xf32>
    %2 = tpu.matmul %0, %1, %cst {dimension_numbers = #tpu.dot_dimension_numbers<[1], [0], [0], [1], [0, 0, 1, 1], [], []>} : vector<16x640xbf16>, vector<640x1024xbf16>, vector<16x1024xf32> -> vector<16x1024xf32>
    %c0_3 = arith.constant 0 : index
    %c0_4 = arith.constant 0 : index
    %3 = vector.load %arg3[%c0_3, %c0_4] : memref<1x1024xf32, #tpu.memory_space<vmem>>, vector<1x1024xf32>
    %4 = vector.broadcast %3 : vector<1x1024xf32> to vector<16x1024xf32>
    %5 = arith.addf %2, %4 : vector<16x1024xf32>
    %6 = arith.truncf %5 : vector<16x1024xf32> to vector<16x1024xbf16>
    %7 = math.tanh %6 : vector<16x1024xbf16>
    %c0_5 = arith.constant 0 : index
    %c0_6 = arith.constant 0 : index
    %8 = vector.load %arg4[%c0_5, %c0_6] : memref<1024x512xbf16, #tpu.memory_space<vmem>>, vector<1024x512xbf16>
    %cst_7 = arith.constant dense<0.000000e+00> : vector<16x512xf32>
    %9 = tpu.matmul %7, %8, %cst_7 {dimension_numbers = #tpu.dot_dimension_numbers<[1], [0], [0], [1], [0, 0, 1, 1], [], []>} : vector<16x1024xbf16>, vector<1024x512xbf16>, vector<16x512xf32> -> vector<16x512xf32>
    %c0_8 = arith.constant 0 : index
    %c0_9 = arith.constant 0 : index
    %10 = vector.load %arg5[%c0_8, %c0_9] : memref<1x512xf32, #tpu.memory_space<vmem>>, vector<1x512xf32>
    %11 = vector.broadcast %10 : vector<1x512xf32> to vector<16x512xf32>
    %12 = arith.addf %9, %11 : vector<16x512xf32>
    %13 = arith.truncf %12 : vector<16x512xf32> to vector<16x512xbf16>
    %14 = math.tanh %13 : vector<16x512xbf16>
    %c0_10 = arith.constant 0 : index
    %c0_11 = arith.constant 0 : index
    %15 = vector.load %arg6[%c0_10, %c0_11] : memref<512x256xbf16, #tpu.memory_space<vmem>>, vector<512x256xbf16>
    %cst_12 = arith.constant dense<0.000000e+00> : vector<16x256xf32>
    %16 = tpu.matmul %14, %15, %cst_12 {dimension_numbers = #tpu.dot_dimension_numbers<[1], [0], [0], [1], [0, 0, 1, 1], [], []>} : vector<16x512xbf16>, vector<512x256xbf16>, vector<16x256xf32> -> vector<16x256xf32>
    %c0_13 = arith.constant 0 : index
    %c0_14 = arith.constant 0 : index
    %17 = vector.load %arg7[%c0_13, %c0_14] : memref<1x256xf32, #tpu.memory_space<vmem>>, vector<1x256xf32>
    %18 = vector.broadcast %17 : vector<1x256xf32> to vector<16x256xf32>
    %19 = arith.addf %16, %18 : vector<16x256xf32>
    %20 = arith.truncf %19 : vector<16x256xf32> to vector<16x256xbf16>
    %21 = math.tanh %20 : vector<16x256xbf16>
    %c0_15 = arith.constant 0 : index
    %c0_16 = arith.constant 0 : index
    %22 = vector.load %arg8[%c0_15, %c0_16] : memref<256x128xbf16, #tpu.memory_space<vmem>>, vector<256x128xbf16>
    %cst_17 = arith.constant dense<0.000000e+00> : vector<16x128xf32>
    %23 = tpu.matmul %21, %22, %cst_17 {dimension_numbers = #tpu.dot_dimension_numbers<[1], [0], [0], [1], [0, 0, 1, 1], [], []>} : vector<16x256xbf16>, vector<256x128xbf16>, vector<16x128xf32> -> vector<16x128xf32>
    %c0_18 = arith.constant 0 : index
    %c0_19 = arith.constant 0 : index
    %24 = vector.load %arg9[%c0_18, %c0_19] : memref<1x128xf32, #tpu.memory_space<vmem>>, vector<1x128xf32>
    %25 = vector.broadcast %24 : vector<1x128xf32> to vector<16x128xf32>
    %26 = arith.addf %23, %25 : vector<16x128xf32>
    %27 = arith.truncf %26 : vector<16x128xf32> to vector<16x128xbf16>
    %28 = math.tanh %27 : vector<16x128xbf16>
    %c0_20 = arith.constant 0 : index
    %c0_21 = arith.constant 0 : index
    %29 = vector.load %arg10[%c0_20, %c0_21] : memref<128x128xbf16, #tpu.memory_space<vmem>>, vector<128x128xbf16>
    %cst_22 = arith.constant dense<0.000000e+00> : vector<16x128xf32>
    %30 = tpu.matmul %28, %29, %cst_22 {dimension_numbers = #tpu.dot_dimension_numbers<[1], [0], [0], [1], [0, 0, 1, 1], [], []>} : vector<16x128xbf16>, vector<128x128xbf16>, vector<16x128xf32> -> vector<16x128xf32>
    %c0_23 = arith.constant 0 : index
    %c0_24 = arith.constant 0 : index
    %31 = vector.load %arg11[%c0_23, %c0_24] : memref<1x128xf32, #tpu.memory_space<vmem>>, vector<1x128xf32>
    %32 = vector.broadcast %31 : vector<1x128xf32> to vector<16x128xf32>
    %33 = arith.addf %30, %32 : vector<16x128xf32>
    %c0_25 = arith.constant 0 : index
    %c0_26 = arith.constant 0 : index
    %34 = vector.load %arg12[%c0_25, %c0_26] : memref<16x128xf32, #tpu.memory_space<vmem>>, vector<16x128xf32>
    tpu.vector_store %arg12[%c0_25, %c0_26], %33 {strides = array<i32>} : memref<16x128xf32, #tpu.memory_space<vmem>>, vector<16x128xf32>,
    return
  }
  func.func @transform_0(%arg0: i32) -> (i32, i32) {
    %c0_i32 = arith.constant 0 : i32
    %c0_i32_0 = arith.constant 0 : i32
    return %arg0, %c0_i32 : i32, i32
  }
  func.func @transform_1(%arg0: i32) -> (i32, i32) {
    %c0_i32 = arith.constant 0 : i32
    %c0_i32_0 = arith.constant 0 : i32
    %c0_i32_1 = arith.constant 0 : i32
    return %c0_i32, %c0_i32_0 : i32, i32
  }
  func.func @transform_2(%arg0: i32) -> (i32, i32) {
    %c0_i32 = arith.constant 0 : i32
    %c0_i32_0 = arith.constant 0 : i32
    %c0_i32_1 = arith.constant 0 : i32
    return %c0_i32, %c0_i32_0 : i32, i32
  }
  func.func @transform_3(%arg0: i32) -> (i32, i32) {
    %c0_i32 = arith.constant 0 : i32
    %c0_i32_0 = arith.constant 0 : i32
    %c0_i32_1 = arith.constant 0 : i32
    return %c0_i32, %c0_i32_0 : i32, i32
  }
  func.func @transform_4(%arg0: i32) -> (i32, i32) {
    %c0_i32 = arith.constant 0 : i32
    %c0_i32_0 = arith.constant 0 : i32
    %c0_i32_1 = arith.constant 0 : i32
    return %c0_i32, %c0_i32_0 : i32, i32
  }
  func.func @transform_5(%arg0: i32) -> (i32, i32) {
    %c0_i32 = arith.constant 0 : i32
    %c0_i32_0 = arith.constant 0 : i32
    %c0_i32_1 = arith.constant 0 : i32
    return %c0_i32, %c0_i32_0 : i32, i32
  }
  func.func @transform_6(%arg0: i32) -> (i32, i32) {
    %c0_i32 = arith.constant 0 : i32
    %c0_i32_0 = arith.constant 0 : i32
    %c0_i32_1 = arith.constant 0 : i32
    return %c0_i32, %c0_i32_0 : i32, i32
  }
  func.func @transform_7(%arg0: i32) -> (i32, i32) {
    %c0_i32 = arith.constant 0 : i32
    %c0_i32_0 = arith.constant 0 : i32
    %c0_i32_1 = arith.constant 0 : i32
    return %c0_i32, %c0_i32_0 : i32, i32
  }
  func.func @transform_8(%arg0: i32) -> (i32, i32) {
    %c0_i32 = arith.constant 0 : i32
    %c0_i32_0 = arith.constant 0 : i32
    %c0_i32_1 = arith.constant 0 : i32
    return %c0_i32, %c0_i32_0 : i32, i32
  }
  func.func @transform_9(%arg0: i32) -> (i32, i32) {
    %c0_i32 = arith.constant 0 : i32
    %c0_i32_0 = arith.constant 0 : i32
    %c0_i32_1 = arith.constant 0 : i32
    return %c0_i32, %c0_i32_0 : i32, i32
  }
  func.func @transform_10(%arg0: i32) -> (i32, i32) {
    %c0_i32 = arith.constant 0 : i32
    %c0_i32_0 = arith.constant 0 : i32
    %c0_i32_1 = arith.constant 0 : i32
    return %c0_i32, %c0_i32_0 : i32, i32
  }
  func.func @transform_11(%arg0: i32) -> (i32, i32) {
    %c0_i32 = arith.constant 0 : i32
    %c0_i32_0 = arith.constant 0 : i32
    return %arg0, %c0_i32 : i32, i32
  }
}

</mosaic_0001>

<llo_original>
// kernel: tpu_custom_call.1
$region0: #{tpu_custom_call.1}
  #allocation0 [shape = 'u32[]', space=smem, size = 0x4, offset = 0x4, fixed_abs, tag = 'smem constant byte address 0x4 - core index']
  #allocation1 [shape = 'u32[72,128]{1,0:T(1,128)}', space=vmem, size = 0x9000, scoped, tag = 'internal scratch']
  %s0 = inlined_call_operand.hbm [shape: bf16[16,640], index: 0, kind: input, shape index: {}]
  %s1 = inlined_call_operand.hbm [shape: bf16[640,1024], index: 1, kind: input, shape index: {}]
  %s2 = inlined_call_operand.hbm [shape: f32[1,1024], index: 2, kind: input, shape index: {}]
  %s3 = inlined_call_operand.hbm [shape: bf16[1024,512], index: 3, kind: input, shape index: {}]
  %s4 = inlined_call_operand.hbm [shape: f32[1,512], index: 4, kind: input, shape index: {}]
  %s5 = inlined_call_operand.hbm [shape: bf16[512,256], index: 5, kind: input, shape index: {}]
  %s6 = inlined_call_operand.hbm [shape: f32[1,256], index: 6, kind: input, shape index: {}]
  %s7 = inlined_call_operand.hbm [shape: bf16[256,128], index: 7, kind: input, shape index: {}]
  %s8 = inlined_call_operand.hbm [shape: f32[1,128], index: 8, kind: input, shape index: {}]
  %s9 = inlined_call_operand.hbm [shape: bf16[128,128], index: 9, kind: input, shape index: {}]
  %s10 = inlined_call_operand.hbm [shape: f32[1,128], index: 10, kind: input, shape index: {}]
  %s11 = inlined_call_operand.hbm [shape: f32[16,128], index: 11, kind: output, shape index: {}]
  %s12 = sld [smem:[#allocation0]]
  $region98: #{tpu_custom_call.1} parent=0
    _
  %s14 = ssub.s32 1, %s12
  %s15 = scalar_select 0, %s14, %s12
  $region1: #{tpu_custom_call.1} parent=0
    #allocation2 [shape = 'u8[20480]{0}', space=vmem, size = 0x5000, scoped, tag = 'input window, operand 0, single buffered']
    #allocation3 [shape = 's32[1]{0}', space=sflag, size = 0x4, scoped, tag = 'scoped memory for tpu_custom_call.1']
    #allocation4 [shape = 's32[1]{0}', space=sflag, size = 0x4, scoped, tag = 'scoped memory for tpu_custom_call.1']
    #allocation5 [shape = 'u8[1310720]{0}', space=vmem, size = 0x140000, scoped, tag = 'input window, operand 1, single buffered']
    #allocation6 [shape = 's32[1]{0}', space=sflag, size = 0x4, scoped, tag = 'scoped memory for tpu_custom_call.1']
    #allocation7 [shape = 'u8[4096]{0}', space=vmem, size = 0x1000, scoped, tag = 'input window, operand 2, single buffered']
    #allocation8 [shape = 'u8[1048576]{0}', space=vmem, size = 0x100000, scoped, tag = 'input window, operand 3, single buffered']
    #allocation9 [shape = 's32[1]{0}', space=sflag, size = 0x4, scoped, tag = 'scoped memory for tpu_custom_call.1']
    #allocation10 [shape = 'u8[2048]{0}', space=vmem, size = 0x800, scoped, tag = 'input window, operand 4, single buffered']
    #allocation11 [shape = 'u8[262144]{0}', space=vmem, size = 0x40000, scoped, tag = 'input window, operand 5, single buffered']
    #allocation12 [shape = 's32[1]{0}', space=sflag, size = 0x4, scoped, tag = 'scoped memory for tpu_custom_call.1']
    #allocation13 [shape = 'u8[1024]{0}', space=vmem, size = 0x400, scoped, tag = 'input window, operand 6, single buffered']
    #allocation14 [shape = 'u8[65536]{0}', space=vmem, size = 0x10000, scoped, tag = 'input window, operand 7, single buffered']
    #allocation15 [shape = 's32[1]{0}', space=sflag, size = 0x4, scoped, tag = 'scoped memory for tpu_custom_call.1']
    #allocation16 [shape = 'u8[512]{0}', space=vmem, size = 0x400, scoped, tag = 'input window, operand 8, single buffered']
    #allocation17 [shape = 'u8[32768]{0}', space=vmem, size = 0x8000, scoped, tag = 'input window, operand 9, single buffered']
    #allocation18 [shape = 's32[1]{0}', space=sflag, size = 0x4, scoped, tag = 'scoped memory for tpu_custom_call.1']
    #allocation19 [shape = 'u8[512]{0}', space=vmem, size = 0x400, scoped, tag = 'input window, operand 10, single buffered']
    #allocation20 [shape = 'u8[8192]{0}', space=vmem, size = 0x2000, scoped, tag = 'output window, operand 0, single buffered']
    %16 = vsyncpa [#allocation3], 0
    %17 = vsyncpa [#allocation6], 0
    %18 = vsyncpa [#allocation9], 0
    %19 = vsyncpa [#allocation12], 0
    %20 = vsyncpa [#allocation15], 0
    %21 = vsyncpa [#allocation18], 0
    %22 = vsyncpa [#allocation4], 0
    // Predicated region
    $region2: #{tpu_custom_call.1} parent=1 // pred_check
      _
    $region3: #{tpu_custom_call.1} parent=1 // pred_check_branch
      %24 = sbr.rel (0) target = $region5
    $region4: #{tpu_custom_call.1} parent=1 // pred_region
      %26 = vsyncadd [#allocation3], 0
      %s27 = sshll.u32 %s0, 4
      %s28 = int_to_ptr.hbm [resolvable:$true] %s27
      %s29 = sshll.u32 [#allocation2], 4
      %s30 = int_to_ptr.vmem [resolvable:$true] %s29
      %35 = dma.hbm_to_vmem [thread:$0]  %s28, 640, %s30, [#allocation3], 320, 320, 20
    $region5: #{tpu_custom_call.1} parent=1 // pred_fallthru
      _
    // Predicated region
    $region6: #{tpu_custom_call.1} parent=1 // pred_check
      _
    $region7: #{tpu_custom_call.1} parent=1 // pred_check_branch
      %37 = sbr.rel (0) target = $region9
    $region8: #{tpu_custom_call.1} parent=1 // pred_region
      %39 = vsyncadd [#allocation6], 0
      %s40 = sshll.u32 %s1, 4
      %s41 = int_to_ptr.hbm [resolvable:$true] %s40
      %s42 = sshll.u32 [#allocation5], 4
      %s43 = int_to_ptr.vmem [resolvable:$true] %s42
      %48 = dma.hbm_to_vmem [thread:$0]  %s41, 40960, %s43, [#allocation6], 512, 512, 32
    $region9: #{tpu_custom_call.1} parent=1 // pred_fallthru
      _
    // Predicated region
    $region10: #{tpu_custom_call.1} parent=1 // pred_check
      _
    $region11: #{tpu_custom_call.1} parent=1 // pred_check_branch
      %50 = sbr.rel (0) target = $region13
    $region12: #{tpu_custom_call.1} parent=1 // pred_region
      %52 = vsyncadd [#allocation6], 0
      %s54 = sshll.u32 %s2, 4
      %s55 = int_to_ptr.hbm [resolvable:$true] %s54
      %s56 = sshll.u32 [#allocation7], 4
      %s57 = int_to_ptr.vmem [resolvable:$true] %s56
      %59 = dma.hbm_to_vmem [thread:$0]  %s55, 128, %s57, [#allocation6]
    $region13: #{tpu_custom_call.1} parent=1 // pred_fallthru
      _
    // Predicated region
    $region14: #{tpu_custom_call.1} parent=1 // pred_check
      _
    $region15: #{tpu_custom_call.1} parent=1 // pred_check_branch
      %61 = sbr.rel (0) target = $region17
    $region16: #{tpu_custom_call.1} parent=1 // pred_region
      %63 = vsyncadd [#allocation9], 0
      %s64 = sshll.u32 %s3, 4
      %s65 = int_to_ptr.hbm [resolvable:$true] %s64
      %s66 = sshll.u32 [#allocation8], 4
      %s67 = int_to_ptr.vmem [resolvable:$true] %s66
      %72 = dma.hbm_to_vmem [thread:$0]  %s65, 32768, %s67, [#allocation9], 256, 256, 16
    $region17: #{tpu_custom_call.1} parent=1 // pred_fallthru
      _
    // Predicated region
    $region18: #{tpu_custom_call.1} parent=1 // pred_check
      _
    $region19: #{tpu_custom_call.1} parent=1 // pred_check_branch
      %74 = sbr.rel (0) target = $region21
    $region20: #{tpu_custom_call.1} parent=1 // pred_region
      %76 = vsyncadd [#allocation9], 0
      %s78 = sshll.u32 %s4, 4
      %s79 = int_to_ptr.hbm [resolvable:$true] %s78
      %s80 = sshll.u32 [#allocation10], 4
      %s81 = int_to_ptr.vmem [resolvable:$true] %s80
      %83 = dma.hbm_to_vmem [thread:$0]  %s79, 64, %s81, [#allocation9]
    $region21: #{tpu_custom_call.1} parent=1 // pred_fallthru
      _
    // Predicated region
    $region22: #{tpu_custom_call.1} parent=1 // pred_check
      _
    $region23: #{tpu_custom_call.1} parent=1 // pred_check_branch
      %85 = sbr.rel (0) target = $region25
    $region24: #{tpu_custom_call.1} parent=1 // pred_region
      %87 = vsyncadd [#allocation12], 0
      %s88 = sshll.u32 %s5, 4
      %s89 = int_to_ptr.hbm [resolvable:$true] %s88
      %s90 = sshll.u32 [#allocation11], 4
      %s91 = int_to_ptr.vmem [resolvable:$true] %s90
      %96 = dma.hbm_to_vmem [thread:$0]  %s89, 8192, %s91, [#allocation12], 128, 128, 8
    $region25: #{tpu_custom_call.1} parent=1 // pred_fallthru
      _
    // Predicated region
    $region26: #{tpu_custom_call.1} parent=1 // pred_check
      _
    $region27: #{tpu_custom_call.1} parent=1 // pred_check_branch
      %98 = sbr.rel (0) target = $region29
    $region28: #{tpu_custom_call.1} parent=1 // pred_region
      %100 = vsyncadd [#allocation12], 0
      %s102 = sshll.u32 %s6, 4
      %s103 = int_to_ptr.hbm [resolvable:$true] %s102
      %s104 = sshll.u32 [#allocation13], 4
      %s105 = int_to_ptr.vmem [resolvable:$true] %s104
      %107 = dma.hbm_to_vmem [thread:$0]  %s103, 32, %s105, [#allocation12]
    $region29: #{tpu_custom_call.1} parent=1 // pred_fallthru
      _
    // Predicated region
    $region30: #{tpu_custom_call.1} parent=1 // pred_check
      _
    $region31: #{tpu_custom_call.1} parent=1 // pred_check_branch
      %109 = sbr.rel (0) target = $region33
    $region32: #{tpu_custom_call.1} parent=1 // pred_region
      %111 = vsyncadd [#allocation15], 0
      %s112 = sshll.u32 %s7, 4
      %s113 = int_to_ptr.hbm [resolvable:$true] %s112
      %s114 = sshll.u32 [#allocation14], 4
      %s115 = int_to_ptr.vmem [resolvable:$true] %s114
      %120 = dma.hbm_to_vmem [thread:$0]  %s113, 2048, %s115, [#allocation15], 64, 64, 4
    $region33: #{tpu_custom_call.1} parent=1 // pred_fallthru
      _
    // Predicated region
    $region34: #{tpu_custom_call.1} parent=1 // pred_check
      _
    $region35: #{tpu_custom_call.1} parent=1 // pred_check_branch
      %122 = sbr.rel (0) target = $region37
    $region36: #{tpu_custom_call.1} parent=1 // pred_region
      %124 = vsyncadd [#allocation15], 0
      %s126 = sshll.u32 %s8, 4
      %s127 = int_to_ptr.hbm [resolvable:$true] %s126
      %s128 = sshll.u32 [#allocation16], 4
      %s129 = int_to_ptr.vmem [resolvable:$true] %s128
      %131 = dma.hbm_to_vmem [thread:$0]  %s127, 16, %s129, [#allocation15]
    $region37: #{tpu_custom_call.1} parent=1 // pred_fallthru
      _
    // Predicated region
    $region38: #{tpu_custom_call.1} parent=1 // pred_check
      _
    $region39: #{tpu_custom_call.1} parent=1 // pred_check_branch
      %133 = sbr.rel (0) target = $region41
    $region40: #{tpu_custom_call.1} parent=1 // pred_region
      %135 = vsyncadd [#allocation18], 0
      %s136 = sshll.u32 %s9, 4
      %s137 = int_to_ptr.hbm [resolvable:$true] %s136
      %s138 = sshll.u32 [#allocation17], 4
      %s139 = int_to_ptr.vmem [resolvable:$true] %s138
      %144 = dma.hbm_to_vmem [thread:$0]  %s137, 1024, %s139, [#allocation18], 64, 64, 4
    $region41: #{tpu_custom_call.1} parent=1 // pred_fallthru
      _
    // Predicated region
    $region42: #{tpu_custom_call.1} parent=1 // pred_check
      _
    $region43: #{tpu_custom_call.1} parent=1 // pred_check_branch
      %146 = sbr.rel (0) target = $region45
    $region44: #{tpu_custom_call.1} parent=1 // pred_region
      %148 = vsyncadd [#allocation18], 0
      %s150 = sshll.u32 %s10, 4
      %s151 = int_to_ptr.hbm [resolvable:$true] %s150
      %s152 = sshll.u32 [#allocation19], 4
      %s153 = int_to_ptr.vmem [resolvable:$true] %s152
      %155 = dma.hbm_to_vmem [thread:$0]  %s151, 16, %s153, [#allocation18]
    $region45: #{tpu_custom_call.1} parent=1 // pred_fallthru
      _
    // Predicated region
    $region46: #{tpu_custom_call.1} parent=1 // pred_check
      _
    $region47: #{tpu_custom_call.1} parent=1 // pred_check_branch
      %157 = sbr.rel (0) target = $region49
    $region48: #{tpu_custom_call.1} parent=1 // pred_region
      %159 = dma.done [#allocation3], 640
    $region49: #{tpu_custom_call.1} parent=1 // pred_fallthru
      _
    // Predicated region
    $region50: #{tpu_custom_call.1} parent=1 // pred_check
      _
    $region51: #{tpu_custom_call.1} parent=1 // pred_check_branch
      %161 = sbr.rel (0) target = $region53
    $region52: #{tpu_custom_call.1} parent=1 // pred_region
      %163 = dma.done [#allocation6], 40960
    $region53: #{tpu_custom_call.1} parent=1 // pred_fallthru
      _
    // Predicated region
    $region54: #{tpu_custom_call.1} parent=1 // pred_check
      _
    $region55: #{tpu_custom_call.1} parent=1 // pred_check_branch
      %165 = sbr.rel (0) target = $region57
    $region56: #{tpu_custom_call.1} parent=1 // pred_region
      %167 = dma.done [#allocation6], 128
    $region57: #{tpu_custom_call.1} parent=1 // pred_fallthru
      _
    // Predicated region
    $region58: #{tpu_custom_call.1} parent=1 // pred_check
      _
    $region59: #{tpu_custom_call.1} parent=1 // pred_check_branch
      %169 = sbr.rel (0) target = $region61
    $region60: #{tpu_custom_call.1} parent=1 // pred_region
      %171 = dma.done [#allocation9], 32768
    $region61: #{tpu_custom_call.1} parent=1 // pred_fallthru
      _
    // Predicated region
    $region62: #{tpu_custom_call.1} parent=1 // pred_check
      _
    $region63: #{tpu_custom_call.1} parent=1 // pred_check_branch
      %173 = sbr.rel (0) target = $region65
    $region64: #{tpu_custom_call.1} parent=1 // pred_region
      %175 = dma.done [#allocation9], 64
    $region65: #{tpu_custom_call.1} parent=1 // pred_fallthru
      _
    // Predicated region
    $region66: #{tpu_custom_call.1} parent=1 // pred_check
      _
    $region67: #{tpu_custom_call.1} parent=1 // pred_check_branch
      %177 = sbr.rel (0) target = $region69
    $region68: #{tpu_custom_call.1} parent=1 // pred_region
      %179 = dma.done [#allocation12], 8192
    $region69: #{tpu_custom_call.1} parent=1 // pred_fallthru
      _
    // Predicated region
    $region70: #{tpu_custom_call.1} parent=1 // pred_check
      _
    $region71: #{tpu_custom_call.1} parent=1 // pred_check_branch
      %181 = sbr.rel (0) target = $region73
    $region72: #{tpu_custom_call.1} parent=1 // pred_region
      %183 = dma.done [#allocation12], 32
    $region73: #{tpu_custom_call.1} parent=1 // pred_fallthru
      _
    // Predicated region
    $region74: #{tpu_custom_call.1} parent=1 // pred_check
      _
    $region75: #{tpu_custom_call.1} parent=1 // pred_check_branch
      %185 = sbr.rel (0) target = $region77
    $region76: #{tpu_custom_call.1} parent=1 // pred_region
      %187 = dma.done [#allocation15], 2048
    $region77: #{tpu_custom_call.1} parent=1 // pred_fallthru
      _
    // Predicated region
    $region78: #{tpu_custom_call.1} parent=1 // pred_check
      _
    $region79: #{tpu_custom_call.1} parent=1 // pred_check_branch
      %189 = sbr.rel (0) target = $region81
    $region80: #{tpu_custom_call.1} parent=1 // pred_region
      %191 = dma.done [#allocation15], 16
    $region81: #{tpu_custom_call.1} parent=1 // pred_fallthru
      _
    // Predicated region
    $region82: #{tpu_custom_call.1} parent=1 // pred_check
      _
    $region83: #{tpu_custom_call.1} parent=1 // pred_check_branch
      %193 = sbr.rel (0) target = $region85
    $region84: #{tpu_custom_call.1} parent=1 // pred_region
      %195 = dma.done [#allocation18], 1024
    $region85: #{tpu_custom_call.1} parent=1 // pred_fallthru
      _
    // Predicated region
    $region86: #{tpu_custom_call.1} parent=1 // pred_check
      _
    $region87: #{tpu_custom_call.1} parent=1 // pred_check_branch
      %197 = sbr.rel (0) target = $region89
    $region88: #{tpu_custom_call.1} parent=1 // pred_region
      %199 = dma.done [#allocation18], 16
    $region89: #{tpu_custom_call.1} parent=1 // pred_fallthru
      _
    %v200 = vld [vmem:[#allocation2] sm:$0xff]
    %v201 = vld [vmem:[#allocation2 + $0x8] sm:$0xff]
    %v202 = vld [vmem:[#allocation2 + $0x10] sm:$0xf]
    %v203 = vld [vmem:[#allocation2 + $0x14] sm:$0xff]
    %v204 = vld [vmem:[#allocation2 + $0x1c] sm:$0xff]
    %v205 = vld [vmem:[#allocation2 + $0x24] sm:$0xf]
    %v206 = vld [vmem:[#allocation5] sm:$0xff]
    %v207 = vld [vmem:[#allocation5 + $0x8] sm:$0xff]
    %v208 = vld [vmem:[#allocation5 + $0x10] sm:$0xff]
    %v209 = vld [vmem:[#allocation5 + $0x18] sm:$0xff]
    %v210 = vld [vmem:[#allocation5 + $0x20] sm:$0xff]
    %v211 = vld [vmem:[#allocation5 + $0x28] sm:$0xff]
    %v212 = vld [vmem:[#allocation5 + $0x30] sm:$0xff]
    %v213 = vld [vmem:[#allocation5 + $0x38] sm:$0xff]
    %v214 = vld [vmem:[#allocation5 + $0x40] sm:$0xff]
    %v215 = vld [vmem:[#allocation5 + $0x48] sm:$0xff]
    %v216 = vld [vmem:[#allocation5 + $0x50] sm:$0xff]
    %v217 = vld [vmem:[#allocation5 + $0x58] sm:$0xff]
    %v218 = vld [vmem:[#allocation5 + $0x60] sm:$0xff]
    %v219 = vld [vmem:[#allocation5 + $0x68] sm:$0xff]
    %v220 = vld [vmem:[#allocation5 + $0x70] sm:$0xff]
    %v221 = vld [vmem:[#allocation5 + $0x78] sm:$0xff]
    %v222 = vld [vmem:[#allocation5 + $0x80] sm:$0xff]
    %v223 = vld [vmem:[#allocation5 + $0x88] sm:$0xff]
    %v224 = vld [vmem:[#allocation5 + $0x90] sm:$0xff]
    %v225 = vld [vmem:[#allocation5 + $0x98] sm:$0xff]
    %v226 = vld [vmem:[#allocation5 + $0xa0] sm:$0xff]
    %v227 = vld [vmem:[#allocation5 + $0xa8] sm:$0xff]
    %v228 = vld [vmem:[#allocation5 + $0xb0] sm:$0xff]
    %v229 = vld [vmem:[#allocation5 + $0xb8] sm:$0xff]
    %v230 = vld [vmem:[#allocation5 + $0xc0] sm:$0xff]
    %v231 = vld [vmem:[#allocation5 + $0xc8] sm:$0xff]
    %v232 = vld [vmem:[#allocation5 + $0xd0] sm:$0xff]
    %v233 = vld [vmem:[#allocation5 + $0xd8] sm:$0xff]
    %v234 = vld [vmem:[#allocation5 + $0xe0] sm:$0xff]
    %v235 = vld [vmem:[#allocation5 + $0xe8] sm:$0xff]
    %v236 = vld [vmem:[#allocation5 + $0xf0] sm:$0xff]
    %v237 = vld [vmem:[#allocation5 + $0xf8] sm:$0xff]
    %v238 = vld [vmem:[#allocation5 + $0x100] sm:$0xff]
    %v239 = vld [vmem:[#allocation5 + $0x108] sm:$0xff]
    %v240 = vld [vmem:[#allocation5 + $0x110] sm:$0xff]
    %v241 = vld [vmem:[#allocation5 + $0x118] sm:$0xff]
    %v242 = vld [vmem:[#allocation5 + $0x120] sm:$0xff]
    %v243 = vld [vmem:[#allocation5 + $0x128] sm:$0xff]
    %v244 = vld [vmem:[#allocation5 + $0x130] sm:$0xff]
    %v245 = vld [vmem:[#allocation5 + $0x138] sm:$0xff]
    %v246 = vld [vmem:[#allocation5 + $0x140] sm:$0xff]
    %v247 = vld [vmem:[#allocation5 + $0x148] sm:$0xff]
    %v248 = vld [vmem:[#allocation5 + $0x150] sm:$0xff]
    %v249 = vld [vmem:[#allocation5 + $0x158] sm:$0xff]
    %v250 = vld [vmem:[#allocation5 + $0x160] sm:$0xff]
    %v251 = vld [vmem:[#allocation5 + $0x168] sm:$0xff]
    %v252 = vld [vmem:[#allocation5 + $0x170] sm:$0xff]
    %v253 = vld [vmem:[#allocation5 + $0x178] sm:$0xff]
    %v254 = vld [vmem:[#allocation5 + $0x180] sm:$0xff]
    %v255 = vld [vmem:[#allocation5 + $0x188] sm:$0xff]
    %v256 = vld [vmem:[#allocation5 + $0x190] sm:$0xff]
    %v257 = vld [vmem:[#allocation5 + $0x198] sm:$0xff]
    %v258 = vld [vmem:[#allocation5 + $0x1a0] sm:$0xff]
    %v259 = vld [vmem:[#allocation5 + $0x1a8] sm:$0xff]
    %v260 = vld [vmem:[#allocation5 + $0x1b0] sm:$0xff]
    %v261 = vld [vmem:[#allocation5 + $0x1b8] sm:$0xff]
    %v262 = vld [vmem:[#allocation5 + $0x1c0] sm:$0xff]
    %v263 = vld [vmem:[#allocation5 + $0x1c8] sm:$0xff]
    %v264 = vld [vmem:[#allocation5 + $0x1d0] sm:$0xff]
    %v265 = vld [vmem:[#allocation5 + $0x1d8] sm:$0xff]
    %v266 = vld [vmem:[#allocation5 + $0x1e0] sm:$0xff]
    %v267 = vld [vmem:[#allocation5 + $0x1e8] sm:$0xff]
    %v268 = vld [vmem:[#allocation5 + $0x1f0] sm:$0xff]
    %v269 = vld [vmem:[#allocation5 + $0x1f8] sm:$0xff]
    %v270 = vld [vmem:[#allocation5 + $0x200] sm:$0xff]
    %v271 = vld [vmem:[#allocation5 + $0x208] sm:$0xff]
    %v272 = vld [vmem:[#allocation5 + $0x210] sm:$0xff]
    %v273 = vld [vmem:[#allocation5 + $0x218] sm:$0xff]
    %v274 = vld [vmem:[#allocation5 + $0x220] sm:$0xff]
    %v275 = vld [vmem:[#allocation5 + $0x228] sm:$0xff]
    %v276 = vld [vmem:[#allocation5 + $0x230] sm:$0xff]
    %v277 = vld [vmem:[#allocation5 + $0x238] sm:$0xff]
    %v278 = vld [vmem:[#allocation5 + $0x240] sm:$0xff]
    %v279 = vld [vmem:[#allocation5 + $0x248] sm:$0xff]
    %v280 = vld [vmem:[#allocation5 + $0x250] sm:$0xff]
    %v281 = vld [vmem:[#allocation5 + $0x258] sm:$0xff]
    %v282 = vld [vmem:[#allocation5 + $0x260] sm:$0xff]
    %v283 = vld [vmem:[#allocation5 + $0x268] sm:$0xff]
    %v284 = vld [vmem:[#allocation5 + $0x270] sm:$0xff]
    %v285 = vld [vmem:[#allocation5 + $0x278] sm:$0xff]
    %v286 = vld [vmem:[#allocation5 + $0x280] sm:$0xff]
    %v287 = vld [vmem:[#allocation5 + $0x288] sm:$0xff]
    %v288 = vld [vmem:[#allocation5 + $0x290] sm:$0xff]
    %v289 = vld [vmem:[#allocation5 + $0x298] sm:$0xff]
    %v290 = vld [vmem:[#allocation5 + $0x2a0] sm:$0xff]
    %v291 = vld [vmem:[#allocation5 + $0x2a8] sm:$0xff]
    %v292 = vld [vmem:[#allocation5 + $0x2b0] sm:$0xff]
    %v293 = vld [vmem:[#allocation5 + $0x2b8] sm:$0xff]
    %v294 = vld [vmem:[#allocation5 + $0x2c0] sm:$0xff]
    %v295 = vld [vmem:[#allocation5 + $0x2c8] sm:$0xff]
    %v296 = vld [vmem:[#allocation5 + $0x2d0] sm:$0xff]
    %v297 = vld [vmem:[#allocation5 + $0x2d8] sm:$0xff]
    %v298 = vld [vmem:[#allocation5 + $0x2e0] sm:$0xff]
    %v299 = vld [vmem:[#allocation5 + $0x2e8] sm:$0xff]
    %v300 = vld [vmem:[#allocation5 + $0x2f0] sm:$0xff]
    %v301 = vld [vmem:[#allocation5 + $0x2f8] sm:$0xff]
    %v302 = vld [vmem:[#allocation5 + $0x300] sm:$0xff]
    %v303 = vld [vmem:[#allocation5 + $0x308] sm:$0xff]
    %v304 = vld [vmem:[#allocation5 + $0x310] sm:$0xff]
    %v305 = vld [vmem:[#allocation5 + $0x318] sm:$0xff]
    %v306 = vld [vmem:[#allocation5 + $0x320] sm:$0xff]
    %v307 = vld [vmem:[#allocation5 + $0x328] sm:$0xff]
    %v308 = vld [vmem:[#allocation5 + $0x330] sm:$0xff]
    %v309 = vld [vmem:[#allocation5 + $0x338] sm:$0xff]
    %v310 = vld [vmem:[#allocation5 + $0x340] sm:$0xff]
    %v311 = vld [vmem:[#allocation5 + $0x348] sm:$0xff]
    %v312 = vld [vmem:[#allocation5 + $0x350] sm:$0xff]
    %v313 = vld [vmem:[#allocation5 + $0x358] sm:$0xff]
    %v314 = vld [vmem:[#allocation5 + $0x360] sm:$0xff]
    %v315 = vld [vmem:[#allocation5 + $0x368] sm:$0xff]
    %v316 = vld [vmem:[#allocation5 + $0x370] sm:$0xff]
    %v317 = vld [vmem:[#allocation5 + $0x378] sm:$0xff]
    %v318 = vld [vmem:[#allocation5 + $0x380] sm:$0xff]
    %v319 = vld [vmem:[#allocation5 + $0x388] sm:$0xff]
    %v320 = vld [vmem:[#allocation5 + $0x390] sm:$0xff]
    %v321 = vld [vmem:[#allocation5 + $0x398] sm:$0xff]
    %v322 = vld [vmem:[#allocation5 + $0x3a0] sm:$0xff]
    %v323 = vld [vmem:[#allocation5 + $0x3a8] sm:$0xff]
    %v324 = vld [vmem:[#allocation5 + $0x3b0] sm:$0xff]
    %v325 = vld [vmem:[#allocation5 + $0x3b8] sm:$0xff]
    %v326 = vld [vmem:[#allocation5 + $0x3c0] sm:$0xff]
    %v327 = vld [vmem:[#allocation5 + $0x3c8] sm:$0xff]
    %v328 = vld [vmem:[#allocation5 + $0x3d0] sm:$0xff]
    %v329 = vld [vmem:[#allocation5 + $0x3d8] sm:$0xff]
    %v330 = vld [vmem:[#allocation5 + $0x3e0] sm:$0xff]
    %v331 = vld [vmem:[#allocation5 + $0x3e8] sm:$0xff]
    %v332 = vld [vmem:[#allocation5 + $0x3f0] sm:$0xff]
    %v333 = vld [vmem:[#allocation5 + $0x3f8] sm:$0xff]
    %v334 = vld [vmem:[#allocation5 + $0x400] sm:$0xff]
    %v335 = vld [vmem:[#allocation5 + $0x408] sm:$0xff]
    %v336 = vld [vmem:[#allocation5 + $0x410] sm:$0xff]
    %v337 = vld [vmem:[#allocation5 + $0x418] sm:$0xff]
    %v338 = vld [vmem:[#allocation5 + $0x420] sm:$0xff]
    %v339 = vld [vmem:[#allocation5 + $0x428] sm:$0xff]
    %v340 = vld [vmem:[#allocation5 + $0x430] sm:$0xff]
    %v341 = vld [vmem:[#allocation5 + $0x438] sm:$0xff]
    %v342 = vld [vmem:[#allocation5 + $0x440] sm:$0xff]
    %v343 = vld [vmem:[#allocation5 + $0x448] sm:$0xff]
    %v344 = vld [vmem:[#allocation5 + $0x450] sm:$0xff]
    %v345 = vld [vmem:[#allocation5 + $0x458] sm:$0xff]
    %v346 = vld [vmem:[#allocation5 + $0x460] sm:$0xff]
    %v347 = vld [vmem:[#allocation5 + $0x468] sm:$0xff]
    %v348 = vld [vmem:[#allocation5 + $0x470] sm:$0xff]
    %v349 = vld [vmem:[#allocation5 + $0x478] sm:$0xff]
    %v350 = vld [vmem:[#allocation5 + $0x480] sm:$0xff]
    %v351 = vld [vmem:[#allocation5 + $0x488] sm:$0xff]
    %v352 = vld [vmem:[#allocation5 + $0x490] sm:$0xff]
    %v353 = vld [vmem:[#allocation5 + $0x498] sm:$0xff]
    %v354 = vld [vmem:[#allocation5 + $0x4a0] sm:$0xff]
    %v355 = vld [vmem:[#allocation5 + $0x4a8] sm:$0xff]
    %v356 = vld [vmem:[#allocation5 + $0x4b0] sm:$0xff]
    %v357 = vld [vmem:[#allocation5 + $0x4b8] sm:$0xff]
    %v358 = vld [vmem:[#allocation5 + $0x4c0] sm:$0xff]
    %v359 = vld [vmem:[#allocation5 + $0x4c8] sm:$0xff]
    %v360 = vld [vmem:[#allocation5 + $0x4d0] sm:$0xff]
    %v361 = vld [vmem:[#allocation5 + $0x4d8] sm:$0xff]
    %v362 = vld [vmem:[#allocation5 + $0x4e0] sm:$0xff]
    %v363 = vld [vmem:[#allocation5 + $0x4e8] sm:$0xff]
    %v364 = vld [vmem:[#allocation5 + $0x4f0] sm:$0xff]
    %v365 = vld [vmem:[#allocation5 + $0x4f8] sm:$0xff]
    %v366 = vld [vmem:[#allocation5 + $0x500] sm:$0xff]
    %v367 = vld [vmem:[#allocation5 + $0x508] sm:$0xff]
    %v368 = vld [vmem:[#allocation5 + $0x510] sm:$0xff]
    %v369 = vld [vmem:[#allocation5 + $0x518] sm:$0xff]
    %v370 = vld [vmem:[#allocation5 + $0x520] sm:$0xff]
    %v371 = vld [vmem:[#allocation5 + $0x528] sm:$0xff]
    %v372 = vld [vmem:[#allocation5 + $0x530] sm:$0xff]
    %v373 = vld [vmem:[#allocation5 + $0x538] sm:$0xff]
    %v374 = vld [vmem:[#allocation5 + $0x540] sm:$0xff]
    %v375 = vld [vmem:[#allocation5 + $0x548] sm:$0xff]
    %v376 = vld [vmem:[#allocation5 + $0x550] sm:$0xff]
    %v377 = vld [vmem:[#allocation5 + $0x558] sm:$0xff]
    %v378 = vld [vmem:[#allocation5 + $0x560] sm:$0xff]
    %v379 = vld [vmem:[#allocation5 + $0x568] sm:$0xff]
    %v380 = vld [vmem:[#allocation5 + $0x570] sm:$0xff]
    %v381 = vld [vmem:[#allocation5 + $0x578] sm:$0xff]
    %v382 = vld [vmem:[#allocation5 + $0x580] sm:$0xff]
    %v383 = vld [vmem:[#allocation5 + $0x588] sm:$0xff]
    %v384 = vld [vmem:[#allocation5 + $0x590] sm:$0xff]
    %v385 = vld [vmem:[#allocation5 + $0x598] sm:$0xff]
    %v386 = vld [vmem:[#allocation5 + $0x5a0] sm:$0xff]
    %v387 = vld [vmem:[#allocation5 + $0x5a8] sm:$0xff]
    %v388 = vld [vmem:[#allocation5 + $0x5b0] sm:$0xff]
    %v389 = vld [vmem:[#allocation5 + $0x5b8] sm:$0xff]
    %v390 = vld [vmem:[#allocation5 + $0x5c0] sm:$0xff]
    %v391 = vld [vmem:[#allocation5 + $0x5c8] sm:$0xff]
    %v392 = vld [vmem:[#allocation5 + $0x5d0] sm:$0xff]
    %v393 = vld [vmem:[#allocation5 + $0x5d8] sm:$0xff]
    %v394 = vld [vmem:[#allocation5 + $0x5e0] sm:$0xff]
    %v395 = vld [vmem:[#allocation5 + $0x5e8] sm:$0xff]
    %v396 = vld [vmem:[#allocation5 + $0x5f0] sm:$0xff]
    %v397 = vld [vmem:[#allocation5 + $0x5f8] sm:$0xff]
    %v398 = vld [vmem:[#allocation5 + $0x600] sm:$0xff]
    %v399 = vld [vmem:[#allocation5 + $0x608] sm:$0xff]
    %v400 = vld [vmem:[#allocation5 + $0x610] sm:$0xff]
    %v401 = vld [vmem:[#allocation5 + $0x618] sm:$0xff]
    %v402 = vld [vmem:[#allocation5 + $0x620] sm:$0xff]
    %v403 = vld [vmem:[#allocation5 + $0x628] sm:$0xff]
    %v404 = vld [vmem:[#allocation5 + $0x630] sm:$0xff]
    %v405 = vld [vmem:[#allocation5 + $0x638] sm:$0xff]
    %v406 = vld [vmem:[#allocation5 + $0x640] sm:$0xff]
    %v407 = vld [vmem:[#allocation5 + $0x648] sm:$0xff]
    %v408 = vld [vmem:[#allocation5 + $0x650] sm:$0xff]
    %v409 = vld [vmem:[#allocation5 + $0x658] sm:$0xff]
    %v410 = vld [vmem:[#allocation5 + $0x660] sm:$0xff]
    %v411 = vld [vmem:[#allocation5 + $0x668] sm:$0xff]
    %v412 = vld [vmem:[#allocation5 + $0x670] sm:$0xff]
    %v413 = vld [vmem:[#allocation5 + $0x678] sm:$0xff]
    %v414 = vld [vmem:[#allocation5 + $0x680] sm:$0xff]
    %v415 = vld [vmem:[#allocation5 + $0x688] sm:$0xff]
    %v416 = vld [vmem:[#allocation5 + $0x690] sm:$0xff]
    %v417 = vld [vmem:[#allocation5 + $0x698] sm:$0xff]
    %v418 = vld [vmem:[#allocation5 + $0x6a0] sm:$0xff]
    %v419 = vld [vmem:[#allocation5 + $0x6a8] sm:$0xff]
    %v420 = vld [vmem:[#allocation5 + $0x6b0] sm:$0xff]
    %v421 = vld [vmem:[#allocation5 + $0x6b8] sm:$0xff]
    %v422 = vld [vmem:[#allocation5 + $0x6c0] sm:$0xff]
    %v423 = vld [vmem:[#allocation5 + $0x6c8] sm:$0xff]
    %v424 = vld [vmem:[#allocation5 + $0x6d0] sm:$0xff]
    %v425 = vld [vmem:[#allocation5 + $0x6d8] sm:$0xff]
    %v426 = vld [vmem:[#allocation5 + $0x6e0] sm:$0xff]
    %v427 = vld [vmem:[#allocation5 + $0x6e8] sm:$0xff]
    %v428 = vld [vmem:[#allocation5 + $0x6f0] sm:$0xff]
    %v429 = vld [vmem:[#allocation5 + $0x6f8] sm:$0xff]
    %v430 = vld [vmem:[#allocation5 + $0x700] sm:$0xff]
    %v431 = vld [vmem:[#allocation5 + $0x708] sm:$0xff]
    %v432 = vld [vmem:[#allocation5 + $0x710] sm:$0xff]
    %v433 = vld [vmem:[#allocation5 + $0x718] sm:$0xff]
    %v434 = vld [vmem:[#allocation5 + $0x720] sm:$0xff]
    %v435 = vld [vmem:[#allocation5 + $0x728] sm:$0xff]
    %v436 = vld [vmem:[#allocation5 + $0x730] sm:$0xff]
    %v437 = vld [vmem:[#allocation5 + $0x738] sm:$0xff]
    %v438 = vld [vmem:[#allocation5 + $0x740] sm:$0xff]
    %v439 = vld [vmem:[#allocation5 + $0x748] sm:$0xff]
    %v440 = vld [vmem:[#allocation5 + $0x750] sm:$0xff]
    %v441 = vld [vmem:[#allocation5 + $0x758] sm:$0xff]
    %v442 = vld [vmem:[#allocation5 + $0x760] sm:$0xff]
    %v443 = vld [vmem:[#allocation5 + $0x768] sm:$0xff]
    %v444 = vld [vmem:[#allocation5 + $0x770] sm:$0xff]
    %v445 = vld [vmem:[#allocation5 + $0x778] sm:$0xff]
    %v446 = vld [vmem:[#allocation5 + $0x780] sm:$0xff]
    %v447 = vld [vmem:[#allocation5 + $0x788] sm:$0xff]
    %v448 = vld [vmem:[#allocation5 + $0x790] sm:$0xff]
    %v449 = vld [vmem:[#allocation5 + $0x798] sm:$0xff]
    %v450 = vld [vmem:[#allocation5 + $0x7a0] sm:$0xff]
    %v451 = vld [vmem:[#allocation5 + $0x7a8] sm:$0xff]
    %v452 = vld [vmem:[#allocation5 + $0x7b0] sm:$0xff]
    %v453 = vld [vmem:[#allocation5 + $0x7b8] sm:$0xff]
    %v454 = vld [vmem:[#allocation5 + $0x7c0] sm:$0xff]
    %v455 = vld [vmem:[#allocation5 + $0x7c8] sm:$0xff]
    %v456 = vld [vmem:[#allocation5 + $0x7d0] sm:$0xff]
    %v457 = vld [vmem:[#allocation5 + $0x7d8] sm:$0xff]
    %v458 = vld [vmem:[#allocation5 + $0x7e0] sm:$0xff]
    %v459 = vld [vmem:[#allocation5 + $0x7e8] sm:$0xff]
    %v460 = vld [vmem:[#allocation5 + $0x7f0] sm:$0xff]
    %v461 = vld [vmem:[#allocation5 + $0x7f8] sm:$0xff]
    %v462 = vld [vmem:[#allocation5 + $0x800] sm:$0xff]
    %v463 = vld [vmem:[#allocation5 + $0x808] sm:$0xff]
    %v464 = vld [vmem:[#allocation5 + $0x810] sm:$0xff]
    %v465 = vld [vmem:[#allocation5 + $0x818] sm:$0xff]
    %v466 = vld [vmem:[#allocation5 + $0x820] sm:$0xff]
    %v467 = vld [vmem:[#allocation5 + $0x828] sm:$0xff]
    %v468 = vld [vmem:[#allocation5 + $0x830] sm:$0xff]
    %v469 = vld [vmem:[#allocation5 + $0x838] sm:$0xff]
    %v470 = vld [vmem:[#allocation5 + $0x840] sm:$0xff]
    %v471 = vld [vmem:[#allocation5 + $0x848] sm:$0xff]
    %v472 = vld [vmem:[#allocation5 + $0x850] sm:$0xff]
    %v473 = vld [vmem:[#allocation5 + $0x858] sm:$0xff]
    %v474 = vld [vmem:[#allocation5 + $0x860] sm:$0xff]
    %v475 = vld [vmem:[#allocation5 + $0x868] sm:$0xff]
    %v476 = vld [vmem:[#allocation5 + $0x870] sm:$0xff]
    %v477 = vld [vmem:[#allocation5 + $0x878] sm:$0xff]
    %v478 = vld [vmem:[#allocation5 + $0x880] sm:$0xff]
    %v479 = vld [vmem:[#allocation5 + $0x888] sm:$0xff]
    %v480 = vld [vmem:[#allocation5 + $0x890] sm:$0xff]
    %v481 = vld [vmem:[#allocation5 + $0x898] sm:$0xff]
    %v482 = vld [vmem:[#allocation5 + $0x8a0] sm:$0xff]
    %v483 = vld [vmem:[#allocation5 + $0x8a8] sm:$0xff]
    %v484 = vld [vmem:[#allocation5 + $0x8b0] sm:$0xff]
    %v485 = vld [vmem:[#allocation5 + $0x8b8] sm:$0xff]
    %v486 = vld [vmem:[#allocation5 + $0x8c0] sm:$0xff]
    %v487 = vld [vmem:[#allocation5 + $0x8c8] sm:$0xff]
    %v488 = vld [vmem:[#allocation5 + $0x8d0] sm:$0xff]
    %v489 = vld [vmem:[#allocation5 + $0x8d8] sm:$0xff]
    %v490 = vld [vmem:[#allocation5 + $0x8e0] sm:$0xff]
    %v491 = vld [vmem:[#allocation5 + $0x8e8] sm:$0xff]
    %v492 = vld [vmem:[#allocation5 + $0x8f0] sm:$0xff]
    %v493 = vld [vmem:[#allocation5 + $0x8f8] sm:$0xff]
    %v494 = vld [vmem:[#allocation5 + $0x900] sm:$0xff]
    %v495 = vld [vmem:[#allocation5 + $0x908] sm:$0xff]
    %v496 = vld [vmem:[#allocation5 + $0x910] sm:$0xff]
    %v497 = vld [vmem:[#allocation5 + $0x918] sm:$0xff]
    %v498 = vld [vmem:[#allocation5 + $0x920] sm:$0xff]
    %v499 = vld [vmem:[#allocation5 + $0x928] sm:$0xff]
    %v500 = vld [vmem:[#allocation5 + $0x930] sm:$0xff]
    %v501 = vld [vmem:[#allocation5 + $0x938] sm:$0xff]
    %v502 = vld [vmem:[#allocation5 + $0x940] sm:$0xff]
    %v503 = vld [vmem:[#allocation5 + $0x948] sm:$0xff]
    %v504 = vld [vmem:[#allocation5 + $0x950] sm:$0xff]
    %v505 = vld [vmem:[#allocation5 + $0x958] sm:$0xff]
    %v506 = vld [vmem:[#allocation5 + $0x960] sm:$0xff]
    %v507 = vld [vmem:[#allocation5 + $0x968] sm:$0xff]
    %v508 = vld [vmem:[#allocation5 + $0x970] sm:$0xff]
    %v509 = vld [vmem:[#allocation5 + $0x978] sm:$0xff]
    %v510 = vld [vmem:[#allocation5 + $0x980] sm:$0xff]
    %v511 = vld [vmem:[#allocation5 + $0x988] sm:$0xff]
    %v512 = vld [vmem:[#allocation5 + $0x990] sm:$0xff]
    %v513 = vld [vmem:[#allocation5 + $0x998] sm:$0xff]
    %v514 = vld [vmem:[#allocation5 + $0x9a0] sm:$0xff]
    %v515 = vld [vmem:[#allocation5 + $0x9a8] sm:$0xff]
    %v516 = vld [vmem:[#allocation5 + $0x9b0] sm:$0xff]
    %v517 = vld [vmem:[#allocation5 + $0x9b8] sm:$0xff]
    %v518 = vld [vmem:[#allocation5 + $0x9c0] sm:$0xff]
    %v519 = vld [vmem:[#allocation5 + $0x9c8] sm:$0xff]
    %v520 = vld [vmem:[#allocation5 + $0x9d0] sm:$0xff]
    %v521 = vld [vmem:[#allocation5 + $0x9d8] sm:$0xff]
    %v522 = vld [vmem:[#allocation5 + $0x9e0] sm:$0xff]
    %v523 = vld [vmem:[#allocation5 + $0x9e8] sm:$0xff]
    %v524 = vld [vmem:[#allocation5 + $0x9f0] sm:$0xff]
    %v525 = vld [vmem:[#allocation5 + $0x9f8] sm:$0xff]
    %v526 = vld [vmem:[#allocation7] sm:$0xff]
    %v528 = vperm.slane %v526, 0
    %v529 = vperm.slane %v526, 1
    %v530 = vperm.slane %v526, 2
    %v531 = vperm.slane %v526, 3
    %v532 = vperm.slane %v526, 4
    %v533 = vperm.slane %v526, 5
    %v534 = vperm.slane %v526, 6
    %v535 = vperm.slane %v526, 7
    %v550 = vunpack.c.l.b16 %v200
    %v551 = vunpack.c.h.b16 %v200
    %v552 = vunpack.c.l.b16 %v201
    %v553 = vunpack.c.h.b16 %v201
    %v554 = vunpack.c.l.b16 %v202
    %v555 = vunpack.c.l.b16 %v203
    %v556 = vunpack.c.h.b16 %v203
    %v557 = vunpack.c.l.b16 %v204
    %v558 = vunpack.c.h.b16 %v204
    %v559 = vunpack.c.l.b16 %v205
    %v560 = vpack.c.b16 %v555, %v550
    %v561 = vpack.c.b16 %v556, %v551
    %v562 = vpack.c.b16 %v557, %v552
    %v563 = vpack.c.b16 %v558, %v553
    %v564 = vpack.c.b16 %v559, %v554
    %v890 = vunpack.c.l.b16 %v206
    %v891 = vunpack.c.h.b16 %v206
    %v892 = vunpack.c.l.b16 %v207
    %v893 = vunpack.c.h.b16 %v207
    %v894 = vunpack.c.l.b16 %v208
    %v895 = vunpack.c.h.b16 %v208
    %v896 = vunpack.c.l.b16 %v209
    %v897 = vunpack.c.h.b16 %v209
    %v898 = vunpack.c.l.b16 %v210
    %v899 = vunpack.c.h.b16 %v210
    %v900 = vunpack.c.l.b16 %v211
    %v901 = vunpack.c.h.b16 %v211
    %v902 = vunpack.c.l.b16 %v212
    %v903 = vunpack.c.h.b16 %v212
    %v904 = vunpack.c.l.b16 %v213
    %v905 = vunpack.c.h.b16 %v213
    %v906 = vunpack.c.l.b16 %v214
    %v907 = vunpack.c.h.b16 %v214
    %v908 = vunpack.c.l.b16 %v215
    %v909 = vunpack.c.h.b16 %v215
    %v910 = vunpack.c.l.b16 %v216
    %v911 = vunpack.c.h.b16 %v216
    %v912 = vunpack.c.l.b16 %v217
    %v913 = vunpack.c.h.b16 %v217
    %v914 = vunpack.c.l.b16 %v218
    %v915 = vunpack.c.h.b16 %v218
    %v916 = vunpack.c.l.b16 %v219
    %v917 = vunpack.c.h.b16 %v219
    %v918 = vunpack.c.l.b16 %v220
    %v919 = vunpack.c.h.b16 %v220
    %v920 = vunpack.c.l.b16 %v221
    %v921 = vunpack.c.h.b16 %v221
    %v922 = vunpack.c.l.b16 %v222
    %v923 = vunpack.c.h.b16 %v222
    %v924 = vunpack.c.l.b16 %v223
    %v925 = vunpack.c.h.b16 %v223
    %v926 = vunpack.c.l.b16 %v224
    %v927 = vunpack.c.h.b16 %v224
    %v928 = vunpack.c.l.b16 %v225
    %v929 = vunpack.c.h.b16 %v225
    %v930 = vunpack.c.l.b16 %v226
    %v931 = vunpack.c.h.b16 %v226
    %v932 = vunpack.c.l.b16 %v227
    %v933 = vunpack.c.h.b16 %v227
    %v934 = vunpack.c.l.b16 %v228
    %v935 = vunpack.c.h.b16 %v228
    %v936 = vunpack.c.l.b16 %v229
    %v937 = vunpack.c.h.b16 %v229
    %v938 = vunpack.c.l.b16 %v230
    %v939 = vunpack.c.h.b16 %v230
    %v940 = vunpack.c.l.b16 %v231
    %v941 = vunpack.c.h.b16 %v231
    %v942 = vunpack.c.l.b16 %v232
    %v943 = vunpack.c.h.b16 %v232
    %v944 = vunpack.c.l.b16 %v233
    %v945 = vunpack.c.h.b16 %v233
    %v946 = vunpack.c.l.b16 %v234
    %v947 = vunpack.c.h.b16 %v234
    %v948 = vunpack.c.l.b16 %v235
    %v949 = vunpack.c.h.b16 %v235
    %v950 = vunpack.c.l.b16 %v236
    %v951 = vunpack.c.h.b16 %v236
    %v952 = vunpack.c.l.b16 %v237
    %v953 = vunpack.c.h.b16 %v237
    %v954 = vunpack.c.l.b16 %v238
    %v955 = vunpack.c.h.b16 %v238
    %v956 = vunpack.c.l.b16 %v239
    %v957 = vunpack.c.h.b16 %v239
    %v958 = vunpack.c.l.b16 %v240
    %v959 = vunpack.c.h.b16 %v240
    %v960 = vunpack.c.l.b16 %v241
    %v961 = vunpack.c.h.b16 %v241
    %v962 = vunpack.c.l.b16 %v242
    %v963 = vunpack.c.h.b16 %v242
    %v964 = vunpack.c.l.b16 %v243
    %v965 = vunpack.c.h.b16 %v243
    %v966 = vunpack.c.l.b16 %v244
    %v967 = vunpack.c.h.b16 %v244
    %v968 = vunpack.c.l.b16 %v245
    %v969 = vunpack.c.h.b16 %v245
    %v970 = vunpack.c.l.b16 %v246
    %v971 = vunpack.c.h.b16 %v246
    %v972 = vunpack.c.l.b16 %v247
    %v973 = vunpack.c.h.b16 %v247
    %v974 = vunpack.c.l.b16 %v248
    %v975 = vunpack.c.h.b16 %v248
    %v976 = vunpack.c.l.b16 %v249
    %v977 = vunpack.c.h.b16 %v249
    %v978 = vunpack.c.l.b16 %v250
    %v979 = vunpack.c.h.b16 %v250
    %v980 = vunpack.c.l.b16 %v251
    %v981 = vunpack.c.h.b16 %v251
    %v982 = vunpack.c.l.b16 %v252
    %v983 = vunpack.c.h.b16 %v252
    %v984 = vunpack.c.l.b16 %v253
    %v985 = vunpack.c.h.b16 %v253
    %v986 = vunpack.c.l.b16 %v254
    %v987 = vunpack.c.h.b16 %v254
    %v988 = vunpack.c.l.b16 %v255
    %v989 = vunpack.c.h.b16 %v255
    %v990 = vunpack.c.l.b16 %v256
    %v991 = vunpack.c.h.b16 %v256
    %v992 = vunpack.c.l.b16 %v257
    %v993 = vunpack.c.h.b16 %v257
    %v994 = vunpack.c.l.b16 %v258
    %v995 = vunpack.c.h.b16 %v258
    %v996 = vunpack.c.l.b16 %v259
    %v997 = vunpack.c.h.b16 %v259
    %v998 = vunpack.c.l.b16 %v260
    %v999 = vunpack.c.h.b16 %v260
    %v1000 = vunpack.c.l.b16 %v261
    %v1001 = vunpack.c.h.b16 %v261
    %v1002 = vunpack.c.l.b16 %v262
    %v1003 = vunpack.c.h.b16 %v262
    %v1004 = vunpack.c.l.b16 %v263
    %v1005 = vunpack.c.h.b16 %v263
    %v1006 = vunpack.c.l.b16 %v264
    %v1007 = vunpack.c.h.b16 %v264
    %v1008 = vunpack.c.l.b16 %v265
    %v1009 = vunpack.c.h.b16 %v265
    %v1010 = vunpack.c.l.b16 %v266
    %v1011 = vunpack.c.h.b16 %v266
    %v1012 = vunpack.c.l.b16 %v267
    %v1013 = vunpack.c.h.b16 %v267
    %v1014 = vunpack.c.l.b16 %v268
    %v1015 = vunpack.c.h.b16 %v268
    %v1016 = vunpack.c.l.b16 %v269
    %v1017 = vunpack.c.h.b16 %v269
    %v1018 = vunpack.c.l.b16 %v270
    %v1019 = vunpack.c.h.b16 %v270
    %v1020 = vunpack.c.l.b16 %v271
    %v1021 = vunpack.c.h.b16 %v271
    %v1022 = vunpack.c.l.b16 %v272
    %v1023 = vunpack.c.h.b16 %v272
    %v1024 = vunpack.c.l.b16 %v273
    %v1025 = vunpack.c.h.b16 %v273
    %v1026 = vunpack.c.l.b16 %v274
    %v1027 = vunpack.c.h.b16 %v274
    %v1028 = vunpack.c.l.b16 %v275
    %v1029 = vunpack.c.h.b16 %v275
    %v1030 = vunpack.c.l.b16 %v276
    %v1031 = vunpack.c.h.b16 %v276
    %v1032 = vunpack.c.l.b16 %v277
    %v1033 = vunpack.c.h.b16 %v277
    %v1034 = vunpack.c.l.b16 %v278
    %v1035 = vunpack.c.h.b16 %v278
    %v1036 = vunpack.c.l.b16 %v279
    %v1037 = vunpack.c.h.b16 %v279
    %v1038 = vunpack.c.l.b16 %v280
    %v1039 = vunpack.c.h.b16 %v280
    %v1040 = vunpack.c.l.b16 %v281
    %v1041 = vunpack.c.h.b16 %v281
    %v1042 = vunpack.c.l.b16 %v282
    %v1043 = vunpack.c.h.b16 %v282
    %v1044 = vunpack.c.l.b16 %v283
    %v1045 = vunpack.c.h.b16 %v283
    %v1046 = vunpack.c.l.b16 %v284
    %v1047 = vunpack.c.h.b16 %v284
    %v1048 = vunpack.c.l.b16 %v285
    %v1049 = vunpack.c.h.b16 %v285
    %v1050 = vunpack.c.l.b16 %v286
    %v1051 = vunpack.c.h.b16 %v286
    %v1052 = vunpack.c.l.b16 %v287
    %v1053 = vunpack.c.h.b16 %v287
    %v1054 = vunpack.c.l.b16 %v288
    %v1055 = vunpack.c.h.b16 %v288
    %v1056 = vunpack.c.l.b16 %v289
    %v1057 = vunpack.c.h.b16 %v289
    %v1058 = vunpack.c.l.b16 %v290
    %v1059 = vunpack.c.h.b16 %v290
    %v1060 = vunpack.c.l.b16 %v291
    %v1061 = vunpack.c.h.b16 %v291
    %v1062 = vunpack.c.l.b16 %v292
    %v1063 = vunpack.c.h.b16 %v292
    %v1064 = vunpack.c.l.b16 %v293
    %v1065 = vunpack.c.h.b16 %v293
    %v1066 = vunpack.c.l.b16 %v294
    %v1067 = vunpack.c.h.b16 %v294
    %v1068 = vunpack.c.l.b16 %v295
    %v1069 = vunpack.c.h.b16 %v295
    %v1070 = vunpack.c.l.b16 %v296
    %v1071 = vunpack.c.h.b16 %v296
    %v1072 = vunpack.c.l.b16 %v297
    %v1073 = vunpack.c.h.b16 %v297
    %v1074 = vunpack.c.l.b16 %v298
    %v1075 = vunpack.c.h.b16 %v298
    %v1076 = vunpack.c.l.b16 %v299
    %v1077 = vunpack.c.h.b16 %v299
    %v1078 = vunpack.c.l.b16 %v300
    %v1079 = vunpack.c.h.b16 %v300
    %v1080 = vunpack.c.l.b16 %v301
    %v1081 = vunpack.c.h.b16 %v301
    %v1082 = vunpack.c.l.b16 %v302
    %v1083 = vunpack.c.h.b16 %v302
    %v1084 = vunpack.c.l.b16 %v303
    %v1085 = vunpack.c.h.b16 %v303
    %v1086 = vunpack.c.l.b16 %v304
    %v1087 = vunpack.c.h.b16 %v304
    %v1088 = vunpack.c.l.b16 %v305
    %v1089 = vunpack.c.h.b16 %v305
    %v1090 = vunpack.c.l.b16 %v306
    %v1091 = vunpack.c.h.b16 %v306
    %v1092 = vunpack.c.l.b16 %v307
    %v1093 = vunpack.c.h.b16 %v307
    %v1094 = vunpack.c.l.b16 %v308
    %v1095 = vunpack.c.h.b16 %v308
    %v1096 = vunpack.c.l.b16 %v309
    %v1097 = vunpack.c.h.b16 %v309
    %v1098 = vunpack.c.l.b16 %v310
    %v1099 = vunpack.c.h.b16 %v310
    %v1100 = vunpack.c.l.b16 %v311
    %v1101 = vunpack.c.h.b16 %v311
    %v1102 = vunpack.c.l.b16 %v312
    %v1103 = vunpack.c.h.b16 %v312
    %v1104 = vunpack.c.l.b16 %v313
    %v1105 = vunpack.c.h.b16 %v313
    %v1106 = vunpack.c.l.b16 %v314
    %v1107 = vunpack.c.h.b16 %v314
    %v1108 = vunpack.c.l.b16 %v315
    %v1109 = vunpack.c.h.b16 %v315
    %v1110 = vunpack.c.l.b16 %v316
    %v1111 = vunpack.c.h.b16 %v316
    %v1112 = vunpack.c.l.b16 %v317
    %v1113 = vunpack.c.h.b16 %v317
    %v1114 = vunpack.c.l.b16 %v318
    %v1115 = vunpack.c.h.b16 %v318
    %v1116 = vunpack.c.l.b16 %v319
    %v1117 = vunpack.c.h.b16 %v319
    %v1118 = vunpack.c.l.b16 %v320
    %v1119 = vunpack.c.h.b16 %v320
    %v1120 = vunpack.c.l.b16 %v321
    %v1121 = vunpack.c.h.b16 %v321
    %v1122 = vunpack.c.l.b16 %v322
    %v1123 = vunpack.c.h.b16 %v322
    %v1124 = vunpack.c.l.b16 %v323
    %v1125 = vunpack.c.h.b16 %v323
    %v1126 = vunpack.c.l.b16 %v324
    %v1127 = vunpack.c.h.b16 %v324
    %v1128 = vunpack.c.l.b16 %v325
    %v1129 = vunpack.c.h.b16 %v325
    %v1130 = vunpack.c.l.b16 %v326
    %v1131 = vunpack.c.h.b16 %v326
    %v1132 = vunpack.c.l.b16 %v327
    %v1133 = vunpack.c.h.b16 %v327
    %v1134 = vunpack.c.l.b16 %v328
    %v1135 = vunpack.c.h.b16 %v328
    %v1136 = vunpack.c.l.b16 %v329
    %v1137 = vunpack.c.h.b16 %v329
    %v1138 = vunpack.c.l.b16 %v330
    %v1139 = vunpack.c.h.b16 %v330
    %v1140 = vunpack.c.l.b16 %v331
    %v1141 = vunpack.c.h.b16 %v331
    %v1142 = vunpack.c.l.b16 %v332
    %v1143 = vunpack.c.h.b16 %v332
    %v1144 = vunpack.c.l.b16 %v333
    %v1145 = vunpack.c.h.b16 %v333
    %v1146 = vunpack.c.l.b16 %v334
    %v1147 = vunpack.c.h.b16 %v334
    %v1148 = vunpack.c.l.b16 %v335
    %v1149 = vunpack.c.h.b16 %v335
    %v1150 = vunpack.c.l.b16 %v336
    %v1151 = vunpack.c.h.b16 %v336
    %v1152 = vunpack.c.l.b16 %v337
    %v1153 = vunpack.c.h.b16 %v337
    %v1154 = vunpack.c.l.b16 %v338
    %v1155 = vunpack.c.h.b16 %v338
    %v1156 = vunpack.c.l.b16 %v339
    %v1157 = vunpack.c.h.b16 %v339
    %v1158 = vunpack.c.l.b16 %v340
    %v1159 = vunpack.c.h.b16 %v340
    %v1160 = vunpack.c.l.b16 %v341
    %v1161 = vunpack.c.h.b16 %v341
    %v1162 = vunpack.c.l.b16 %v342
    %v1163 = vunpack.c.h.b16 %v342
    %v1164 = vunpack.c.l.b16 %v343
    %v1165 = vunpack.c.h.b16 %v343
    %v1166 = vunpack.c.l.b16 %v344
    %v1167 = vunpack.c.h.b16 %v344
    %v1168 = vunpack.c.l.b16 %v345
    %v1169 = vunpack.c.h.b16 %v345
    %v1170 = vunpack.c.l.b16 %v346
    %v1171 = vunpack.c.h.b16 %v346
    %v1172 = vunpack.c.l.b16 %v347
    %v1173 = vunpack.c.h.b16 %v347
    %v1174 = vunpack.c.l.b16 %v348
    %v1175 = vunpack.c.h.b16 %v348
    %v1176 = vunpack.c.l.b16 %v349
    %v1177 = vunpack.c.h.b16 %v349
    %v1178 = vunpack.c.l.b16 %v350
    %v1179 = vunpack.c.h.b16 %v350
    %v1180 = vunpack.c.l.b16 %v351
    %v1181 = vunpack.c.h.b16 %v351
    %v1182 = vunpack.c.l.b16 %v352
    %v1183 = vunpack.c.h.b16 %v352
    %v1184 = vunpack.c.l.b16 %v353
    %v1185 = vunpack.c.h.b16 %v353
    %v1186 = vunpack.c.l.b16 %v354
    %v1187 = vunpack.c.h.b16 %v354
    %v1188 = vunpack.c.l.b16 %v355
    %v1189 = vunpack.c.h.b16 %v355
    %v1190 = vunpack.c.l.b16 %v356
    %v1191 = vunpack.c.h.b16 %v356
    %v1192 = vunpack.c.l.b16 %v357
    %v1193 = vunpack.c.h.b16 %v357
    %v1194 = vunpack.c.l.b16 %v358
    %v1195 = vunpack.c.h.b16 %v358
    %v1196 = vunpack.c.l.b16 %v359
    %v1197 = vunpack.c.h.b16 %v359
    %v1198 = vunpack.c.l.b16 %v360
    %v1199 = vunpack.c.h.b16 %v360
    %v1200 = vunpack.c.l.b16 %v361
    %v1201 = vunpack.c.h.b16 %v361
    %v1202 = vunpack.c.l.b16 %v362
    %v1203 = vunpack.c.h.b16 %v362
    %v1204 = vunpack.c.l.b16 %v363
    %v1205 = vunpack.c.h.b16 %v363
    %v1206 = vunpack.c.l.b16 %v364
    %v1207 = vunpack.c.h.b16 %v364
    %v1208 = vunpack.c.l.b16 %v365
    %v1209 = vunpack.c.h.b16 %v365
    %v1210 = vunpack.c.l.b16 %v366
    %v1211 = vunpack.c.h.b16 %v366
    %v1212 = vunpack.c.l.b16 %v367
    %v1213 = vunpack.c.h.b16 %v367
    %v1214 = vunpack.c.l.b16 %v368
    %v1215 = vunpack.c.h.b16 %v368
    %v1216 = vunpack.c.l.b16 %v369
    %v1217 = vunpack.c.h.b16 %v369
    %v1218 = vunpack.c.l.b16 %v370
    %v1219 = vunpack.c.h.b16 %v370
    %v1220 = vunpack.c.l.b16 %v371
    %v1221 = vunpack.c.h.b16 %v371
    %v1222 = vunpack.c.l.b16 %v372
    %v1223 = vunpack.c.h.b16 %v372
    %v1224 = vunpack.c.l.b16 %v373
    %v1225 = vunpack.c.h.b16 %v373
    %v1226 = vunpack.c.l.b16 %v374
    %v1227 = vunpack.c.h.b16 %v374
    %v1228 = vunpack.c.l.b16 %v375
    %v1229 = vunpack.c.h.b16 %v375
    %v1230 = vunpack.c.l.b16 %v376
    %v1231 = vunpack.c.h.b16 %v376
    %v1232 = vunpack.c.l.b16 %v377
    %v1233 = vunpack.c.h.b16 %v377
    %v1234 = vunpack.c.l.b16 %v378
    %v1235 = vunpack.c.h.b16 %v378
    %v1236 = vunpack.c.l.b16 %v379
    %v1237 = vunpack.c.h.b16 %v379
    %v1238 = vunpack.c.l.b16 %v380
    %v1239 = vunpack.c.h.b16 %v380
    %v1240 = vunpack.c.l.b16 %v381
    %v1241 = vunpack.c.h.b16 %v381
    %v1242 = vunpack.c.l.b16 %v382
    %v1243 = vunpack.c.h.b16 %v382
    %v1244 = vunpack.c.l.b16 %v383
    %v1245 = vunpack.c.h.b16 %v383
    %v1246 = vunpack.c.l.b16 %v384
    %v1247 = vunpack.c.h.b16 %v384
    %v1248 = vunpack.c.l.b16 %v385
    %v1249 = vunpack.c.h.b16 %v385
    %v1250 = vunpack.c.l.b16 %v386
    %v1251 = vunpack.c.h.b16 %v386
    %v1252 = vunpack.c.l.b16 %v387
    %v1253 = vunpack.c.h.b16 %v387
    %v1254 = vunpack.c.l.b16 %v388
    %v1255 = vunpack.c.h.b16 %v388
    %v1256 = vunpack.c.l.b16 %v389
    %v1257 = vunpack.c.h.b16 %v389
    %v1258 = vunpack.c.l.b16 %v390
    %v1259 = vunpack.c.h.b16 %v390
    %v1260 = vunpack.c.l.b16 %v391
    %v1261 = vunpack.c.h.b16 %v391
    %v1262 = vunpack.c.l.b16 %v392
    %v1263 = vunpack.c.h.b16 %v392
    %v1264 = vunpack.c.l.b16 %v393
    %v1265 = vunpack.c.h.b16 %v393
    %v1266 = vunpack.c.l.b16 %v394
    %v1267 = vunpack.c.h.b16 %v394
    %v1268 = vunpack.c.l.b16 %v395
    %v1269 = vunpack.c.h.b16 %v395
    %v1270 = vunpack.c.l.b16 %v396
    %v1271 = vunpack.c.h.b16 %v396
    %v1272 = vunpack.c.l.b16 %v397
    %v1273 = vunpack.c.h.b16 %v397
    %v1274 = vunpack.c.l.b16 %v398
    %v1275 = vunpack.c.h.b16 %v398
    %v1276 = vunpack.c.l.b16 %v399
    %v1277 = vunpack.c.h.b16 %v399
    %v1278 = vunpack.c.l.b16 %v400
    %v1279 = vunpack.c.h.b16 %v400
    %v1280 = vunpack.c.l.b16 %v401
    %v1281 = vunpack.c.h.b16 %v401
    %v1282 = vunpack.c.l.b16 %v402
    %v1283 = vunpack.c.h.b16 %v402
    %v1284 = vunpack.c.l.b16 %v403
    %v1285 = vunpack.c.h.b16 %v403
    %v1286 = vunpack.c.l.b16 %v404
    %v1287 = vunpack.c.h.b16 %v404
    %v1288 = vunpack.c.l.b16 %v405
    %v1289 = vunpack.c.h.b16 %v405
    %v1290 = vunpack.c.l.b16 %v406
    %v1291 = vunpack.c.h.b16 %v406
    %v1292 = vunpack.c.l.b16 %v407
    %v1293 = vunpack.c.h.b16 %v407
    %v1294 = vunpack.c.l.b16 %v408
    %v1295 = vunpack.c.h.b16 %v408
    %v1296 = vunpack.c.l.b16 %v409
    %v1297 = vunpack.c.h.b16 %v409
    %v1298 = vunpack.c.l.b16 %v410
    %v1299 = vunpack.c.h.b16 %v410
    %v1300 = vunpack.c.l.b16 %v411
    %v1301 = vunpack.c.h.b16 %v411
    %v1302 = vunpack.c.l.b16 %v412
    %v1303 = vunpack.c.h.b16 %v412
    %v1304 = vunpack.c.l.b16 %v413
    %v1305 = vunpack.c.h.b16 %v413
    %v1306 = vunpack.c.l.b16 %v414
    %v1307 = vunpack.c.h.b16 %v414
    %v1308 = vunpack.c.l.b16 %v415
    %v1309 = vunpack.c.h.b16 %v415
    %v1310 = vunpack.c.l.b16 %v416
    %v1311 = vunpack.c.h.b16 %v416
    %v1312 = vunpack.c.l.b16 %v417
    %v1313 = vunpack.c.h.b16 %v417
    %v1314 = vunpack.c.l.b16 %v418
    %v1315 = vunpack.c.h.b16 %v418
    %v1316 = vunpack.c.l.b16 %v419
    %v1317 = vunpack.c.h.b16 %v419
    %v1318 = vunpack.c.l.b16 %v420
    %v1319 = vunpack.c.h.b16 %v420
    %v1320 = vunpack.c.l.b16 %v421
    %v1321 = vunpack.c.h.b16 %v421
    %v1322 = vunpack.c.l.b16 %v422
    %v1323 = vunpack.c.h.b16 %v422
    %v1324 = vunpack.c.l.b16 %v423
    %v1325 = vunpack.c.h.b16 %v423
    %v1326 = vunpack.c.l.b16 %v424
    %v1327 = vunpack.c.h.b16 %v424
    %v1328 = vunpack.c.l.b16 %v425
    %v1329 = vunpack.c.h.b16 %v425
    %v1330 = vunpack.c.l.b16 %v426
    %v1331 = vunpack.c.h.b16 %v426
    %v1332 = vunpack.c.l.b16 %v427
    %v1333 = vunpack.c.h.b16 %v427
    %v1334 = vunpack.c.l.b16 %v428
    %v1335 = vunpack.c.h.b16 %v428
    %v1336 = vunpack.c.l.b16 %v429
    %v1337 = vunpack.c.h.b16 %v429
    %v1338 = vunpack.c.l.b16 %v430
    %v1339 = vunpack.c.h.b16 %v430
    %v1340 = vunpack.c.l.b16 %v431
    %v1341 = vunpack.c.h.b16 %v431
    %v1342 = vunpack.c.l.b16 %v432
    %v1343 = vunpack.c.h.b16 %v432
    %v1344 = vunpack.c.l.b16 %v433
    %v1345 = vunpack.c.h.b16 %v433
    %v1346 = vunpack.c.l.b16 %v434
    %v1347 = vunpack.c.h.b16 %v434
    %v1348 = vunpack.c.l.b16 %v435
    %v1349 = vunpack.c.h.b16 %v435
    %v1350 = vunpack.c.l.b16 %v436
    %v1351 = vunpack.c.h.b16 %v436
    %v1352 = vunpack.c.l.b16 %v437
    %v1353 = vunpack.c.h.b16 %v437
    %v1354 = vunpack.c.l.b16 %v438
    %v1355 = vunpack.c.h.b16 %v438
    %v1356 = vunpack.c.l.b16 %v439
    %v1357 = vunpack.c.h.b16 %v439
    %v1358 = vunpack.c.l.b16 %v440
    %v1359 = vunpack.c.h.b16 %v440
    %v1360 = vunpack.c.l.b16 %v441
    %v1361 = vunpack.c.h.b16 %v441
    %v1362 = vunpack.c.l.b16 %v442
    %v1363 = vunpack.c.h.b16 %v442
    %v1364 = vunpack.c.l.b16 %v443
    %v1365 = vunpack.c.h.b16 %v443
    %v1366 = vunpack.c.l.b16 %v444
    %v1367 = vunpack.c.h.b16 %v444
    %v1368 = vunpack.c.l.b16 %v445
    %v1369 = vunpack.c.h.b16 %v445
    %v1370 = vunpack.c.l.b16 %v446
    %v1371 = vunpack.c.h.b16 %v446
    %v1372 = vunpack.c.l.b16 %v447
    %v1373 = vunpack.c.h.b16 %v447
    %v1374 = vunpack.c.l.b16 %v448
    %v1375 = vunpack.c.h.b16 %v448
    %v1376 = vunpack.c.l.b16 %v449
    %v1377 = vunpack.c.h.b16 %v449
    %v1378 = vunpack.c.l.b16 %v450
    %v1379 = vunpack.c.h.b16 %v450
    %v1380 = vunpack.c.l.b16 %v451
    %v1381 = vunpack.c.h.b16 %v451
    %v1382 = vunpack.c.l.b16 %v452
    %v1383 = vunpack.c.h.b16 %v452
    %v1384 = vunpack.c.l.b16 %v453
    %v1385 = vunpack.c.h.b16 %v453
    %v1386 = vunpack.c.l.b16 %v454
    %v1387 = vunpack.c.h.b16 %v454
    %v1388 = vunpack.c.l.b16 %v455
    %v1389 = vunpack.c.h.b16 %v455
    %v1390 = vunpack.c.l.b16 %v456
    %v1391 = vunpack.c.h.b16 %v456
    %v1392 = vunpack.c.l.b16 %v457
    %v1393 = vunpack.c.h.b16 %v457
    %v1394 = vunpack.c.l.b16 %v458
    %v1395 = vunpack.c.h.b16 %v458
    %v1396 = vunpack.c.l.b16 %v459
    %v1397 = vunpack.c.h.b16 %v459
    %v1398 = vunpack.c.l.b16 %v460
    %v1399 = vunpack.c.h.b16 %v460
    %v1400 = vunpack.c.l.b16 %v461
    %v1401 = vunpack.c.h.b16 %v461
    %v1402 = vunpack.c.l.b16 %v462
    %v1403 = vunpack.c.h.b16 %v462
    %v1404 = vunpack.c.l.b16 %v463
    %v1405 = vunpack.c.h.b16 %v463
    %v1406 = vunpack.c.l.b16 %v464
    %v1407 = vunpack.c.h.b16 %v464
    %v1408 = vunpack.c.l.b16 %v465
    %v1409 = vunpack.c.h.b16 %v465
    %v1410 = vunpack.c.l.b16 %v466
    %v1411 = vunpack.c.h.b16 %v466
    %v1412 = vunpack.c.l.b16 %v467
    %v1413 = vunpack.c.h.b16 %v467
    %v1414 = vunpack.c.l.b16 %v468
    %v1415 = vunpack.c.h.b16 %v468
    %v1416 = vunpack.c.l.b16 %v469
    %v1417 = vunpack.c.h.b16 %v469
    %v1418 = vunpack.c.l.b16 %v470
    %v1419 = vunpack.c.h.b16 %v470
    %v1420 = vunpack.c.l.b16 %v471
    %v1421 = vunpack.c.h.b16 %v471
    %v1422 = vunpack.c.l.b16 %v472
    %v1423 = vunpack.c.h.b16 %v472
    %v1424 = vunpack.c.l.b16 %v473
    %v1425 = vunpack.c.h.b16 %v473
    %v1426 = vunpack.c.l.b16 %v474
    %v1427 = vunpack.c.h.b16 %v474
    %v1428 = vunpack.c.l.b16 %v475
    %v1429 = vunpack.c.h.b16 %v475
    %v1430 = vunpack.c.l.b16 %v476
    %v1431 = vunpack.c.h.b16 %v476
    %v1432 = vunpack.c.l.b16 %v477
    %v1433 = vunpack.c.h.b16 %v477
    %v1434 = vunpack.c.l.b16 %v478
    %v1435 = vunpack.c.h.b16 %v478
    %v1436 = vunpack.c.l.b16 %v479
    %v1437 = vunpack.c.h.b16 %v479
    %v1438 = vunpack.c.l.b16 %v480
    %v1439 = vunpack.c.h.b16 %v480
    %v1440 = vunpack.c.l.b16 %v481
    %v1441 = vunpack.c.h.b16 %v481
    %v1442 = vunpack.c.l.b16 %v482
    %v1443 = vunpack.c.h.b16 %v482
    %v1444 = vunpack.c.l.b16 %v483
    %v1445 = vunpack.c.h.b16 %v483
    %v1446 = vunpack.c.l.b16 %v484
    %v1447 = vunpack.c.h.b16 %v484
    %v1448 = vunpack.c.l.b16 %v485
    %v1449 = vunpack.c.h.b16 %v485
    %v1450 = vunpack.c.l.b16 %v486
    %v1451 = vunpack.c.h.b16 %v486
    %v1452 = vunpack.c.l.b16 %v487
    %v1453 = vunpack.c.h.b16 %v487
    %v1454 = vunpack.c.l.b16 %v488
    %v1455 = vunpack.c.h.b16 %v488
    %v1456 = vunpack.c.l.b16 %v489
    %v1457 = vunpack.c.h.b16 %v489
    %v1458 = vunpack.c.l.b16 %v490
    %v1459 = vunpack.c.h.b16 %v490
    %v1460 = vunpack.c.l.b16 %v491
    %v1461 = vunpack.c.h.b16 %v491
    %v1462 = vunpack.c.l.b16 %v492
    %v1463 = vunpack.c.h.b16 %v492
    %v1464 = vunpack.c.l.b16 %v493
    %v1465 = vunpack.c.h.b16 %v493
    %v1466 = vunpack.c.l.b16 %v494
    %v1467 = vunpack.c.h.b16 %v494
    %v1468 = vunpack.c.l.b16 %v495
    %v1469 = vunpack.c.h.b16 %v495
    %v1470 = vunpack.c.l.b16 %v496
    %v1471 = vunpack.c.h.b16 %v496
    %v1472 = vunpack.c.l.b16 %v497
    %v1473 = vunpack.c.h.b16 %v497
    %v1474 = vunpack.c.l.b16 %v498
    %v1475 = vunpack.c.h.b16 %v498
    %v1476 = vunpack.c.l.b16 %v499
    %v1477 = vunpack.c.h.b16 %v499
    %v1478 = vunpack.c.l.b16 %v500
    %v1479 = vunpack.c.h.b16 %v500
    %v1480 = vunpack.c.l.b16 %v501
    %v1481 = vunpack.c.h.b16 %v501
    %v1482 = vunpack.c.l.b16 %v502
    %v1483 = vunpack.c.h.b16 %v502
    %v1484 = vunpack.c.l.b16 %v503
    %v1485 = vunpack.c.h.b16 %v503
    %v1486 = vunpack.c.l.b16 %v504
    %v1487 = vunpack.c.h.b16 %v504
    %v1488 = vunpack.c.l.b16 %v505
    %v1489 = vunpack.c.h.b16 %v505
    %v1490 = vunpack.c.l.b16 %v506
    %v1491 = vunpack.c.h.b16 %v506
    %v1492 = vunpack.c.l.b16 %v507
    %v1493 = vunpack.c.h.b16 %v507
    %v1494 = vunpack.c.l.b16 %v508
    %v1495 = vunpack.c.h.b16 %v508
    %v1496 = vunpack.c.l.b16 %v509
    %v1497 = vunpack.c.h.b16 %v509
    %v1498 = vunpack.c.l.b16 %v510
    %v1499 = vunpack.c.h.b16 %v510
    %v1500 = vunpack.c.l.b16 %v511
    %v1501 = vunpack.c.h.b16 %v511
    %v1502 = vunpack.c.l.b16 %v512
    %v1503 = vunpack.c.h.b16 %v512
    %v1504 = vunpack.c.l.b16 %v513
    %v1505 = vunpack.c.h.b16 %v513
    %v1506 = vunpack.c.l.b16 %v514
    %v1507 = vunpack.c.h.b16 %v514
    %v1508 = vunpack.c.l.b16 %v515
    %v1509 = vunpack.c.h.b16 %v515
    %v1510 = vunpack.c.l.b16 %v516
    %v1511 = vunpack.c.h.b16 %v516
    %v1512 = vunpack.c.l.b16 %v517
    %v1513 = vunpack.c.h.b16 %v517
    %v1514 = vunpack.c.l.b16 %v518
    %v1515 = vunpack.c.h.b16 %v518
    %v1516 = vunpack.c.l.b16 %v519
    %v1517 = vunpack.c.h.b16 %v519
    %v1518 = vunpack.c.l.b16 %v520
    %v1519 = vunpack.c.h.b16 %v520
    %v1520 = vunpack.c.l.b16 %v521
    %v1521 = vunpack.c.h.b16 %v521
    %v1522 = vunpack.c.l.b16 %v522
    %v1523 = vunpack.c.h.b16 %v522
    %v1524 = vunpack.c.l.b16 %v523
    %v1525 = vunpack.c.h.b16 %v523
    %v1526 = vunpack.c.l.b16 %v524
    %v1527 = vunpack.c.h.b16 %v524
    %v1528 = vunpack.c.l.b16 %v525
    %v1529 = vunpack.c.h.b16 %v525
    %v1530 = vpack.c.b16 %v898, %v890
    %v1531 = vpack.c.b16 %v899, %v891
    %v1532 = vpack.c.b16 %v900, %v892
    %v1533 = vpack.c.b16 %v901, %v893
    %v1534 = vpack.c.b16 %v902, %v894
    %v1535 = vpack.c.b16 %v903, %v895
    %v1536 = vpack.c.b16 %v904, %v896
    %v1537 = vpack.c.b16 %v905, %v897
    %v1538 = vpack.c.b16 %v914, %v906
    %v1539 = vpack.c.b16 %v915, %v907
    %v1540 = vpack.c.b16 %v916, %v908
    %v1541 = vpack.c.b16 %v917, %v909
    %v1542 = vpack.c.b16 %v918, %v910
    %v1543 = vpack.c.b16 %v919, %v911
    %v1544 = vpack.c.b16 %v920, %v912
    %v1545 = vpack.c.b16 %v921, %v913
    %v1546 = vpack.c.b16 %v930, %v922
    %v1547 = vpack.c.b16 %v931, %v923
    %v1548 = vpack.c.b16 %v932, %v924
    %v1549 = vpack.c.b16 %v933, %v925
    %v1550 = vpack.c.b16 %v934, %v926
    %v1551 = vpack.c.b16 %v935, %v927
    %v1552 = vpack.c.b16 %v936, %v928
    %v1553 = vpack.c.b16 %v937, %v929
    %v1554 = vpack.c.b16 %v946, %v938
    %v1555 = vpack.c.b16 %v947, %v939
    %v1556 = vpack.c.b16 %v948, %v940
    %v1557 = vpack.c.b16 %v949, %v941
    %v1558 = vpack.c.b16 %v950, %v942
    %v1559 = vpack.c.b16 %v951, %v943
    %v1560 = vpack.c.b16 %v952, %v944
    %v1561 = vpack.c.b16 %v953, %v945
    %v1562 = vpack.c.b16 %v962, %v954
    %v1563 = vpack.c.b16 %v963, %v955
    %v1564 = vpack.c.b16 %v964, %v956
    %v1565 = vpack.c.b16 %v965, %v957
    %v1566 = vpack.c.b16 %v966, %v958
    %v1567 = vpack.c.b16 %v967, %v959
    %v1568 = vpack.c.b16 %v968, %v960
    %v1569 = vpack.c.b16 %v969, %v961
    %v1570 = vpack.c.b16 %v978, %v970
    %v1571 = vpack.c.b16 %v979, %v971
    %v1572 = vpack.c.b16 %v980, %v972
    %v1573 = vpack.c.b16 %v981, %v973
    %v1574 = vpack.c.b16 %v982, %v974
    %v1575 = vpack.c.b16 %v983, %v975
    %v1576 = vpack.c.b16 %v984, %v976
    %v1577 = vpack.c.b16 %v985, %v977
    %v1578 = vpack.c.b16 %v994, %v986
    %v1579 = vpack.c.b16 %v995, %v987
    %v1580 = vpack.c.b16 %v996, %v988
    %v1581 = vpack.c.b16 %v997, %v989
    %v1582 = vpack.c.b16 %v998, %v990
    %v1583 = vpack.c.b16 %v999, %v991
    %v1584 = vpack.c.b16 %v1000, %v992
    %v1585 = vpack.c.b16 %v1001, %v993
    %v1586 = vpack.c.b16 %v1010, %v1002
    %v1587 = vpack.c.b16 %v1011, %v1003
    %v1588 = vpack.c.b16 %v1012, %v1004
    %v1589 = vpack.c.b16 %v1013, %v1005
    %v1590 = vpack.c.b16 %v1014, %v1006
    %v1591 = vpack.c.b16 %v1015, %v1007
    %v1592 = vpack.c.b16 %v1016, %v1008
    %v1593 = vpack.c.b16 %v1017, %v1009
    %v1594 = vpack.c.b16 %v1026, %v1018
    %v1595 = vpack.c.b16 %v1027, %v1019
    %v1596 = vpack.c.b16 %v1028, %v1020
    %v1597 = vpack.c.b16 %v1029, %v1021
    %v1598 = vpack.c.b16 %v1030, %v1022
    %v1599 = vpack.c.b16 %v1031, %v1023
    %v1600 = vpack.c.b16 %v1032, %v1024
    %v1601 = vpack.c.b16 %v1033, %v1025
    %v1602 = vpack.c.b16 %v1042, %v1034
    %v1603 = vpack.c.b16 %v1043, %v1035
    %v1604 = vpack.c.b16 %v1044, %v1036
    %v1605 = vpack.c.b16 %v1045, %v1037
    %v1606 = vpack.c.b16 %v1046, %v1038
    %v1607 = vpack.c.b16 %v1047, %v1039
    %v1608 = vpack.c.b16 %v1048, %v1040
    %v1609 = vpack.c.b16 %v1049, %v1041
    %v1610 = vpack.c.b16 %v1058, %v1050
    %v1611 = vpack.c.b16 %v1059, %v1051
    %v1612 = vpack.c.b16 %v1060, %v1052
    %v1613 = vpack.c.b16 %v1061, %v1053
    %v1614 = vpack.c.b16 %v1062, %v1054
    %v1615 = vpack.c.b16 %v1063, %v1055
    %v1616 = vpack.c.b16 %v1064, %v1056
    %v1617 = vpack.c.b16 %v1065, %v1057
    %v1618 = vpack.c.b16 %v1074, %v1066
    %v1619 = vpack.c.b16 %v1075, %v1067
    %v1620 = vpack.c.b16 %v1076, %v1068
    %v1621 = vpack.c.b16 %v1077, %v1069
    %v1622 = vpack.c.b16 %v1078, %v1070
    %v1623 = vpack.c.b16 %v1079, %v1071
    %v1624 = vpack.c.b16 %v1080, %v1072
    %v1625 = vpack.c.b16 %v1081, %v1073
    %v1626 = vpack.c.b16 %v1090, %v1082
    %v1627 = vpack.c.b16 %v1091, %v1083
    %v1628 = vpack.c.b16 %v1092, %v1084
    %v1629 = vpack.c.b16 %v1093, %v1085
    %v1630 = vpack.c.b16 %v1094, %v1086
    %v1631 = vpack.c.b16 %v1095, %v1087
    %v1632 = vpack.c.b16 %v1096, %v1088
    %v1633 = vpack.c.b16 %v1097, %v1089
    %v1634 = vpack.c.b16 %v1106, %v1098
    %v1635 = vpack.c.b16 %v1107, %v1099
    %v1636 = vpack.c.b16 %v1108, %v1100
    %v1637 = vpack.c.b16 %v1109, %v1101
    %v1638 = vpack.c.b16 %v1110, %v1102
    %v1639 = vpack.c.b16 %v1111, %v1103
    %v1640 = vpack.c.b16 %v1112, %v1104
    %v1641 = vpack.c.b16 %v1113, %v1105
    %v1642 = vpack.c.b16 %v1122, %v1114
    %v1643 = vpack.c.b16 %v1123, %v1115
    %v1644 = vpack.c.b16 %v1124, %v1116
    %v1645 = vpack.c.b16 %v1125, %v1117
    %v1646 = vpack.c.b16 %v1126, %v1118
    %v1647 = vpack.c.b16 %v1127, %v1119
    %v1648 = vpack.c.b16 %v1128, %v1120
    %v1649 = vpack.c.b16 %v1129, %v1121
    %v1650 = vpack.c.b16 %v1138, %v1130
    %v1651 = vpack.c.b16 %v1139, %v1131
    %v1652 = vpack.c.b16 %v1140, %v1132
    %v1653 = vpack.c.b16 %v1141, %v1133
    %v1654 = vpack.c.b16 %v1142, %v1134
    %v1655 = vpack.c.b16 %v1143, %v1135
    %v1656 = vpack.c.b16 %v1144, %v1136
    %v1657 = vpack.c.b16 %v1145, %v1137
    %v1658 = vpack.c.b16 %v1154, %v1146
    %v1659 = vpack.c.b16 %v1155, %v1147
    %v1660 = vpack.c.b16 %v1156, %v1148
    %v1661 = vpack.c.b16 %v1157, %v1149
    %v1662 = vpack.c.b16 %v1158, %v1150
    %v1663 = vpack.c.b16 %v1159, %v1151
    %v1664 = vpack.c.b16 %v1160, %v1152
    %v1665 = vpack.c.b16 %v1161, %v1153
    %v1666 = vpack.c.b16 %v1170, %v1162
    %v1667 = vpack.c.b16 %v1171, %v1163
    %v1668 = vpack.c.b16 %v1172, %v1164
    %v1669 = vpack.c.b16 %v1173, %v1165
    %v1670 = vpack.c.b16 %v1174, %v1166
    %v1671 = vpack.c.b16 %v1175, %v1167
    %v1672 = vpack.c.b16 %v1176, %v1168
    %v1673 = vpack.c.b16 %v1177, %v1169
    %v1674 = vpack.c.b16 %v1186, %v1178
    %v1675 = vpack.c.b16 %v1187, %v1179
    %v1676 = vpack.c.b16 %v1188, %v1180
    %v1677 = vpack.c.b16 %v1189, %v1181
    %v1678 = vpack.c.b16 %v1190, %v1182
    %v1679 = vpack.c.b16 %v1191, %v1183
    %v1680 = vpack.c.b16 %v1192, %v1184
    %v1681 = vpack.c.b16 %v1193, %v1185
    %v1682 = vpack.c.b16 %v1202, %v1194
    %v1683 = vpack.c.b16 %v1203, %v1195
    %v1684 = vpack.c.b16 %v1204, %v1196
    %v1685 = vpack.c.b16 %v1205, %v1197
    %v1686 = vpack.c.b16 %v1206, %v1198
    %v1687 = vpack.c.b16 %v1207, %v1199
    %v1688 = vpack.c.b16 %v1208, %v1200
    %v1689 = vpack.c.b16 %v1209, %v1201
    %v1690 = vpack.c.b16 %v1218, %v1210
    %v1691 = vpack.c.b16 %v1219, %v1211
    %v1692 = vpack.c.b16 %v1220, %v1212
    %v1693 = vpack.c.b16 %v1221, %v1213
    %v1694 = vpack.c.b16 %v1222, %v1214
    %v1695 = vpack.c.b16 %v1223, %v1215
    %v1696 = vpack.c.b16 %v1224, %v1216
    %v1697 = vpack.c.b16 %v1225, %v1217
    %v1698 = vpack.c.b16 %v1234, %v1226
    %v1699 = vpack.c.b16 %v1235, %v1227
    %v1700 = vpack.c.b16 %v1236, %v1228
    %v1701 = vpack.c.b16 %v1237, %v1229
    %v1702 = vpack.c.b16 %v1238, %v1230
    %v1703 = vpack.c.b16 %v1239, %v1231
    %v1704 = vpack.c.b16 %v1240, %v1232
    %v1705 = vpack.c.b16 %v1241, %v1233
    %v1706 = vpack.c.b16 %v1250, %v1242
    %v1707 = vpack.c.b16 %v1251, %v1243
    %v1708 = vpack.c.b16 %v1252, %v1244
    %v1709 = vpack.c.b16 %v1253, %v1245
    %v1710 = vpack.c.b16 %v1254, %v1246
    %v1711 = vpack.c.b16 %v1255, %v1247
    %v1712 = vpack.c.b16 %v1256, %v1248
    %v1713 = vpack.c.b16 %v1257, %v1249
    %v1714 = vpack.c.b16 %v1266, %v1258
    %v1715 = vpack.c.b16 %v1267, %v1259
    %v1716 = vpack.c.b16 %v1268, %v1260
    %v1717 = vpack.c.b16 %v1269, %v1261
    %v1718 = vpack.c.b16 %v1270, %v1262
    %v1719 = vpack.c.b16 %v1271, %v1263
    %v1720 = vpack.c.b16 %v1272, %v1264
    %v1721 = vpack.c.b16 %v1273, %v1265
    %v1722 = vpack.c.b16 %v1282, %v1274
    %v1723 = vpack.c.b16 %v1283, %v1275
    %v1724 = vpack.c.b16 %v1284, %v1276
    %v1725 = vpack.c.b16 %v1285, %v1277
    %v1726 = vpack.c.b16 %v1286, %v1278
    %v1727 = vpack.c.b16 %v1287, %v1279
    %v1728 = vpack.c.b16 %v1288, %v1280
    %v1729 = vpack.c.b16 %v1289, %v1281
    %v1730 = vpack.c.b16 %v1298, %v1290
    %v1731 = vpack.c.b16 %v1299, %v1291
    %v1732 = vpack.c.b16 %v1300, %v1292
    %v1733 = vpack.c.b16 %v1301, %v1293
    %v1734 = vpack.c.b16 %v1302, %v1294
    %v1735 = vpack.c.b16 %v1303, %v1295
    %v1736 = vpack.c.b16 %v1304, %v1296
    %v1737 = vpack.c.b16 %v1305, %v1297
    %v1738 = vpack.c.b16 %v1314, %v1306
    %v1739 = vpack.c.b16 %v1315, %v1307
    %v1740 = vpack.c.b16 %v1316, %v1308
    %v1741 = vpack.c.b16 %v1317, %v1309
    %v1742 = vpack.c.b16 %v1318, %v1310
    %v1743 = vpack.c.b16 %v1319, %v1311
    %v1744 = vpack.c.b16 %v1320, %v1312
    %v1745 = vpack.c.b16 %v1321, %v1313
    %v1746 = vpack.c.b16 %v1330, %v1322
    %v1747 = vpack.c.b16 %v1331, %v1323
    %v1748 = vpack.c.b16 %v1332, %v1324
    %v1749 = vpack.c.b16 %v1333, %v1325
    %v1750 = vpack.c.b16 %v1334, %v1326
    %v1751 = vpack.c.b16 %v1335, %v1327
    %v1752 = vpack.c.b16 %v1336, %v1328
    %v1753 = vpack.c.b16 %v1337, %v1329
    %v1754 = vpack.c.b16 %v1346, %v1338
    %v1755 = vpack.c.b16 %v1347, %v1339
    %v1756 = vpack.c.b16 %v1348, %v1340
    %v1757 = vpack.c.b16 %v1349, %v1341
    %v1758 = vpack.c.b16 %v1350, %v1342
    %v1759 = vpack.c.b16 %v1351, %v1343
    %v1760 = vpack.c.b16 %v1352, %v1344
    %v1761 = vpack.c.b16 %v1353, %v1345
    %v1762 = vpack.c.b16 %v1362, %v1354
    %v1763 = vpack.c.b16 %v1363, %v1355
    %v1764 = vpack.c.b16 %v1364, %v1356
    %v1765 = vpack.c.b16 %v1365, %v1357
    %v1766 = vpack.c.b16 %v1366, %v1358
    %v1767 = vpack.c.b16 %v1367, %v1359
    %v1768 = vpack.c.b16 %v1368, %v1360
    %v1769 = vpack.c.b16 %v1369, %v1361
    %v1770 = vpack.c.b16 %v1378, %v1370
    %v1771 = vpack.c.b16 %v1379, %v1371
    %v1772 = vpack.c.b16 %v1380, %v1372
    %v1773 = vpack.c.b16 %v1381, %v1373
    %v1774 = vpack.c.b16 %v1382, %v1374
    %v1775 = vpack.c.b16 %v1383, %v1375
    %v1776 = vpack.c.b16 %v1384, %v1376
    %v1777 = vpack.c.b16 %v1385, %v1377
    %v1778 = vpack.c.b16 %v1394, %v1386
    %v1779 = vpack.c.b16 %v1395, %v1387
    %v1780 = vpack.c.b16 %v1396, %v1388
    %v1781 = vpack.c.b16 %v1397, %v1389
    %v1782 = vpack.c.b16 %v1398, %v1390
    %v1783 = vpack.c.b16 %v1399, %v1391
    %v1784 = vpack.c.b16 %v1400, %v1392
    %v1785 = vpack.c.b16 %v1401, %v1393
    %v1786 = vpack.c.b16 %v1410, %v1402
    %v1787 = vpack.c.b16 %v1411, %v1403
    %v1788 = vpack.c.b16 %v1412, %v1404
    %v1789 = vpack.c.b16 %v1413, %v1405
    %v1790 = vpack.c.b16 %v1414, %v1406
    %v1791 = vpack.c.b16 %v1415, %v1407
    %v1792 = vpack.c.b16 %v1416, %v1408
    %v1793 = vpack.c.b16 %v1417, %v1409
    %v1794 = vpack.c.b16 %v1426, %v1418
    %v1795 = vpack.c.b16 %v1427, %v1419
    %v1796 = vpack.c.b16 %v1428, %v1420
    %v1797 = vpack.c.b16 %v1429, %v1421
    %v1798 = vpack.c.b16 %v1430, %v1422
    %v1799 = vpack.c.b16 %v1431, %v1423
    %v1800 = vpack.c.b16 %v1432, %v1424
    %v1801 = vpack.c.b16 %v1433, %v1425
    %v1802 = vpack.c.b16 %v1442, %v1434
    %v1803 = vpack.c.b16 %v1443, %v1435
    %v1804 = vpack.c.b16 %v1444, %v1436
    %v1805 = vpack.c.b16 %v1445, %v1437
    %v1806 = vpack.c.b16 %v1446, %v1438
    %v1807 = vpack.c.b16 %v1447, %v1439
    %v1808 = vpack.c.b16 %v1448, %v1440
    %v1809 = vpack.c.b16 %v1449, %v1441
    %v1810 = vpack.c.b16 %v1458, %v1450
    %v1811 = vpack.c.b16 %v1459, %v1451
    %v1812 = vpack.c.b16 %v1460, %v1452
    %v1813 = vpack.c.b16 %v1461, %v1453
    %v1814 = vpack.c.b16 %v1462, %v1454
    %v1815 = vpack.c.b16 %v1463, %v1455
    %v1816 = vpack.c.b16 %v1464, %v1456
    %v1817 = vpack.c.b16 %v1465, %v1457
    %v1818 = vpack.c.b16 %v1474, %v1466
    %v1819 = vpack.c.b16 %v1475, %v1467
    %v1820 = vpack.c.b16 %v1476, %v1468
    %v1821 = vpack.c.b16 %v1477, %v1469
    %v1822 = vpack.c.b16 %v1478, %v1470
    %v1823 = vpack.c.b16 %v1479, %v1471
    %v1824 = vpack.c.b16 %v1480, %v1472
    %v1825 = vpack.c.b16 %v1481, %v1473
    %v1826 = vpack.c.b16 %v1490, %v1482
    %v1827 = vpack.c.b16 %v1491, %v1483
    %v1828 = vpack.c.b16 %v1492, %v1484
    %v1829 = vpack.c.b16 %v1493, %v1485
    %v1830 = vpack.c.b16 %v1494, %v1486
    %v1831 = vpack.c.b16 %v1495, %v1487
    %v1832 = vpack.c.b16 %v1496, %v1488
    %v1833 = vpack.c.b16 %v1497, %v1489
    %v1834 = vpack.c.b16 %v1506, %v1498
    %v1835 = vpack.c.b16 %v1507, %v1499
    %v1836 = vpack.c.b16 %v1508, %v1500
    %v1837 = vpack.c.b16 %v1509, %v1501
    %v1838 = vpack.c.b16 %v1510, %v1502
    %v1839 = vpack.c.b16 %v1511, %v1503
    %v1840 = vpack.c.b16 %v1512, %v1504
    %v1841 = vpack.c.b16 %v1513, %v1505
    %v1842 = vpack.c.b16 %v1522, %v1514
    %v1843 = vpack.c.b16 %v1523, %v1515
    %v1844 = vpack.c.b16 %v1524, %v1516
    %v1845 = vpack.c.b16 %v1525, %v1517
    %v1846 = vpack.c.b16 %v1526, %v1518
    %v1847 = vpack.c.b16 %v1527, %v1519
    %v1848 = vpack.c.b16 %v1528, %v1520
    %v1849 = vpack.c.b16 %v1529, %v1521
    %2170 = vmatpush.bf16.msra.mxu0 %v1586
    %2171 = vmatpush.bf16.msra.mxu0 %v1578
    %2172 = vmatpush.bf16.msra.mxu0 %v1570
    %2173 = vmatpush.bf16.msra.mxu0 %v1562
    %2174 = vmatpush.bf16.msra.mxu0 %v1554
    %2175 = vmatpush.bf16.msra.mxu0 %v1546
    %2176 = vmatpush.bf16.msra.mxu0 %v1538
    %2177 = vmatpush.bf16.msra.mxu0 %v1530
    %2178 = vmatmul.bf16.gmra.mxu0 %v560
    %v2179 = vpop.f32.mrf.mxu0
    %v2180 = vadd.f32 %v528, %v2179
    %v2181 = vpop.f32.mrf.mxu0
    %v2182 = vadd.f32 %v528, %v2181
    %2183 = vdwg.mxu0
    %2184 = vmatpush.bf16.msra.mxu0 %v1650
    %2185 = vmatpush.bf16.msra.mxu0 %v1642
    %2186 = vmatpush.bf16.msra.mxu0 %v1634
    %2187 = vmatpush.bf16.msra.mxu0 %v1626
    %2188 = vmatpush.bf16.msra.mxu0 %v1618
    %2189 = vmatpush.bf16.msra.mxu0 %v1610
    %2190 = vmatpush.bf16.msra.mxu0 %v1602
    %2191 = vmatpush.bf16.msra.mxu0 %v1594
    %2192 = vmatmul.bf16.gmra.mxu0 %v561
    %v2193 = vpop.f32.mrf.mxu0
    %v2194 = vadd.f32 %v2180, %v2193
    %v2195 = vpop.f32.mrf.mxu0
    %v2196 = vadd.f32 %v2182, %v2195
    %2197 = vdwg.mxu0
    %2198 = vmatpush.bf16.msra.mxu0 %v1714
    %2199 = vmatpush.bf16.msra.mxu0 %v1706
    %2200 = vmatpush.bf16.msra.mxu0 %v1698
    %2201 = vmatpush.bf16.msra.mxu0 %v1690
    %2202 = vmatpush.bf16.msra.mxu0 %v1682
    %2203 = vmatpush.bf16.msra.mxu0 %v1674
    %2204 = vmatpush.bf16.msra.mxu0 %v1666
    %2205 = vmatpush.bf16.msra.mxu0 %v1658
    %2206 = vmatmul.bf16.gmra.mxu0 %v562
    %v2207 = vpop.f32.mrf.mxu0
    %v2208 = vadd.f32 %v2194, %v2207
    %v2209 = vpop.f32.mrf.mxu0
    %v2210 = vadd.f32 %v2196, %v2209
    %2211 = vdwg.mxu0
    %2212 = vmatpush.bf16.msra.mxu0 %v1778
    %2213 = vmatpush.bf16.msra.mxu0 %v1770
    %2214 = vmatpush.bf16.msra.mxu0 %v1762
    %2215 = vmatpush.bf16.msra.mxu0 %v1754
    %2216 = vmatpush.bf16.msra.mxu0 %v1746
    %2217 = vmatpush.bf16.msra.mxu0 %v1738
    %2218 = vmatpush.bf16.msra.mxu0 %v1730
    %2219 = vmatpush.bf16.msra.mxu0 %v1722
    %2220 = vmatmul.bf16.gmra.mxu0 %v563
    %v2221 = vpop.f32.mrf.mxu0
    %v2222 = vadd.f32 %v2208, %v2221
    %v2223 = vpop.f32.mrf.mxu0
    %v2224 = vadd.f32 %v2210, %v2223
    %2225 = vdwg.mxu0
    %2226 = vmatpush.bf16.msra.mxu0 %v1842
    %2227 = vmatpush.bf16.msra.mxu0 %v1834
    %2228 = vmatpush.bf16.msra.mxu0 %v1826
    %2229 = vmatpush.bf16.msra.mxu0 %v1818
    %2230 = vmatpush.bf16.msra.mxu0 %v1810
    %2231 = vmatpush.bf16.msra.mxu0 %v1802
    %2232 = vmatpush.bf16.msra.mxu0 %v1794
    %2233 = vmatpush.bf16.msra.mxu0 %v1786
    %2234 = vmatmul.bf16.gmra.mxu0 %v564
    %v2235 = vpop.f32.mrf.mxu0
    %v2236 = vadd.f32 %v2222, %v2235
    %v2237 = vpop.f32.mrf.mxu0
    %v2238 = vadd.f32 %v2224, %v2237
    %2239 = vdwg.mxu0
    %2240 = vmatpush.bf16.msra.mxu0 %v1587
    %2241 = vmatpush.bf16.msra.mxu0 %v1579
    %2242 = vmatpush.bf16.msra.mxu0 %v1571
    %2243 = vmatpush.bf16.msra.mxu0 %v1563
    %2244 = vmatpush.bf16.msra.mxu0 %v1555
    %2245 = vmatpush.bf16.msra.mxu0 %v1547
    %2246 = vmatpush.bf16.msra.mxu0 %v1539
    %2247 = vmatpush.bf16.msra.mxu0 %v1531
    %2248 = vmatmul.bf16.gmra.mxu0 %v560
    %v2249 = vpop.f32.mrf.mxu0
    %v2250 = vadd.f32 %v529, %v2249
    %v2251 = vpop.f32.mrf.mxu0
    %v2252 = vadd.f32 %v529, %v2251
    %2253 = vdwg.mxu0
    %2254 = vmatpush.bf16.msra.mxu0 %v1651
    %2255 = vmatpush.bf16.msra.mxu0 %v1643
    %2256 = vmatpush.bf16.msra.mxu0 %v1635
    %2257 = vmatpush.bf16.msra.mxu0 %v1627
    %2258 = vmatpush.bf16.msra.mxu0 %v1619
    %2259 = vmatpush.bf16.msra.mxu0 %v1611
    %2260 = vmatpush.bf16.msra.mxu0 %v1603
    %2261 = vmatpush.bf16.msra.mxu0 %v1595
    %2262 = vmatmul.bf16.gmra.mxu0 %v561
    %v2263 = vpop.f32.mrf.mxu0
    %v2264 = vadd.f32 %v2250, %v2263
    %v2265 = vpop.f32.mrf.mxu0
    %v2266 = vadd.f32 %v2252, %v2265
    %2267 = vdwg.mxu0
    %2268 = vmatpush.bf16.msra.mxu0 %v1715
    %2269 = vmatpush.bf16.msra.mxu0 %v1707
    %2270 = vmatpush.bf16.msra.mxu0 %v1699
    %2271 = vmatpush.bf16.msra.mxu0 %v1691
    %2272 = vmatpush.bf16.msra.mxu0 %v1683
    %2273 = vmatpush.bf16.msra.mxu0 %v1675
    %2274 = vmatpush.bf16.msra.mxu0 %v1667
    %2275 = vmatpush.bf16.msra.mxu0 %v1659
    %2276 = vmatmul.bf16.gmra.mxu0 %v562
    %v2277 = vpop.f32.mrf.mxu0
    %v2278 = vadd.f32 %v2264, %v2277
    %v2279 = vpop.f32.mrf.mxu0
    %v2280 = vadd.f32 %v2266, %v2279
    %2281 = vdwg.mxu0
    %2282 = vmatpush.bf16.msra.mxu0 %v1779
    %2283 = vmatpush.bf16.msra.mxu0 %v1771
    %2284 = vmatpush.bf16.msra.mxu0 %v1763
    %2285 = vmatpush.bf16.msra.mxu0 %v1755
    %2286 = vmatpush.bf16.msra.mxu0 %v1747
    %2287 = vmatpush.bf16.msra.mxu0 %v1739
    %2288 = vmatpush.bf16.msra.mxu0 %v1731
    %2289 = vmatpush.bf16.msra.mxu0 %v1723
    %2290 = vmatmul.bf16.gmra.mxu0 %v563
    %v2291 = vpop.f32.mrf.mxu0
    %v2292 = vadd.f32 %v2278, %v2291
    %v2293 = vpop.f32.mrf.mxu0
    %v2294 = vadd.f32 %v2280, %v2293
    %2295 = vdwg.mxu0
    %2296 = vmatpush.bf16.msra.mxu0 %v1843
    %2297 = vmatpush.bf16.msra.mxu0 %v1835
    %2298 = vmatpush.bf16.msra.mxu0 %v1827
    %2299 = vmatpush.bf16.msra.mxu0 %v1819
    %2300 = vmatpush.bf16.msra.mxu0 %v1811
    %2301 = vmatpush.bf16.msra.mxu0 %v1803
    %2302 = vmatpush.bf16.msra.mxu0 %v1795
    %2303 = vmatpush.bf16.msra.mxu0 %v1787
    %2304 = vmatmul.bf16.gmra.mxu0 %v564
    %v2305 = vpop.f32.mrf.mxu0
    %v2306 = vadd.f32 %v2292, %v2305
    %v2307 = vpop.f32.mrf.mxu0
    %v2308 = vadd.f32 %v2294, %v2307
    %2309 = vdwg.mxu0
    %2310 = vmatpush.bf16.msra.mxu0 %v1588
    %2311 = vmatpush.bf16.msra.mxu0 %v1580
    %2312 = vmatpush.bf16.msra.mxu0 %v1572
    %2313 = vmatpush.bf16.msra.mxu0 %v1564
    %2314 = vmatpush.bf16.msra.mxu0 %v1556
    %2315 = vmatpush.bf16.msra.mxu0 %v1548
    %2316 = vmatpush.bf16.msra.mxu0 %v1540
    %2317 = vmatpush.bf16.msra.mxu0 %v1532
    %2318 = vmatmul.bf16.gmra.mxu0 %v560
    %v2319 = vpop.f32.mrf.mxu0
    %v2320 = vadd.f32 %v530, %v2319
    %v2321 = vpop.f32.mrf.mxu0
    %v2322 = vadd.f32 %v530, %v2321
    %2323 = vdwg.mxu0
    %2324 = vmatpush.bf16.msra.mxu0 %v1652
    %2325 = vmatpush.bf16.msra.mxu0 %v1644
    %2326 = vmatpush.bf16.msra.mxu0 %v1636
    %2327 = vmatpush.bf16.msra.mxu0 %v1628
    %2328 = vmatpush.bf16.msra.mxu0 %v1620
    %2329 = vmatpush.bf16.msra.mxu0 %v1612
    %2330 = vmatpush.bf16.msra.mxu0 %v1604
    %2331 = vmatpush.bf16.msra.mxu0 %v1596
    %2332 = vmatmul.bf16.gmra.mxu0 %v561
    %v2333 = vpop.f32.mrf.mxu0
    %v2334 = vadd.f32 %v2320, %v2333
    %v2335 = vpop.f32.mrf.mxu0
    %v2336 = vadd.f32 %v2322, %v2335
    %2337 = vdwg.mxu0
    %2338 = vmatpush.bf16.msra.mxu0 %v1716
    %2339 = vmatpush.bf16.msra.mxu0 %v1708
    %2340 = vmatpush.bf16.msra.mxu0 %v1700
    %2341 = vmatpush.bf16.msra.mxu0 %v1692
    %2342 = vmatpush.bf16.msra.mxu0 %v1684
    %2343 = vmatpush.bf16.msra.mxu0 %v1676
    %2344 = vmatpush.bf16.msra.mxu0 %v1668
    %2345 = vmatpush.bf16.msra.mxu0 %v1660
    %2346 = vmatmul.bf16.gmra.mxu0 %v562
    %v2347 = vpop.f32.mrf.mxu0
    %v2348 = vadd.f32 %v2334, %v2347
    %v2349 = vpop.f32.mrf.mxu0
    %v2350 = vadd.f32 %v2336, %v2349
    %2351 = vdwg.mxu0
    %2352 = vmatpush.bf16.msra.mxu0 %v1780
    %2353 = vmatpush.bf16.msra.mxu0 %v1772
    %2354 = vmatpush.bf16.msra.mxu0 %v1764
    %2355 = vmatpush.bf16.msra.mxu0 %v1756
    %2356 = vmatpush.bf16.msra.mxu0 %v1748
    %2357 = vmatpush.bf16.msra.mxu0 %v1740
    %2358 = vmatpush.bf16.msra.mxu0 %v1732
    %2359 = vmatpush.bf16.msra.mxu0 %v1724
    %2360 = vmatmul.bf16.gmra.mxu0 %v563
    %v2361 = vpop.f32.mrf.mxu0
    %v2362 = vadd.f32 %v2348, %v2361
    %v2363 = vpop.f32.mrf.mxu0
    %v2364 = vadd.f32 %v2350, %v2363
    %2365 = vdwg.mxu0
    %2366 = vmatpush.bf16.msra.mxu0 %v1844
    %2367 = vmatpush.bf16.msra.mxu0 %v1836
    %2368 = vmatpush.bf16.msra.mxu0 %v1828
    %2369 = vmatpush.bf16.msra.mxu0 %v1820
    %2370 = vmatpush.bf16.msra.mxu0 %v1812
    %2371 = vmatpush.bf16.msra.mxu0 %v1804
    %2372 = vmatpush.bf16.msra.mxu0 %v1796
    %2373 = vmatpush.bf16.msra.mxu0 %v1788
    %2374 = vmatmul.bf16.gmra.mxu0 %v564
    %v2375 = vpop.f32.mrf.mxu0
    %v2376 = vadd.f32 %v2362, %v2375
    %v2377 = vpop.f32.mrf.mxu0
    %v2378 = vadd.f32 %v2364, %v2377
    %2379 = vdwg.mxu0
    %2380 = vmatpush.bf16.msra.mxu0 %v1589
    %2381 = vmatpush.bf16.msra.mxu0 %v1581
    %2382 = vmatpush.bf16.msra.mxu0 %v1573
    %2383 = vmatpush.bf16.msra.mxu0 %v1565
    %2384 = vmatpush.bf16.msra.mxu0 %v1557
    %2385 = vmatpush.bf16.msra.mxu0 %v1549
    %2386 = vmatpush.bf16.msra.mxu0 %v1541
    %2387 = vmatpush.bf16.msra.mxu0 %v1533
    %2388 = vmatmul.bf16.gmra.mxu0 %v560
    %v2389 = vpop.f32.mrf.mxu0
    %v2390 = vadd.f32 %v531, %v2389
    %v2391 = vpop.f32.mrf.mxu0
    %v2392 = vadd.f32 %v531, %v2391
    %2393 = vdwg.mxu0
    %2394 = vmatpush.bf16.msra.mxu0 %v1653
    %2395 = vmatpush.bf16.msra.mxu0 %v1645
    %2396 = vmatpush.bf16.msra.mxu0 %v1637
    %2397 = vmatpush.bf16.msra.mxu0 %v1629
    %2398 = vmatpush.bf16.msra.mxu0 %v1621
    %2399 = vmatpush.bf16.msra.mxu0 %v1613
    %2400 = vmatpush.bf16.msra.mxu0 %v1605
    %2401 = vmatpush.bf16.msra.mxu0 %v1597
    %2402 = vmatmul.bf16.gmra.mxu0 %v561
    %v2403 = vpop.f32.mrf.mxu0
    %v2404 = vadd.f32 %v2390, %v2403
    %v2405 = vpop.f32.mrf.mxu0
    %v2406 = vadd.f32 %v2392, %v2405
    %2407 = vdwg.mxu0
    %2408 = vmatpush.bf16.msra.mxu0 %v1717
    %2409 = vmatpush.bf16.msra.mxu0 %v1709
    %2410 = vmatpush.bf16.msra.mxu0 %v1701
    %2411 = vmatpush.bf16.msra.mxu0 %v1693
    %2412 = vmatpush.bf16.msra.mxu0 %v1685
    %2413 = vmatpush.bf16.msra.mxu0 %v1677
    %2414 = vmatpush.bf16.msra.mxu0 %v1669
    %2415 = vmatpush.bf16.msra.mxu0 %v1661
    %2416 = vmatmul.bf16.gmra.mxu0 %v562
    %v2417 = vpop.f32.mrf.mxu0
    %v2418 = vadd.f32 %v2404, %v2417
    %v2419 = vpop.f32.mrf.mxu0
    %v2420 = vadd.f32 %v2406, %v2419
    %2421 = vdwg.mxu0
    %2422 = vmatpush.bf16.msra.mxu0 %v1781
    %2423 = vmatpush.bf16.msra.mxu0 %v1773
    %2424 = vmatpush.bf16.msra.mxu0 %v1765
    %2425 = vmatpush.bf16.msra.mxu0 %v1757
    %2426 = vmatpush.bf16.msra.mxu0 %v1749
    %2427 = vmatpush.bf16.msra.mxu0 %v1741
    %2428 = vmatpush.bf16.msra.mxu0 %v1733
    %2429 = vmatpush.bf16.msra.mxu0 %v1725
    %2430 = vmatmul.bf16.gmra.mxu0 %v563
    %v2431 = vpop.f32.mrf.mxu0
    %v2432 = vadd.f32 %v2418, %v2431
    %v2433 = vpop.f32.mrf.mxu0
    %v2434 = vadd.f32 %v2420, %v2433
    %2435 = vdwg.mxu0
    %2436 = vmatpush.bf16.msra.mxu0 %v1845
    %2437 = vmatpush.bf16.msra.mxu0 %v1837
    %2438 = vmatpush.bf16.msra.mxu0 %v1829
    %2439 = vmatpush.bf16.msra.mxu0 %v1821
    %2440 = vmatpush.bf16.msra.mxu0 %v1813
    %2441 = vmatpush.bf16.msra.mxu0 %v1805
    %2442 = vmatpush.bf16.msra.mxu0 %v1797
    %2443 = vmatpush.bf16.msra.mxu0 %v1789
    %2444 = vmatmul.bf16.gmra.mxu0 %v564
    %v2445 = vpop.f32.mrf.mxu0
    %v2446 = vadd.f32 %v2432, %v2445
    %v2447 = vpop.f32.mrf.mxu0
    %v2448 = vadd.f32 %v2434, %v2447
    %2449 = vdwg.mxu0
    %2450 = vmatpush.bf16.msra.mxu0 %v1590
    %2451 = vmatpush.bf16.msra.mxu0 %v1582
    %2452 = vmatpush.bf16.msra.mxu0 %v1574
    %2453 = vmatpush.bf16.msra.mxu0 %v1566
    %2454 = vmatpush.bf16.msra.mxu0 %v1558
    %2455 = vmatpush.bf16.msra.mxu0 %v1550
    %2456 = vmatpush.bf16.msra.mxu0 %v1542
    %2457 = vmatpush.bf16.msra.mxu0 %v1534
    %2458 = vmatmul.bf16.gmra.mxu0 %v560
    %v2459 = vpop.f32.mrf.mxu0
    %v2460 = vadd.f32 %v532, %v2459
    %v2461 = vpop.f32.mrf.mxu0
    %v2462 = vadd.f32 %v532, %v2461
    %2463 = vdwg.mxu0
    %2464 = vmatpush.bf16.msra.mxu0 %v1654
    %2465 = vmatpush.bf16.msra.mxu0 %v1646
    %2466 = vmatpush.bf16.msra.mxu0 %v1638
    %2467 = vmatpush.bf16.msra.mxu0 %v1630
    %2468 = vmatpush.bf16.msra.mxu0 %v1622
    %2469 = vmatpush.bf16.msra.mxu0 %v1614
    %2470 = vmatpush.bf16.msra.mxu0 %v1606
    %2471 = vmatpush.bf16.msra.mxu0 %v1598
    %2472 = vmatmul.bf16.gmra.mxu0 %v561
    %v2473 = vpop.f32.mrf.mxu0
    %v2474 = vadd.f32 %v2460, %v2473
    %v2475 = vpop.f32.mrf.mxu0
    %v2476 = vadd.f32 %v2462, %v2475
    %2477 = vdwg.mxu0
    %2478 = vmatpush.bf16.msra.mxu0 %v1718
    %2479 = vmatpush.bf16.msra.mxu0 %v1710
    %2480 = vmatpush.bf16.msra.mxu0 %v1702
    %2481 = vmatpush.bf16.msra.mxu0 %v1694
    %2482 = vmatpush.bf16.msra.mxu0 %v1686
    %2483 = vmatpush.bf16.msra.mxu0 %v1678
    %2484 = vmatpush.bf16.msra.mxu0 %v1670
    %2485 = vmatpush.bf16.msra.mxu0 %v1662
    %2486 = vmatmul.bf16.gmra.mxu0 %v562
    %v2487 = vpop.f32.mrf.mxu0
    %v2488 = vadd.f32 %v2474, %v2487
    %v2489 = vpop.f32.mrf.mxu0
    %v2490 = vadd.f32 %v2476, %v2489
    %2491 = vdwg.mxu0
    %2492 = vmatpush.bf16.msra.mxu0 %v1782
    %2493 = vmatpush.bf16.msra.mxu0 %v1774
    %2494 = vmatpush.bf16.msra.mxu0 %v1766
    %2495 = vmatpush.bf16.msra.mxu0 %v1758
    %2496 = vmatpush.bf16.msra.mxu0 %v1750
    %2497 = vmatpush.bf16.msra.mxu0 %v1742
    %2498 = vmatpush.bf16.msra.mxu0 %v1734
    %2499 = vmatpush.bf16.msra.mxu0 %v1726
    %2500 = vmatmul.bf16.gmra.mxu0 %v563
    %v2501 = vpop.f32.mrf.mxu0
    %v2502 = vadd.f32 %v2488, %v2501
    %v2503 = vpop.f32.mrf.mxu0
    %v2504 = vadd.f32 %v2490, %v2503
    %2505 = vdwg.mxu0
    %2506 = vmatpush.bf16.msra.mxu0 %v1846
    %2507 = vmatpush.bf16.msra.mxu0 %v1838
    %2508 = vmatpush.bf16.msra.mxu0 %v1830
    %2509 = vmatpush.bf16.msra.mxu0 %v1822
    %2510 = vmatpush.bf16.msra.mxu0 %v1814
    %2511 = vmatpush.bf16.msra.mxu0 %v1806
    %2512 = vmatpush.bf16.msra.mxu0 %v1798
    %2513 = vmatpush.bf16.msra.mxu0 %v1790
    %2514 = vmatmul.bf16.gmra.mxu0 %v564
    %v2515 = vpop.f32.mrf.mxu0
    %v2516 = vadd.f32 %v2502, %v2515
    %v2517 = vpop.f32.mrf.mxu0
    %v2518 = vadd.f32 %v2504, %v2517
    %2519 = vdwg.mxu0
    %2520 = vmatpush.bf16.msra.mxu0 %v1591
    %2521 = vmatpush.bf16.msra.mxu0 %v1583
    %2522 = vmatpush.bf16.msra.mxu0 %v1575
    %2523 = vmatpush.bf16.msra.mxu0 %v1567
    %2524 = vmatpush.bf16.msra.mxu0 %v1559
    %2525 = vmatpush.bf16.msra.mxu0 %v1551
    %2526 = vmatpush.bf16.msra.mxu0 %v1543
    %2527 = vmatpush.bf16.msra.mxu0 %v1535
    %2528 = vmatmul.bf16.gmra.mxu0 %v560
    %v2529 = vpop.f32.mrf.mxu0
    %v2530 = vadd.f32 %v533, %v2529
    %v2531 = vpop.f32.mrf.mxu0
    %v2532 = vadd.f32 %v533, %v2531
    %2533 = vdwg.mxu0
    %2534 = vmatpush.bf16.msra.mxu0 %v1655
    %2535 = vmatpush.bf16.msra.mxu0 %v1647
    %2536 = vmatpush.bf16.msra.mxu0 %v1639
    %2537 = vmatpush.bf16.msra.mxu0 %v1631
    %2538 = vmatpush.bf16.msra.mxu0 %v1623
    %2539 = vmatpush.bf16.msra.mxu0 %v1615
    %2540 = vmatpush.bf16.msra.mxu0 %v1607
    %2541 = vmatpush.bf16.msra.mxu0 %v1599
    %2542 = vmatmul.bf16.gmra.mxu0 %v561
    %v2543 = vpop.f32.mrf.mxu0
    %v2544 = vadd.f32 %v2530, %v2543
    %v2545 = vpop.f32.mrf.mxu0
    %v2546 = vadd.f32 %v2532, %v2545
    %2547 = vdwg.mxu0
    %2548 = vmatpush.bf16.msra.mxu0 %v1719
    %2549 = vmatpush.bf16.msra.mxu0 %v1711
    %2550 = vmatpush.bf16.msra.mxu0 %v1703
    %2551 = vmatpush.bf16.msra.mxu0 %v1695
    %2552 = vmatpush.bf16.msra.mxu0 %v1687
    %2553 = vmatpush.bf16.msra.mxu0 %v1679
    %2554 = vmatpush.bf16.msra.mxu0 %v1671
    %2555 = vmatpush.bf16.msra.mxu0 %v1663
    %2556 = vmatmul.bf16.gmra.mxu0 %v562
    %v2557 = vpop.f32.mrf.mxu0
    %v2558 = vadd.f32 %v2544, %v2557
    %v2559 = vpop.f32.mrf.mxu0
    %v2560 = vadd.f32 %v2546, %v2559
    %2561 = vdwg.mxu0
    %2562 = vmatpush.bf16.msra.mxu0 %v1783
    %2563 = vmatpush.bf16.msra.mxu0 %v1775
    %2564 = vmatpush.bf16.msra.mxu0 %v1767
    %2565 = vmatpush.bf16.msra.mxu0 %v1759
    %2566 = vmatpush.bf16.msra.mxu0 %v1751
    %2567 = vmatpush.bf16.msra.mxu0 %v1743
    %2568 = vmatpush.bf16.msra.mxu0 %v1735
    %2569 = vmatpush.bf16.msra.mxu0 %v1727
    %2570 = vmatmul.bf16.gmra.mxu0 %v563
    %v2571 = vpop.f32.mrf.mxu0
    %v2572 = vadd.f32 %v2558, %v2571
    %v2573 = vpop.f32.mrf.mxu0
    %v2574 = vadd.f32 %v2560, %v2573
    %2575 = vdwg.mxu0
    %2576 = vmatpush.bf16.msra.mxu0 %v1847
    %2577 = vmatpush.bf16.msra.mxu0 %v1839
    %2578 = vmatpush.bf16.msra.mxu0 %v1831
    %2579 = vmatpush.bf16.msra.mxu0 %v1823
    %2580 = vmatpush.bf16.msra.mxu0 %v1815
    %2581 = vmatpush.bf16.msra.mxu0 %v1807
    %2582 = vmatpush.bf16.msra.mxu0 %v1799
    %2583 = vmatpush.bf16.msra.mxu0 %v1791
    %2584 = vmatmul.bf16.gmra.mxu0 %v564
    %v2585 = vpop.f32.mrf.mxu0
    %v2586 = vadd.f32 %v2572, %v2585
    %v2587 = vpop.f32.mrf.mxu0
    %v2588 = vadd.f32 %v2574, %v2587
    %2589 = vdwg.mxu0
    %2590 = vmatpush.bf16.msra.mxu0 %v1592
    %2591 = vmatpush.bf16.msra.mxu0 %v1584
    %2592 = vmatpush.bf16.msra.mxu0 %v1576
    %2593 = vmatpush.bf16.msra.mxu0 %v1568
    %2594 = vmatpush.bf16.msra.mxu0 %v1560
    %2595 = vmatpush.bf16.msra.mxu0 %v1552
    %2596 = vmatpush.bf16.msra.mxu0 %v1544
    %2597 = vmatpush.bf16.msra.mxu0 %v1536
    %2598 = vmatmul.bf16.gmra.mxu0 %v560
    %v2599 = vpop.f32.mrf.mxu0
    %v2600 = vadd.f32 %v534, %v2599
    %v2601 = vpop.f32.mrf.mxu0
    %v2602 = vadd.f32 %v534, %v2601
    %2603 = vdwg.mxu0
    %2604 = vmatpush.bf16.msra.mxu0 %v1656
    %2605 = vmatpush.bf16.msra.mxu0 %v1648
    %2606 = vmatpush.bf16.msra.mxu0 %v1640
    %2607 = vmatpush.bf16.msra.mxu0 %v1632
    %2608 = vmatpush.bf16.msra.mxu0 %v1624
    %2609 = vmatpush.bf16.msra.mxu0 %v1616
    %2610 = vmatpush.bf16.msra.mxu0 %v1608
    %2611 = vmatpush.bf16.msra.mxu0 %v1600
    %2612 = vmatmul.bf16.gmra.mxu0 %v561
    %v2613 = vpop.f32.mrf.mxu0
    %v2614 = vadd.f32 %v2600, %v2613
    %v2615 = vpop.f32.mrf.mxu0
    %v2616 = vadd.f32 %v2602, %v2615
    %2617 = vdwg.mxu0
    %2618 = vmatpush.bf16.msra.mxu0 %v1720
    %2619 = vmatpush.bf16.msra.mxu0 %v1712
    %2620 = vmatpush.bf16.msra.mxu0 %v1704
    %2621 = vmatpush.bf16.msra.mxu0 %v1696
    %2622 = vmatpush.bf16.msra.mxu0 %v1688
    %2623 = vmatpush.bf16.msra.mxu0 %v1680
    %2624 = vmatpush.bf16.msra.mxu0 %v1672
    %2625 = vmatpush.bf16.msra.mxu0 %v1664
    %2626 = vmatmul.bf16.gmra.mxu0 %v562
    %v2627 = vpop.f32.mrf.mxu0
    %v2628 = vadd.f32 %v2614, %v2627
    %v2629 = vpop.f32.mrf.mxu0
    %v2630 = vadd.f32 %v2616, %v2629
    %2631 = vdwg.mxu0
    %2632 = vmatpush.bf16.msra.mxu0 %v1784
    %2633 = vmatpush.bf16.msra.mxu0 %v1776
    %2634 = vmatpush.bf16.msra.mxu0 %v1768
    %2635 = vmatpush.bf16.msra.mxu0 %v1760
    %2636 = vmatpush.bf16.msra.mxu0 %v1752
    %2637 = vmatpush.bf16.msra.mxu0 %v1744
    %2638 = vmatpush.bf16.msra.mxu0 %v1736
    %2639 = vmatpush.bf16.msra.mxu0 %v1728
    %2640 = vmatmul.bf16.gmra.mxu0 %v563
    %v2641 = vpop.f32.mrf.mxu0
    %v2642 = vadd.f32 %v2628, %v2641
    %v2643 = vpop.f32.mrf.mxu0
    %v2644 = vadd.f32 %v2630, %v2643
    %2645 = vdwg.mxu0
    %2646 = vmatpush.bf16.msra.mxu0 %v1848
    %2647 = vmatpush.bf16.msra.mxu0 %v1840
    %2648 = vmatpush.bf16.msra.mxu0 %v1832
    %2649 = vmatpush.bf16.msra.mxu0 %v1824
    %2650 = vmatpush.bf16.msra.mxu0 %v1816
    %2651 = vmatpush.bf16.msra.mxu0 %v1808
    %2652 = vmatpush.bf16.msra.mxu0 %v1800
    %2653 = vmatpush.bf16.msra.mxu0 %v1792
    %2654 = vmatmul.bf16.gmra.mxu0 %v564
    %v2655 = vpop.f32.mrf.mxu0
    %v2656 = vadd.f32 %v2642, %v2655
    %v2657 = vpop.f32.mrf.mxu0
    %v2658 = vadd.f32 %v2644, %v2657
    %2659 = vdwg.mxu0
    %2660 = vmatpush.bf16.msra.mxu0 %v1593
    %2661 = vmatpush.bf16.msra.mxu0 %v1585
    %2662 = vmatpush.bf16.msra.mxu0 %v1577
    %2663 = vmatpush.bf16.msra.mxu0 %v1569
    %2664 = vmatpush.bf16.msra.mxu0 %v1561
    %2665 = vmatpush.bf16.msra.mxu0 %v1553
    %2666 = vmatpush.bf16.msra.mxu0 %v1545
    %2667 = vmatpush.bf16.msra.mxu0 %v1537
    %2668 = vmatmul.bf16.gmra.mxu0 %v560
    %v2669 = vpop.f32.mrf.mxu0
    %v2670 = vadd.f32 %v535, %v2669
    %v2671 = vpop.f32.mrf.mxu0
    %v2672 = vadd.f32 %v535, %v2671
    %2673 = vdwg.mxu0
    %2674 = vmatpush.bf16.msra.mxu0 %v1657
    %2675 = vmatpush.bf16.msra.mxu0 %v1649
    %2676 = vmatpush.bf16.msra.mxu0 %v1641
    %2677 = vmatpush.bf16.msra.mxu0 %v1633
    %2678 = vmatpush.bf16.msra.mxu0 %v1625
    %2679 = vmatpush.bf16.msra.mxu0 %v1617
    %2680 = vmatpush.bf16.msra.mxu0 %v1609
    %2681 = vmatpush.bf16.msra.mxu0 %v1601
    %2682 = vmatmul.bf16.gmra.mxu0 %v561
    %v2683 = vpop.f32.mrf.mxu0
    %v2684 = vadd.f32 %v2670, %v2683
    %v2685 = vpop.f32.mrf.mxu0
    %v2686 = vadd.f32 %v2672, %v2685
    %2687 = vdwg.mxu0
    %2688 = vmatpush.bf16.msra.mxu0 %v1721
    %2689 = vmatpush.bf16.msra.mxu0 %v1713
    %2690 = vmatpush.bf16.msra.mxu0 %v1705
    %2691 = vmatpush.bf16.msra.mxu0 %v1697
    %2692 = vmatpush.bf16.msra.mxu0 %v1689
    %2693 = vmatpush.bf16.msra.mxu0 %v1681
    %2694 = vmatpush.bf16.msra.mxu0 %v1673
    %2695 = vmatpush.bf16.msra.mxu0 %v1665
    %2696 = vmatmul.bf16.gmra.mxu0 %v562
    %v2697 = vpop.f32.mrf.mxu0
    %v2698 = vadd.f32 %v2684, %v2697
    %v2699 = vpop.f32.mrf.mxu0
    %v2700 = vadd.f32 %v2686, %v2699
    %2701 = vdwg.mxu0
    %2702 = vmatpush.bf16.msra.mxu0 %v1785
    %2703 = vmatpush.bf16.msra.mxu0 %v1777
    %2704 = vmatpush.bf16.msra.mxu0 %v1769
    %2705 = vmatpush.bf16.msra.mxu0 %v1761
    %2706 = vmatpush.bf16.msra.mxu0 %v1753
    %2707 = vmatpush.bf16.msra.mxu0 %v1745
    %2708 = vmatpush.bf16.msra.mxu0 %v1737
    %2709 = vmatpush.bf16.msra.mxu0 %v1729
    %2710 = vmatmul.bf16.gmra.mxu0 %v563
    %v2711 = vpop.f32.mrf.mxu0
    %v2712 = vadd.f32 %v2698, %v2711
    %v2713 = vpop.f32.mrf.mxu0
    %v2714 = vadd.f32 %v2700, %v2713
    %2715 = vdwg.mxu0
    %2716 = vmatpush.bf16.msra.mxu0 %v1849
    %2717 = vmatpush.bf16.msra.mxu0 %v1841
    %2718 = vmatpush.bf16.msra.mxu0 %v1833
    %2719 = vmatpush.bf16.msra.mxu0 %v1825
    %2720 = vmatpush.bf16.msra.mxu0 %v1817
    %2721 = vmatpush.bf16.msra.mxu0 %v1809
    %2722 = vmatpush.bf16.msra.mxu0 %v1801
    %2723 = vmatpush.bf16.msra.mxu0 %v1793
    %2724 = vmatmul.bf16.gmra.mxu0 %v564
    %v2725 = vpop.f32.mrf.mxu0
    %v2726 = vadd.f32 %v2712, %v2725
    %v2727 = vpop.f32.mrf.mxu0
    %v2728 = vadd.f32 %v2714, %v2727
    %2729 = vdwg.mxu0
    %v2730 = vpack.c.bf16 %v2238, %v2236
    %v2731 = vpack.c.bf16 %v2308, %v2306
    %v2732 = vpack.c.bf16 %v2378, %v2376
    %v2733 = vpack.c.bf16 %v2448, %v2446
    %v2734 = vpack.c.bf16 %v2518, %v2516
    %v2735 = vpack.c.bf16 %v2588, %v2586
    %v2736 = vpack.c.bf16 %v2658, %v2656
    %v2737 = vpack.c.bf16 %v2728, %v2726
    %v2738 = vunpack.c.l.bf16 %v2730
    %v2739 = vunpack.c.l.bf16 %v2731
    %v2740 = vunpack.c.l.bf16 %v2732
    %v2741 = vunpack.c.l.bf16 %v2733
    %v2742 = vunpack.c.l.bf16 %v2734
    %v2743 = vunpack.c.l.bf16 %v2735
    %v2744 = vunpack.c.l.bf16 %v2736
    %v2745 = vunpack.c.l.bf16 %v2737
    %v2746 = vunpack.c.h.bf16 %v2730
    %v2747 = vunpack.c.h.bf16 %v2731
    %v2748 = vunpack.c.h.bf16 %v2732
    %v2749 = vunpack.c.h.bf16 %v2733
    %v2750 = vunpack.c.h.bf16 %v2734
    %v2751 = vunpack.c.h.bf16 %v2735
    %v2752 = vunpack.c.h.bf16 %v2736
    %v2753 = vunpack.c.h.bf16 %v2737
    %v2754 = vtanh.pop %v2738
    %v2755 = vtanh.pop %v2739
    %v2756 = vtanh.pop %v2740
    %v2757 = vtanh.pop %v2741
    %v2758 = vtanh.pop %v2742
    %v2759 = vtanh.pop %v2743
    %v2760 = vtanh.pop %v2744
    %v2761 = vtanh.pop %v2745
    %v2762 = vtanh.pop %v2746
    %v2763 = vtanh.pop %v2747
    %v2764 = vtanh.pop %v2748
    %v2765 = vtanh.pop %v2749
    %v2766 = vtanh.pop %v2750
    %v2767 = vtanh.pop %v2751
    %v2768 = vtanh.pop %v2752
    %v2769 = vtanh.pop %v2753
    %v2770 = vpack.c.bf16 %v2762, %v2754
    %v2771 = vpack.c.bf16 %v2763, %v2755
    %v2772 = vpack.c.bf16 %v2764, %v2756
    %v2773 = vpack.c.bf16 %v2765, %v2757
    %v2774 = vpack.c.bf16 %v2766, %v2758
    %v2775 = vpack.c.bf16 %v2767, %v2759
    %v2776 = vpack.c.bf16 %v2768, %v2760
    %v2777 = vpack.c.bf16 %v2769, %v2761
    %v2778 = vld [vmem:[#allocation8] sm:$0xff]
    %v2779 = vld [vmem:[#allocation8 + $0x8] sm:$0xff]
    %v2780 = vld [vmem:[#allocation8 + $0x10] sm:$0xff]
    %v2781 = vld [vmem:[#allocation8 + $0x18] sm:$0xff]
    %v2782 = vld [vmem:[#allocation8 + $0x20] sm:$0xff]
    %v2783 = vld [vmem:[#allocation8 + $0x28] sm:$0xff]
    %v2784 = vld [vmem:[#allocation8 + $0x30] sm:$0xff]
    %v2785 = vld [vmem:[#allocation8 + $0x38] sm:$0xff]
    %v2786 = vld [vmem:[#allocation8 + $0x40] sm:$0xff]
    %v2787 = vld [vmem:[#allocation8 + $0x48] sm:$0xff]
    %v2788 = vld [vmem:[#allocation8 + $0x50] sm:$0xff]
    %v2789 = vld [vmem:[#allocation8 + $0x58] sm:$0xff]
    %v2790 = vld [vmem:[#allocation8 + $0x60] sm:$0xff]
    %v2791 = vld [vmem:[#allocation8 + $0x68] sm:$0xff]
    %v2792 = vld [vmem:[#allocation8 + $0x70] sm:$0xff]
    %v2793 = vld [vmem:[#allocation8 + $0x78] sm:$0xff]
    %v2794 = vld [vmem:[#allocation8 + $0x80] sm:$0xff]
    %v2795 = vld [vmem:[#allocation8 + $0x88] sm:$0xff]
    %v2796 = vld [vmem:[#allocation8 + $0x90] sm:$0xff]
    %v2797 = vld [vmem:[#allocation8 + $0x98] sm:$0xff]
    %v2798 = vld [vmem:[#allocation8 + $0xa0] sm:$0xff]
    %v2799 = vld [vmem:[#allocation8 + $0xa8] sm:$0xff]
    %v2800 = vld [vmem:[#allocation8 + $0xb0] sm:$0xff]
    %v2801 = vld [vmem:[#allocation8 + $0xb8] sm:$0xff]
    %v2802 = vld [vmem:[#allocation8 + $0xc0] sm:$0xff]
    %v2803 = vld [vmem:[#allocation8 + $0xc8] sm:$0xff]
    %v2804 = vld [vmem:[#allocation8 + $0xd0] sm:$0xff]
    %v2805 = vld [vmem:[#allocation8 + $0xd8] sm:$0xff]
    %v2806 = vld [vmem:[#allocation8 + $0xe0] sm:$0xff]
    %v2807 = vld [vmem:[#allocation8 + $0xe8] sm:$0xff]
    %v2808 = vld [vmem:[#allocation8 + $0xf0] sm:$0xff]
    %v2809 = vld [vmem:[#allocation8 + $0xf8] sm:$0xff]
    %v2810 = vld [vmem:[#allocation8 + $0x100] sm:$0xff]
    %v2811 = vld [vmem:[#allocation8 + $0x108] sm:$0xff]
    %v2812 = vld [vmem:[#allocation8 + $0x110] sm:$0xff]
    %v2813 = vld [vmem:[#allocation8 + $0x118] sm:$0xff]
    %v2814 = vld [vmem:[#allocation8 + $0x120] sm:$0xff]
    %v2815 = vld [vmem:[#allocation8 + $0x128] sm:$0xff]
    %v2816 = vld [vmem:[#allocation8 + $0x130] sm:$0xff]
    %v2817 = vld [vmem:[#allocation8 + $0x138] sm:$0xff]
    %v2818 = vld [vmem:[#allocation8 + $0x140] sm:$0xff]
    %v2819 = vld [vmem:[#allocation8 + $0x148] sm:$0xff]
    %v2820 = vld [vmem:[#allocation8 + $0x150] sm:$0xff]
    %v2821 = vld [vmem:[#allocation8 + $0x158] sm:$0xff]
    %v2822 = vld [vmem:[#allocation8 + $0x160] sm:$0xff]
    %v2823 = vld [vmem:[#allocation8 + $0x168] sm:$0xff]
    %v2824 = vld [vmem:[#allocation8 + $0x170] sm:$0xff]
    %v2825 = vld [vmem:[#allocation8 + $0x178] sm:$0xff]
    %v2826 = vld [vmem:[#allocation8 + $0x180] sm:$0xff]
    %v2827 = vld [vmem:[#allocation8 + $0x188] sm:$0xff]
    %v2828 = vld [vmem:[#allocation8 + $0x190] sm:$0xff]
    %v2829 = vld [vmem:[#allocation8 + $0x198] sm:$0xff]
    %v2830 = vld [vmem:[#allocation8 + $0x1a0] sm:$0xff]
    %v2831 = vld [vmem:[#allocation8 + $0x1a8] sm:$0xff]
    %v2832 = vld [vmem:[#allocation8 + $0x1b0] sm:$0xff]
    %v2833 = vld [vmem:[#allocation8 + $0x1b8] sm:$0xff]
    %v2834 = vld [vmem:[#allocation8 + $0x1c0] sm:$0xff]
    %v2835 = vld [vmem:[#allocation8 + $0x1c8] sm:$0xff]
    %v2836 = vld [vmem:[#allocation8 + $0x1d0] sm:$0xff]
    %v2837 = vld [vmem:[#allocation8 + $0x1d8] sm:$0xff]
    %v2838 = vld [vmem:[#allocation8 + $0x1e0] sm:$0xff]
    %v2839 = vld [vmem:[#allocation8 + $0x1e8] sm:$0xff]
    %v2840 = vld [vmem:[#allocation8 + $0x1f0] sm:$0xff]
    %v2841 = vld [vmem:[#allocation8 + $0x1f8] sm:$0xff]
    %v2842 = vld [vmem:[#allocation8 + $0x200] sm:$0xff]
    %v2843 = vld [vmem:[#allocation8 + $0x208] sm:$0xff]
    %v2844 = vld [vmem:[#allocation8 + $0x210] sm:$0xff]
    %v2845 = vld [vmem:[#allocation8 + $0x218] sm:$0xff]
    %v2846 = vld [vmem:[#allocation8 + $0x220] sm:$0xff]
    %v2847 = vld [vmem:[#allocation8 + $0x228] sm:$0xff]
    %v2848 = vld [vmem:[#allocation8 + $0x230] sm:$0xff]
    %v2849 = vld [vmem:[#allocation8 + $0x238] sm:$0xff]
    %v2850 = vld [vmem:[#allocation8 + $0x240] sm:$0xff]
    %v2851 = vld [vmem:[#allocation8 + $0x248] sm:$0xff]
    %v2852 = vld [vmem:[#allocation8 + $0x250] sm:$0xff]
    %v2853 = vld [vmem:[#allocation8 + $0x258] sm:$0xff]
    %v2854 = vld [vmem:[#allocation8 + $0x260] sm:$0xff]
    %v2855 = vld [vmem:[#allocation8 + $0x268] sm:$0xff]
    %v2856 = vld [vmem:[#allocation8 + $0x270] sm:$0xff]
    %v2857 = vld [vmem:[#allocation8 + $0x278] sm:$0xff]
    %v2858 = vld [vmem:[#allocation8 + $0x280] sm:$0xff]
    %v2859 = vld [vmem:[#allocation8 + $0x288] sm:$0xff]
    %v2860 = vld [vmem:[#allocation8 + $0x290] sm:$0xff]
    %v2861 = vld [vmem:[#allocation8 + $0x298] sm:$0xff]
    %v2862 = vld [vmem:[#allocation8 + $0x2a0] sm:$0xff]
    %v2863 = vld [vmem:[#allocation8 + $0x2a8] sm:$0xff]
    %v2864 = vld [vmem:[#allocation8 + $0x2b0] sm:$0xff]
    %v2865 = vld [vmem:[#allocation8 + $0x2b8] sm:$0xff]
    %v2866 = vld [vmem:[#allocation8 + $0x2c0] sm:$0xff]
    %v2867 = vld [vmem:[#allocation8 + $0x2c8] sm:$0xff]
    %v2868 = vld [vmem:[#allocation8 + $0x2d0] sm:$0xff]
    %v2869 = vld [vmem:[#allocation8 + $0x2d8] sm:$0xff]
    %v2870 = vld [vmem:[#allocation8 + $0x2e0] sm:$0xff]
    %v2871 = vld [vmem:[#allocation8 + $0x2e8] sm:$0xff]
    %v2872 = vld [vmem:[#allocation8 + $0x2f0] sm:$0xff]
    %v2873 = vld [vmem:[#allocation8 + $0x2f8] sm:$0xff]
    %v2874 = vld [vmem:[#allocation8 + $0x300] sm:$0xff]
    %v2875 = vld [vmem:[#allocation8 + $0x308] sm:$0xff]
    %v2876 = vld [vmem:[#allocation8 + $0x310] sm:$0xff]
    %v2877 = vld [vmem:[#allocation8 + $0x318] sm:$0xff]
    %v2878 = vld [vmem:[#allocation8 + $0x320] sm:$0xff]
    %v2879 = vld [vmem:[#allocation8 + $0x328] sm:$0xff]
    %v2880 = vld [vmem:[#allocation8 + $0x330] sm:$0xff]
    %v2881 = vld [vmem:[#allocation8 + $0x338] sm:$0xff]
    %v2882 = vld [vmem:[#allocation8 + $0x340] sm:$0xff]
    %v2883 = vld [vmem:[#allocation8 + $0x348] sm:$0xff]
    %v2884 = vld [vmem:[#allocation8 + $0x350] sm:$0xff]
    %v2885 = vld [vmem:[#allocation8 + $0x358] sm:$0xff]
    %v2886 = vld [vmem:[#allocation8 + $0x360] sm:$0xff]
    %v2887 = vld [vmem:[#allocation8 + $0x368] sm:$0xff]
    %v2888 = vld [vmem:[#allocation8 + $0x370] sm:$0xff]
    %v2889 = vld [vmem:[#allocation8 + $0x378] sm:$0xff]
    %v2890 = vld [vmem:[#allocation8 + $0x380] sm:$0xff]
    %v2891 = vld [vmem:[#allocation8 + $0x388] sm:$0xff]
    %v2892 = vld [vmem:[#allocation8 + $0x390] sm:$0xff]
    %v2893 = vld [vmem:[#allocation8 + $0x398] sm:$0xff]
    %v2894 = vld [vmem:[#allocation8 + $0x3a0] sm:$0xff]
    %v2895 = vld [vmem:[#allocation8 + $0x3a8] sm:$0xff]
    %v2896 = vld [vmem:[#allocation8 + $0x3b0] sm:$0xff]
    %v2897 = vld [vmem:[#allocation8 + $0x3b8] sm:$0xff]
    %v2898 = vld [vmem:[#allocation8 + $0x3c0] sm:$0xff]
    %v2899 = vld [vmem:[#allocation8 + $0x3c8] sm:$0xff]
    %v2900 = vld [vmem:[#allocation8 + $0x3d0] sm:$0xff]
    %v2901 = vld [vmem:[#allocation8 + $0x3d8] sm:$0xff]
    %v2902 = vld [vmem:[#allocation8 + $0x3e0] sm:$0xff]
    %v2903 = vld [vmem:[#allocation8 + $0x3e8] sm:$0xff]
    %v2904 = vld [vmem:[#allocation8 + $0x3f0] sm:$0xff]
    %v2905 = vld [vmem:[#allocation8 + $0x3f8] sm:$0xff]
    %v2906 = vld [vmem:[#allocation8 + $0x400] sm:$0xff]
    %v2907 = vld [vmem:[#allocation8 + $0x408] sm:$0xff]
    %v2908 = vld [vmem:[#allocation8 + $0x410] sm:$0xff]
    %v2909 = vld [vmem:[#allocation8 + $0x418] sm:$0xff]
    %v2910 = vld [vmem:[#allocation8 + $0x420] sm:$0xff]
    %v2911 = vld [vmem:[#allocation8 + $0x428] sm:$0xff]
    %v2912 = vld [vmem:[#allocation8 + $0x430] sm:$0xff]
    %v2913 = vld [vmem:[#allocation8 + $0x438] sm:$0xff]
    %v2914 = vld [vmem:[#allocation8 + $0x440] sm:$0xff]
    %v2915 = vld [vmem:[#allocation8 + $0x448] sm:$0xff]
    %v2916 = vld [vmem:[#allocation8 + $0x450] sm:$0xff]
    %v2917 = vld [vmem:[#allocation8 + $0x458] sm:$0xff]
    %v2918 = vld [vmem:[#allocation8 + $0x460] sm:$0xff]
    %v2919 = vld [vmem:[#allocation8 + $0x468] sm:$0xff]
    %v2920 = vld [vmem:[#allocation8 + $0x470] sm:$0xff]
    %v2921 = vld [vmem:[#allocation8 + $0x478] sm:$0xff]
    %v2922 = vld [vmem:[#allocation8 + $0x480] sm:$0xff]
    %v2923 = vld [vmem:[#allocation8 + $0x488] sm:$0xff]
    %v2924 = vld [vmem:[#allocation8 + $0x490] sm:$0xff]
    %v2925 = vld [vmem:[#allocation8 + $0x498] sm:$0xff]
    %v2926 = vld [vmem:[#allocation8 + $0x4a0] sm:$0xff]
    %v2927 = vld [vmem:[#allocation8 + $0x4a8] sm:$0xff]
    %v2928 = vld [vmem:[#allocation8 + $0x4b0] sm:$0xff]
    %v2929 = vld [vmem:[#allocation8 + $0x4b8] sm:$0xff]
    %v2930 = vld [vmem:[#allocation8 + $0x4c0] sm:$0xff]
    %v2931 = vld [vmem:[#allocation8 + $0x4c8] sm:$0xff]
    %v2932 = vld [vmem:[#allocation8 + $0x4d0] sm:$0xff]
    %v2933 = vld [vmem:[#allocation8 + $0x4d8] sm:$0xff]
    %v2934 = vld [vmem:[#allocation8 + $0x4e0] sm:$0xff]
    %v2935 = vld [vmem:[#allocation8 + $0x4e8] sm:$0xff]
    %v2936 = vld [vmem:[#allocation8 + $0x4f0] sm:$0xff]
    %v2937 = vld [vmem:[#allocation8 + $0x4f8] sm:$0xff]
    %v2938 = vld [vmem:[#allocation8 + $0x500] sm:$0xff]
    %v2939 = vld [vmem:[#allocation8 + $0x508] sm:$0xff]
    %v2940 = vld [vmem:[#allocation8 + $0x510] sm:$0xff]
    %v2941 = vld [vmem:[#allocation8 + $0x518] sm:$0xff]
    %v2942 = vld [vmem:[#allocation8 + $0x520] sm:$0xff]
    %v2943 = vld [vmem:[#allocation8 + $0x528] sm:$0xff]
    %v2944 = vld [vmem:[#allocation8 + $0x530] sm:$0xff]
    %v2945 = vld [vmem:[#allocation8 + $0x538] sm:$0xff]
    %v2946 = vld [vmem:[#allocation8 + $0x540] sm:$0xff]
    %v2947 = vld [vmem:[#allocation8 + $0x548] sm:$0xff]
    %v2948 = vld [vmem:[#allocation8 + $0x550] sm:$0xff]
    %v2949 = vld [vmem:[#allocation8 + $0x558] sm:$0xff]
    %v2950 = vld [vmem:[#allocation8 + $0x560] sm:$0xff]
    %v2951 = vld [vmem:[#allocation8 + $0x568] sm:$0xff]
    %v2952 = vld [vmem:[#allocation8 + $0x570] sm:$0xff]
    %v2953 = vld [vmem:[#allocation8 + $0x578] sm:$0xff]
    %v2954 = vld [vmem:[#allocation8 + $0x580] sm:$0xff]
    %v2955 = vld [vmem:[#allocation8 + $0x588] sm:$0xff]
    %v2956 = vld [vmem:[#allocation8 + $0x590] sm:$0xff]
    %v2957 = vld [vmem:[#allocation8 + $0x598] sm:$0xff]
    %v2958 = vld [vmem:[#allocation8 + $0x5a0] sm:$0xff]
    %v2959 = vld [vmem:[#allocation8 + $0x5a8] sm:$0xff]
    %v2960 = vld [vmem:[#allocation8 + $0x5b0] sm:$0xff]
    %v2961 = vld [vmem:[#allocation8 + $0x5b8] sm:$0xff]
    %v2962 = vld [vmem:[#allocation8 + $0x5c0] sm:$0xff]
    %v2963 = vld [vmem:[#allocation8 + $0x5c8] sm:$0xff]
    %v2964 = vld [vmem:[#allocation8 + $0x5d0] sm:$0xff]
    %v2965 = vld [vmem:[#allocation8 + $0x5d8] sm:$0xff]
    %v2966 = vld [vmem:[#allocation8 + $0x5e0] sm:$0xff]
    %v2967 = vld [vmem:[#allocation8 + $0x5e8] sm:$0xff]
    %v2968 = vld [vmem:[#allocation8 + $0x5f0] sm:$0xff]
    %v2969 = vld [vmem:[#allocation8 + $0x5f8] sm:$0xff]
    %v2970 = vld [vmem:[#allocation8 + $0x600] sm:$0xff]
    %v2971 = vld [vmem:[#allocation8 + $0x608] sm:$0xff]
    %v2972 = vld [vmem:[#allocation8 + $0x610] sm:$0xff]
    %v2973 = vld [vmem:[#allocation8 + $0x618] sm:$0xff]
    %v2974 = vld [vmem:[#allocation8 + $0x620] sm:$0xff]
    %v2975 = vld [vmem:[#allocation8 + $0x628] sm:$0xff]
    %v2976 = vld [vmem:[#allocation8 + $0x630] sm:$0xff]
    %v2977 = vld [vmem:[#allocation8 + $0x638] sm:$0xff]
    %v2978 = vld [vmem:[#allocation8 + $0x640] sm:$0xff]
    %v2979 = vld [vmem:[#allocation8 + $0x648] sm:$0xff]
    %v2980 = vld [vmem:[#allocation8 + $0x650] sm:$0xff]
    %v2981 = vld [vmem:[#allocation8 + $0x658] sm:$0xff]
    %v2982 = vld [vmem:[#allocation8 + $0x660] sm:$0xff]
    %v2983 = vld [vmem:[#allocation8 + $0x668] sm:$0xff]
    %v2984 = vld [vmem:[#allocation8 + $0x670] sm:$0xff]
    %v2985 = vld [vmem:[#allocation8 + $0x678] sm:$0xff]
    %v2986 = vld [vmem:[#allocation8 + $0x680] sm:$0xff]
    %v2987 = vld [vmem:[#allocation8 + $0x688] sm:$0xff]
    %v2988 = vld [vmem:[#allocation8 + $0x690] sm:$0xff]
    %v2989 = vld [vmem:[#allocation8 + $0x698] sm:$0xff]
    %v2990 = vld [vmem:[#allocation8 + $0x6a0] sm:$0xff]
    %v2991 = vld [vmem:[#allocation8 + $0x6a8] sm:$0xff]
    %v2992 = vld [vmem:[#allocation8 + $0x6b0] sm:$0xff]
    %v2993 = vld [vmem:[#allocation8 + $0x6b8] sm:$0xff]
    %v2994 = vld [vmem:[#allocation8 + $0x6c0] sm:$0xff]
    %v2995 = vld [vmem:[#allocation8 + $0x6c8] sm:$0xff]
    %v2996 = vld [vmem:[#allocation8 + $0x6d0] sm:$0xff]
    %v2997 = vld [vmem:[#allocation8 + $0x6d8] sm:$0xff]
    %v2998 = vld [vmem:[#allocation8 + $0x6e0] sm:$0xff]
    %v2999 = vld [vmem:[#allocation8 + $0x6e8] sm:$0xff]
    %v3000 = vld [vmem:[#allocation8 + $0x6f0] sm:$0xff]
    %v3001 = vld [vmem:[#allocation8 + $0x6f8] sm:$0xff]
    %v3002 = vld [vmem:[#allocation8 + $0x700] sm:$0xff]
    %v3003 = vld [vmem:[#allocation8 + $0x708] sm:$0xff]
    %v3004 = vld [vmem:[#allocation8 + $0x710] sm:$0xff]
    %v3005 = vld [vmem:[#allocation8 + $0x718] sm:$0xff]
    %v3006 = vld [vmem:[#allocation8 + $0x720] sm:$0xff]
    %v3007 = vld [vmem:[#allocation8 + $0x728] sm:$0xff]
    %v3008 = vld [vmem:[#allocation8 + $0x730] sm:$0xff]
    %v3009 = vld [vmem:[#allocation8 + $0x738] sm:$0xff]
    %v3010 = vld [vmem:[#allocation8 + $0x740] sm:$0xff]
    %v3011 = vld [vmem:[#allocation8 + $0x748] sm:$0xff]
    %v3012 = vld [vmem:[#allocation8 + $0x750] sm:$0xff]
    %v3013 = vld [vmem:[#allocation8 + $0x758] sm:$0xff]
    %v3014 = vld [vmem:[#allocation8 + $0x760] sm:$0xff]
    %v3015 = vld [vmem:[#allocation8 + $0x768] sm:$0xff]
    %v3016 = vld [vmem:[#allocation8 + $0x770] sm:$0xff]
    %v3017 = vld [vmem:[#allocation8 + $0x778] sm:$0xff]
    %v3018 = vld [vmem:[#allocation8 + $0x780] sm:$0xff]
    %v3019 = vld [vmem:[#allocation8 + $0x788] sm:$0xff]
    %v3020 = vld [vmem:[#allocation8 + $0x790] sm:$0xff]
    %v3021 = vld [vmem:[#allocation8 + $0x798] sm:$0xff]
    %v3022 = vld [vmem:[#allocation8 + $0x7a0] sm:$0xff]
    %v3023 = vld [vmem:[#allocation8 + $0x7a8] sm:$0xff]
    %v3024 = vld [vmem:[#allocation8 + $0x7b0] sm:$0xff]
    %v3025 = vld [vmem:[#allocation8 + $0x7b8] sm:$0xff]
    %v3026 = vld [vmem:[#allocation8 + $0x7c0] sm:$0xff]
    %v3027 = vld [vmem:[#allocation8 + $0x7c8] sm:$0xff]
    %v3028 = vld [vmem:[#allocation8 + $0x7d0] sm:$0xff]
    %v3029 = vld [vmem:[#allocation8 + $0x7d8] sm:$0xff]
    %v3030 = vld [vmem:[#allocation8 + $0x7e0] sm:$0xff]
    %v3031 = vld [vmem:[#allocation8 + $0x7e8] sm:$0xff]
    %v3032 = vld [vmem:[#allocation8 + $0x7f0] sm:$0xff]
    %v3033 = vld [vmem:[#allocation8 + $0x7f8] sm:$0xff]
    %v3034 = vld [vmem:[#allocation10] sm:$0xf]
    %v3036 = vperm.slane %v3034, 0
    %v3037 = vperm.slane %v3034, 1
    %v3038 = vperm.slane %v3034, 2
    %v3039 = vperm.slane %v3034, 3
    %v3300 = vunpack.c.l.b16 %v2778
    %v3301 = vunpack.c.h.b16 %v2778
    %v3302 = vunpack.c.l.b16 %v2779
    %v3303 = vunpack.c.h.b16 %v2779
    %v3304 = vunpack.c.l.b16 %v2780
    %v3305 = vunpack.c.h.b16 %v2780
    %v3306 = vunpack.c.l.b16 %v2781
    %v3307 = vunpack.c.h.b16 %v2781
    %v3308 = vunpack.c.l.b16 %v2782
    %v3309 = vunpack.c.h.b16 %v2782
    %v3310 = vunpack.c.l.b16 %v2783
    %v3311 = vunpack.c.h.b16 %v2783
    %v3312 = vunpack.c.l.b16 %v2784
    %v3313 = vunpack.c.h.b16 %v2784
    %v3314 = vunpack.c.l.b16 %v2785
    %v3315 = vunpack.c.h.b16 %v2785
    %v3316 = vunpack.c.l.b16 %v2786
    %v3317 = vunpack.c.h.b16 %v2786
    %v3318 = vunpack.c.l.b16 %v2787
    %v3319 = vunpack.c.h.b16 %v2787
    %v3320 = vunpack.c.l.b16 %v2788
    %v3321 = vunpack.c.h.b16 %v2788
    %v3322 = vunpack.c.l.b16 %v2789
    %v3323 = vunpack.c.h.b16 %v2789
    %v3324 = vunpack.c.l.b16 %v2790
    %v3325 = vunpack.c.h.b16 %v2790
    %v3326 = vunpack.c.l.b16 %v2791
    %v3327 = vunpack.c.h.b16 %v2791
    %v3328 = vunpack.c.l.b16 %v2792
    %v3329 = vunpack.c.h.b16 %v2792
    %v3330 = vunpack.c.l.b16 %v2793
    %v3331 = vunpack.c.h.b16 %v2793
    %v3332 = vunpack.c.l.b16 %v2794
    %v3333 = vunpack.c.h.b16 %v2794
    %v3334 = vunpack.c.l.b16 %v2795
    %v3335 = vunpack.c.h.b16 %v2795
    %v3336 = vunpack.c.l.b16 %v2796
    %v3337 = vunpack.c.h.b16 %v2796
    %v3338 = vunpack.c.l.b16 %v2797
    %v3339 = vunpack.c.h.b16 %v2797
    %v3340 = vunpack.c.l.b16 %v2798
    %v3341 = vunpack.c.h.b16 %v2798
    %v3342 = vunpack.c.l.b16 %v2799
    %v3343 = vunpack.c.h.b16 %v2799
    %v3344 = vunpack.c.l.b16 %v2800
    %v3345 = vunpack.c.h.b16 %v2800
    %v3346 = vunpack.c.l.b16 %v2801
    %v3347 = vunpack.c.h.b16 %v2801
    %v3348 = vunpack.c.l.b16 %v2802
    %v3349 = vunpack.c.h.b16 %v2802
    %v3350 = vunpack.c.l.b16 %v2803
    %v3351 = vunpack.c.h.b16 %v2803
    %v3352 = vunpack.c.l.b16 %v2804
    %v3353 = vunpack.c.h.b16 %v2804
    %v3354 = vunpack.c.l.b16 %v2805
    %v3355 = vunpack.c.h.b16 %v2805
    %v3356 = vunpack.c.l.b16 %v2806
    %v3357 = vunpack.c.h.b16 %v2806
    %v3358 = vunpack.c.l.b16 %v2807
    %v3359 = vunpack.c.h.b16 %v2807
    %v3360 = vunpack.c.l.b16 %v2808
    %v3361 = vunpack.c.h.b16 %v2808
    %v3362 = vunpack.c.l.b16 %v2809
    %v3363 = vunpack.c.h.b16 %v2809
    %v3364 = vunpack.c.l.b16 %v2810
    %v3365 = vunpack.c.h.b16 %v2810
    %v3366 = vunpack.c.l.b16 %v2811
    %v3367 = vunpack.c.h.b16 %v2811
    %v3368 = vunpack.c.l.b16 %v2812
    %v3369 = vunpack.c.h.b16 %v2812
    %v3370 = vunpack.c.l.b16 %v2813
    %v3371 = vunpack.c.h.b16 %v2813
    %v3372 = vunpack.c.l.b16 %v2814
    %v3373 = vunpack.c.h.b16 %v2814
    %v3374 = vunpack.c.l.b16 %v2815
    %v3375 = vunpack.c.h.b16 %v2815
    %v3376 = vunpack.c.l.b16 %v2816
    %v3377 = vunpack.c.h.b16 %v2816
    %v3378 = vunpack.c.l.b16 %v2817
    %v3379 = vunpack.c.h.b16 %v2817
    %v3380 = vunpack.c.l.b16 %v2818
    %v3381 = vunpack.c.h.b16 %v2818
    %v3382 = vunpack.c.l.b16 %v2819
    %v3383 = vunpack.c.h.b16 %v2819
    %v3384 = vunpack.c.l.b16 %v2820
    %v3385 = vunpack.c.h.b16 %v2820
    %v3386 = vunpack.c.l.b16 %v2821
    %v3387 = vunpack.c.h.b16 %v2821
    %v3388 = vunpack.c.l.b16 %v2822
    %v3389 = vunpack.c.h.b16 %v2822
    %v3390 = vunpack.c.l.b16 %v2823
    %v3391 = vunpack.c.h.b16 %v2823
    %v3392 = vunpack.c.l.b16 %v2824
    %v3393 = vunpack.c.h.b16 %v2824
    %v3394 = vunpack.c.l.b16 %v2825
    %v3395 = vunpack.c.h.b16 %v2825
    %v3396 = vunpack.c.l.b16 %v2826
    %v3397 = vunpack.c.h.b16 %v2826
    %v3398 = vunpack.c.l.b16 %v2827
    %v3399 = vunpack.c.h.b16 %v2827
    %v3400 = vunpack.c.l.b16 %v2828
    %v3401 = vunpack.c.h.b16 %v2828
    %v3402 = vunpack.c.l.b16 %v2829
    %v3403 = vunpack.c.h.b16 %v2829
    %v3404 = vunpack.c.l.b16 %v2830
    %v3405 = vunpack.c.h.b16 %v2830
    %v3406 = vunpack.c.l.b16 %v2831
    %v3407 = vunpack.c.h.b16 %v2831
    %v3408 = vunpack.c.l.b16 %v2832
    %v3409 = vunpack.c.h.b16 %v2832
    %v3410 = vunpack.c.l.b16 %v2833
    %v3411 = vunpack.c.h.b16 %v2833
    %v3412 = vunpack.c.l.b16 %v2834
    %v3413 = vunpack.c.h.b16 %v2834
    %v3414 = vunpack.c.l.b16 %v2835
    %v3415 = vunpack.c.h.b16 %v2835
    %v3416 = vunpack.c.l.b16 %v2836
    %v3417 = vunpack.c.h.b16 %v2836
    %v3418 = vunpack.c.l.b16 %v2837
    %v3419 = vunpack.c.h.b16 %v2837
    %v3420 = vunpack.c.l.b16 %v2838
    %v3421 = vunpack.c.h.b16 %v2838
    %v3422 = vunpack.c.l.b16 %v2839
    %v3423 = vunpack.c.h.b16 %v2839
    %v3424 = vunpack.c.l.b16 %v2840
    %v3425 = vunpack.c.h.b16 %v2840
    %v3426 = vunpack.c.l.b16 %v2841
    %v3427 = vunpack.c.h.b16 %v2841
    %v3428 = vunpack.c.l.b16 %v2842
    %v3429 = vunpack.c.h.b16 %v2842
    %v3430 = vunpack.c.l.b16 %v2843
    %v3431 = vunpack.c.h.b16 %v2843
    %v3432 = vunpack.c.l.b16 %v2844
    %v3433 = vunpack.c.h.b16 %v2844
    %v3434 = vunpack.c.l.b16 %v2845
    %v3435 = vunpack.c.h.b16 %v2845
    %v3436 = vunpack.c.l.b16 %v2846
    %v3437 = vunpack.c.h.b16 %v2846
    %v3438 = vunpack.c.l.b16 %v2847
    %v3439 = vunpack.c.h.b16 %v2847
    %v3440 = vunpack.c.l.b16 %v2848
    %v3441 = vunpack.c.h.b16 %v2848
    %v3442 = vunpack.c.l.b16 %v2849
    %v3443 = vunpack.c.h.b16 %v2849
    %v3444 = vunpack.c.l.b16 %v2850
    %v3445 = vunpack.c.h.b16 %v2850
    %v3446 = vunpack.c.l.b16 %v2851
    %v3447 = vunpack.c.h.b16 %v2851
    %v3448 = vunpack.c.l.b16 %v2852
    %v3449 = vunpack.c.h.b16 %v2852
    %v3450 = vunpack.c.l.b16 %v2853
    %v3451 = vunpack.c.h.b16 %v2853
    %v3452 = vunpack.c.l.b16 %v2854
    %v3453 = vunpack.c.h.b16 %v2854
    %v3454 = vunpack.c.l.b16 %v2855
    %v3455 = vunpack.c.h.b16 %v2855
    %v3456 = vunpack.c.l.b16 %v2856
    %v3457 = vunpack.c.h.b16 %v2856
    %v3458 = vunpack.c.l.b16 %v2857
    %v3459 = vunpack.c.h.b16 %v2857
    %v3460 = vunpack.c.l.b16 %v2858
    %v3461 = vunpack.c.h.b16 %v2858
    %v3462 = vunpack.c.l.b16 %v2859
    %v3463 = vunpack.c.h.b16 %v2859
    %v3464 = vunpack.c.l.b16 %v2860
    %v3465 = vunpack.c.h.b16 %v2860
    %v3466 = vunpack.c.l.b16 %v2861
    %v3467 = vunpack.c.h.b16 %v2861
    %v3468 = vunpack.c.l.b16 %v2862
    %v3469 = vunpack.c.h.b16 %v2862
    %v3470 = vunpack.c.l.b16 %v2863
    %v3471 = vunpack.c.h.b16 %v2863
    %v3472 = vunpack.c.l.b16 %v2864
    %v3473 = vunpack.c.h.b16 %v2864
    %v3474 = vunpack.c.l.b16 %v2865
    %v3475 = vunpack.c.h.b16 %v2865
    %v3476 = vunpack.c.l.b16 %v2866
    %v3477 = vunpack.c.h.b16 %v2866
    %v3478 = vunpack.c.l.b16 %v2867
    %v3479 = vunpack.c.h.b16 %v2867
    %v3480 = vunpack.c.l.b16 %v2868
    %v3481 = vunpack.c.h.b16 %v2868
    %v3482 = vunpack.c.l.b16 %v2869
    %v3483 = vunpack.c.h.b16 %v2869
    %v3484 = vunpack.c.l.b16 %v2870
    %v3485 = vunpack.c.h.b16 %v2870
    %v3486 = vunpack.c.l.b16 %v2871
    %v3487 = vunpack.c.h.b16 %v2871
    %v3488 = vunpack.c.l.b16 %v2872
    %v3489 = vunpack.c.h.b16 %v2872
    %v3490 = vunpack.c.l.b16 %v2873
    %v3491 = vunpack.c.h.b16 %v2873
    %v3492 = vunpack.c.l.b16 %v2874
    %v3493 = vunpack.c.h.b16 %v2874
    %v3494 = vunpack.c.l.b16 %v2875
    %v3495 = vunpack.c.h.b16 %v2875
    %v3496 = vunpack.c.l.b16 %v2876
    %v3497 = vunpack.c.h.b16 %v2876
    %v3498 = vunpack.c.l.b16 %v2877
    %v3499 = vunpack.c.h.b16 %v2877
    %v3500 = vunpack.c.l.b16 %v2878
    %v3501 = vunpack.c.h.b16 %v2878
    %v3502 = vunpack.c.l.b16 %v2879
    %v3503 = vunpack.c.h.b16 %v2879
    %v3504 = vunpack.c.l.b16 %v2880
    %v3505 = vunpack.c.h.b16 %v2880
    %v3506 = vunpack.c.l.b16 %v2881
    %v3507 = vunpack.c.h.b16 %v2881
    %v3508 = vunpack.c.l.b16 %v2882
    %v3509 = vunpack.c.h.b16 %v2882
    %v3510 = vunpack.c.l.b16 %v2883
    %v3511 = vunpack.c.h.b16 %v2883
    %v3512 = vunpack.c.l.b16 %v2884
    %v3513 = vunpack.c.h.b16 %v2884
    %v3514 = vunpack.c.l.b16 %v2885
    %v3515 = vunpack.c.h.b16 %v2885
    %v3516 = vunpack.c.l.b16 %v2886
    %v3517 = vunpack.c.h.b16 %v2886
    %v3518 = vunpack.c.l.b16 %v2887
    %v3519 = vunpack.c.h.b16 %v2887
    %v3520 = vunpack.c.l.b16 %v2888
    %v3521 = vunpack.c.h.b16 %v2888
    %v3522 = vunpack.c.l.b16 %v2889
    %v3523 = vunpack.c.h.b16 %v2889
    %v3524 = vunpack.c.l.b16 %v2890
    %v3525 = vunpack.c.h.b16 %v2890
    %v3526 = vunpack.c.l.b16 %v2891
    %v3527 = vunpack.c.h.b16 %v2891
    %v3528 = vunpack.c.l.b16 %v2892
    %v3529 = vunpack.c.h.b16 %v2892
    %v3530 = vunpack.c.l.b16 %v2893
    %v3531 = vunpack.c.h.b16 %v2893
    %v3532 = vunpack.c.l.b16 %v2894
    %v3533 = vunpack.c.h.b16 %v2894
    %v3534 = vunpack.c.l.b16 %v2895
    %v3535 = vunpack.c.h.b16 %v2895
    %v3536 = vunpack.c.l.b16 %v2896
    %v3537 = vunpack.c.h.b16 %v2896
    %v3538 = vunpack.c.l.b16 %v2897
    %v3539 = vunpack.c.h.b16 %v2897
    %v3540 = vunpack.c.l.b16 %v2898
    %v3541 = vunpack.c.h.b16 %v2898
    %v3542 = vunpack.c.l.b16 %v2899
    %v3543 = vunpack.c.h.b16 %v2899
    %v3544 = vunpack.c.l.b16 %v2900
    %v3545 = vunpack.c.h.b16 %v2900
    %v3546 = vunpack.c.l.b16 %v2901
    %v3547 = vunpack.c.h.b16 %v2901
    %v3548 = vunpack.c.l.b16 %v2902
    %v3549 = vunpack.c.h.b16 %v2902
    %v3550 = vunpack.c.l.b16 %v2903
    %v3551 = vunpack.c.h.b16 %v2903
    %v3552 = vunpack.c.l.b16 %v2904
    %v3553 = vunpack.c.h.b16 %v2904
    %v3554 = vunpack.c.l.b16 %v2905
    %v3555 = vunpack.c.h.b16 %v2905
    %v3556 = vunpack.c.l.b16 %v2906
    %v3557 = vunpack.c.h.b16 %v2906
    %v3558 = vunpack.c.l.b16 %v2907
    %v3559 = vunpack.c.h.b16 %v2907
    %v3560 = vunpack.c.l.b16 %v2908
    %v3561 = vunpack.c.h.b16 %v2908
    %v3562 = vunpack.c.l.b16 %v2909
    %v3563 = vunpack.c.h.b16 %v2909
    %v3564 = vunpack.c.l.b16 %v2910
    %v3565 = vunpack.c.h.b16 %v2910
    %v3566 = vunpack.c.l.b16 %v2911
    %v3567 = vunpack.c.h.b16 %v2911
    %v3568 = vunpack.c.l.b16 %v2912
    %v3569 = vunpack.c.h.b16 %v2912
    %v3570 = vunpack.c.l.b16 %v2913
    %v3571 = vunpack.c.h.b16 %v2913
    %v3572 = vunpack.c.l.b16 %v2914
    %v3573 = vunpack.c.h.b16 %v2914
    %v3574 = vunpack.c.l.b16 %v2915
    %v3575 = vunpack.c.h.b16 %v2915
    %v3576 = vunpack.c.l.b16 %v2916
    %v3577 = vunpack.c.h.b16 %v2916
    %v3578 = vunpack.c.l.b16 %v2917
    %v3579 = vunpack.c.h.b16 %v2917
    %v3580 = vunpack.c.l.b16 %v2918
    %v3581 = vunpack.c.h.b16 %v2918
    %v3582 = vunpack.c.l.b16 %v2919
    %v3583 = vunpack.c.h.b16 %v2919
    %v3584 = vunpack.c.l.b16 %v2920
    %v3585 = vunpack.c.h.b16 %v2920
    %v3586 = vunpack.c.l.b16 %v2921
    %v3587 = vunpack.c.h.b16 %v2921
    %v3588 = vunpack.c.l.b16 %v2922
    %v3589 = vunpack.c.h.b16 %v2922
    %v3590 = vunpack.c.l.b16 %v2923
    %v3591 = vunpack.c.h.b16 %v2923
    %v3592 = vunpack.c.l.b16 %v2924
    %v3593 = vunpack.c.h.b16 %v2924
    %v3594 = vunpack.c.l.b16 %v2925
    %v3595 = vunpack.c.h.b16 %v2925
    %v3596 = vunpack.c.l.b16 %v2926
    %v3597 = vunpack.c.h.b16 %v2926
    %v3598 = vunpack.c.l.b16 %v2927
    %v3599 = vunpack.c.h.b16 %v2927
    %v3600 = vunpack.c.l.b16 %v2928
    %v3601 = vunpack.c.h.b16 %v2928
    %v3602 = vunpack.c.l.b16 %v2929
    %v3603 = vunpack.c.h.b16 %v2929
    %v3604 = vunpack.c.l.b16 %v2930
    %v3605 = vunpack.c.h.b16 %v2930
    %v3606 = vunpack.c.l.b16 %v2931
    %v3607 = vunpack.c.h.b16 %v2931
    %v3608 = vunpack.c.l.b16 %v2932
    %v3609 = vunpack.c.h.b16 %v2932
    %v3610 = vunpack.c.l.b16 %v2933
    %v3611 = vunpack.c.h.b16 %v2933
    %v3612 = vunpack.c.l.b16 %v2934
    %v3613 = vunpack.c.h.b16 %v2934
    %v3614 = vunpack.c.l.b16 %v2935
    %v3615 = vunpack.c.h.b16 %v2935
    %v3616 = vunpack.c.l.b16 %v2936
    %v3617 = vunpack.c.h.b16 %v2936
    %v3618 = vunpack.c.l.b16 %v2937
    %v3619 = vunpack.c.h.b16 %v2937
    %v3620 = vunpack.c.l.b16 %v2938
    %v3621 = vunpack.c.h.b16 %v2938
    %v3622 = vunpack.c.l.b16 %v2939
    %v3623 = vunpack.c.h.b16 %v2939
    %v3624 = vunpack.c.l.b16 %v2940
    %v3625 = vunpack.c.h.b16 %v2940
    %v3626 = vunpack.c.l.b16 %v2941
    %v3627 = vunpack.c.h.b16 %v2941
    %v3628 = vunpack.c.l.b16 %v2942
    %v3629 = vunpack.c.h.b16 %v2942
    %v3630 = vunpack.c.l.b16 %v2943
    %v3631 = vunpack.c.h.b16 %v2943
    %v3632 = vunpack.c.l.b16 %v2944
    %v3633 = vunpack.c.h.b16 %v2944
    %v3634 = vunpack.c.l.b16 %v2945
    %v3635 = vunpack.c.h.b16 %v2945
    %v3636 = vunpack.c.l.b16 %v2946
    %v3637 = vunpack.c.h.b16 %v2946
    %v3638 = vunpack.c.l.b16 %v2947
    %v3639 = vunpack.c.h.b16 %v2947
    %v3640 = vunpack.c.l.b16 %v2948
    %v3641 = vunpack.c.h.b16 %v2948
    %v3642 = vunpack.c.l.b16 %v2949
    %v3643 = vunpack.c.h.b16 %v2949
    %v3644 = vunpack.c.l.b16 %v2950
    %v3645 = vunpack.c.h.b16 %v2950
    %v3646 = vunpack.c.l.b16 %v2951
    %v3647 = vunpack.c.h.b16 %v2951
    %v3648 = vunpack.c.l.b16 %v2952
    %v3649 = vunpack.c.h.b16 %v2952
    %v3650 = vunpack.c.l.b16 %v2953
    %v3651 = vunpack.c.h.b16 %v2953
    %v3652 = vunpack.c.l.b16 %v2954
    %v3653 = vunpack.c.h.b16 %v2954
    %v3654 = vunpack.c.l.b16 %v2955
    %v3655 = vunpack.c.h.b16 %v2955
    %v3656 = vunpack.c.l.b16 %v2956
    %v3657 = vunpack.c.h.b16 %v2956
    %v3658 = vunpack.c.l.b16 %v2957
    %v3659 = vunpack.c.h.b16 %v2957
    %v3660 = vunpack.c.l.b16 %v2958
    %v3661 = vunpack.c.h.b16 %v2958
    %v3662 = vunpack.c.l.b16 %v2959
    %v3663 = vunpack.c.h.b16 %v2959
    %v3664 = vunpack.c.l.b16 %v2960
    %v3665 = vunpack.c.h.b16 %v2960
    %v3666 = vunpack.c.l.b16 %v2961
    %v3667 = vunpack.c.h.b16 %v2961
    %v3668 = vunpack.c.l.b16 %v2962
    %v3669 = vunpack.c.h.b16 %v2962
    %v3670 = vunpack.c.l.b16 %v2963
    %v3671 = vunpack.c.h.b16 %v2963
    %v3672 = vunpack.c.l.b16 %v2964
    %v3673 = vunpack.c.h.b16 %v2964
    %v3674 = vunpack.c.l.b16 %v2965
    %v3675 = vunpack.c.h.b16 %v2965
    %v3676 = vunpack.c.l.b16 %v2966
    %v3677 = vunpack.c.h.b16 %v2966
    %v3678 = vunpack.c.l.b16 %v2967
    %v3679 = vunpack.c.h.b16 %v2967
    %v3680 = vunpack.c.l.b16 %v2968
    %v3681 = vunpack.c.h.b16 %v2968
    %v3682 = vunpack.c.l.b16 %v2969
    %v3683 = vunpack.c.h.b16 %v2969
    %v3684 = vunpack.c.l.b16 %v2970
    %v3685 = vunpack.c.h.b16 %v2970
    %v3686 = vunpack.c.l.b16 %v2971
    %v3687 = vunpack.c.h.b16 %v2971
    %v3688 = vunpack.c.l.b16 %v2972
    %v3689 = vunpack.c.h.b16 %v2972
    %v3690 = vunpack.c.l.b16 %v2973
    %v3691 = vunpack.c.h.b16 %v2973
    %v3692 = vunpack.c.l.b16 %v2974
    %v3693 = vunpack.c.h.b16 %v2974
    %v3694 = vunpack.c.l.b16 %v2975
    %v3695 = vunpack.c.h.b16 %v2975
    %v3696 = vunpack.c.l.b16 %v2976
    %v3697 = vunpack.c.h.b16 %v2976
    %v3698 = vunpack.c.l.b16 %v2977
    %v3699 = vunpack.c.h.b16 %v2977
    %v3700 = vunpack.c.l.b16 %v2978
    %v3701 = vunpack.c.h.b16 %v2978
    %v3702 = vunpack.c.l.b16 %v2979
    %v3703 = vunpack.c.h.b16 %v2979
    %v3704 = vunpack.c.l.b16 %v2980
    %v3705 = vunpack.c.h.b16 %v2980
    %v3706 = vunpack.c.l.b16 %v2981
    %v3707 = vunpack.c.h.b16 %v2981
    %v3708 = vunpack.c.l.b16 %v2982
    %v3709 = vunpack.c.h.b16 %v2982
    %v3710 = vunpack.c.l.b16 %v2983
    %v3711 = vunpack.c.h.b16 %v2983
    %v3712 = vunpack.c.l.b16 %v2984
    %v3713 = vunpack.c.h.b16 %v2984
    %v3714 = vunpack.c.l.b16 %v2985
    %v3715 = vunpack.c.h.b16 %v2985
    %v3716 = vunpack.c.l.b16 %v2986
    %v3717 = vunpack.c.h.b16 %v2986
    %v3718 = vunpack.c.l.b16 %v2987
    %v3719 = vunpack.c.h.b16 %v2987
    %v3720 = vunpack.c.l.b16 %v2988
    %v3721 = vunpack.c.h.b16 %v2988
    %v3722 = vunpack.c.l.b16 %v2989
    %v3723 = vunpack.c.h.b16 %v2989
    %v3724 = vunpack.c.l.b16 %v2990
    %v3725 = vunpack.c.h.b16 %v2990
    %v3726 = vunpack.c.l.b16 %v2991
    %v3727 = vunpack.c.h.b16 %v2991
    %v3728 = vunpack.c.l.b16 %v2992
    %v3729 = vunpack.c.h.b16 %v2992
    %v3730 = vunpack.c.l.b16 %v2993
    %v3731 = vunpack.c.h.b16 %v2993
    %v3732 = vunpack.c.l.b16 %v2994
    %v3733 = vunpack.c.h.b16 %v2994
    %v3734 = vunpack.c.l.b16 %v2995
    %v3735 = vunpack.c.h.b16 %v2995
    %v3736 = vunpack.c.l.b16 %v2996
    %v3737 = vunpack.c.h.b16 %v2996
    %v3738 = vunpack.c.l.b16 %v2997
    %v3739 = vunpack.c.h.b16 %v2997
    %v3740 = vunpack.c.l.b16 %v2998
    %v3741 = vunpack.c.h.b16 %v2998
    %v3742 = vunpack.c.l.b16 %v2999
    %v3743 = vunpack.c.h.b16 %v2999
    %v3744 = vunpack.c.l.b16 %v3000
    %v3745 = vunpack.c.h.b16 %v3000
    %v3746 = vunpack.c.l.b16 %v3001
    %v3747 = vunpack.c.h.b16 %v3001
    %v3748 = vunpack.c.l.b16 %v3002
    %v3749 = vunpack.c.h.b16 %v3002
    %v3750 = vunpack.c.l.b16 %v3003
    %v3751 = vunpack.c.h.b16 %v3003
    %v3752 = vunpack.c.l.b16 %v3004
    %v3753 = vunpack.c.h.b16 %v3004
    %v3754 = vunpack.c.l.b16 %v3005
    %v3755 = vunpack.c.h.b16 %v3005
    %v3756 = vunpack.c.l.b16 %v3006
    %v3757 = vunpack.c.h.b16 %v3006
    %v3758 = vunpack.c.l.b16 %v3007
    %v3759 = vunpack.c.h.b16 %v3007
    %v3760 = vunpack.c.l.b16 %v3008
    %v3761 = vunpack.c.h.b16 %v3008
    %v3762 = vunpack.c.l.b16 %v3009
    %v3763 = vunpack.c.h.b16 %v3009
    %v3764 = vunpack.c.l.b16 %v3010
    %v3765 = vunpack.c.h.b16 %v3010
    %v3766 = vunpack.c.l.b16 %v3011
    %v3767 = vunpack.c.h.b16 %v3011
    %v3768 = vunpack.c.l.b16 %v3012
    %v3769 = vunpack.c.h.b16 %v3012
    %v3770 = vunpack.c.l.b16 %v3013
    %v3771 = vunpack.c.h.b16 %v3013
    %v3772 = vunpack.c.l.b16 %v3014
    %v3773 = vunpack.c.h.b16 %v3014
    %v3774 = vunpack.c.l.b16 %v3015
    %v3775 = vunpack.c.h.b16 %v3015
    %v3776 = vunpack.c.l.b16 %v3016
    %v3777 = vunpack.c.h.b16 %v3016
    %v3778 = vunpack.c.l.b16 %v3017
    %v3779 = vunpack.c.h.b16 %v3017
    %v3780 = vunpack.c.l.b16 %v3018
    %v3781 = vunpack.c.h.b16 %v3018
    %v3782 = vunpack.c.l.b16 %v3019
    %v3783 = vunpack.c.h.b16 %v3019
    %v3784 = vunpack.c.l.b16 %v3020
    %v3785 = vunpack.c.h.b16 %v3020
    %v3786 = vunpack.c.l.b16 %v3021
    %v3787 = vunpack.c.h.b16 %v3021
    %v3788 = vunpack.c.l.b16 %v3022
    %v3789 = vunpack.c.h.b16 %v3022
    %v3790 = vunpack.c.l.b16 %v3023
    %v3791 = vunpack.c.h.b16 %v3023
    %v3792 = vunpack.c.l.b16 %v3024
    %v3793 = vunpack.c.h.b16 %v3024
    %v3794 = vunpack.c.l.b16 %v3025
    %v3795 = vunpack.c.h.b16 %v3025
    %v3796 = vunpack.c.l.b16 %v3026
    %v3797 = vunpack.c.h.b16 %v3026
    %v3798 = vunpack.c.l.b16 %v3027
    %v3799 = vunpack.c.h.b16 %v3027
    %v3800 = vunpack.c.l.b16 %v3028
    %v3801 = vunpack.c.h.b16 %v3028
    %v3802 = vunpack.c.l.b16 %v3029
    %v3803 = vunpack.c.h.b16 %v3029
    %v3804 = vunpack.c.l.b16 %v3030
    %v3805 = vunpack.c.h.b16 %v3030
    %v3806 = vunpack.c.l.b16 %v3031
    %v3807 = vunpack.c.h.b16 %v3031
    %v3808 = vunpack.c.l.b16 %v3032
    %v3809 = vunpack.c.h.b16 %v3032
    %v3810 = vunpack.c.l.b16 %v3033
    %v3811 = vunpack.c.h.b16 %v3033
    %v3812 = vpack.c.b16 %v3304, %v3300
    %v3813 = vpack.c.b16 %v3305, %v3301
    %v3814 = vpack.c.b16 %v3306, %v3302
    %v3815 = vpack.c.b16 %v3307, %v3303
    %v3816 = vpack.c.b16 %v3312, %v3308
    %v3817 = vpack.c.b16 %v3313, %v3309
    %v3818 = vpack.c.b16 %v3314, %v3310
    %v3819 = vpack.c.b16 %v3315, %v3311
    %v3820 = vpack.c.b16 %v3320, %v3316
    %v3821 = vpack.c.b16 %v3321, %v3317
    %v3822 = vpack.c.b16 %v3322, %v3318
    %v3823 = vpack.c.b16 %v3323, %v3319
    %v3824 = vpack.c.b16 %v3328, %v3324
    %v3825 = vpack.c.b16 %v3329, %v3325
    %v3826 = vpack.c.b16 %v3330, %v3326
    %v3827 = vpack.c.b16 %v3331, %v3327
    %v3828 = vpack.c.b16 %v3336, %v3332
    %v3829 = vpack.c.b16 %v3337, %v3333
    %v3830 = vpack.c.b16 %v3338, %v3334
    %v3831 = vpack.c.b16 %v3339, %v3335
    %v3832 = vpack.c.b16 %v3344, %v3340
    %v3833 = vpack.c.b16 %v3345, %v3341
    %v3834 = vpack.c.b16 %v3346, %v3342
    %v3835 = vpack.c.b16 %v3347, %v3343
    %v3836 = vpack.c.b16 %v3352, %v3348
    %v3837 = vpack.c.b16 %v3353, %v3349
    %v3838 = vpack.c.b16 %v3354, %v3350
    %v3839 = vpack.c.b16 %v3355, %v3351
    %v3840 = vpack.c.b16 %v3360, %v3356
    %v3841 = vpack.c.b16 %v3361, %v3357
    %v3842 = vpack.c.b16 %v3362, %v3358
    %v3843 = vpack.c.b16 %v3363, %v3359
    %v3844 = vpack.c.b16 %v3368, %v3364
    %v3845 = vpack.c.b16 %v3369, %v3365
    %v3846 = vpack.c.b16 %v3370, %v3366
    %v3847 = vpack.c.b16 %v3371, %v3367
    %v3848 = vpack.c.b16 %v3376, %v3372
    %v3849 = vpack.c.b16 %v3377, %v3373
    %v3850 = vpack.c.b16 %v3378, %v3374
    %v3851 = vpack.c.b16 %v3379, %v3375
    %v3852 = vpack.c.b16 %v3384, %v3380
    %v3853 = vpack.c.b16 %v3385, %v3381
    %v3854 = vpack.c.b16 %v3386, %v3382
    %v3855 = vpack.c.b16 %v3387, %v3383
    %v3856 = vpack.c.b16 %v3392, %v3388
    %v3857 = vpack.c.b16 %v3393, %v3389
    %v3858 = vpack.c.b16 %v3394, %v3390
    %v3859 = vpack.c.b16 %v3395, %v3391
    %v3860 = vpack.c.b16 %v3400, %v3396
    %v3861 = vpack.c.b16 %v3401, %v3397
    %v3862 = vpack.c.b16 %v3402, %v3398
    %v3863 = vpack.c.b16 %v3403, %v3399
    %v3864 = vpack.c.b16 %v3408, %v3404
    %v3865 = vpack.c.b16 %v3409, %v3405
    %v3866 = vpack.c.b16 %v3410, %v3406
    %v3867 = vpack.c.b16 %v3411, %v3407
    %v3868 = vpack.c.b16 %v3416, %v3412
    %v3869 = vpack.c.b16 %v3417, %v3413
    %v3870 = vpack.c.b16 %v3418, %v3414
    %v3871 = vpack.c.b16 %v3419, %v3415
    %v3872 = vpack.c.b16 %v3424, %v3420
    %v3873 = vpack.c.b16 %v3425, %v3421
    %v3874 = vpack.c.b16 %v3426, %v3422
    %v3875 = vpack.c.b16 %v3427, %v3423
    %v3876 = vpack.c.b16 %v3432, %v3428
    %v3877 = vpack.c.b16 %v3433, %v3429
    %v3878 = vpack.c.b16 %v3434, %v3430
    %v3879 = vpack.c.b16 %v3435, %v3431
    %v3880 = vpack.c.b16 %v3440, %v3436
    %v3881 = vpack.c.b16 %v3441, %v3437
    %v3882 = vpack.c.b16 %v3442, %v3438
    %v3883 = vpack.c.b16 %v3443, %v3439
    %v3884 = vpack.c.b16 %v3448, %v3444
    %v3885 = vpack.c.b16 %v3449, %v3445
    %v3886 = vpack.c.b16 %v3450, %v3446
    %v3887 = vpack.c.b16 %v3451, %v3447
    %v3888 = vpack.c.b16 %v3456, %v3452
    %v3889 = vpack.c.b16 %v3457, %v3453
    %v3890 = vpack.c.b16 %v3458, %v3454
    %v3891 = vpack.c.b16 %v3459, %v3455
    %v3892 = vpack.c.b16 %v3464, %v3460
    %v3893 = vpack.c.b16 %v3465, %v3461
    %v3894 = vpack.c.b16 %v3466, %v3462
    %v3895 = vpack.c.b16 %v3467, %v3463
    %v3896 = vpack.c.b16 %v3472, %v3468
    %v3897 = vpack.c.b16 %v3473, %v3469
    %v3898 = vpack.c.b16 %v3474, %v3470
    %v3899 = vpack.c.b16 %v3475, %v3471
    %v3900 = vpack.c.b16 %v3480, %v3476
    %v3901 = vpack.c.b16 %v3481, %v3477
    %v3902 = vpack.c.b16 %v3482, %v3478
    %v3903 = vpack.c.b16 %v3483, %v3479
    %v3904 = vpack.c.b16 %v3488, %v3484
    %v3905 = vpack.c.b16 %v3489, %v3485
    %v3906 = vpack.c.b16 %v3490, %v3486
    %v3907 = vpack.c.b16 %v3491, %v3487
    %v3908 = vpack.c.b16 %v3496, %v3492
    %v3909 = vpack.c.b16 %v3497, %v3493
    %v3910 = vpack.c.b16 %v3498, %v3494
    %v3911 = vpack.c.b16 %v3499, %v3495
    %v3912 = vpack.c.b16 %v3504, %v3500
    %v3913 = vpack.c.b16 %v3505, %v3501
    %v3914 = vpack.c.b16 %v3506, %v3502
    %v3915 = vpack.c.b16 %v3507, %v3503
    %v3916 = vpack.c.b16 %v3512, %v3508
    %v3917 = vpack.c.b16 %v3513, %v3509
    %v3918 = vpack.c.b16 %v3514, %v3510
    %v3919 = vpack.c.b16 %v3515, %v3511
    %v3920 = vpack.c.b16 %v3520, %v3516
    %v3921 = vpack.c.b16 %v3521, %v3517
    %v3922 = vpack.c.b16 %v3522, %v3518
    %v3923 = vpack.c.b16 %v3523, %v3519
    %v3924 = vpack.c.b16 %v3528, %v3524
    %v3925 = vpack.c.b16 %v3529, %v3525
    %v3926 = vpack.c.b16 %v3530, %v3526
    %v3927 = vpack.c.b16 %v3531, %v3527
    %v3928 = vpack.c.b16 %v3536, %v3532
    %v3929 = vpack.c.b16 %v3537, %v3533
    %v3930 = vpack.c.b16 %v3538, %v3534
    %v3931 = vpack.c.b16 %v3539, %v3535
    %v3932 = vpack.c.b16 %v3544, %v3540
    %v3933 = vpack.c.b16 %v3545, %v3541
    %v3934 = vpack.c.b16 %v3546, %v3542
    %v3935 = vpack.c.b16 %v3547, %v3543
    %v3936 = vpack.c.b16 %v3552, %v3548
    %v3937 = vpack.c.b16 %v3553, %v3549
    %v3938 = vpack.c.b16 %v3554, %v3550
    %v3939 = vpack.c.b16 %v3555, %v3551
    %v3940 = vpack.c.b16 %v3560, %v3556
    %v3941 = vpack.c.b16 %v3561, %v3557
    %v3942 = vpack.c.b16 %v3562, %v3558
    %v3943 = vpack.c.b16 %v3563, %v3559
    %v3944 = vpack.c.b16 %v3568, %v3564
    %v3945 = vpack.c.b16 %v3569, %v3565
    %v3946 = vpack.c.b16 %v3570, %v3566
    %v3947 = vpack.c.b16 %v3571, %v3567
    %v3948 = vpack.c.b16 %v3576, %v3572
    %v3949 = vpack.c.b16 %v3577, %v3573
    %v3950 = vpack.c.b16 %v3578, %v3574
    %v3951 = vpack.c.b16 %v3579, %v3575
    %v3952 = vpack.c.b16 %v3584, %v3580
    %v3953 = vpack.c.b16 %v3585, %v3581
    %v3954 = vpack.c.b16 %v3586, %v3582
    %v3955 = vpack.c.b16 %v3587, %v3583
    %v3956 = vpack.c.b16 %v3592, %v3588
    %v3957 = vpack.c.b16 %v3593, %v3589
    %v3958 = vpack.c.b16 %v3594, %v3590
    %v3959 = vpack.c.b16 %v3595, %v3591
    %v3960 = vpack.c.b16 %v3600, %v3596
    %v3961 = vpack.c.b16 %v3601, %v3597
    %v3962 = vpack.c.b16 %v3602, %v3598
    %v3963 = vpack.c.b16 %v3603, %v3599
    %v3964 = vpack.c.b16 %v3608, %v3604
    %v3965 = vpack.c.b16 %v3609, %v3605
    %v3966 = vpack.c.b16 %v3610, %v3606
    %v3967 = vpack.c.b16 %v3611, %v3607
    %v3968 = vpack.c.b16 %v3616, %v3612
    %v3969 = vpack.c.b16 %v3617, %v3613
    %v3970 = vpack.c.b16 %v3618, %v3614
    %v3971 = vpack.c.b16 %v3619, %v3615
    %v3972 = vpack.c.b16 %v3624, %v3620
    %v3973 = vpack.c.b16 %v3625, %v3621
    %v3974 = vpack.c.b16 %v3626, %v3622
    %v3975 = vpack.c.b16 %v3627, %v3623
    %v3976 = vpack.c.b16 %v3632, %v3628
    %v3977 = vpack.c.b16 %v3633, %v3629
    %v3978 = vpack.c.b16 %v3634, %v3630
    %v3979 = vpack.c.b16 %v3635, %v3631
    %v3980 = vpack.c.b16 %v3640, %v3636
    %v3981 = vpack.c.b16 %v3641, %v3637
    %v3982 = vpack.c.b16 %v3642, %v3638
    %v3983 = vpack.c.b16 %v3643, %v3639
    %v3984 = vpack.c.b16 %v3648, %v3644
    %v3985 = vpack.c.b16 %v3649, %v3645
    %v3986 = vpack.c.b16 %v3650, %v3646
    %v3987 = vpack.c.b16 %v3651, %v3647
    %v3988 = vpack.c.b16 %v3656, %v3652
    %v3989 = vpack.c.b16 %v3657, %v3653
    %v3990 = vpack.c.b16 %v3658, %v3654
    %v3991 = vpack.c.b16 %v3659, %v3655
    %v3992 = vpack.c.b16 %v3664, %v3660
    %v3993 = vpack.c.b16 %v3665, %v3661
    %v3994 = vpack.c.b16 %v3666, %v3662
    %v3995 = vpack.c.b16 %v3667, %v3663
    %v3996 = vpack.c.b16 %v3672, %v3668
    %v3997 = vpack.c.b16 %v3673, %v3669
    %v3998 = vpack.c.b16 %v3674, %v3670
    %v3999 = vpack.c.b16 %v3675, %v3671
    %v4000 = vpack.c.b16 %v3680, %v3676
    %v4001 = vpack.c.b16 %v3681, %v3677
    %v4002 = vpack.c.b16 %v3682, %v3678
    %v4003 = vpack.c.b16 %v3683, %v3679
    %v4004 = vpack.c.b16 %v3688, %v3684
    %v4005 = vpack.c.b16 %v3689, %v3685
    %v4006 = vpack.c.b16 %v3690, %v3686
    %v4007 = vpack.c.b16 %v3691, %v3687
    %v4008 = vpack.c.b16 %v3696, %v3692
    %v4009 = vpack.c.b16 %v3697, %v3693
    %v4010 = vpack.c.b16 %v3698, %v3694
    %v4011 = vpack.c.b16 %v3699, %v3695
    %v4012 = vpack.c.b16 %v3704, %v3700
    %v4013 = vpack.c.b16 %v3705, %v3701
    %v4014 = vpack.c.b16 %v3706, %v3702
    %v4015 = vpack.c.b16 %v3707, %v3703
    %v4016 = vpack.c.b16 %v3712, %v3708
    %v4017 = vpack.c.b16 %v3713, %v3709
    %v4018 = vpack.c.b16 %v3714, %v3710
    %v4019 = vpack.c.b16 %v3715, %v3711
    %v4020 = vpack.c.b16 %v3720, %v3716
    %v4021 = vpack.c.b16 %v3721, %v3717
    %v4022 = vpack.c.b16 %v3722, %v3718
    %v4023 = vpack.c.b16 %v3723, %v3719
    %v4024 = vpack.c.b16 %v3728, %v3724
    %v4025 = vpack.c.b16 %v3729, %v3725
    %v4026 = vpack.c.b16 %v3730, %v3726
    %v4027 = vpack.c.b16 %v3731, %v3727
    %v4028 = vpack.c.b16 %v3736, %v3732
    %v4029 = vpack.c.b16 %v3737, %v3733
    %v4030 = vpack.c.b16 %v3738, %v3734
    %v4031 = vpack.c.b16 %v3739, %v3735
    %v4032 = vpack.c.b16 %v3744, %v3740
    %v4033 = vpack.c.b16 %v3745, %v3741
    %v4034 = vpack.c.b16 %v3746, %v3742
    %v4035 = vpack.c.b16 %v3747, %v3743
    %v4036 = vpack.c.b16 %v3752, %v3748
    %v4037 = vpack.c.b16 %v3753, %v3749
    %v4038 = vpack.c.b16 %v3754, %v3750
    %v4039 = vpack.c.b16 %v3755, %v3751
    %v4040 = vpack.c.b16 %v3760, %v3756
    %v4041 = vpack.c.b16 %v3761, %v3757
    %v4042 = vpack.c.b16 %v3762, %v3758
    %v4043 = vpack.c.b16 %v3763, %v3759
    %v4044 = vpack.c.b16 %v3768, %v3764
    %v4045 = vpack.c.b16 %v3769, %v3765
    %v4046 = vpack.c.b16 %v3770, %v3766
    %v4047 = vpack.c.b16 %v3771, %v3767
    %v4048 = vpack.c.b16 %v3776, %v3772
    %v4049 = vpack.c.b16 %v3777, %v3773
    %v4050 = vpack.c.b16 %v3778, %v3774
    %v4051 = vpack.c.b16 %v3779, %v3775
    %v4052 = vpack.c.b16 %v3784, %v3780
    %v4053 = vpack.c.b16 %v3785, %v3781
    %v4054 = vpack.c.b16 %v3786, %v3782
    %v4055 = vpack.c.b16 %v3787, %v3783
    %v4056 = vpack.c.b16 %v3792, %v3788
    %v4057 = vpack.c.b16 %v3793, %v3789
    %v4058 = vpack.c.b16 %v3794, %v3790
    %v4059 = vpack.c.b16 %v3795, %v3791
    %v4060 = vpack.c.b16 %v3800, %v3796
    %v4061 = vpack.c.b16 %v3801, %v3797
    %v4062 = vpack.c.b16 %v3802, %v3798
    %v4063 = vpack.c.b16 %v3803, %v3799
    %v4064 = vpack.c.b16 %v3808, %v3804
    %v4065 = vpack.c.b16 %v3809, %v3805
    %v4066 = vpack.c.b16 %v3810, %v3806
    %v4067 = vpack.c.b16 %v3811, %v3807
    %4324 = vmatpush.bf16.msra.mxu0 %v3840
    %4325 = vmatpush.bf16.msra.mxu0 %v3836
    %4326 = vmatpush.bf16.msra.mxu0 %v3832
    %4327 = vmatpush.bf16.msra.mxu0 %v3828
    %4328 = vmatpush.bf16.msra.mxu0 %v3824
    %4329 = vmatpush.bf16.msra.mxu0 %v3820
    %4330 = vmatpush.bf16.msra.mxu0 %v3816
    %4331 = vmatpush.bf16.msra.mxu0 %v3812
    %4332 = vmatmul.bf16.gmra.mxu0 %v2770
    %v4333 = vpop.f32.mrf.mxu0
    %v4334 = vadd.f32 %v3036, %v4333
    %v4335 = vpop.f32.mrf.mxu0
    %v4336 = vadd.f32 %v3036, %v4335
    %4337 = vdwg.mxu0
    %4338 = vmatpush.bf16.msra.mxu0 %v3872
    %4339 = vmatpush.bf16.msra.mxu0 %v3868
    %4340 = vmatpush.bf16.msra.mxu0 %v3864
    %4341 = vmatpush.bf16.msra.mxu0 %v3860
    %4342 = vmatpush.bf16.msra.mxu0 %v3856
    %4343 = vmatpush.bf16.msra.mxu0 %v3852
    %4344 = vmatpush.bf16.msra.mxu0 %v3848
    %4345 = vmatpush.bf16.msra.mxu0 %v3844
    %4346 = vmatmul.bf16.gmra.mxu0 %v2771
    %v4347 = vpop.f32.mrf.mxu0
    %v4348 = vadd.f32 %v4334, %v4347
    %v4349 = vpop.f32.mrf.mxu0
    %v4350 = vadd.f32 %v4336, %v4349
    %4351 = vdwg.mxu0
    %4352 = vmatpush.bf16.msra.mxu0 %v3904
    %4353 = vmatpush.bf16.msra.mxu0 %v3900
    %4354 = vmatpush.bf16.msra.mxu0 %v3896
    %4355 = vmatpush.bf16.msra.mxu0 %v3892
    %4356 = vmatpush.bf16.msra.mxu0 %v3888
    %4357 = vmatpush.bf16.msra.mxu0 %v3884
    %4358 = vmatpush.bf16.msra.mxu0 %v3880
    %4359 = vmatpush.bf16.msra.mxu0 %v3876
    %4360 = vmatmul.bf16.gmra.mxu0 %v2772
    %v4361 = vpop.f32.mrf.mxu0
    %v4362 = vadd.f32 %v4348, %v4361
    %v4363 = vpop.f32.mrf.mxu0
    %v4364 = vadd.f32 %v4350, %v4363
    %4365 = vdwg.mxu0
    %4366 = vmatpush.bf16.msra.mxu0 %v3936
    %4367 = vmatpush.bf16.msra.mxu0 %v3932
    %4368 = vmatpush.bf16.msra.mxu0 %v3928
    %4369 = vmatpush.bf16.msra.mxu0 %v3924
    %4370 = vmatpush.bf16.msra.mxu0 %v3920
    %4371 = vmatpush.bf16.msra.mxu0 %v3916
    %4372 = vmatpush.bf16.msra.mxu0 %v3912
    %4373 = vmatpush.bf16.msra.mxu0 %v3908
    %4374 = vmatmul.bf16.gmra.mxu0 %v2773
    %v4375 = vpop.f32.mrf.mxu0
    %v4376 = vadd.f32 %v4362, %v4375
    %v4377 = vpop.f32.mrf.mxu0
    %v4378 = vadd.f32 %v4364, %v4377
    %4379 = vdwg.mxu0
    %4380 = vmatpush.bf16.msra.mxu0 %v3968
    %4381 = vmatpush.bf16.msra.mxu0 %v3964
    %4382 = vmatpush.bf16.msra.mxu0 %v3960
    %4383 = vmatpush.bf16.msra.mxu0 %v3956
    %4384 = vmatpush.bf16.msra.mxu0 %v3952
    %4385 = vmatpush.bf16.msra.mxu0 %v3948
    %4386 = vmatpush.bf16.msra.mxu0 %v3944
    %4387 = vmatpush.bf16.msra.mxu0 %v3940
    %4388 = vmatmul.bf16.gmra.mxu0 %v2774
    %v4389 = vpop.f32.mrf.mxu0
    %v4390 = vadd.f32 %v4376, %v4389
    %v4391 = vpop.f32.mrf.mxu0
    %v4392 = vadd.f32 %v4378, %v4391
    %4393 = vdwg.mxu0
    %4394 = vmatpush.bf16.msra.mxu0 %v4000
    %4395 = vmatpush.bf16.msra.mxu0 %v3996
    %4396 = vmatpush.bf16.msra.mxu0 %v3992
    %4397 = vmatpush.bf16.msra.mxu0 %v3988
    %4398 = vmatpush.bf16.msra.mxu0 %v3984
    %4399 = vmatpush.bf16.msra.mxu0 %v3980
    %4400 = vmatpush.bf16.msra.mxu0 %v3976
    %4401 = vmatpush.bf16.msra.mxu0 %v3972
    %4402 = vmatmul.bf16.gmra.mxu0 %v2775
    %v4403 = vpop.f32.mrf.mxu0
    %v4404 = vadd.f32 %v4390, %v4403
    %v4405 = vpop.f32.mrf.mxu0
    %v4406 = vadd.f32 %v4392, %v4405
    %4407 = vdwg.mxu0
    %4408 = vmatpush.bf16.msra.mxu0 %v4032
    %4409 = vmatpush.bf16.msra.mxu0 %v4028
    %4410 = vmatpush.bf16.msra.mxu0 %v4024
    %4411 = vmatpush.bf16.msra.mxu0 %v4020
    %4412 = vmatpush.bf16.msra.mxu0 %v4016
    %4413 = vmatpush.bf16.msra.mxu0 %v4012
    %4414 = vmatpush.bf16.msra.mxu0 %v4008
    %4415 = vmatpush.bf16.msra.mxu0 %v4004
    %4416 = vmatmul.bf16.gmra.mxu0 %v2776
    %v4417 = vpop.f32.mrf.mxu0
    %v4418 = vadd.f32 %v4404, %v4417
    %v4419 = vpop.f32.mrf.mxu0
    %v4420 = vadd.f32 %v4406, %v4419
    %4421 = vdwg.mxu0
    %4422 = vmatpush.bf16.msra.mxu0 %v4064
    %4423 = vmatpush.bf16.msra.mxu0 %v4060
    %4424 = vmatpush.bf16.msra.mxu0 %v4056
    %4425 = vmatpush.bf16.msra.mxu0 %v4052
    %4426 = vmatpush.bf16.msra.mxu0 %v4048
    %4427 = vmatpush.bf16.msra.mxu0 %v4044
    %4428 = vmatpush.bf16.msra.mxu0 %v4040
    %4429 = vmatpush.bf16.msra.mxu0 %v4036
    %4430 = vmatmul.bf16.gmra.mxu0 %v2777
    %v4431 = vpop.f32.mrf.mxu0
    %v4432 = vadd.f32 %v4418, %v4431
    %v4433 = vpop.f32.mrf.mxu0
    %v4434 = vadd.f32 %v4420, %v4433
    %4435 = vdwg.mxu0
    %4436 = vmatpush.bf16.msra.mxu0 %v3841
    %4437 = vmatpush.bf16.msra.mxu0 %v3837
    %4438 = vmatpush.bf16.msra.mxu0 %v3833
    %4439 = vmatpush.bf16.msra.mxu0 %v3829
    %4440 = vmatpush.bf16.msra.mxu0 %v3825
    %4441 = vmatpush.bf16.msra.mxu0 %v3821
    %4442 = vmatpush.bf16.msra.mxu0 %v3817
    %4443 = vmatpush.bf16.msra.mxu0 %v3813
    %4444 = vmatmul.bf16.gmra.mxu0 %v2770
    %v4445 = vpop.f32.mrf.mxu0
    %v4446 = vadd.f32 %v3037, %v4445
    %v4447 = vpop.f32.mrf.mxu0
    %v4448 = vadd.f32 %v3037, %v4447
    %4449 = vdwg.mxu0
    %4450 = vmatpush.bf16.msra.mxu0 %v3873
    %4451 = vmatpush.bf16.msra.mxu0 %v3869
    %4452 = vmatpush.bf16.msra.mxu0 %v3865
    %4453 = vmatpush.bf16.msra.mxu0 %v3861
    %4454 = vmatpush.bf16.msra.mxu0 %v3857
    %4455 = vmatpush.bf16.msra.mxu0 %v3853
    %4456 = vmatpush.bf16.msra.mxu0 %v3849
    %4457 = vmatpush.bf16.msra.mxu0 %v3845
    %4458 = vmatmul.bf16.gmra.mxu0 %v2771
    %v4459 = vpop.f32.mrf.mxu0
    %v4460 = vadd.f32 %v4446, %v4459
    %v4461 = vpop.f32.mrf.mxu0
    %v4462 = vadd.f32 %v4448, %v4461
    %4463 = vdwg.mxu0
    %4464 = vmatpush.bf16.msra.mxu0 %v3905
    %4465 = vmatpush.bf16.msra.mxu0 %v3901
    %4466 = vmatpush.bf16.msra.mxu0 %v3897
    %4467 = vmatpush.bf16.msra.mxu0 %v3893
    %4468 = vmatpush.bf16.msra.mxu0 %v3889
    %4469 = vmatpush.bf16.msra.mxu0 %v3885
    %4470 = vmatpush.bf16.msra.mxu0 %v3881
    %4471 = vmatpush.bf16.msra.mxu0 %v3877
    %4472 = vmatmul.bf16.gmra.mxu0 %v2772
    %v4473 = vpop.f32.mrf.mxu0
    %v4474 = vadd.f32 %v4460, %v4473
    %v4475 = vpop.f32.mrf.mxu0
    %v4476 = vadd.f32 %v4462, %v4475
    %4477 = vdwg.mxu0
    %4478 = vmatpush.bf16.msra.mxu0 %v3937
    %4479 = vmatpush.bf16.msra.mxu0 %v3933
    %4480 = vmatpush.bf16.msra.mxu0 %v3929
    %4481 = vmatpush.bf16.msra.mxu0 %v3925
    %4482 = vmatpush.bf16.msra.mxu0 %v3921
    %4483 = vmatpush.bf16.msra.mxu0 %v3917
    %4484 = vmatpush.bf16.msra.mxu0 %v3913
    %4485 = vmatpush.bf16.msra.mxu0 %v3909
    %4486 = vmatmul.bf16.gmra.mxu0 %v2773
    %v4487 = vpop.f32.mrf.mxu0
    %v4488 = vadd.f32 %v4474, %v4487
    %v4489 = vpop.f32.mrf.mxu0
    %v4490 = vadd.f32 %v4476, %v4489
    %4491 = vdwg.mxu0
    %4492 = vmatpush.bf16.msra.mxu0 %v3969
    %4493 = vmatpush.bf16.msra.mxu0 %v3965
    %4494 = vmatpush.bf16.msra.mxu0 %v3961
    %4495 = vmatpush.bf16.msra.mxu0 %v3957
    %4496 = vmatpush.bf16.msra.mxu0 %v3953
    %4497 = vmatpush.bf16.msra.mxu0 %v3949
    %4498 = vmatpush.bf16.msra.mxu0 %v3945
    %4499 = vmatpush.bf16.msra.mxu0 %v3941
    %4500 = vmatmul.bf16.gmra.mxu0 %v2774
    %v4501 = vpop.f32.mrf.mxu0
    %v4502 = vadd.f32 %v4488, %v4501
    %v4503 = vpop.f32.mrf.mxu0
    %v4504 = vadd.f32 %v4490, %v4503
    %4505 = vdwg.mxu0
    %4506 = vmatpush.bf16.msra.mxu0 %v4001
    %4507 = vmatpush.bf16.msra.mxu0 %v3997
    %4508 = vmatpush.bf16.msra.mxu0 %v3993
    %4509 = vmatpush.bf16.msra.mxu0 %v3989
    %4510 = vmatpush.bf16.msra.mxu0 %v3985
    %4511 = vmatpush.bf16.msra.mxu0 %v3981
    %4512 = vmatpush.bf16.msra.mxu0 %v3977
    %4513 = vmatpush.bf16.msra.mxu0 %v3973
    %4514 = vmatmul.bf16.gmra.mxu0 %v2775
    %v4515 = vpop.f32.mrf.mxu0
    %v4516 = vadd.f32 %v4502, %v4515
    %v4517 = vpop.f32.mrf.mxu0
    %v4518 = vadd.f32 %v4504, %v4517
    %4519 = vdwg.mxu0
    %4520 = vmatpush.bf16.msra.mxu0 %v4033
    %4521 = vmatpush.bf16.msra.mxu0 %v4029
    %4522 = vmatpush.bf16.msra.mxu0 %v4025
    %4523 = vmatpush.bf16.msra.mxu0 %v4021
    %4524 = vmatpush.bf16.msra.mxu0 %v4017
    %4525 = vmatpush.bf16.msra.mxu0 %v4013
    %4526 = vmatpush.bf16.msra.mxu0 %v4009
    %4527 = vmatpush.bf16.msra.mxu0 %v4005
    %4528 = vmatmul.bf16.gmra.mxu0 %v2776
    %v4529 = vpop.f32.mrf.mxu0
    %v4530 = vadd.f32 %v4516, %v4529
    %v4531 = vpop.f32.mrf.mxu0
    %v4532 = vadd.f32 %v4518, %v4531
    %4533 = vdwg.mxu0
    %4534 = vmatpush.bf16.msra.mxu0 %v4065
    %4535 = vmatpush.bf16.msra.mxu0 %v4061
    %4536 = vmatpush.bf16.msra.mxu0 %v4057
    %4537 = vmatpush.bf16.msra.mxu0 %v4053
    %4538 = vmatpush.bf16.msra.mxu0 %v4049
    %4539 = vmatpush.bf16.msra.mxu0 %v4045
    %4540 = vmatpush.bf16.msra.mxu0 %v4041
    %4541 = vmatpush.bf16.msra.mxu0 %v4037
    %4542 = vmatmul.bf16.gmra.mxu0 %v2777
    %v4543 = vpop.f32.mrf.mxu0
    %v4544 = vadd.f32 %v4530, %v4543
    %v4545 = vpop.f32.mrf.mxu0
    %v4546 = vadd.f32 %v4532, %v4545
    %4547 = vdwg.mxu0
    %4548 = vmatpush.bf16.msra.mxu0 %v3842
    %4549 = vmatpush.bf16.msra.mxu0 %v3838
    %4550 = vmatpush.bf16.msra.mxu0 %v3834
    %4551 = vmatpush.bf16.msra.mxu0 %v3830
    %4552 = vmatpush.bf16.msra.mxu0 %v3826
    %4553 = vmatpush.bf16.msra.mxu0 %v3822
    %4554 = vmatpush.bf16.msra.mxu0 %v3818
    %4555 = vmatpush.bf16.msra.mxu0 %v3814
    %4556 = vmatmul.bf16.gmra.mxu0 %v2770
    %v4557 = vpop.f32.mrf.mxu0
    %v4558 = vadd.f32 %v3038, %v4557
    %v4559 = vpop.f32.mrf.mxu0
    %v4560 = vadd.f32 %v3038, %v4559
    %4561 = vdwg.mxu0
    %4562 = vmatpush.bf16.msra.mxu0 %v3874
    %4563 = vmatpush.bf16.msra.mxu0 %v3870
    %4564 = vmatpush.bf16.msra.mxu0 %v3866
    %4565 = vmatpush.bf16.msra.mxu0 %v3862
    %4566 = vmatpush.bf16.msra.mxu0 %v3858
    %4567 = vmatpush.bf16.msra.mxu0 %v3854
    %4568 = vmatpush.bf16.msra.mxu0 %v3850
    %4569 = vmatpush.bf16.msra.mxu0 %v3846
    %4570 = vmatmul.bf16.gmra.mxu0 %v2771
    %v4571 = vpop.f32.mrf.mxu0
    %v4572 = vadd.f32 %v4558, %v4571
    %v4573 = vpop.f32.mrf.mxu0
    %v4574 = vadd.f32 %v4560, %v4573
    %4575 = vdwg.mxu0
    %4576 = vmatpush.bf16.msra.mxu0 %v3906
    %4577 = vmatpush.bf16.msra.mxu0 %v3902
    %4578 = vmatpush.bf16.msra.mxu0 %v3898
    %4579 = vmatpush.bf16.msra.mxu0 %v3894
    %4580 = vmatpush.bf16.msra.mxu0 %v3890
    %4581 = vmatpush.bf16.msra.mxu0 %v3886
    %4582 = vmatpush.bf16.msra.mxu0 %v3882
    %4583 = vmatpush.bf16.msra.mxu0 %v3878
    %4584 = vmatmul.bf16.gmra.mxu0 %v2772
    %v4585 = vpop.f32.mrf.mxu0
    %v4586 = vadd.f32 %v4572, %v4585
    %v4587 = vpop.f32.mrf.mxu0
    %v4588 = vadd.f32 %v4574, %v4587
    %4589 = vdwg.mxu0
    %4590 = vmatpush.bf16.msra.mxu0 %v3938
    %4591 = vmatpush.bf16.msra.mxu0 %v3934
    %4592 = vmatpush.bf16.msra.mxu0 %v3930
    %4593 = vmatpush.bf16.msra.mxu0 %v3926
    %4594 = vmatpush.bf16.msra.mxu0 %v3922
    %4595 = vmatpush.bf16.msra.mxu0 %v3918
    %4596 = vmatpush.bf16.msra.mxu0 %v3914
    %4597 = vmatpush.bf16.msra.mxu0 %v3910
    %4598 = vmatmul.bf16.gmra.mxu0 %v2773
    %v4599 = vpop.f32.mrf.mxu0
    %v4600 = vadd.f32 %v4586, %v4599
    %v4601 = vpop.f32.mrf.mxu0
    %v4602 = vadd.f32 %v4588, %v4601
    %4603 = vdwg.mxu0
    %4604 = vmatpush.bf16.msra.mxu0 %v3970
    %4605 = vmatpush.bf16.msra.mxu0 %v3966
    %4606 = vmatpush.bf16.msra.mxu0 %v3962
    %4607 = vmatpush.bf16.msra.mxu0 %v3958
    %4608 = vmatpush.bf16.msra.mxu0 %v3954
    %4609 = vmatpush.bf16.msra.mxu0 %v3950
    %4610 = vmatpush.bf16.msra.mxu0 %v3946
    %4611 = vmatpush.bf16.msra.mxu0 %v3942
    %4612 = vmatmul.bf16.gmra.mxu0 %v2774
    %v4613 = vpop.f32.mrf.mxu0
    %v4614 = vadd.f32 %v4600, %v4613
    %v4615 = vpop.f32.mrf.mxu0
    %v4616 = vadd.f32 %v4602, %v4615
    %4617 = vdwg.mxu0
    %4618 = vmatpush.bf16.msra.mxu0 %v4002
    %4619 = vmatpush.bf16.msra.mxu0 %v3998
    %4620 = vmatpush.bf16.msra.mxu0 %v3994
    %4621 = vmatpush.bf16.msra.mxu0 %v3990
    %4622 = vmatpush.bf16.msra.mxu0 %v3986
    %4623 = vmatpush.bf16.msra.mxu0 %v3982
    %4624 = vmatpush.bf16.msra.mxu0 %v3978
    %4625 = vmatpush.bf16.msra.mxu0 %v3974
    %4626 = vmatmul.bf16.gmra.mxu0 %v2775
    %v4627 = vpop.f32.mrf.mxu0
    %v4628 = vadd.f32 %v4614, %v4627
    %v4629 = vpop.f32.mrf.mxu0
    %v4630 = vadd.f32 %v4616, %v4629
    %4631 = vdwg.mxu0
    %4632 = vmatpush.bf16.msra.mxu0 %v4034
    %4633 = vmatpush.bf16.msra.mxu0 %v4030
    %4634 = vmatpush.bf16.msra.mxu0 %v4026
    %4635 = vmatpush.bf16.msra.mxu0 %v4022
    %4636 = vmatpush.bf16.msra.mxu0 %v4018
    %4637 = vmatpush.bf16.msra.mxu0 %v4014
    %4638 = vmatpush.bf16.msra.mxu0 %v4010
    %4639 = vmatpush.bf16.msra.mxu0 %v4006
    %4640 = vmatmul.bf16.gmra.mxu0 %v2776
    %v4641 = vpop.f32.mrf.mxu0
    %v4642 = vadd.f32 %v4628, %v4641
    %v4643 = vpop.f32.mrf.mxu0
    %v4644 = vadd.f32 %v4630, %v4643
    %4645 = vdwg.mxu0
    %4646 = vmatpush.bf16.msra.mxu0 %v4066
    %4647 = vmatpush.bf16.msra.mxu0 %v4062
    %4648 = vmatpush.bf16.msra.mxu0 %v4058
    %4649 = vmatpush.bf16.msra.mxu0 %v4054
    %4650 = vmatpush.bf16.msra.mxu0 %v4050
    %4651 = vmatpush.bf16.msra.mxu0 %v4046
    %4652 = vmatpush.bf16.msra.mxu0 %v4042
    %4653 = vmatpush.bf16.msra.mxu0 %v4038
    %4654 = vmatmul.bf16.gmra.mxu0 %v2777
    %v4655 = vpop.f32.mrf.mxu0
    %v4656 = vadd.f32 %v4642, %v4655
    %v4657 = vpop.f32.mrf.mxu0
    %v4658 = vadd.f32 %v4644, %v4657
    %4659 = vdwg.mxu0
    %4660 = vmatpush.bf16.msra.mxu0 %v3843
    %4661 = vmatpush.bf16.msra.mxu0 %v3839
    %4662 = vmatpush.bf16.msra.mxu0 %v3835
    %4663 = vmatpush.bf16.msra.mxu0 %v3831
    %4664 = vmatpush.bf16.msra.mxu0 %v3827
    %4665 = vmatpush.bf16.msra.mxu0 %v3823
    %4666 = vmatpush.bf16.msra.mxu0 %v3819
    %4667 = vmatpush.bf16.msra.mxu0 %v3815
    %4668 = vmatmul.bf16.gmra.mxu0 %v2770
    %v4669 = vpop.f32.mrf.mxu0
    %v4670 = vadd.f32 %v3039, %v4669
    %v4671 = vpop.f32.mrf.mxu0
    %v4672 = vadd.f32 %v3039, %v4671
    %4673 = vdwg.mxu0
    %4674 = vmatpush.bf16.msra.mxu0 %v3875
    %4675 = vmatpush.bf16.msra.mxu0 %v3871
    %4676 = vmatpush.bf16.msra.mxu0 %v3867
    %4677 = vmatpush.bf16.msra.mxu0 %v3863
    %4678 = vmatpush.bf16.msra.mxu0 %v3859
    %4679 = vmatpush.bf16.msra.mxu0 %v3855
    %4680 = vmatpush.bf16.msra.mxu0 %v3851
    %4681 = vmatpush.bf16.msra.mxu0 %v3847
    %4682 = vmatmul.bf16.gmra.mxu0 %v2771
    %v4683 = vpop.f32.mrf.mxu0
    %v4684 = vadd.f32 %v4670, %v4683
    %v4685 = vpop.f32.mrf.mxu0
    %v4686 = vadd.f32 %v4672, %v4685
    %4687 = vdwg.mxu0
    %4688 = vmatpush.bf16.msra.mxu0 %v3907
    %4689 = vmatpush.bf16.msra.mxu0 %v3903
    %4690 = vmatpush.bf16.msra.mxu0 %v3899
    %4691 = vmatpush.bf16.msra.mxu0 %v3895
    %4692 = vmatpush.bf16.msra.mxu0 %v3891
    %4693 = vmatpush.bf16.msra.mxu0 %v3887
    %4694 = vmatpush.bf16.msra.mxu0 %v3883
    %4695 = vmatpush.bf16.msra.mxu0 %v3879
    %4696 = vmatmul.bf16.gmra.mxu0 %v2772
    %v4697 = vpop.f32.mrf.mxu0
    %v4698 = vadd.f32 %v4684, %v4697
    %v4699 = vpop.f32.mrf.mxu0
    %v4700 = vadd.f32 %v4686, %v4699
    %4701 = vdwg.mxu0
    %4702 = vmatpush.bf16.msra.mxu0 %v3939
    %4703 = vmatpush.bf16.msra.mxu0 %v3935
    %4704 = vmatpush.bf16.msra.mxu0 %v3931
    %4705 = vmatpush.bf16.msra.mxu0 %v3927
    %4706 = vmatpush.bf16.msra.mxu0 %v3923
    %4707 = vmatpush.bf16.msra.mxu0 %v3919
    %4708 = vmatpush.bf16.msra.mxu0 %v3915
    %4709 = vmatpush.bf16.msra.mxu0 %v3911
    %4710 = vmatmul.bf16.gmra.mxu0 %v2773
    %v4711 = vpop.f32.mrf.mxu0
    %v4712 = vadd.f32 %v4698, %v4711
    %v4713 = vpop.f32.mrf.mxu0
    %v4714 = vadd.f32 %v4700, %v4713
    %4715 = vdwg.mxu0
    %4716 = vmatpush.bf16.msra.mxu0 %v3971
    %4717 = vmatpush.bf16.msra.mxu0 %v3967
    %4718 = vmatpush.bf16.msra.mxu0 %v3963
    %4719 = vmatpush.bf16.msra.mxu0 %v3959
    %4720 = vmatpush.bf16.msra.mxu0 %v3955
    %4721 = vmatpush.bf16.msra.mxu0 %v3951
    %4722 = vmatpush.bf16.msra.mxu0 %v3947
    %4723 = vmatpush.bf16.msra.mxu0 %v3943
    %4724 = vmatmul.bf16.gmra.mxu0 %v2774
    %v4725 = vpop.f32.mrf.mxu0
    %v4726 = vadd.f32 %v4712, %v4725
    %v4727 = vpop.f32.mrf.mxu0
    %v4728 = vadd.f32 %v4714, %v4727
    %4729 = vdwg.mxu0
    %4730 = vmatpush.bf16.msra.mxu0 %v4003
    %4731 = vmatpush.bf16.msra.mxu0 %v3999
    %4732 = vmatpush.bf16.msra.mxu0 %v3995
    %4733 = vmatpush.bf16.msra.mxu0 %v3991
    %4734 = vmatpush.bf16.msra.mxu0 %v3987
    %4735 = vmatpush.bf16.msra.mxu0 %v3983
    %4736 = vmatpush.bf16.msra.mxu0 %v3979
    %4737 = vmatpush.bf16.msra.mxu0 %v3975
    %4738 = vmatmul.bf16.gmra.mxu0 %v2775
    %v4739 = vpop.f32.mrf.mxu0
    %v4740 = vadd.f32 %v4726, %v4739
    %v4741 = vpop.f32.mrf.mxu0
    %v4742 = vadd.f32 %v4728, %v4741
    %4743 = vdwg.mxu0
    %4744 = vmatpush.bf16.msra.mxu0 %v4035
    %4745 = vmatpush.bf16.msra.mxu0 %v4031
    %4746 = vmatpush.bf16.msra.mxu0 %v4027
    %4747 = vmatpush.bf16.msra.mxu0 %v4023
    %4748 = vmatpush.bf16.msra.mxu0 %v4019
    %4749 = vmatpush.bf16.msra.mxu0 %v4015
    %4750 = vmatpush.bf16.msra.mxu0 %v4011
    %4751 = vmatpush.bf16.msra.mxu0 %v4007
    %4752 = vmatmul.bf16.gmra.mxu0 %v2776
    %v4753 = vpop.f32.mrf.mxu0
    %v4754 = vadd.f32 %v4740, %v4753
    %v4755 = vpop.f32.mrf.mxu0
    %v4756 = vadd.f32 %v4742, %v4755
    %4757 = vdwg.mxu0
    %4758 = vmatpush.bf16.msra.mxu0 %v4067
    %4759 = vmatpush.bf16.msra.mxu0 %v4063
    %4760 = vmatpush.bf16.msra.mxu0 %v4059
    %4761 = vmatpush.bf16.msra.mxu0 %v4055
    %4762 = vmatpush.bf16.msra.mxu0 %v4051
    %4763 = vmatpush.bf16.msra.mxu0 %v4047
    %4764 = vmatpush.bf16.msra.mxu0 %v4043
    %4765 = vmatpush.bf16.msra.mxu0 %v4039
    %4766 = vmatmul.bf16.gmra.mxu0 %v2777
    %v4767 = vpop.f32.mrf.mxu0
    %v4768 = vadd.f32 %v4754, %v4767
    %v4769 = vpop.f32.mrf.mxu0
    %v4770 = vadd.f32 %v4756, %v4769
    %4771 = vdwg.mxu0
    %v4772 = vpack.c.bf16 %v4434, %v4432
    %v4773 = vpack.c.bf16 %v4546, %v4544
    %v4774 = vpack.c.bf16 %v4658, %v4656
    %v4775 = vpack.c.bf16 %v4770, %v4768
    %v4776 = vunpack.c.l.bf16 %v4772
    %v4777 = vunpack.c.l.bf16 %v4773
    %v4778 = vunpack.c.l.bf16 %v4774
    %v4779 = vunpack.c.l.bf16 %v4775
    %v4780 = vunpack.c.h.bf16 %v4772
    %v4781 = vunpack.c.h.bf16 %v4773
    %v4782 = vunpack.c.h.bf16 %v4774
    %v4783 = vunpack.c.h.bf16 %v4775
    %v4784 = vtanh.pop %v4776
    %v4785 = vtanh.pop %v4777
    %v4786 = vtanh.pop %v4778
    %v4787 = vtanh.pop %v4779
    %v4788 = vtanh.pop %v4780
    %v4789 = vtanh.pop %v4781
    %v4790 = vtanh.pop %v4782
    %v4791 = vtanh.pop %v4783
    %v4792 = vpack.c.bf16 %v4788, %v4784
    %v4793 = vpack.c.bf16 %v4789, %v4785
    %v4794 = vpack.c.bf16 %v4790, %v4786
    %v4795 = vpack.c.bf16 %v4791, %v4787
    %v4796 = vld [vmem:[#allocation11] sm:$0xff]
    %v4797 = vld [vmem:[#allocation11 + $0x8] sm:$0xff]
    %v4798 = vld [vmem:[#allocation11 + $0x10] sm:$0xff]
    %v4799 = vld [vmem:[#allocation11 + $0x18] sm:$0xff]
    %v4800 = vld [vmem:[#allocation11 + $0x20] sm:$0xff]
    %v4801 = vld [vmem:[#allocation11 + $0x28] sm:$0xff]
    %v4802 = vld [vmem:[#allocation11 + $0x30] sm:$0xff]
    %v4803 = vld [vmem:[#allocation11 + $0x38] sm:$0xff]
    %v4804 = vld [vmem:[#allocation11 + $0x40] sm:$0xff]
    %v4805 = vld [vmem:[#allocation11 + $0x48] sm:$0xff]
    %v4806 = vld [vmem:[#allocation11 + $0x50] sm:$0xff]
    %v4807 = vld [vmem:[#allocation11 + $0x58] sm:$0xff]
    %v4808 = vld [vmem:[#allocation11 + $0x60] sm:$0xff]
    %v4809 = vld [vmem:[#allocation11 + $0x68] sm:$0xff]
    %v4810 = vld [vmem:[#allocation11 + $0x70] sm:$0xff]
    %v4811 = vld [vmem:[#allocation11 + $0x78] sm:$0xff]
    %v4812 = vld [vmem:[#allocation11 + $0x80] sm:$0xff]
    %v4813 = vld [vmem:[#allocation11 + $0x88] sm:$0xff]
    %v4814 = vld [vmem:[#allocation11 + $0x90] sm:$0xff]
    %v4815 = vld [vmem:[#allocation11 + $0x98] sm:$0xff]
    %v4816 = vld [vmem:[#allocation11 + $0xa0] sm:$0xff]
    %v4817 = vld [vmem:[#allocation11 + $0xa8] sm:$0xff]
    %v4818 = vld [vmem:[#allocation11 + $0xb0] sm:$0xff]
    %v4819 = vld [vmem:[#allocation11 + $0xb8] sm:$0xff]
    %v4820 = vld [vmem:[#allocation11 + $0xc0] sm:$0xff]
    %v4821 = vld [vmem:[#allocation11 + $0xc8] sm:$0xff]
    %v4822 = vld [vmem:[#allocation11 + $0xd0] sm:$0xff]
    %v4823 = vld [vmem:[#allocation11 + $0xd8] sm:$0xff]
    %v4824 = vld [vmem:[#allocation11 + $0xe0] sm:$0xff]
    %v4825 = vld [vmem:[#allocation11 + $0xe8] sm:$0xff]
    %v4826 = vld [vmem:[#allocation11 + $0xf0] sm:$0xff]
    %v4827 = vld [vmem:[#allocation11 + $0xf8] sm:$0xff]
    %v4828 = vld [vmem:[#allocation11 + $0x100] sm:$0xff]
    %v4829 = vld [vmem:[#allocation11 + $0x108] sm:$0xff]
    %v4830 = vld [vmem:[#allocation11 + $0x110] sm:$0xff]
    %v4831 = vld [vmem:[#allocation11 + $0x118] sm:$0xff]
    %v4832 = vld [vmem:[#allocation11 + $0x120] sm:$0xff]
    %v4833 = vld [vmem:[#allocation11 + $0x128] sm:$0xff]
    %v4834 = vld [vmem:[#allocation11 + $0x130] sm:$0xff]
    %v4835 = vld [vmem:[#allocation11 + $0x138] sm:$0xff]
    %v4836 = vld [vmem:[#allocation11 + $0x140] sm:$0xff]
    %v4837 = vld [vmem:[#allocation11 + $0x148] sm:$0xff]
    %v4838 = vld [vmem:[#allocation11 + $0x150] sm:$0xff]
    %v4839 = vld [vmem:[#allocation11 + $0x158] sm:$0xff]
    %v4840 = vld [vmem:[#allocation11 + $0x160] sm:$0xff]
    %v4841 = vld [vmem:[#allocation11 + $0x168] sm:$0xff]
    %v4842 = vld [vmem:[#allocation11 + $0x170] sm:$0xff]
    %v4843 = vld [vmem:[#allocation11 + $0x178] sm:$0xff]
    %v4844 = vld [vmem:[#allocation11 + $0x180] sm:$0xff]
    %v4845 = vld [vmem:[#allocation11 + $0x188] sm:$0xff]
    %v4846 = vld [vmem:[#allocation11 + $0x190] sm:$0xff]
    %v4847 = vld [vmem:[#allocation11 + $0x198] sm:$0xff]
    %v4848 = vld [vmem:[#allocation11 + $0x1a0] sm:$0xff]
    %v4849 = vld [vmem:[#allocation11 + $0x1a8] sm:$0xff]
    %v4850 = vld [vmem:[#allocation11 + $0x1b0] sm:$0xff]
    %v4851 = vld [vmem:[#allocation11 + $0x1b8] sm:$0xff]
    %v4852 = vld [vmem:[#allocation11 + $0x1c0] sm:$0xff]
    %v4853 = vld [vmem:[#allocation11 + $0x1c8] sm:$0xff]
    %v4854 = vld [vmem:[#allocation11 + $0x1d0] sm:$0xff]
    %v4855 = vld [vmem:[#allocation11 + $0x1d8] sm:$0xff]
    %v4856 = vld [vmem:[#allocation11 + $0x1e0] sm:$0xff]
    %v4857 = vld [vmem:[#allocation11 + $0x1e8] sm:$0xff]
    %v4858 = vld [vmem:[#allocation11 + $0x1f0] sm:$0xff]
    %v4859 = vld [vmem:[#allocation11 + $0x1f8] sm:$0xff]
    %v4860 = vld [vmem:[#allocation13] sm:$0x3]
    %v4862 = vperm.slane %v4860, 0
    %v4863 = vperm.slane %v4860, 1
    %v4930 = vunpack.c.l.b16 %v4796
    %v4931 = vunpack.c.h.b16 %v4796
    %v4932 = vunpack.c.l.b16 %v4797
    %v4933 = vunpack.c.h.b16 %v4797
    %v4934 = vunpack.c.l.b16 %v4798
    %v4935 = vunpack.c.h.b16 %v4798
    %v4936 = vunpack.c.l.b16 %v4799
    %v4937 = vunpack.c.h.b16 %v4799
    %v4938 = vunpack.c.l.b16 %v4800
    %v4939 = vunpack.c.h.b16 %v4800
    %v4940 = vunpack.c.l.b16 %v4801
    %v4941 = vunpack.c.h.b16 %v4801
    %v4942 = vunpack.c.l.b16 %v4802
    %v4943 = vunpack.c.h.b16 %v4802
    %v4944 = vunpack.c.l.b16 %v4803
    %v4945 = vunpack.c.h.b16 %v4803
    %v4946 = vunpack.c.l.b16 %v4804
    %v4947 = vunpack.c.h.b16 %v4804
    %v4948 = vunpack.c.l.b16 %v4805
    %v4949 = vunpack.c.h.b16 %v4805
    %v4950 = vunpack.c.l.b16 %v4806
    %v4951 = vunpack.c.h.b16 %v4806
    %v4952 = vunpack.c.l.b16 %v4807
    %v4953 = vunpack.c.h.b16 %v4807
    %v4954 = vunpack.c.l.b16 %v4808
    %v4955 = vunpack.c.h.b16 %v4808
    %v4956 = vunpack.c.l.b16 %v4809
    %v4957 = vunpack.c.h.b16 %v4809
    %v4958 = vunpack.c.l.b16 %v4810
    %v4959 = vunpack.c.h.b16 %v4810
    %v4960 = vunpack.c.l.b16 %v4811
    %v4961 = vunpack.c.h.b16 %v4811
    %v4962 = vunpack.c.l.b16 %v4812
    %v4963 = vunpack.c.h.b16 %v4812
    %v4964 = vunpack.c.l.b16 %v4813
    %v4965 = vunpack.c.h.b16 %v4813
    %v4966 = vunpack.c.l.b16 %v4814
    %v4967 = vunpack.c.h.b16 %v4814
    %v4968 = vunpack.c.l.b16 %v4815
    %v4969 = vunpack.c.h.b16 %v4815
    %v4970 = vunpack.c.l.b16 %v4816
    %v4971 = vunpack.c.h.b16 %v4816
    %v4972 = vunpack.c.l.b16 %v4817
    %v4973 = vunpack.c.h.b16 %v4817
    %v4974 = vunpack.c.l.b16 %v4818
    %v4975 = vunpack.c.h.b16 %v4818
    %v4976 = vunpack.c.l.b16 %v4819
    %v4977 = vunpack.c.h.b16 %v4819
    %v4978 = vunpack.c.l.b16 %v4820
    %v4979 = vunpack.c.h.b16 %v4820
    %v4980 = vunpack.c.l.b16 %v4821
    %v4981 = vunpack.c.h.b16 %v4821
    %v4982 = vunpack.c.l.b16 %v4822
    %v4983 = vunpack.c.h.b16 %v4822
    %v4984 = vunpack.c.l.b16 %v4823
    %v4985 = vunpack.c.h.b16 %v4823
    %v4986 = vunpack.c.l.b16 %v4824
    %v4987 = vunpack.c.h.b16 %v4824
    %v4988 = vunpack.c.l.b16 %v4825
    %v4989 = vunpack.c.h.b16 %v4825
    %v4990 = vunpack.c.l.b16 %v4826
    %v4991 = vunpack.c.h.b16 %v4826
    %v4992 = vunpack.c.l.b16 %v4827
    %v4993 = vunpack.c.h.b16 %v4827
    %v4994 = vunpack.c.l.b16 %v4828
    %v4995 = vunpack.c.h.b16 %v4828
    %v4996 = vunpack.c.l.b16 %v4829
    %v4997 = vunpack.c.h.b16 %v4829
    %v4998 = vunpack.c.l.b16 %v4830
    %v4999 = vunpack.c.h.b16 %v4830
    %v5000 = vunpack.c.l.b16 %v4831
    %v5001 = vunpack.c.h.b16 %v4831
    %v5002 = vunpack.c.l.b16 %v4832
    %v5003 = vunpack.c.h.b16 %v4832
    %v5004 = vunpack.c.l.b16 %v4833
    %v5005 = vunpack.c.h.b16 %v4833
    %v5006 = vunpack.c.l.b16 %v4834
    %v5007 = vunpack.c.h.b16 %v4834
    %v5008 = vunpack.c.l.b16 %v4835
    %v5009 = vunpack.c.h.b16 %v4835
    %v5010 = vunpack.c.l.b16 %v4836
    %v5011 = vunpack.c.h.b16 %v4836
    %v5012 = vunpack.c.l.b16 %v4837
    %v5013 = vunpack.c.h.b16 %v4837
    %v5014 = vunpack.c.l.b16 %v4838
    %v5015 = vunpack.c.h.b16 %v4838
    %v5016 = vunpack.c.l.b16 %v4839
    %v5017 = vunpack.c.h.b16 %v4839
    %v5018 = vunpack.c.l.b16 %v4840
    %v5019 = vunpack.c.h.b16 %v4840
    %v5020 = vunpack.c.l.b16 %v4841
    %v5021 = vunpack.c.h.b16 %v4841
    %v5022 = vunpack.c.l.b16 %v4842
    %v5023 = vunpack.c.h.b16 %v4842
    %v5024 = vunpack.c.l.b16 %v4843
    %v5025 = vunpack.c.h.b16 %v4843
    %v5026 = vunpack.c.l.b16 %v4844
    %v5027 = vunpack.c.h.b16 %v4844
    %v5028 = vunpack.c.l.b16 %v4845
    %v5029 = vunpack.c.h.b16 %v4845
    %v5030 = vunpack.c.l.b16 %v4846
    %v5031 = vunpack.c.h.b16 %v4846
    %v5032 = vunpack.c.l.b16 %v4847
    %v5033 = vunpack.c.h.b16 %v4847
    %v5034 = vunpack.c.l.b16 %v4848
    %v5035 = vunpack.c.h.b16 %v4848
    %v5036 = vunpack.c.l.b16 %v4849
    %v5037 = vunpack.c.h.b16 %v4849
    %v5038 = vunpack.c.l.b16 %v4850
    %v5039 = vunpack.c.h.b16 %v4850
    %v5040 = vunpack.c.l.b16 %v4851
    %v5041 = vunpack.c.h.b16 %v4851
    %v5042 = vunpack.c.l.b16 %v4852
    %v5043 = vunpack.c.h.b16 %v4852
    %v5044 = vunpack.c.l.b16 %v4853
    %v5045 = vunpack.c.h.b16 %v4853
    %v5046 = vunpack.c.l.b16 %v4854
    %v5047 = vunpack.c.h.b16 %v4854
    %v5048 = vunpack.c.l.b16 %v4855
    %v5049 = vunpack.c.h.b16 %v4855
    %v5050 = vunpack.c.l.b16 %v4856
    %v5051 = vunpack.c.h.b16 %v4856
    %v5052 = vunpack.c.l.b16 %v4857
    %v5053 = vunpack.c.h.b16 %v4857
    %v5054 = vunpack.c.l.b16 %v4858
    %v5055 = vunpack.c.h.b16 %v4858
    %v5056 = vunpack.c.l.b16 %v4859
    %v5057 = vunpack.c.h.b16 %v4859
    %v5058 = vpack.c.b16 %v4932, %v4930
    %v5059 = vpack.c.b16 %v4933, %v4931
    %v5060 = vpack.c.b16 %v4936, %v4934
    %v5061 = vpack.c.b16 %v4937, %v4935
    %v5062 = vpack.c.b16 %v4940, %v4938
    %v5063 = vpack.c.b16 %v4941, %v4939
    %v5064 = vpack.c.b16 %v4944, %v4942
    %v5065 = vpack.c.b16 %v4945, %v4943
    %v5066 = vpack.c.b16 %v4948, %v4946
    %v5067 = vpack.c.b16 %v4949, %v4947
    %v5068 = vpack.c.b16 %v4952, %v4950
    %v5069 = vpack.c.b16 %v4953, %v4951
    %v5070 = vpack.c.b16 %v4956, %v4954
    %v5071 = vpack.c.b16 %v4957, %v4955
    %v5072 = vpack.c.b16 %v4960, %v4958
    %v5073 = vpack.c.b16 %v4961, %v4959
    %v5074 = vpack.c.b16 %v4964, %v4962
    %v5075 = vpack.c.b16 %v4965, %v4963
    %v5076 = vpack.c.b16 %v4968, %v4966
    %v5077 = vpack.c.b16 %v4969, %v4967
    %v5078 = vpack.c.b16 %v4972, %v4970
    %v5079 = vpack.c.b16 %v4973, %v4971
    %v5080 = vpack.c.b16 %v4976, %v4974
    %v5081 = vpack.c.b16 %v4977, %v4975
    %v5082 = vpack.c.b16 %v4980, %v4978
    %v5083 = vpack.c.b16 %v4981, %v4979
    %v5084 = vpack.c.b16 %v4984, %v4982
    %v5085 = vpack.c.b16 %v4985, %v4983
    %v5086 = vpack.c.b16 %v4988, %v4986
    %v5087 = vpack.c.b16 %v4989, %v4987
    %v5088 = vpack.c.b16 %v4992, %v4990
    %v5089 = vpack.c.b16 %v4993, %v4991
    %v5090 = vpack.c.b16 %v4996, %v4994
    %v5091 = vpack.c.b16 %v4997, %v4995
    %v5092 = vpack.c.b16 %v5000, %v4998
    %v5093 = vpack.c.b16 %v5001, %v4999
    %v5094 = vpack.c.b16 %v5004, %v5002
    %v5095 = vpack.c.b16 %v5005, %v5003
    %v5096 = vpack.c.b16 %v5008, %v5006
    %v5097 = vpack.c.b16 %v5009, %v5007
    %v5098 = vpack.c.b16 %v5012, %v5010
    %v5099 = vpack.c.b16 %v5013, %v5011
    %v5100 = vpack.c.b16 %v5016, %v5014
    %v5101 = vpack.c.b16 %v5017, %v5015
    %v5102 = vpack.c.b16 %v5020, %v5018
    %v5103 = vpack.c.b16 %v5021, %v5019
    %v5104 = vpack.c.b16 %v5024, %v5022
    %v5105 = vpack.c.b16 %v5025, %v5023
    %v5106 = vpack.c.b16 %v5028, %v5026
    %v5107 = vpack.c.b16 %v5029, %v5027
    %v5108 = vpack.c.b16 %v5032, %v5030
    %v5109 = vpack.c.b16 %v5033, %v5031
    %v5110 = vpack.c.b16 %v5036, %v5034
    %v5111 = vpack.c.b16 %v5037, %v5035
    %v5112 = vpack.c.b16 %v5040, %v5038
    %v5113 = vpack.c.b16 %v5041, %v5039
    %v5114 = vpack.c.b16 %v5044, %v5042
    %v5115 = vpack.c.b16 %v5045, %v5043
    %v5116 = vpack.c.b16 %v5048, %v5046
    %v5117 = vpack.c.b16 %v5049, %v5047
    %v5118 = vpack.c.b16 %v5052, %v5050
    %v5119 = vpack.c.b16 %v5053, %v5051
    %v5120 = vpack.c.b16 %v5056, %v5054
    %v5121 = vpack.c.b16 %v5057, %v5055
    %5186 = vmatpush.bf16.msra.mxu0 %v5072
    %5187 = vmatpush.bf16.msra.mxu0 %v5070
    %5188 = vmatpush.bf16.msra.mxu0 %v5068
    %5189 = vmatpush.bf16.msra.mxu0 %v5066
    %5190 = vmatpush.bf16.msra.mxu0 %v5064
    %5191 = vmatpush.bf16.msra.mxu0 %v5062
    %5192 = vmatpush.bf16.msra.mxu0 %v5060
    %5193 = vmatpush.bf16.msra.mxu0 %v5058
    %5194 = vmatmul.bf16.gmra.mxu0 %v4792
    %v5195 = vpop.f32.mrf.mxu0
    %v5196 = vadd.f32 %v4862, %v5195
    %v5197 = vpop.f32.mrf.mxu0
    %v5198 = vadd.f32 %v4862, %v5197
    %5199 = vdwg.mxu0
    %5200 = vmatpush.bf16.msra.mxu0 %v5088
    %5201 = vmatpush.bf16.msra.mxu0 %v5086
    %5202 = vmatpush.bf16.msra.mxu0 %v5084
    %5203 = vmatpush.bf16.msra.mxu0 %v5082
    %5204 = vmatpush.bf16.msra.mxu0 %v5080
    %5205 = vmatpush.bf16.msra.mxu0 %v5078
    %5206 = vmatpush.bf16.msra.mxu0 %v5076
    %5207 = vmatpush.bf16.msra.mxu0 %v5074
    %5208 = vmatmul.bf16.gmra.mxu0 %v4793
    %v5209 = vpop.f32.mrf.mxu0
    %v5210 = vadd.f32 %v5196, %v5209
    %v5211 = vpop.f32.mrf.mxu0
    %v5212 = vadd.f32 %v5198, %v5211
    %5213 = vdwg.mxu0
    %5214 = vmatpush.bf16.msra.mxu0 %v5104
    %5215 = vmatpush.bf16.msra.mxu0 %v5102
    %5216 = vmatpush.bf16.msra.mxu0 %v5100
    %5217 = vmatpush.bf16.msra.mxu0 %v5098
    %5218 = vmatpush.bf16.msra.mxu0 %v5096
    %5219 = vmatpush.bf16.msra.mxu0 %v5094
    %5220 = vmatpush.bf16.msra.mxu0 %v5092
    %5221 = vmatpush.bf16.msra.mxu0 %v5090
    %5222 = vmatmul.bf16.gmra.mxu0 %v4794
    %v5223 = vpop.f32.mrf.mxu0
    %v5224 = vadd.f32 %v5210, %v5223
    %v5225 = vpop.f32.mrf.mxu0
    %v5226 = vadd.f32 %v5212, %v5225
    %5227 = vdwg.mxu0
    %5228 = vmatpush.bf16.msra.mxu0 %v5120
    %5229 = vmatpush.bf16.msra.mxu0 %v5118
    %5230 = vmatpush.bf16.msra.mxu0 %v5116
    %5231 = vmatpush.bf16.msra.mxu0 %v5114
    %5232 = vmatpush.bf16.msra.mxu0 %v5112
    %5233 = vmatpush.bf16.msra.mxu0 %v5110
    %5234 = vmatpush.bf16.msra.mxu0 %v5108
    %5235 = vmatpush.bf16.msra.mxu0 %v5106
    %5236 = vmatmul.bf16.gmra.mxu0 %v4795
    %v5237 = vpop.f32.mrf.mxu0
    %v5238 = vadd.f32 %v5224, %v5237
    %v5239 = vpop.f32.mrf.mxu0
    %v5240 = vadd.f32 %v5226, %v5239
    %5241 = vdwg.mxu0
    %5242 = vmatpush.bf16.msra.mxu0 %v5073
    %5243 = vmatpush.bf16.msra.mxu0 %v5071
    %5244 = vmatpush.bf16.msra.mxu0 %v5069
    %5245 = vmatpush.bf16.msra.mxu0 %v5067
    %5246 = vmatpush.bf16.msra.mxu0 %v5065
    %5247 = vmatpush.bf16.msra.mxu0 %v5063
    %5248 = vmatpush.bf16.msra.mxu0 %v5061
    %5249 = vmatpush.bf16.msra.mxu0 %v5059
    %5250 = vmatmul.bf16.gmra.mxu0 %v4792
    %v5251 = vpop.f32.mrf.mxu0
    %v5252 = vadd.f32 %v4863, %v5251
    %v5253 = vpop.f32.mrf.mxu0
    %v5254 = vadd.f32 %v4863, %v5253
    %5255 = vdwg.mxu0
    %5256 = vmatpush.bf16.msra.mxu0 %v5089
    %5257 = vmatpush.bf16.msra.mxu0 %v5087
    %5258 = vmatpush.bf16.msra.mxu0 %v5085
    %5259 = vmatpush.bf16.msra.mxu0 %v5083
    %5260 = vmatpush.bf16.msra.mxu0 %v5081
    %5261 = vmatpush.bf16.msra.mxu0 %v5079
    %5262 = vmatpush.bf16.msra.mxu0 %v5077
    %5263 = vmatpush.bf16.msra.mxu0 %v5075
    %5264 = vmatmul.bf16.gmra.mxu0 %v4793
    %v5265 = vpop.f32.mrf.mxu0
    %v5266 = vadd.f32 %v5252, %v5265
    %v5267 = vpop.f32.mrf.mxu0
    %v5268 = vadd.f32 %v5254, %v5267
    %5269 = vdwg.mxu0
    %5270 = vmatpush.bf16.msra.mxu0 %v5105
    %5271 = vmatpush.bf16.msra.mxu0 %v5103
    %5272 = vmatpush.bf16.msra.mxu0 %v5101
    %5273 = vmatpush.bf16.msra.mxu0 %v5099
    %5274 = vmatpush.bf16.msra.mxu0 %v5097
    %5275 = vmatpush.bf16.msra.mxu0 %v5095
    %5276 = vmatpush.bf16.msra.mxu0 %v5093
    %5277 = vmatpush.bf16.msra.mxu0 %v5091
    %5278 = vmatmul.bf16.gmra.mxu0 %v4794
    %v5279 = vpop.f32.mrf.mxu0
    %v5280 = vadd.f32 %v5266, %v5279
    %v5281 = vpop.f32.mrf.mxu0
    %v5282 = vadd.f32 %v5268, %v5281
    %5283 = vdwg.mxu0
    %5284 = vmatpush.bf16.msra.mxu0 %v5121
    %5285 = vmatpush.bf16.msra.mxu0 %v5119
    %5286 = vmatpush.bf16.msra.mxu0 %v5117
    %5287 = vmatpush.bf16.msra.mxu0 %v5115
    %5288 = vmatpush.bf16.msra.mxu0 %v5113
    %5289 = vmatpush.bf16.msra.mxu0 %v5111
    %5290 = vmatpush.bf16.msra.mxu0 %v5109
    %5291 = vmatpush.bf16.msra.mxu0 %v5107
    %5292 = vmatmul.bf16.gmra.mxu0 %v4795
    %v5293 = vpop.f32.mrf.mxu0
    %v5294 = vadd.f32 %v5280, %v5293
    %v5295 = vpop.f32.mrf.mxu0
    %v5296 = vadd.f32 %v5282, %v5295
    %5297 = vdwg.mxu0
    %v5298 = vpack.c.bf16 %v5240, %v5238
    %v5299 = vpack.c.bf16 %v5296, %v5294
    %v5300 = vunpack.c.l.bf16 %v5298
    %v5301 = vunpack.c.l.bf16 %v5299
    %v5302 = vunpack.c.h.bf16 %v5298
    %v5303 = vunpack.c.h.bf16 %v5299
    %v5304 = vtanh.pop %v5300
    %v5305 = vtanh.pop %v5301
    %v5306 = vtanh.pop %v5302
    %v5307 = vtanh.pop %v5303
    %v5308 = vpack.c.bf16 %v5306, %v5304
    %v5309 = vpack.c.bf16 %v5307, %v5305
    %v5310 = vld [vmem:[#allocation14] sm:$0xf]
    %v5311 = vld [vmem:[#allocation14 + $0x4] sm:$0xf]
    %v5312 = vld [vmem:[#allocation14 + $0x8] sm:$0xf]
    %v5313 = vld [vmem:[#allocation14 + $0xc] sm:$0xf]
    %v5314 = vld [vmem:[#allocation14 + $0x10] sm:$0xf]
    %v5315 = vld [vmem:[#allocation14 + $0x14] sm:$0xf]
    %v5316 = vld [vmem:[#allocation14 + $0x18] sm:$0xf]
    %v5317 = vld [vmem:[#allocation14 + $0x1c] sm:$0xf]
    %v5318 = vld [vmem:[#allocation14 + $0x20] sm:$0xf]
    %v5319 = vld [vmem:[#allocation14 + $0x24] sm:$0xf]
    %v5320 = vld [vmem:[#allocation14 + $0x28] sm:$0xf]
    %v5321 = vld [vmem:[#allocation14 + $0x2c] sm:$0xf]
    %v5322 = vld [vmem:[#allocation14 + $0x30] sm:$0xf]
    %v5323 = vld [vmem:[#allocation14 + $0x34] sm:$0xf]
    %v5324 = vld [vmem:[#allocation14 + $0x38] sm:$0xf]
    %v5325 = vld [vmem:[#allocation14 + $0x3c] sm:$0xf]
    %v5326 = vld [vmem:[#allocation14 + $0x40] sm:$0xf]
    %v5327 = vld [vmem:[#allocation14 + $0x44] sm:$0xf]
    %v5328 = vld [vmem:[#allocation14 + $0x48] sm:$0xf]
    %v5329 = vld [vmem:[#allocation14 + $0x4c] sm:$0xf]
    %v5330 = vld [vmem:[#allocation14 + $0x50] sm:$0xf]
    %v5331 = vld [vmem:[#allocation14 + $0x54] sm:$0xf]
    %v5332 = vld [vmem:[#allocation14 + $0x58] sm:$0xf]
    %v5333 = vld [vmem:[#allocation14 + $0x5c] sm:$0xf]
    %v5334 = vld [vmem:[#allocation14 + $0x60] sm:$0xf]
    %v5335 = vld [vmem:[#allocation14 + $0x64] sm:$0xf]
    %v5336 = vld [vmem:[#allocation14 + $0x68] sm:$0xf]
    %v5337 = vld [vmem:[#allocation14 + $0x6c] sm:$0xf]
    %v5338 = vld [vmem:[#allocation14 + $0x70] sm:$0xf]
    %v5339 = vld [vmem:[#allocation14 + $0x74] sm:$0xf]
    %v5340 = vld [vmem:[#allocation14 + $0x78] sm:$0xf]
    %v5341 = vld [vmem:[#allocation14 + $0x7c] sm:$0xf]
    %v5342 = vld [vmem:[#allocation16] sm:$0x1]
    %v5344 = vperm.slane %v5342, 0
    %v5378 = vunpack.c.l.b16 %v5310
    %v5379 = vunpack.c.l.b16 %v5311
    %v5380 = vunpack.c.l.b16 %v5312
    %v5381 = vunpack.c.l.b16 %v5313
    %v5382 = vunpack.c.l.b16 %v5314
    %v5383 = vunpack.c.l.b16 %v5315
    %v5384 = vunpack.c.l.b16 %v5316
    %v5385 = vunpack.c.l.b16 %v5317
    %v5386 = vunpack.c.l.b16 %v5318
    %v5387 = vunpack.c.l.b16 %v5319
    %v5388 = vunpack.c.l.b16 %v5320
    %v5389 = vunpack.c.l.b16 %v5321
    %v5390 = vunpack.c.l.b16 %v5322
    %v5391 = vunpack.c.l.b16 %v5323
    %v5392 = vunpack.c.l.b16 %v5324
    %v5393 = vunpack.c.l.b16 %v5325
    %v5394 = vunpack.c.l.b16 %v5326
    %v5395 = vunpack.c.l.b16 %v5327
    %v5396 = vunpack.c.l.b16 %v5328
    %v5397 = vunpack.c.l.b16 %v5329
    %v5398 = vunpack.c.l.b16 %v5330
    %v5399 = vunpack.c.l.b16 %v5331
    %v5400 = vunpack.c.l.b16 %v5332
    %v5401 = vunpack.c.l.b16 %v5333
    %v5402 = vunpack.c.l.b16 %v5334
    %v5403 = vunpack.c.l.b16 %v5335
    %v5404 = vunpack.c.l.b16 %v5336
    %v5405 = vunpack.c.l.b16 %v5337
    %v5406 = vunpack.c.l.b16 %v5338
    %v5407 = vunpack.c.l.b16 %v5339
    %v5408 = vunpack.c.l.b16 %v5340
    %v5409 = vunpack.c.l.b16 %v5341
    %v5410 = vpack.c.b16 %v5379, %v5378
    %v5411 = vpack.c.b16 %v5381, %v5380
    %v5412 = vpack.c.b16 %v5383, %v5382
    %v5413 = vpack.c.b16 %v5385, %v5384
    %v5414 = vpack.c.b16 %v5387, %v5386
    %v5415 = vpack.c.b16 %v5389, %v5388
    %v5416 = vpack.c.b16 %v5391, %v5390
    %v5417 = vpack.c.b16 %v5393, %v5392
    %v5418 = vpack.c.b16 %v5395, %v5394
    %v5419 = vpack.c.b16 %v5397, %v5396
    %v5420 = vpack.c.b16 %v5399, %v5398
    %v5421 = vpack.c.b16 %v5401, %v5400
    %v5422 = vpack.c.b16 %v5403, %v5402
    %v5423 = vpack.c.b16 %v5405, %v5404
    %v5424 = vpack.c.b16 %v5407, %v5406
    %v5425 = vpack.c.b16 %v5409, %v5408
    %5442 = vmatpush.bf16.msra.mxu0 %v5417
    %5443 = vmatpush.bf16.msra.mxu0 %v5416
    %5444 = vmatpush.bf16.msra.mxu0 %v5415
    %5445 = vmatpush.bf16.msra.mxu0 %v5414
    %5446 = vmatpush.bf16.msra.mxu0 %v5413
    %5447 = vmatpush.bf16.msra.mxu0 %v5412
    %5448 = vmatpush.bf16.msra.mxu0 %v5411
    %5449 = vmatpush.bf16.msra.mxu0 %v5410
    %5450 = vmatmul.bf16.gmra.mxu0 %v5308
    %v5451 = vpop.f32.mrf.mxu0
    %v5452 = vadd.f32 %v5344, %v5451
    %v5453 = vpop.f32.mrf.mxu0
    %v5454 = vadd.f32 %v5344, %v5453
    %5455 = vdwg.mxu0
    %5456 = vmatpush.bf16.msra.mxu0 %v5425
    %5457 = vmatpush.bf16.msra.mxu0 %v5424
    %5458 = vmatpush.bf16.msra.mxu0 %v5423
    %5459 = vmatpush.bf16.msra.mxu0 %v5422
    %5460 = vmatpush.bf16.msra.mxu0 %v5421
    %5461 = vmatpush.bf16.msra.mxu0 %v5420
    %5462 = vmatpush.bf16.msra.mxu0 %v5419
    %5463 = vmatpush.bf16.msra.mxu0 %v5418
    %5464 = vmatmul.bf16.gmra.mxu0 %v5309
    %v5465 = vpop.f32.mrf.mxu0
    %v5466 = vadd.f32 %v5452, %v5465
    %v5467 = vpop.f32.mrf.mxu0
    %v5468 = vadd.f32 %v5454, %v5467
    %5469 = vdwg.mxu0
    %v5470 = vpack.c.bf16 %v5468, %v5466
    %v5471 = vunpack.c.l.bf16 %v5470
    %v5472 = vunpack.c.h.bf16 %v5470
    %v5473 = vtanh.pop %v5471
    %v5474 = vtanh.pop %v5472
    %v5475 = vpack.c.bf16 %v5474, %v5473
    %v5476 = vld [vmem:[#allocation17] sm:$0xf]
    %v5477 = vld [vmem:[#allocation17 + $0x4] sm:$0xf]
    %v5478 = vld [vmem:[#allocation17 + $0x8] sm:$0xf]
    %v5479 = vld [vmem:[#allocation17 + $0xc] sm:$0xf]
    %v5480 = vld [vmem:[#allocation17 + $0x10] sm:$0xf]
    %v5481 = vld [vmem:[#allocation17 + $0x14] sm:$0xf]
    %v5482 = vld [vmem:[#allocation17 + $0x18] sm:$0xf]
    %v5483 = vld [vmem:[#allocation17 + $0x1c] sm:$0xf]
    %v5484 = vld [vmem:[#allocation17 + $0x20] sm:$0xf]
    %v5485 = vld [vmem:[#allocation17 + $0x24] sm:$0xf]
    %v5486 = vld [vmem:[#allocation17 + $0x28] sm:$0xf]
    %v5487 = vld [vmem:[#allocation17 + $0x2c] sm:$0xf]
    %v5488 = vld [vmem:[#allocation17 + $0x30] sm:$0xf]
    %v5489 = vld [vmem:[#allocation17 + $0x34] sm:$0xf]
    %v5490 = vld [vmem:[#allocation17 + $0x38] sm:$0xf]
    %v5491 = vld [vmem:[#allocation17 + $0x3c] sm:$0xf]
    %v5492 = vld [vmem:[#allocation19] sm:$0x1]
    %v5494 = vperm.slane %v5492, 0
    %v5512 = vunpack.c.l.b16 %v5476
    %v5513 = vunpack.c.l.b16 %v5477
    %v5514 = vunpack.c.l.b16 %v5478
    %v5515 = vunpack.c.l.b16 %v5479
    %v5516 = vunpack.c.l.b16 %v5480
    %v5517 = vunpack.c.l.b16 %v5481
    %v5518 = vunpack.c.l.b16 %v5482
    %v5519 = vunpack.c.l.b16 %v5483
    %v5520 = vunpack.c.l.b16 %v5484
    %v5521 = vunpack.c.l.b16 %v5485
    %v5522 = vunpack.c.l.b16 %v5486
    %v5523 = vunpack.c.l.b16 %v5487
    %v5524 = vunpack.c.l.b16 %v5488
    %v5525 = vunpack.c.l.b16 %v5489
    %v5526 = vunpack.c.l.b16 %v5490
    %v5527 = vunpack.c.l.b16 %v5491
    %v5528 = vpack.c.b16 %v5513, %v5512
    %v5529 = vpack.c.b16 %v5515, %v5514
    %v5530 = vpack.c.b16 %v5517, %v5516
    %v5531 = vpack.c.b16 %v5519, %v5518
    %v5532 = vpack.c.b16 %v5521, %v5520
    %v5533 = vpack.c.b16 %v5523, %v5522
    %v5534 = vpack.c.b16 %v5525, %v5524
    %v5535 = vpack.c.b16 %v5527, %v5526
    %5544 = vmatpush.bf16.msra.mxu0 %v5535
    %5545 = vmatpush.bf16.msra.mxu0 %v5534
    %5546 = vmatpush.bf16.msra.mxu0 %v5533
    %5547 = vmatpush.bf16.msra.mxu0 %v5532
    %5548 = vmatpush.bf16.msra.mxu0 %v5531
    %5549 = vmatpush.bf16.msra.mxu0 %v5530
    %5550 = vmatpush.bf16.msra.mxu0 %v5529
    %5551 = vmatpush.bf16.msra.mxu0 %v5528
    %5552 = vmatmul.bf16.gmra.mxu0 %v5475
    %v5553 = vpop.f32.mrf.mxu0
    %v5554 = vadd.f32 %v5494, %v5553
    %v5555 = vpop.f32.mrf.mxu0
    %v5556 = vadd.f32 %v5494, %v5555
    %5557 = vdwg.mxu0
    %5558 = vst [vmem:[#allocation20] sm:$0xff] %v5554
    %5559 = vst [vmem:[#allocation20 + $0x8] sm:$0xff] %v5556
    // Predicated region
    $region90: #{tpu_custom_call.1} parent=1 // pred_check
      _
    $region91: #{tpu_custom_call.1} parent=1 // pred_check_branch
      %5561 = sbr.rel (0) target = $region93
    $region92: #{tpu_custom_call.1} parent=1 // pred_region
      %5563 = vsyncadd [#allocation4], 0
      %s5564 = sshll.u32 [#allocation20], 4
      %s5565 = int_to_ptr.vmem [resolvable:$true] %s5564
      %s5566 = sshll.u32 %s11, 4
      %s5567 = int_to_ptr.hbm [resolvable:$true] %s5566
      %5572 = dma.vmem_to_hbm [thread:$0]  %s5565, 256, %s5567, [#allocation4], 128, 128, 8
    $region93: #{tpu_custom_call.1} parent=1 // pred_fallthru
      _
    // Predicated region
    $region94: #{tpu_custom_call.1} parent=1 // pred_check
      _
    $region95: #{tpu_custom_call.1} parent=1 // pred_check_branch
      %5574 = sbr.rel (0) target = $region97
    $region96: #{tpu_custom_call.1} parent=1 // pred_region
      %5576 = dma.done [#allocation4], 256
    $region97: #{tpu_custom_call.1} parent=1 // pred_fallthru
      _
    %5577 = vsyncpa [#allocation3], 1
    %5578 = vsyncpa [#allocation6], 1
    %5579 = vsyncpa [#allocation9], 1
    %5580 = vsyncpa [#allocation12], 1
    %5581 = vsyncpa [#allocation15], 1
    %5582 = vsyncpa [#allocation18], 1
    %5583 = vsyncpa [#allocation4], 1

// kernel: tpu_custom_call.1
$region0: #{tpu_custom_call.1}
  #allocation0 [shape = 'u32[]', space=smem, size = 0x4, offset = 0x4, fixed_abs, tag = 'smem constant byte address 0x4 - core index']
  #allocation1 [shape = 'u32[72,128]{1,0:T(1,128)}', space=vmem, size = 0x9000, scoped, tag = 'internal scratch']
  %s0 = inlined_call_operand.hbm [shape: bf16[16,640], index: 0, kind: input, shape index: {}]
  %s1 = inlined_call_operand.hbm [shape: bf16[640,1024], index: 1, kind: input, shape index: {}]
  %s2 = inlined_call_operand.hbm [shape: f32[1,1024], index: 2, kind: input, shape index: {}]
  %s3 = inlined_call_operand.hbm [shape: bf16[1024,512], index: 3, kind: input, shape index: {}]
  %s4 = inlined_call_operand.hbm [shape: f32[1,512], index: 4, kind: input, shape index: {}]
  %s5 = inlined_call_operand.hbm [shape: bf16[512,256], index: 5, kind: input, shape index: {}]
  %s6 = inlined_call_operand.hbm [shape: f32[1,256], index: 6, kind: input, shape index: {}]
  %s7 = inlined_call_operand.hbm [shape: bf16[256,128], index: 7, kind: input, shape index: {}]
  %s8 = inlined_call_operand.hbm [shape: f32[1,128], index: 8, kind: input, shape index: {}]
  %s9 = inlined_call_operand.hbm [shape: bf16[128,128], index: 9, kind: input, shape index: {}]
  %s10 = inlined_call_operand.hbm [shape: f32[1,128], index: 10, kind: input, shape index: {}]
  %s11 = inlined_call_operand.hbm [shape: f32[16,128], index: 11, kind: output, shape index: {}]
  %s12 = sld [smem:[#allocation0]]
  $region98: #{tpu_custom_call.1} parent=0
    _
  %s14 = ssub.s32 1, %s12
  %s15 = scalar_select 0, %s14, %s12
  $region1: #{tpu_custom_call.1} parent=0
    #allocation2 [shape = 'u8[20480]{0}', space=vmem, size = 0x5000, scoped, tag = 'input window, operand 0, single buffered']
    #allocation3 [shape = 's32[1]{0}', space=sflag, size = 0x4, scoped, tag = 'scoped memory for tpu_custom_call.1']
    #allocation4 [shape = 's32[1]{0}', space=sflag, size = 0x4, scoped, tag = 'scoped memory for tpu_custom_call.1']
    #allocation5 [shape = 'u8[1310720]{0}', space=vmem, size = 0x140000, scoped, tag = 'input window, operand 1, single buffered']
    #allocation6 [shape = 's32[1]{0}', space=sflag, size = 0x4, scoped, tag = 'scoped memory for tpu_custom_call.1']
    #allocation7 [shape = 'u8[4096]{0}', space=vmem, size = 0x1000, scoped, tag = 'input window, operand 2, single buffered']
    #allocation8 [shape = 'u8[1048576]{0}', space=vmem, size = 0x100000, scoped, tag = 'input window, operand 3, single buffered']
    #allocation9 [shape = 's32[1]{0}', space=sflag, size = 0x4, scoped, tag = 'scoped memory for tpu_custom_call.1']
    #allocation10 [shape = 'u8[2048]{0}', space=vmem, size = 0x800, scoped, tag = 'input window, operand 4, single buffered']
    #allocation11 [shape = 'u8[262144]{0}', space=vmem, size = 0x40000, scoped, tag = 'input window, operand 5, single buffered']
    #allocation12 [shape = 's32[1]{0}', space=sflag, size = 0x4, scoped, tag = 'scoped memory for tpu_custom_call.1']
    #allocation13 [shape = 'u8[1024]{0}', space=vmem, size = 0x400, scoped, tag = 'input window, operand 6, single buffered']
    #allocation14 [shape = 'u8[65536]{0}', space=vmem, size = 0x10000, scoped, tag = 'input window, operand 7, single buffered']
    #allocation15 [shape = 's32[1]{0}', space=sflag, size = 0x4, scoped, tag = 'scoped memory for tpu_custom_call.1']
    #allocation16 [shape = 'u8[512]{0}', space=vmem, size = 0x400, scoped, tag = 'input window, operand 8, single buffered']
    #allocation17 [shape = 'u8[32768]{0}', space=vmem, size = 0x8000, scoped, tag = 'input window, operand 9, single buffered']
    #allocation18 [shape = 's32[1]{0}', space=sflag, size = 0x4, scoped, tag = 'scoped memory for tpu_custom_call.1']
    #allocation19 [shape = 'u8[512]{0}', space=vmem, size = 0x400, scoped, tag = 'input window, operand 10, single buffered']
    #allocation20 [shape = 'u8[8192]{0}', space=vmem, size = 0x2000, scoped, tag = 'output window, operand 0, single buffered']
    %16 = vsyncpa [#allocation3], 0
    %17 = vsyncpa [#allocation6], 0
    %18 = vsyncpa [#allocation9], 0
    %19 = vsyncpa [#allocation12], 0
    %20 = vsyncpa [#allocation15], 0
    %21 = vsyncpa [#allocation18], 0
    %22 = vsyncpa [#allocation4], 0
    // Predicated region
    $region2: #{tpu_custom_call.1} parent=1 // pred_check
      _
    $region3: #{tpu_custom_call.1} parent=1 // pred_check_branch
      %24 = sbr.rel (0) target = $region5
    $region4: #{tpu_custom_call.1} parent=1 // pred_region
      %26 = vsyncadd [#allocation3], 0
      %s27 = sshll.u32 %s0, 4
      %s28 = int_to_ptr.hbm [resolvable:$true] %s27
      %s29 = sshll.u32 [#allocation2], 4
      %s30 = int_to_ptr.vmem [resolvable:$true] %s29
      %35 = dma.hbm_to_vmem [thread:$0]  %s28, 640, %s30, [#allocation3], 320, 320, 20
    $region5: #{tpu_custom_call.1} parent=1 // pred_fallthru
      _
    // Predicated region
    $region6: #{tpu_custom_call.1} parent=1 // pred_check
      _
    $region7: #{tpu_custom_call.1} parent=1 // pred_check_branch
      %37 = sbr.rel (0) target = $region9
    $region8: #{tpu_custom_call.1} parent=1 // pred_region
      %39 = vsyncadd [#allocation6], 0
      %s40 = sshll.u32 %s1, 4
      %s41 = int_to_ptr.hbm [resolvable:$true] %s40
      %s42 = sshll.u32 [#allocation5], 4
      %s43 = int_to_ptr.vmem [resolvable:$true] %s42
      %48 = dma.hbm_to_vmem [thread:$0]  %s41, 40960, %s43, [#allocation6], 512, 512, 32
    $region9: #{tpu_custom_call.1} parent=1 // pred_fallthru
      _
    // Predicated region
    $region10: #{tpu_custom_call.1} parent=1 // pred_check
      _
    $region11: #{tpu_custom_call.1} parent=1 // pred_check_branch
      %50 = sbr.rel (0) target = $region13
    $region12: #{tpu_custom_call.1} parent=1 // pred_region
      %52 = vsyncadd [#allocation6], 0
      %s54 = sshll.u32 %s2, 4
      %s55 = int_to_ptr.hbm [resolvable:$true] %s54
      %s56 = sshll.u32 [#allocation7], 4
      %s57 = int_to_ptr.vmem [resolvable:$true] %s56
      %59 = dma.hbm_to_vmem [thread:$0]  %s55, 128, %s57, [#allocation6]
    $region13: #{tpu_custom_call.1} parent=1 // pred_fallthru
      _
    // Predicated region
    $region14: #{tpu_custom_call.1} parent=1 // pred_check
      _
    $region15: #{tpu_custom_call.1} parent=1 // pred_check_branch
      %61 = sbr.rel (0) target = $region17
    $region16: #{tpu_custom_call.1} parent=1 // pred_region
      %63 = vsyncadd [#allocation9], 0
      %s64 = sshll.u32 %s3, 4
      %s65 = int_to_ptr.hbm [resolvable:$true] %s64
      %s66 = sshll.u32 [#allocation8], 4
      %s67 = int_to_ptr.vmem [resolvable:$true] %s66
      %72 = dma.hbm_to_vmem [thread:$0]  %s65, 32768, %s67, [#allocation9], 256, 256, 16
    $region17: #{tpu_custom_call.1} parent=1 // pred_fallthru
      _
    // Predicated region
    $region18: #{tpu_custom_call.1} parent=1 // pred_check
      _
    $region19: #{tpu_custom_call.1} parent=1 // pred_check_branch
      %74 = sbr.rel (0) target = $region21
    $region20: #{tpu_custom_call.1} parent=1 // pred_region
      %76 = vsyncadd [#allocation9], 0
      %s78 = sshll.u32 %s4, 4
      %s79 = int_to_ptr.hbm [resolvable:$true] %s78
      %s80 = sshll.u32 [#allocation10], 4
      %s81 = int_to_ptr.vmem [resolvable:$true] %s80
      %83 = dma.hbm_to_vmem [thread:$0]  %s79, 64, %s81, [#allocation9]
    $region21: #{tpu_custom_call.1} parent=1 // pred_fallthru
      _
    // Predicated region
    $region22: #{tpu_custom_call.1} parent=1 // pred_check
      _
    $region23: #{tpu_custom_call.1} parent=1 // pred_check_branch
      %85 = sbr.rel (0) target = $region25
    $region24: #{tpu_custom_call.1} parent=1 // pred_region
      %87 = vsyncadd [#allocation12], 0
      %s88 = sshll.u32 %s5, 4
      %s89 = int_to_ptr.hbm [resolvable:$true] %s88
      %s90 = sshll.u32 [#allocation11], 4
      %s91 = int_to_ptr.vmem [resolvable:$true] %s90
      %96 = dma.hbm_to_vmem [thread:$0]  %s89, 8192, %s91, [#allocation12], 128, 128, 8
    $region25: #{tpu_custom_call.1} parent=1 // pred_fallthru
      _
    // Predicated region
    $region26: #{tpu_custom_call.1} parent=1 // pred_check
      _
    $region27: #{tpu_custom_call.1} parent=1 // pred_check_branch
      %98 = sbr.rel (0) target = $region29
    $region28: #{tpu_custom_call.1} parent=1 // pred_region
      %100 = vsyncadd [#allocation12], 0
      %s102 = sshll.u32 %s6, 4
      %s103 = int_to_ptr.hbm [resolvable:$true] %s102
      %s104 = sshll.u32 [#allocation13], 4
      %s105 = int_to_ptr.vmem [resolvable:$true] %s104
      %107 = dma.hbm_to_vmem [thread:$0]  %s103, 32, %s105, [#allocation12]
    $region29: #{tpu_custom_call.1} parent=1 // pred_fallthru
      _
    // Predicated region
    $region30: #{tpu_custom_call.1} parent=1 // pred_check
      _
    $region31: #{tpu_custom_call.1} parent=1 // pred_check_branch
      %109 = sbr.rel (0) target = $region33
    $region32: #{tpu_custom_call.1} parent=1 // pred_region
      %111 = vsyncadd [#allocation15], 0
      %s112 = sshll.u32 %s7, 4
      %s113 = int_to_ptr.hbm [resolvable:$true] %s112
      %s114 = sshll.u32 [#allocation14], 4
      %s115 = int_to_ptr.vmem [resolvable:$true] %s114
      %120 = dma.hbm_to_vmem [thread:$0]  %s113, 2048, %s115, [#allocation15], 64, 64, 4
    $region33: #{tpu_custom_call.1} parent=1 // pred_fallthru
      _
    // Predicated region
    $region34: #{tpu_custom_call.1} parent=1 // pred_check
      _
    $region35: #{tpu_custom_call.1} parent=1 // pred_check_branch
      %122 = sbr.rel (0) target = $region37
    $region36: #{tpu_custom_call.1} parent=1 // pred_region
      %124 = vsyncadd [#allocation15], 0
      %s126 = sshll.u32 %s8, 4
      %s127 = int_to_ptr.hbm [resolvable:$true] %s126
      %s128 = sshll.u32 [#allocation16], 4
      %s129 = int_to_ptr.vmem [resolvable:$true] %s128
      %131 = dma.hbm_to_vmem [thread:$0]  %s127, 16, %s129, [#allocation15]
    $region37: #{tpu_custom_call.1} parent=1 // pred_fallthru
      _
    // Predicated region
    $region38: #{tpu_custom_call.1} parent=1 // pred_check
      _
    $region39: #{tpu_custom_call.1} parent=1 // pred_check_branch
      %133 = sbr.rel (0) target = $region41
    $region40: #{tpu_custom_call.1} parent=1 // pred_region
      %135 = vsyncadd [#allocation18], 0
      %s136 = sshll.u32 %s9, 4
      %s137 = int_to_ptr.hbm [resolvable:$true] %s136
      %s138 = sshll.u32 [#allocation17], 4
      %s139 = int_to_ptr.vmem [resolvable:$true] %s138
      %144 = dma.hbm_to_vmem [thread:$0]  %s137, 1024, %s139, [#allocation18], 64, 64, 4
    $region41: #{tpu_custom_call.1} parent=1 // pred_fallthru
      _
    // Predicated region
    $region42: #{tpu_custom_call.1} parent=1 // pred_check
      _
    $region43: #{tpu_custom_call.1} parent=1 // pred_check_branch
      %146 = sbr.rel (0) target = $region45
    $region44: #{tpu_custom_call.1} parent=1 // pred_region
      %148 = vsyncadd [#allocation18], 0
      %s150 = sshll.u32 %s10, 4
      %s151 = int_to_ptr.hbm [resolvable:$true] %s150
      %s152 = sshll.u32 [#allocation19], 4
      %s153 = int_to_ptr.vmem [resolvable:$true] %s152
      %155 = dma.hbm_to_vmem [thread:$0]  %s151, 16, %s153, [#allocation18]
    $region45: #{tpu_custom_call.1} parent=1 // pred_fallthru
      _
    // Predicated region
    $region46: #{tpu_custom_call.1} parent=1 // pred_check
      _
    $region47: #{tpu_custom_call.1} parent=1 // pred_check_branch
      %157 = sbr.rel (0) target = $region49
    $region48: #{tpu_custom_call.1} parent=1 // pred_region
      %159 = dma.done [#allocation3], 640
    $region49: #{tpu_custom_call.1} parent=1 // pred_fallthru
      _
    // Predicated region
    $region50: #{tpu_custom_call.1} parent=1 // pred_check
      _
    $region51: #{tpu_custom_call.1} parent=1 // pred_check_branch
      %161 = sbr.rel (0) target = $region53
    $region52: #{tpu_custom_call.1} parent=1 // pred_region
      %163 = dma.done [#allocation6], 40960
    $region53: #{tpu_custom_call.1} parent=1 // pred_fallthru
      _
    // Predicated region
    $region54: #{tpu_custom_call.1} parent=1 // pred_check
      _
    $region55: #{tpu_custom_call.1} parent=1 // pred_check_branch
      %165 = sbr.rel (0) target = $region57
    $region56: #{tpu_custom_call.1} parent=1 // pred_region
      %167 = dma.done [#allocation6], 128
    $region57: #{tpu_custom_call.1} parent=1 // pred_fallthru
      _
    // Predicated region
    $region58: #{tpu_custom_call.1} parent=1 // pred_check
      _
    $region59: #{tpu_custom_call.1} parent=1 // pred_check_branch
      %169 = sbr.rel (0) target = $region61
    $region60: #{tpu_custom_call.1} parent=1 // pred_region
      %171 = dma.done [#allocation9], 32768
    $region61: #{tpu_custom_call.1} parent=1 // pred_fallthru
      _
    // Predicated region
    $region62: #{tpu_custom_call.1} parent=1 // pred_check
      _
    $region63: #{tpu_custom_call.1} parent=1 // pred_check_branch
      %173 = sbr.rel (0) target = $region65
    $region64: #{tpu_custom_call.1} parent=1 // pred_region
      %175 = dma.done [#allocation9], 64
    $region65: #{tpu_custom_call.1} parent=1 // pred_fallthru
      _
    // Predicated region
    $region66: #{tpu_custom_call.1} parent=1 // pred_check
      _
    $region67: #{tpu_custom_call.1} parent=1 // pred_check_branch
      %177 = sbr.rel (0) target = $region69
    $region68: #{tpu_custom_call.1} parent=1 // pred_region
      %179 = dma.done [#allocation12], 8192
    $region69: #{tpu_custom_call.1} parent=1 // pred_fallthru
      _
    // Predicated region
    $region70: #{tpu_custom_call.1} parent=1 // pred_check
      _
    $region71: #{tpu_custom_call.1} parent=1 // pred_check_branch
      %181 = sbr.rel (0) target = $region73
    $region72: #{tpu_custom_call.1} parent=1 // pred_region
      %183 = dma.done [#allocation12], 32
    $region73: #{tpu_custom_call.1} parent=1 // pred_fallthru
      _
    // Predicated region
    $region74: #{tpu_custom_call.1} parent=1 // pred_check
      _
    $region75: #{tpu_custom_call.1} parent=1 // pred_check_branch
      %185 = sbr.rel (0) target = $region77
    $region76: #{tpu_custom_call.1} parent=1 // pred_region
      %187 = dma.done [#allocation15], 2048
    $region77: #{tpu_custom_call.1} parent=1 // pred_fallthru
      _
    // Predicated region
    $region78: #{tpu_custom_call.1} parent=1 // pred_check
      _
    $region79: #{tpu_custom_call.1} parent=1 // pred_check_branch
      %189 = sbr.rel (0) target = $region81
    $region80: #{tpu_custom_call.1} parent=1 // pred_region
      %191 = dma.done [#allocation15], 16
    $region81: #{tpu_custom_call.1} parent=1 // pred_fallthru
      _
    // Predicated region
    $region82: #{tpu_custom_call.1} parent=1 // pred_check
      _
    $region83: #{tpu_custom_call.1} parent=1 // pred_check_branch
      %193 = sbr.rel (0) target = $region85
    $region84: #{tpu_custom_call.1} parent=1 // pred_region
      %195 = dma.done [#allocation18], 1024
    $region85: #{tpu_custom_call.1} parent=1 // pred_fallthru
      _
    // Predicated region
    $region86: #{tpu_custom_call.1} parent=1 // pred_check
      _
    $region87: #{tpu_custom_call.1} parent=1 // pred_check_branch
      %197 = sbr.rel (0) target = $region89
    $region88: #{tpu_custom_call.1} parent=1 // pred_region
      %199 = dma.done [#allocation18], 16
    $region89: #{tpu_custom_call.1} parent=1 // pred_fallthru
      _
    %v200 = vld [vmem:[#allocation2] sm:$0xff]
    %v201 = vld [vmem:[#allocation2 + $0x8] sm:$0xff]
    %v202 = vld [vmem:[#allocation2 + $0x10] sm:$0xf]
    %v203 = vld [vmem:[#allocation2 + $0x14] sm:$0xff]
    %v204 = vld [vmem:[#allocation2 + $0x1c] sm:$0xff]
    %v205 = vld [vmem:[#allocation2 + $0x24] sm:$0xf]
    %v206 = vld [vmem:[#allocation5] sm:$0xff]
    %v207 = vld [vmem:[#allocation5 + $0x8] sm:$0xff]
    %v208 = vld [vmem:[#allocation5 + $0x10] sm:$0xff]
    %v209 = vld [vmem:[#allocation5 + $0x18] sm:$0xff]
    %v210 = vld [vmem:[#allocation5 + $0x20] sm:$0xff]
    %v211 = vld [vmem:[#allocation5 + $0x28] sm:$0xff]
    %v212 = vld [vmem:[#allocation5 + $0x30] sm:$0xff]
    %v213 = vld [vmem:[#allocation5 + $0x38] sm:$0xff]
    %v214 = vld [vmem:[#allocation5 + $0x40] sm:$0xff]
    %v215 = vld [vmem:[#allocation5 + $0x48] sm:$0xff]
    %v216 = vld [vmem:[#allocation5 + $0x50] sm:$0xff]
    %v217 = vld [vmem:[#allocation5 + $0x58] sm:$0xff]
    %v218 = vld [vmem:[#allocation5 + $0x60] sm:$0xff]
    %v219 = vld [vmem:[#allocation5 + $0x68] sm:$0xff]
    %v220 = vld [vmem:[#allocation5 + $0x70] sm:$0xff]
    %v221 = vld [vmem:[#allocation5 + $0x78] sm:$0xff]
    %v222 = vld [vmem:[#allocation5 + $0x80] sm:$0xff]
    %v223 = vld [vmem:[#allocation5 + $0x88] sm:$0xff]
    %v224 = vld [vmem:[#allocation5 + $0x90] sm:$0xff]
    %v225 = vld [vmem:[#allocation5 + $0x98] sm:$0xff]
    %v226 = vld [vmem:[#allocation5 + $0xa0] sm:$0xff]
    %v227 = vld [vmem:[#allocation5 + $0xa8] sm:$0xff]
    %v228 = vld [vmem:[#allocation5 + $0xb0] sm:$0xff]
    %v229 = vld [vmem:[#allocation5 + $0xb8] sm:$0xff]
    %v230 = vld [vmem:[#allocation5 + $0xc0] sm:$0xff]
    %v231 = vld [vmem:[#allocation5 + $0xc8] sm:$0xff]
    %v232 = vld [vmem:[#allocation5 + $0xd0] sm:$0xff]
    %v233 = vld [vmem:[#allocation5 + $0xd8] sm:$0xff]
    %v234 = vld [vmem:[#allocation5 + $0xe0] sm:$0xff]
    %v235 = vld [vmem:[#allocation5 + $0xe8] sm:$0xff]
    %v236 = vld [vmem:[#allocation5 + $0xf0] sm:$0xff]
    %v237 = vld [vmem:[#allocation5 + $0xf8] sm:$0xff]
    %v238 = vld [vmem:[#allocation5 + $0x100] sm:$0xff]
    %v239 = vld [vmem:[#allocation5 + $0x108] sm:$0xff]
    %v240 = vld [vmem:[#allocation5 + $0x110] sm:$0xff]
    %v241 = vld [vmem:[#allocation5 + $0x118] sm:$0xff]
    %v242 = vld [vmem:[#allocation5 + $0x120] sm:$0xff]
    %v243 = vld [vmem:[#allocation5 + $0x128] sm:$0xff]
    %v244 = vld [vmem:[#allocation5 + $0x130] sm:$0xff]
    %v245 = vld [vmem:[#allocation5 + $0x138] sm:$0xff]
    %v246 = vld [vmem:[#allocation5 + $0x140] sm:$0xff]
    %v247 = vld [vmem:[#allocation5 + $0x148] sm:$0xff]
    %v248 = vld [vmem:[#allocation5 + $0x150] sm:$0xff]
    %v249 = vld [vmem:[#allocation5 + $0x158] sm:$0xff]
    %v250 = vld [vmem:[#allocation5 + $0x160] sm:$0xff]
    %v251 = vld [vmem:[#allocation5 + $0x168] sm:$0xff]
    %v252 = vld [vmem:[#allocation5 + $0x170] sm:$0xff]
    %v253 = vld [vmem:[#allocation5 + $0x178] sm:$0xff]
    %v254 = vld [vmem:[#allocation5 + $0x180] sm:$0xff]
    %v255 = vld [vmem:[#allocation5 + $0x188] sm:$0xff]
    %v256 = vld [vmem:[#allocation5 + $0x190] sm:$0xff]
    %v257 = vld [vmem:[#allocation5 + $0x198] sm:$0xff]
    %v258 = vld [vmem:[#allocation5 + $0x1a0] sm:$0xff]
    %v259 = vld [vmem:[#allocation5 + $0x1a8] sm:$0xff]
    %v260 = vld [vmem:[#allocation5 + $0x1b0] sm:$0xff]
    %v261 = vld [vmem:[#allocation5 + $0x1b8] sm:$0xff]
    %v262 = vld [vmem:[#allocation5 + $0x1c0] sm:$0xff]
    %v263 = vld [vmem:[#allocation5 + $0x1c8] sm:$0xff]
    %v264 = vld [vmem:[#allocation5 + $0x1d0] sm:$0xff]
    %v265 = vld [vmem:[#allocation5 + $0x1d8] sm:$0xff]
    %v266 = vld [vmem:[#allocation5 + $0x1e0] sm:$0xff]
    %v267 = vld [vmem:[#allocation5 + $0x1e8] sm:$0xff]
    %v268 = vld [vmem:[#allocation5 + $0x1f0] sm:$0xff]
    %v269 = vld [vmem:[#allocation5 + $0x1f8] sm:$0xff]
    %v270 = vld [vmem:[#allocation5 + $0x200] sm:$0xff]
    %v271 = vld [vmem:[#allocation5 + $0x208] sm:$0xff]
    %v272 = vld [vmem:[#allocation5 + $0x210] sm:$0xff]
    %v273 = vld [vmem:[#allocation5 + $0x218] sm:$0xff]
    %v274 = vld [vmem:[#allocation5 + $0x220] sm:$0xff]
    %v275 = vld [vmem:[#allocation5 + $0x228] sm:$0xff]
    %v276 = vld [vmem:[#allocation5 + $0x230] sm:$0xff]
    %v277 = vld [vmem:[#allocation5 + $0x238] sm:$0xff]
    %v278 = vld [vmem:[#allocation5 + $0x240] sm:$0xff]
    %v279 = vld [vmem:[#allocation5 + $0x248] sm:$0xff]
    %v280 = vld [vmem:[#allocation5 + $0x250] sm:$0xff]
    %v281 = vld [vmem:[#allocation5 + $0x258] sm:$0xff]
    %v282 = vld [vmem:[#allocation5 + $0x260] sm:$0xff]
    %v283 = vld [vmem:[#allocation5 + $0x268] sm:$0xff]
    %v284 = vld [vmem:[#allocation5 + $0x270] sm:$0xff]
    %v285 = vld [vmem:[#allocation5 + $0x278] sm:$0xff]
    %v286 = vld [vmem:[#allocation5 + $0x280] sm:$0xff]
    %v287 = vld [vmem:[#allocation5 + $0x288] sm:$0xff]
    %v288 = vld [vmem:[#allocation5 + $0x290] sm:$0xff]
    %v289 = vld [vmem:[#allocation5 + $0x298] sm:$0xff]
    %v290 = vld [vmem:[#allocation5 + $0x2a0] sm:$0xff]
    %v291 = vld [vmem:[#allocation5 + $0x2a8] sm:$0xff]
    %v292 = vld [vmem:[#allocation5 + $0x2b0] sm:$0xff]
    %v293 = vld [vmem:[#allocation5 + $0x2b8] sm:$0xff]
    %v294 = vld [vmem:[#allocation5 + $0x2c0] sm:$0xff]
    %v295 = vld [vmem:[#allocation5 + $0x2c8] sm:$0xff]
    %v296 = vld [vmem:[#allocation5 + $0x2d0] sm:$0xff]
    %v297 = vld [vmem:[#allocation5 + $0x2d8] sm:$0xff]
    %v298 = vld [vmem:[#allocation5 + $0x2e0] sm:$0xff]
    %v299 = vld [vmem:[#allocation5 + $0x2e8] sm:$0xff]
    %v300 = vld [vmem:[#allocation5 + $0x2f0] sm:$0xff]
    %v301 = vld [vmem:[#allocation5 + $0x2f8] sm:$0xff]
    %v302 = vld [vmem:[#allocation5 + $0x300] sm:$0xff]
    %v303 = vld [vmem:[#allocation5 + $0x308] sm:$0xff]
    %v304 = vld [vmem:[#allocation5 + $0x310] sm:$0xff]
    %v305 = vld [vmem:[#allocation5 + $0x318] sm:$0xff]
    %v306 = vld [vmem:[#allocation5 + $0x320] sm:$0xff]
    %v307 = vld [vmem:[#allocation5 + $0x328] sm:$0xff]
    %v308 = vld [vmem:[#allocation5 + $0x330] sm:$0xff]
    %v309 = vld [vmem:[#allocation5 + $0x338] sm:$0xff]
    %v310 = vld [vmem:[#allocation5 + $0x340] sm:$0xff]
    %v311 = vld [vmem:[#allocation5 + $0x348] sm:$0xff]
    %v312 = vld [vmem:[#allocation5 + $0x350] sm:$0xff]
    %v313 = vld [vmem:[#allocation5 + $0x358] sm:$0xff]
    %v314 = vld [vmem:[#allocation5 + $0x360] sm:$0xff]
    %v315 = vld [vmem:[#allocation5 + $0x368] sm:$0xff]
    %v316 = vld [vmem:[#allocation5 + $0x370] sm:$0xff]
    %v317 = vld [vmem:[#allocation5 + $0x378] sm:$0xff]
    %v318 = vld [vmem:[#allocation5 + $0x380] sm:$0xff]
    %v319 = vld [vmem:[#allocation5 + $0x388] sm:$0xff]
    %v320 = vld [vmem:[#allocation5 + $0x390] sm:$0xff]
    %v321 = vld [vmem:[#allocation5 + $0x398] sm:$0xff]
    %v322 = vld [vmem:[#allocation5 + $0x3a0] sm:$0xff]
    %v323 = vld [vmem:[#allocation5 + $0x3a8] sm:$0xff]
    %v324 = vld [vmem:[#allocation5 + $0x3b0] sm:$0xff]
    %v325 = vld [vmem:[#allocation5 + $0x3b8] sm:$0xff]
    %v326 = vld [vmem:[#allocation5 + $0x3c0] sm:$0xff]
    %v327 = vld [vmem:[#allocation5 + $0x3c8] sm:$0xff]
    %v328 = vld [vmem:[#allocation5 + $0x3d0] sm:$0xff]
    %v329 = vld [vmem:[#allocation5 + $0x3d8] sm:$0xff]
    %v330 = vld [vmem:[#allocation5 + $0x3e0] sm:$0xff]
    %v331 = vld [vmem:[#allocation5 + $0x3e8] sm:$0xff]
    %v332 = vld [vmem:[#allocation5 + $0x3f0] sm:$0xff]
    %v333 = vld [vmem:[#allocation5 + $0x3f8] sm:$0xff]
    %v334 = vld [vmem:[#allocation5 + $0x400] sm:$0xff]
    %v335 = vld [vmem:[#allocation5 + $0x408] sm:$0xff]
    %v336 = vld [vmem:[#allocation5 + $0x410] sm:$0xff]
    %v337 = vld [vmem:[#allocation5 + $0x418] sm:$0xff]
    %v338 = vld [vmem:[#allocation5 + $0x420] sm:$0xff]
    %v339 = vld [vmem:[#allocation5 + $0x428] sm:$0xff]
    %v340 = vld [vmem:[#allocation5 + $0x430] sm:$0xff]
    %v341 = vld [vmem:[#allocation5 + $0x438] sm:$0xff]
    %v342 = vld [vmem:[#allocation5 + $0x440] sm:$0xff]
    %v343 = vld [vmem:[#allocation5 + $0x448] sm:$0xff]
    %v344 = vld [vmem:[#allocation5 + $0x450] sm:$0xff]
    %v345 = vld [vmem:[#allocation5 + $0x458] sm:$0xff]
    %v346 = vld [vmem:[#allocation5 + $0x460] sm:$0xff]
    %v347 = vld [vmem:[#allocation5 + $0x468] sm:$0xff]
    %v348 = vld [vmem:[#allocation5 + $0x470] sm:$0xff]
    %v349 = vld [vmem:[#allocation5 + $0x478] sm:$0xff]
    %v350 = vld [vmem:[#allocation5 + $0x480] sm:$0xff]
    %v351 = vld [vmem:[#allocation5 + $0x488] sm:$0xff]
    %v352 = vld [vmem:[#allocation5 + $0x490] sm:$0xff]
    %v353 = vld [vmem:[#allocation5 + $0x498] sm:$0xff]
    %v354 = vld [vmem:[#allocation5 + $0x4a0] sm:$0xff]
    %v355 = vld [vmem:[#allocation5 + $0x4a8] sm:$0xff]
    %v356 = vld [vmem:[#allocation5 + $0x4b0] sm:$0xff]
    %v357 = vld [vmem:[#allocation5 + $0x4b8] sm:$0xff]
    %v358 = vld [vmem:[#allocation5 + $0x4c0] sm:$0xff]
    %v359 = vld [vmem:[#allocation5 + $0x4c8] sm:$0xff]
    %v360 = vld [vmem:[#allocation5 + $0x4d0] sm:$0xff]
    %v361 = vld [vmem:[#allocation5 + $0x4d8] sm:$0xff]
    %v362 = vld [vmem:[#allocation5 + $0x4e0] sm:$0xff]
    %v363 = vld [vmem:[#allocation5 + $0x4e8] sm:$0xff]
    %v364 = vld [vmem:[#allocation5 + $0x4f0] sm:$0xff]
    %v365 = vld [vmem:[#allocation5 + $0x4f8] sm:$0xff]
    %v366 = vld [vmem:[#allocation5 + $0x500] sm:$0xff]
    %v367 = vld [vmem:[#allocation5 + $0x508] sm:$0xff]
    %v368 = vld [vmem:[#allocation5 + $0x510] sm:$0xff]
    %v369 = vld [vmem:[#allocation5 + $0x518] sm:$0xff]
    %v370 = vld [vmem:[#allocation5 + $0x520] sm:$0xff]
    %v371 = vld [vmem:[#allocation5 + $0x528] sm:$0xff]
    %v372 = vld [vmem:[#allocation5 + $0x530] sm:$0xff]
    %v373 = vld [vmem:[#allocation5 + $0x538] sm:$0xff]
    %v374 = vld [vmem:[#allocation5 + $0x540] sm:$0xff]
    %v375 = vld [vmem:[#allocation5 + $0x548] sm:$0xff]
    %v376 = vld [vmem:[#allocation5 + $0x550] sm:$0xff]
    %v377 = vld [vmem:[#allocation5 + $0x558] sm:$0xff]
    %v378 = vld [vmem:[#allocation5 + $0x560] sm:$0xff]
    %v379 = vld [vmem:[#allocation5 + $0x568] sm:$0xff]
    %v380 = vld [vmem:[#allocation5 + $0x570] sm:$0xff]
    %v381 = vld [vmem:[#allocation5 + $0x578] sm:$0xff]
    %v382 = vld [vmem:[#allocation5 + $0x580] sm:$0xff]
    %v383 = vld [vmem:[#allocation5 + $0x588] sm:$0xff]
    %v384 = vld [vmem:[#allocation5 + $0x590] sm:$0xff]
    %v385 = vld [vmem:[#allocation5 + $0x598] sm:$0xff]
    %v386 = vld [vmem:[#allocation5 + $0x5a0] sm:$0xff]
    %v387 = vld [vmem:[#allocation5 + $0x5a8] sm:$0xff]
    %v388 = vld [vmem:[#allocation5 + $0x5b0] sm:$0xff]
    %v389 = vld [vmem:[#allocation5 + $0x5b8] sm:$0xff]
    %v390 = vld [vmem:[#allocation5 + $0x5c0] sm:$0xff]
    %v391 = vld [vmem:[#allocation5 + $0x5c8] sm:$0xff]
    %v392 = vld [vmem:[#allocation5 + $0x5d0] sm:$0xff]
    %v393 = vld [vmem:[#allocation5 + $0x5d8] sm:$0xff]
    %v394 = vld [vmem:[#allocation5 + $0x5e0] sm:$0xff]
    %v395 = vld [vmem:[#allocation5 + $0x5e8] sm:$0xff]
    %v396 = vld [vmem:[#allocation5 + $0x5f0] sm:$0xff]
    %v397 = vld [vmem:[#allocation5 + $0x5f8] sm:$0xff]
    %v398 = vld [vmem:[#allocation5 + $0x600] sm:$0xff]
    %v399 = vld [vmem:[#allocation5 + $0x608] sm:$0xff]
    %v400 = vld [vmem:[#allocation5 + $0x610] sm:$0xff]
    %v401 = vld [vmem:[#allocation5 + $0x618] sm:$0xff]
    %v402 = vld [vmem:[#allocation5 + $0x620] sm:$0xff]
    %v403 = vld [vmem:[#allocation5 + $0x628] sm:$0xff]
    %v404 = vld [vmem:[#allocation5 + $0x630] sm:$0xff]
    %v405 = vld [vmem:[#allocation5 + $0x638] sm:$0xff]
    %v406 = vld [vmem:[#allocation5 + $0x640] sm:$0xff]
    %v407 = vld [vmem:[#allocation5 + $0x648] sm:$0xff]
    %v408 = vld [vmem:[#allocation5 + $0x650] sm:$0xff]
    %v409 = vld [vmem:[#allocation5 + $0x658] sm:$0xff]
    %v410 = vld [vmem:[#allocation5 + $0x660] sm:$0xff]
    %v411 = vld [vmem:[#allocation5 + $0x668] sm:$0xff]
    %v412 = vld [vmem:[#allocation5 + $0x670] sm:$0xff]
    %v413 = vld [vmem:[#allocation5 + $0x678] sm:$0xff]
    %v414 = vld [vmem:[#allocation5 + $0x680] sm:$0xff]
    %v415 = vld [vmem:[#allocation5 + $0x688] sm:$0xff]
    %v416 = vld [vmem:[#allocation5 + $0x690] sm:$0xff]
    %v417 = vld [vmem:[#allocation5 + $0x698] sm:$0xff]
    %v418 = vld [vmem:[#allocation5 + $0x6a0] sm:$0xff]
    %v419 = vld [vmem:[#allocation5 + $0x6a8] sm:$0xff]
    %v420 = vld [vmem:[#allocation5 + $0x6b0] sm:$0xff]
    %v421 = vld [vmem:[#allocation5 + $0x6b8] sm:$0xff]
    %v422 = vld [vmem:[#allocation5 + $0x6c0] sm:$0xff]
    %v423 = vld [vmem:[#allocation5 + $0x6c8] sm:$0xff]
    %v424 = vld [vmem:[#allocation5 + $0x6d0] sm:$0xff]
    %v425 = vld [vmem:[#allocation5 + $0x6d8] sm:$0xff]
    %v426 = vld [vmem:[#allocation5 + $0x6e0] sm:$0xff]
    %v427 = vld [vmem:[#allocation5 + $0x6e8] sm:$0xff]
    %v428 = vld [vmem:[#allocation5 + $0x6f0] sm:$0xff]
    %v429 = vld [vmem:[#allocation5 + $0x6f8] sm:$0xff]
    %v430 = vld [vmem:[#allocation5 + $0x700] sm:$0xff]
    %v431 = vld [vmem:[#allocation5 + $0x708] sm:$0xff]
    %v432 = vld [vmem:[#allocation5 + $0x710] sm:$0xff]
    %v433 = vld [vmem:[#allocation5 + $0x718] sm:$0xff]
    %v434 = vld [vmem:[#allocation5 + $0x720] sm:$0xff]
    %v435 = vld [vmem:[#allocation5 + $0x728] sm:$0xff]
    %v436 = vld [vmem:[#allocation5 + $0x730] sm:$0xff]
    %v437 = vld [vmem:[#allocation5 + $0x738] sm:$0xff]
    %v438 = vld [vmem:[#allocation5 + $0x740] sm:$0xff]
    %v439 = vld [vmem:[#allocation5 + $0x748] sm:$0xff]
    %v440 = vld [vmem:[#allocation5 + $0x750] sm:$0xff]
    %v441 = vld [vmem:[#allocation5 + $0x758] sm:$0xff]
    %v442 = vld [vmem:[#allocation5 + $0x760] sm:$0xff]
    %v443 = vld [vmem:[#allocation5 + $0x768] sm:$0xff]
    %v444 = vld [vmem:[#allocation5 + $0x770] sm:$0xff]
    %v445 = vld [vmem:[#allocation5 + $0x778] sm:$0xff]
    %v446 = vld [vmem:[#allocation5 + $0x780] sm:$0xff]
    %v447 = vld [vmem:[#allocation5 + $0x788] sm:$0xff]
    %v448 = vld [vmem:[#allocation5 + $0x790] sm:$0xff]
    %v449 = vld [vmem:[#allocation5 + $0x798] sm:$0xff]
    %v450 = vld [vmem:[#allocation5 + $0x7a0] sm:$0xff]
    %v451 = vld [vmem:[#allocation5 + $0x7a8] sm:$0xff]
    %v452 = vld [vmem:[#allocation5 + $0x7b0] sm:$0xff]
    %v453 = vld [vmem:[#allocation5 + $0x7b8] sm:$0xff]
    %v454 = vld [vmem:[#allocation5 + $0x7c0] sm:$0xff]
    %v455 = vld [vmem:[#allocation5 + $0x7c8] sm:$0xff]
    %v456 = vld [vmem:[#allocation5 + $0x7d0] sm:$0xff]
    %v457 = vld [vmem:[#allocation5 + $0x7d8] sm:$0xff]
    %v458 = vld [vmem:[#allocation5 + $0x7e0] sm:$0xff]
    %v459 = vld [vmem:[#allocation5 + $0x7e8] sm:$0xff]
    %v460 = vld [vmem:[#allocation5 + $0x7f0] sm:$0xff]
    %v461 = vld [vmem:[#allocation5 + $0x7f8] sm:$0xff]
    %v462 = vld [vmem:[#allocation5 + $0x800] sm:$0xff]
    %v463 = vld [vmem:[#allocation5 + $0x808] sm:$0xff]
    %v464 = vld [vmem:[#allocation5 + $0x810] sm:$0xff]
    %v465 = vld [vmem:[#allocation5 + $0x818] sm:$0xff]
    %v466 = vld [vmem:[#allocation5 + $0x820] sm:$0xff]
    %v467 = vld [vmem:[#allocation5 + $0x828] sm:$0xff]
    %v468 = vld [vmem:[#allocation5 + $0x830] sm:$0xff]
    %v469 = vld [vmem:[#allocation5 + $0x838] sm:$0xff]
    %v470 = vld [vmem:[#allocation5 + $0x840] sm:$0xff]
    %v471 = vld [vmem:[#allocation5 + $0x848] sm:$0xff]
    %v472 = vld [vmem:[#allocation5 + $0x850] sm:$0xff]
    %v473 = vld [vmem:[#allocation5 + $0x858] sm:$0xff]
    %v474 = vld [vmem:[#allocation5 + $0x860] sm:$0xff]
    %v475 = vld [vmem:[#allocation5 + $0x868] sm:$0xff]
    %v476 = vld [vmem:[#allocation5 + $0x870] sm:$0xff]
    %v477 = vld [vmem:[#allocation5 + $0x878] sm:$0xff]
    %v478 = vld [vmem:[#allocation5 + $0x880] sm:$0xff]
    %v479 = vld [vmem:[#allocation5 + $0x888] sm:$0xff]
    %v480 = vld [vmem:[#allocation5 + $0x890] sm:$0xff]
    %v481 = vld [vmem:[#allocation5 + $0x898] sm:$0xff]
    %v482 = vld [vmem:[#allocation5 + $0x8a0] sm:$0xff]
    %v483 = vld [vmem:[#allocation5 + $0x8a8] sm:$0xff]
    %v484 = vld [vmem:[#allocation5 + $0x8b0] sm:$0xff]
    %v485 = vld [vmem:[#allocation5 + $0x8b8] sm:$0xff]
    %v486 = vld [vmem:[#allocation5 + $0x8c0] sm:$0xff]
    %v487 = vld [vmem:[#allocation5 + $0x8c8] sm:$0xff]
    %v488 = vld [vmem:[#allocation5 + $0x8d0] sm:$0xff]
    %v489 = vld [vmem:[#allocation5 + $0x8d8] sm:$0xff]
    %v490 = vld [vmem:[#allocation5 + $0x8e0] sm:$0xff]
    %v491 = vld [vmem:[#allocation5 + $0x8e8] sm:$0xff]
    %v492 = vld [vmem:[#allocation5 + $0x8f0] sm:$0xff]
    %v493 = vld [vmem:[#allocation5 + $0x8f8] sm:$0xff]
    %v494 = vld [vmem:[#allocation5 + $0x900] sm:$0xff]
    %v495 = vld [vmem:[#allocation5 + $0x908] sm:$0xff]
    %v496 = vld [vmem:[#allocation5 + $0x910] sm:$0xff]
    %v497 = vld [vmem:[#allocation5 + $0x918] sm:$0xff]
    %v498 = vld [vmem:[#allocation5 + $0x920] sm:$0xff]
    %v499 = vld [vmem:[#allocation5 + $0x928] sm:$0xff]
    %v500 = vld [vmem:[#allocation5 + $0x930] sm:$0xff]
    %v501 = vld [vmem:[#allocation5 + $0x938] sm:$0xff]
    %v502 = vld [vmem:[#allocation5 + $0x940] sm:$0xff]
    %v503 = vld [vmem:[#allocation5 + $0x948] sm:$0xff]
    %v504 = vld [vmem:[#allocation5 + $0x950] sm:$0xff]
    %v505 = vld [vmem:[#allocation5 + $0x958] sm:$0xff]
    %v506 = vld [vmem:[#allocation5 + $0x960] sm:$0xff]
    %v507 = vld [vmem:[#allocation5 + $0x968] sm:$0xff]
    %v508 = vld [vmem:[#allocation5 + $0x970] sm:$0xff]
    %v509 = vld [vmem:[#allocation5 + $0x978] sm:$0xff]
    %v510 = vld [vmem:[#allocation5 + $0x980] sm:$0xff]
    %v511 = vld [vmem:[#allocation5 + $0x988] sm:$0xff]
    %v512 = vld [vmem:[#allocation5 + $0x990] sm:$0xff]
    %v513 = vld [vmem:[#allocation5 + $0x998] sm:$0xff]
    %v514 = vld [vmem:[#allocation5 + $0x9a0] sm:$0xff]
    %v515 = vld [vmem:[#allocation5 + $0x9a8] sm:$0xff]
    %v516 = vld [vmem:[#allocation5 + $0x9b0] sm:$0xff]
    %v517 = vld [vmem:[#allocation5 + $0x9b8] sm:$0xff]
    %v518 = vld [vmem:[#allocation5 + $0x9c0] sm:$0xff]
    %v519 = vld [vmem:[#allocation5 + $0x9c8] sm:$0xff]
    %v520 = vld [vmem:[#allocation5 + $0x9d0] sm:$0xff]
    %v521 = vld [vmem:[#allocation5 + $0x9d8] sm:$0xff]
    %v522 = vld [vmem:[#allocation5 + $0x9e0] sm:$0xff]
    %v523 = vld [vmem:[#allocation5 + $0x9e8] sm:$0xff]
    %v524 = vld [vmem:[#allocation5 + $0x9f0] sm:$0xff]
    %v525 = vld [vmem:[#allocation5 + $0x9f8] sm:$0xff]
    %v526 = vld [vmem:[#allocation7] sm:$0xff]
    %v528 = vperm.slane %v526, 0
    %v529 = vperm.slane %v526, 1
    %v530 = vperm.slane %v526, 2
    %v531 = vperm.slane %v526, 3
    %v532 = vperm.slane %v526, 4
    %v533 = vperm.slane %v526, 5
    %v534 = vperm.slane %v526, 6
    %v535 = vperm.slane %v526, 7
    %v550 = vunpack.c.l.b16 %v200
    %v551 = vunpack.c.h.b16 %v200
    %v552 = vunpack.c.l.b16 %v201
    %v553 = vunpack.c.h.b16 %v201
    %v554 = vunpack.c.l.b16 %v202
    %v555 = vunpack.c.l.b16 %v203
    %v556 = vunpack.c.h.b16 %v203
    %v557 = vunpack.c.l.b16 %v204
    %v558 = vunpack.c.h.b16 %v204
    %v559 = vunpack.c.l.b16 %v205
    %v560 = vpack.c.b16 %v555, %v550
    %v561 = vpack.c.b16 %v556, %v551
    %v562 = vpack.c.b16 %v557, %v552
    %v563 = vpack.c.b16 %v558, %v553
    %v564 = vpack.c.b16 %v559, %v554
    %v890 = vunpack.c.l.b16 %v206
    %v891 = vunpack.c.h.b16 %v206
    %v892 = vunpack.c.l.b16 %v207
    %v893 = vunpack.c.h.b16 %v207
    %v894 = vunpack.c.l.b16 %v208
    %v895 = vunpack.c.h.b16 %v208
    %v896 = vunpack.c.l.b16 %v209
    %v897 = vunpack.c.h.b16 %v209
    %v898 = vunpack.c.l.b16 %v210
    %v899 = vunpack.c.h.b16 %v210
    %v900 = vunpack.c.l.b16 %v211
    %v901 = vunpack.c.h.b16 %v211
    %v902 = vunpack.c.l.b16 %v212
    %v903 = vunpack.c.h.b16 %v212
    %v904 = vunpack.c.l.b16 %v213
    %v905 = vunpack.c.h.b16 %v213
    %v906 = vunpack.c.l.b16 %v214
    %v907 = vunpack.c.h.b16 %v214
    %v908 = vunpack.c.l.b16 %v215
    %v909 = vunpack.c.h.b16 %v215
    %v910 = vunpack.c.l.b16 %v216
    %v911 = vunpack.c.h.b16 %v216
    %v912 = vunpack.c.l.b16 %v217
    %v913 = vunpack.c.h.b16 %v217
    %v914 = vunpack.c.l.b16 %v218
    %v915 = vunpack.c.h.b16 %v218
    %v916 = vunpack.c.l.b16 %v219
    %v917 = vunpack.c.h.b16 %v219
    %v918 = vunpack.c.l.b16 %v220
    %v919 = vunpack.c.h.b16 %v220
    %v920 = vunpack.c.l.b16 %v221
    %v921 = vunpack.c.h.b16 %v221
    %v922 = vunpack.c.l.b16 %v222
    %v923 = vunpack.c.h.b16 %v222
    %v924 = vunpack.c.l.b16 %v223
    %v925 = vunpack.c.h.b16 %v223
    %v926 = vunpack.c.l.b16 %v224
    %v927 = vunpack.c.h.b16 %v224
    %v928 = vunpack.c.l.b16 %v225
    %v929 = vunpack.c.h.b16 %v225
    %v930 = vunpack.c.l.b16 %v226
    %v931 = vunpack.c.h.b16 %v226
    %v932 = vunpack.c.l.b16 %v227
    %v933 = vunpack.c.h.b16 %v227
    %v934 = vunpack.c.l.b16 %v228
    %v935 = vunpack.c.h.b16 %v228
    %v936 = vunpack.c.l.b16 %v229
    %v937 = vunpack.c.h.b16 %v229
    %v938 = vunpack.c.l.b16 %v230
    %v939 = vunpack.c.h.b16 %v230
    %v940 = vunpack.c.l.b16 %v231
    %v941 = vunpack.c.h.b16 %v231
    %v942 = vunpack.c.l.b16 %v232
    %v943 = vunpack.c.h.b16 %v232
    %v944 = vunpack.c.l.b16 %v233
    %v945 = vunpack.c.h.b16 %v233
    %v946 = vunpack.c.l.b16 %v234
    %v947 = vunpack.c.h.b16 %v234
    %v948 = vunpack.c.l.b16 %v235
    %v949 = vunpack.c.h.b16 %v235
    %v950 = vunpack.c.l.b16 %v236
    %v951 = vunpack.c.h.b16 %v236
    %v952 = vunpack.c.l.b16 %v237
    %v953 = vunpack.c.h.b16 %v237
    %v954 = vunpack.c.l.b16 %v238
    %v955 = vunpack.c.h.b16 %v238
    %v956 = vunpack.c.l.b16 %v239
    %v957 = vunpack.c.h.b16 %v239
    %v958 = vunpack.c.l.b16 %v240
    %v959 = vunpack.c.h.b16 %v240
    %v960 = vunpack.c.l.b16 %v241
    %v961 = vunpack.c.h.b16 %v241
    %v962 = vunpack.c.l.b16 %v242
    %v963 = vunpack.c.h.b16 %v242
    %v964 = vunpack.c.l.b16 %v243
    %v965 = vunpack.c.h.b16 %v243
    %v966 = vunpack.c.l.b16 %v244
    %v967 = vunpack.c.h.b16 %v244
    %v968 = vunpack.c.l.b16 %v245
    %v969 = vunpack.c.h.b16 %v245
    %v970 = vunpack.c.l.b16 %v246
    %v971 = vunpack.c.h.b16 %v246
    %v972 = vunpack.c.l.b16 %v247
    %v973 = vunpack.c.h.b16 %v247
    %v974 = vunpack.c.l.b16 %v248
    %v975 = vunpack.c.h.b16 %v248
    %v976 = vunpack.c.l.b16 %v249
    %v977 = vunpack.c.h.b16 %v249
    %v978 = vunpack.c.l.b16 %v250
    %v979 = vunpack.c.h.b16 %v250
    %v980 = vunpack.c.l.b16 %v251
    %v981 = vunpack.c.h.b16 %v251
    %v982 = vunpack.c.l.b16 %v252
    %v983 = vunpack.c.h.b16 %v252
    %v984 = vunpack.c.l.b16 %v253
    %v985 = vunpack.c.h.b16 %v253
    %v986 = vunpack.c.l.b16 %v254
    %v987 = vunpack.c.h.b16 %v254
    %v988 = vunpack.c.l.b16 %v255
    %v989 = vunpack.c.h.b16 %v255
    %v990 = vunpack.c.l.b16 %v256
    %v991 = vunpack.c.h.b16 %v256
    %v992 = vunpack.c.l.b16 %v257
    %v993 = vunpack.c.h.b16 %v257
    %v994 = vunpack.c.l.b16 %v258
    %v995 = vunpack.c.h.b16 %v258
    %v996 = vunpack.c.l.b16 %v259
    %v997 = vunpack.c.h.b16 %v259
    %v998 = vunpack.c.l.b16 %v260
    %v999 = vunpack.c.h.b16 %v260
    %v1000 = vunpack.c.l.b16 %v261
    %v1001 = vunpack.c.h.b16 %v261
    %v1002 = vunpack.c.l.b16 %v262
    %v1003 = vunpack.c.h.b16 %v262
    %v1004 = vunpack.c.l.b16 %v263
    %v1005 = vunpack.c.h.b16 %v263
    %v1006 = vunpack.c.l.b16 %v264
    %v1007 = vunpack.c.h.b16 %v264
    %v1008 = vunpack.c.l.b16 %v265
    %v1009 = vunpack.c.h.b16 %v265
    %v1010 = vunpack.c.l.b16 %v266
    %v1011 = vunpack.c.h.b16 %v266
    %v1012 = vunpack.c.l.b16 %v267
    %v1013 = vunpack.c.h.b16 %v267
    %v1014 = vunpack.c.l.b16 %v268
    %v1015 = vunpack.c.h.b16 %v268
    %v1016 = vunpack.c.l.b16 %v269
    %v1017 = vunpack.c.h.b16 %v269
    %v1018 = vunpack.c.l.b16 %v270
    %v1019 = vunpack.c.h.b16 %v270
    %v1020 = vunpack.c.l.b16 %v271
    %v1021 = vunpack.c.h.b16 %v271
    %v1022 = vunpack.c.l.b16 %v272
    %v1023 = vunpack.c.h.b16 %v272
    %v1024 = vunpack.c.l.b16 %v273
    %v1025 = vunpack.c.h.b16 %v273
    %v1026 = vunpack.c.l.b16 %v274
    %v1027 = vunpack.c.h.b16 %v274
    %v1028 = vunpack.c.l.b16 %v275
    %v1029 = vunpack.c.h.b16 %v275
    %v1030 = vunpack.c.l.b16 %v276
    %v1031 = vunpack.c.h.b16 %v276
    %v1032 = vunpack.c.l.b16 %v277
    %v1033 = vunpack.c.h.b16 %v277
    %v1034 = vunpack.c.l.b16 %v278
    %v1035 = vunpack.c.h.b16 %v278
    %v1036 = vunpack.c.l.b16 %v279
    %v1037 = vunpack.c.h.b16 %v279
    %v1038 = vunpack.c.l.b16 %v280
    %v1039 = vunpack.c.h.b16 %v280
    %v1040 = vunpack.c.l.b16 %v281
    %v1041 = vunpack.c.h.b16 %v281
    %v1042 = vunpack.c.l.b16 %v282
    %v1043 = vunpack.c.h.b16 %v282
    %v1044 = vunpack.c.l.b16 %v283
    %v1045 = vunpack.c.h.b16 %v283
    %v1046 = vunpack.c.l.b16 %v284
    %v1047 = vunpack.c.h.b16 %v284
    %v1048 = vunpack.c.l.b16 %v285
    %v1049 = vunpack.c.h.b16 %v285
    %v1050 = vunpack.c.l.b16 %v286
    %v1051 = vunpack.c.h.b16 %v286
    %v1052 = vunpack.c.l.b16 %v287
    %v1053 = vunpack.c.h.b16 %v287
    %v1054 = vunpack.c.l.b16 %v288
    %v1055 = vunpack.c.h.b16 %v288
    %v1056 = vunpack.c.l.b16 %v289
    %v1057 = vunpack.c.h.b16 %v289
    %v1058 = vunpack.c.l.b16 %v290
    %v1059 = vunpack.c.h.b16 %v290
    %v1060 = vunpack.c.l.b16 %v291
    %v1061 = vunpack.c.h.b16 %v291
    %v1062 = vunpack.c.l.b16 %v292
    %v1063 = vunpack.c.h.b16 %v292
    %v1064 = vunpack.c.l.b16 %v293
    %v1065 = vunpack.c.h.b16 %v293
    %v1066 = vunpack.c.l.b16 %v294
    %v1067 = vunpack.c.h.b16 %v294
    %v1068 = vunpack.c.l.b16 %v295
    %v1069 = vunpack.c.h.b16 %v295
    %v1070 = vunpack.c.l.b16 %v296
    %v1071 = vunpack.c.h.b16 %v296
    %v1072 = vunpack.c.l.b16 %v297
    %v1073 = vunpack.c.h.b16 %v297
    %v1074 = vunpack.c.l.b16 %v298
    %v1075 = vunpack.c.h.b16 %v298
    %v1076 = vunpack.c.l.b16 %v299
    %v1077 = vunpack.c.h.b16 %v299
    %v1078 = vunpack.c.l.b16 %v300
    %v1079 = vunpack.c.h.b16 %v300
    %v1080 = vunpack.c.l.b16 %v301
    %v1081 = vunpack.c.h.b16 %v301
    %v1082 = vunpack.c.l.b16 %v302
    %v1083 = vunpack.c.h.b16 %v302
    %v1084 = vunpack.c.l.b16 %v303
    %v1085 = vunpack.c.h.b16 %v303
    %v1086 = vunpack.c.l.b16 %v304
    %v1087 = vunpack.c.h.b16 %v304
    %v1088 = vunpack.c.l.b16 %v305
    %v1089 = vunpack.c.h.b16 %v305
    %v1090 = vunpack.c.l.b16 %v306
    %v1091 = vunpack.c.h.b16 %v306
    %v1092 = vunpack.c.l.b16 %v307
    %v1093 = vunpack.c.h.b16 %v307
    %v1094 = vunpack.c.l.b16 %v308
    %v1095 = vunpack.c.h.b16 %v308
    %v1096 = vunpack.c.l.b16 %v309
    %v1097 = vunpack.c.h.b16 %v309
    %v1098 = vunpack.c.l.b16 %v310
    %v1099 = vunpack.c.h.b16 %v310
    %v1100 = vunpack.c.l.b16 %v311
    %v1101 = vunpack.c.h.b16 %v311
    %v1102 = vunpack.c.l.b16 %v312
    %v1103 = vunpack.c.h.b16 %v312
    %v1104 = vunpack.c.l.b16 %v313
    %v1105 = vunpack.c.h.b16 %v313
    %v1106 = vunpack.c.l.b16 %v314
    %v1107 = vunpack.c.h.b16 %v314
    %v1108 = vunpack.c.l.b16 %v315
    %v1109 = vunpack.c.h.b16 %v315
    %v1110 = vunpack.c.l.b16 %v316
    %v1111 = vunpack.c.h.b16 %v316
    %v1112 = vunpack.c.l.b16 %v317
    %v1113 = vunpack.c.h.b16 %v317
    %v1114 = vunpack.c.l.b16 %v318
    %v1115 = vunpack.c.h.b16 %v318
    %v1116 = vunpack.c.l.b16 %v319
    %v1117 = vunpack.c.h.b16 %v319
    %v1118 = vunpack.c.l.b16 %v320
    %v1119 = vunpack.c.h.b16 %v320
    %v1120 = vunpack.c.l.b16 %v321
    %v1121 = vunpack.c.h.b16 %v321
    %v1122 = vunpack.c.l.b16 %v322
    %v1123 = vunpack.c.h.b16 %v322
    %v1124 = vunpack.c.l.b16 %v323
    %v1125 = vunpack.c.h.b16 %v323
    %v1126 = vunpack.c.l.b16 %v324
    %v1127 = vunpack.c.h.b16 %v324
    %v1128 = vunpack.c.l.b16 %v325
    %v1129 = vunpack.c.h.b16 %v325
    %v1130 = vunpack.c.l.b16 %v326
    %v1131 = vunpack.c.h.b16 %v326
    %v1132 = vunpack.c.l.b16 %v327
    %v1133 = vunpack.c.h.b16 %v327
    %v1134 = vunpack.c.l.b16 %v328
    %v1135 = vunpack.c.h.b16 %v328
    %v1136 = vunpack.c.l.b16 %v329
    %v1137 = vunpack.c.h.b16 %v329
    %v1138 = vunpack.c.l.b16 %v330
    %v1139 = vunpack.c.h.b16 %v330
    %v1140 = vunpack.c.l.b16 %v331
    %v1141 = vunpack.c.h.b16 %v331
    %v1142 = vunpack.c.l.b16 %v332
    %v1143 = vunpack.c.h.b16 %v332
    %v1144 = vunpack.c.l.b16 %v333
    %v1145 = vunpack.c.h.b16 %v333
    %v1146 = vunpack.c.l.b16 %v334
    %v1147 = vunpack.c.h.b16 %v334
    %v1148 = vunpack.c.l.b16 %v335
    %v1149 = vunpack.c.h.b16 %v335
    %v1150 = vunpack.c.l.b16 %v336
    %v1151 = vunpack.c.h.b16 %v336
    %v1152 = vunpack.c.l.b16 %v337
    %v1153 = vunpack.c.h.b16 %v337
    %v1154 = vunpack.c.l.b16 %v338
    %v1155 = vunpack.c.h.b16 %v338
    %v1156 = vunpack.c.l.b16 %v339
    %v1157 = vunpack.c.h.b16 %v339
    %v1158 = vunpack.c.l.b16 %v340
    %v1159 = vunpack.c.h.b16 %v340
    %v1160 = vunpack.c.l.b16 %v341
    %v1161 = vunpack.c.h.b16 %v341
    %v1162 = vunpack.c.l.b16 %v342
    %v1163 = vunpack.c.h.b16 %v342
    %v1164 = vunpack.c.l.b16 %v343
    %v1165 = vunpack.c.h.b16 %v343
    %v1166 = vunpack.c.l.b16 %v344
    %v1167 = vunpack.c.h.b16 %v344
    %v1168 = vunpack.c.l.b16 %v345
    %v1169 = vunpack.c.h.b16 %v345
    %v1170 = vunpack.c.l.b16 %v346
    %v1171 = vunpack.c.h.b16 %v346
    %v1172 = vunpack.c.l.b16 %v347
    %v1173 = vunpack.c.h.b16 %v347
    %v1174 = vunpack.c.l.b16 %v348
    %v1175 = vunpack.c.h.b16 %v348
    %v1176 = vunpack.c.l.b16 %v349
    %v1177 = vunpack.c.h.b16 %v349
    %v1178 = vunpack.c.l.b16 %v350
    %v1179 = vunpack.c.h.b16 %v350
    %v1180 = vunpack.c.l.b16 %v351
    %v1181 = vunpack.c.h.b16 %v351
    %v1182 = vunpack.c.l.b16 %v352
    %v1183 = vunpack.c.h.b16 %v352
    %v1184 = vunpack.c.l.b16 %v353
    %v1185 = vunpack.c.h.b16 %v353
    %v1186 = vunpack.c.l.b16 %v354
    %v1187 = vunpack.c.h.b16 %v354
    %v1188 = vunpack.c.l.b16 %v355
    %v1189 = vunpack.c.h.b16 %v355
    %v1190 = vunpack.c.l.b16 %v356
    %v1191 = vunpack.c.h.b16 %v356
    %v1192 = vunpack.c.l.b16 %v357
    %v1193 = vunpack.c.h.b16 %v357
    %v1194 = vunpack.c.l.b16 %v358
    %v1195 = vunpack.c.h.b16 %v358
    %v1196 = vunpack.c.l.b16 %v359
    %v1197 = vunpack.c.h.b16 %v359
    %v1198 = vunpack.c.l.b16 %v360
    %v1199 = vunpack.c.h.b16 %v360
    %v1200 = vunpack.c.l.b16 %v361
    %v1201 = vunpack.c.h.b16 %v361
    %v1202 = vunpack.c.l.b16 %v362
    %v1203 = vunpack.c.h.b16 %v362
    %v1204 = vunpack.c.l.b16 %v363
    %v1205 = vunpack.c.h.b16 %v363
    %v1206 = vunpack.c.l.b16 %v364
    %v1207 = vunpack.c.h.b16 %v364
    %v1208 = vunpack.c.l.b16 %v365
    %v1209 = vunpack.c.h.b16 %v365
    %v1210 = vunpack.c.l.b16 %v366
    %v1211 = vunpack.c.h.b16 %v366
    %v1212 = vunpack.c.l.b16 %v367
    %v1213 = vunpack.c.h.b16 %v367
    %v1214 = vunpack.c.l.b16 %v368
    %v1215 = vunpack.c.h.b16 %v368
    %v1216 = vunpack.c.l.b16 %v369
    %v1217 = vunpack.c.h.b16 %v369
    %v1218 = vunpack.c.l.b16 %v370
    %v1219 = vunpack.c.h.b16 %v370
    %v1220 = vunpack.c.l.b16 %v371
    %v1221 = vunpack.c.h.b16 %v371
    %v1222 = vunpack.c.l.b16 %v372
    %v1223 = vunpack.c.h.b16 %v372
    %v1224 = vunpack.c.l.b16 %v373
    %v1225 = vunpack.c.h.b16 %v373
    %v1226 = vunpack.c.l.b16 %v374
    %v1227 = vunpack.c.h.b16 %v374
    %v1228 = vunpack.c.l.b16 %v375
    %v1229 = vunpack.c.h.b16 %v375
    %v1230 = vunpack.c.l.b16 %v376
    %v1231 = vunpack.c.h.b16 %v376
    %v1232 = vunpack.c.l.b16 %v377
    %v1233 = vunpack.c.h.b16 %v377
    %v1234 = vunpack.c.l.b16 %v378
    %v1235 = vunpack.c.h.b16 %v378
    %v1236 = vunpack.c.l.b16 %v379
    %v1237 = vunpack.c.h.b16 %v379
    %v1238 = vunpack.c.l.b16 %v380
    %v1239 = vunpack.c.h.b16 %v380
    %v1240 = vunpack.c.l.b16 %v381
    %v1241 = vunpack.c.h.b16 %v381
    %v1242 = vunpack.c.l.b16 %v382
    %v1243 = vunpack.c.h.b16 %v382
    %v1244 = vunpack.c.l.b16 %v383
    %v1245 = vunpack.c.h.b16 %v383
    %v1246 = vunpack.c.l.b16 %v384
    %v1247 = vunpack.c.h.b16 %v384
    %v1248 = vunpack.c.l.b16 %v385
    %v1249 = vunpack.c.h.b16 %v385
    %v1250 = vunpack.c.l.b16 %v386
    %v1251 = vunpack.c.h.b16 %v386
    %v1252 = vunpack.c.l.b16 %v387
    %v1253 = vunpack.c.h.b16 %v387
    %v1254 = vunpack.c.l.b16 %v388
    %v1255 = vunpack.c.h.b16 %v388
    %v1256 = vunpack.c.l.b16 %v389
    %v1257 = vunpack.c.h.b16 %v389
    %v1258 = vunpack.c.l.b16 %v390
    %v1259 = vunpack.c.h.b16 %v390
    %v1260 = vunpack.c.l.b16 %v391
    %v1261 = vunpack.c.h.b16 %v391
    %v1262 = vunpack.c.l.b16 %v392
    %v1263 = vunpack.c.h.b16 %v392
    %v1264 = vunpack.c.l.b16 %v393
    %v1265 = vunpack.c.h.b16 %v393
    %v1266 = vunpack.c.l.b16 %v394
    %v1267 = vunpack.c.h.b16 %v394
    %v1268 = vunpack.c.l.b16 %v395
    %v1269 = vunpack.c.h.b16 %v395
    %v1270 = vunpack.c.l.b16 %v396
    %v1271 = vunpack.c.h.b16 %v396
    %v1272 = vunpack.c.l.b16 %v397
    %v1273 = vunpack.c.h.b16 %v397
    %v1274 = vunpack.c.l.b16 %v398
    %v1275 = vunpack.c.h.b16 %v398
    %v1276 = vunpack.c.l.b16 %v399
    %v1277 = vunpack.c.h.b16 %v399
    %v1278 = vunpack.c.l.b16 %v400
    %v1279 = vunpack.c.h.b16 %v400
    %v1280 = vunpack.c.l.b16 %v401
    %v1281 = vunpack.c.h.b16 %v401
    %v1282 = vunpack.c.l.b16 %v402
    %v1283 = vunpack.c.h.b16 %v402
    %v1284 = vunpack.c.l.b16 %v403
    %v1285 = vunpack.c.h.b16 %v403
    %v1286 = vunpack.c.l.b16 %v404
    %v1287 = vunpack.c.h.b16 %v404
    %v1288 = vunpack.c.l.b16 %v405
    %v1289 = vunpack.c.h.b16 %v405
    %v1290 = vunpack.c.l.b16 %v406
    %v1291 = vunpack.c.h.b16 %v406
    %v1292 = vunpack.c.l.b16 %v407
    %v1293 = vunpack.c.h.b16 %v407
    %v1294 = vunpack.c.l.b16 %v408
    %v1295 = vunpack.c.h.b16 %v408
    %v1296 = vunpack.c.l.b16 %v409
    %v1297 = vunpack.c.h.b16 %v409
    %v1298 = vunpack.c.l.b16 %v410
    %v1299 = vunpack.c.h.b16 %v410
    %v1300 = vunpack.c.l.b16 %v411
    %v1301 = vunpack.c.h.b16 %v411
    %v1302 = vunpack.c.l.b16 %v412
    %v1303 = vunpack.c.h.b16 %v412
    %v1304 = vunpack.c.l.b16 %v413
    %v1305 = vunpack.c.h.b16 %v413
    %v1306 = vunpack.c.l.b16 %v414
    %v1307 = vunpack.c.h.b16 %v414
    %v1308 = vunpack.c.l.b16 %v415
    %v1309 = vunpack.c.h.b16 %v415
    %v1310 = vunpack.c.l.b16 %v416
    %v1311 = vunpack.c.h.b16 %v416
    %v1312 = vunpack.c.l.b16 %v417
    %v1313 = vunpack.c.h.b16 %v417
    %v1314 = vunpack.c.l.b16 %v418
    %v1315 = vunpack.c.h.b16 %v418
    %v1316 = vunpack.c.l.b16 %v419
    %v1317 = vunpack.c.h.b16 %v419
    %v1318 = vunpack.c.l.b16 %v420
    %v1319 = vunpack.c.h.b16 %v420
    %v1320 = vunpack.c.l.b16 %v421
    %v1321 = vunpack.c.h.b16 %v421
    %v1322 = vunpack.c.l.b16 %v422
    %v1323 = vunpack.c.h.b16 %v422
    %v1324 = vunpack.c.l.b16 %v423
    %v1325 = vunpack.c.h.b16 %v423
    %v1326 = vunpack.c.l.b16 %v424
    %v1327 = vunpack.c.h.b16 %v424
    %v1328 = vunpack.c.l.b16 %v425
    %v1329 = vunpack.c.h.b16 %v425
    %v1330 = vunpack.c.l.b16 %v426
    %v1331 = vunpack.c.h.b16 %v426
    %v1332 = vunpack.c.l.b16 %v427
    %v1333 = vunpack.c.h.b16 %v427
    %v1334 = vunpack.c.l.b16 %v428
    %v1335 = vunpack.c.h.b16 %v428
    %v1336 = vunpack.c.l.b16 %v429
    %v1337 = vunpack.c.h.b16 %v429
    %v1338 = vunpack.c.l.b16 %v430
    %v1339 = vunpack.c.h.b16 %v430
    %v1340 = vunpack.c.l.b16 %v431
    %v1341 = vunpack.c.h.b16 %v431
    %v1342 = vunpack.c.l.b16 %v432
    %v1343 = vunpack.c.h.b16 %v432
    %v1344 = vunpack.c.l.b16 %v433
    %v1345 = vunpack.c.h.b16 %v433
    %v1346 = vunpack.c.l.b16 %v434
    %v1347 = vunpack.c.h.b16 %v434
    %v1348 = vunpack.c.l.b16 %v435
    %v1349 = vunpack.c.h.b16 %v435
    %v1350 = vunpack.c.l.b16 %v436
    %v1351 = vunpack.c.h.b16 %v436
    %v1352 = vunpack.c.l.b16 %v437
    %v1353 = vunpack.c.h.b16 %v437
    %v1354 = vunpack.c.l.b16 %v438
    %v1355 = vunpack.c.h.b16 %v438
    %v1356 = vunpack.c.l.b16 %v439
    %v1357 = vunpack.c.h.b16 %v439
    %v1358 = vunpack.c.l.b16 %v440
    %v1359 = vunpack.c.h.b16 %v440
    %v1360 = vunpack.c.l.b16 %v441
    %v1361 = vunpack.c.h.b16 %v441
    %v1362 = vunpack.c.l.b16 %v442
    %v1363 = vunpack.c.h.b16 %v442
    %v1364 = vunpack.c.l.b16 %v443
    %v1365 = vunpack.c.h.b16 %v443
    %v1366 = vunpack.c.l.b16 %v444
    %v1367 = vunpack.c.h.b16 %v444
    %v1368 = vunpack.c.l.b16 %v445
    %v1369 = vunpack.c.h.b16 %v445
    %v1370 = vunpack.c.l.b16 %v446
    %v1371 = vunpack.c.h.b16 %v446
    %v1372 = vunpack.c.l.b16 %v447
    %v1373 = vunpack.c.h.b16 %v447
    %v1374 = vunpack.c.l.b16 %v448
    %v1375 = vunpack.c.h.b16 %v448
    %v1376 = vunpack.c.l.b16 %v449
    %v1377 = vunpack.c.h.b16 %v449
    %v1378 = vunpack.c.l.b16 %v450
    %v1379 = vunpack.c.h.b16 %v450
    %v1380 = vunpack.c.l.b16 %v451
    %v1381 = vunpack.c.h.b16 %v451
    %v1382 = vunpack.c.l.b16 %v452
    %v1383 = vunpack.c.h.b16 %v452
    %v1384 = vunpack.c.l.b16 %v453
    %v1385 = vunpack.c.h.b16 %v453
    %v1386 = vunpack.c.l.b16 %v454
    %v1387 = vunpack.c.h.b16 %v454
    %v1388 = vunpack.c.l.b16 %v455
    %v1389 = vunpack.c.h.b16 %v455
    %v1390 = vunpack.c.l.b16 %v456
    %v1391 = vunpack.c.h.b16 %v456
    %v1392 = vunpack.c.l.b16 %v457
    %v1393 = vunpack.c.h.b16 %v457
    %v1394 = vunpack.c.l.b16 %v458
    %v1395 = vunpack.c.h.b16 %v458
    %v1396 = vunpack.c.l.b16 %v459
    %v1397 = vunpack.c.h.b16 %v459
    %v1398 = vunpack.c.l.b16 %v460
    %v1399 = vunpack.c.h.b16 %v460
    %v1400 = vunpack.c.l.b16 %v461
    %v1401 = vunpack.c.h.b16 %v461
    %v1402 = vunpack.c.l.b16 %v462
    %v1403 = vunpack.c.h.b16 %v462
    %v1404 = vunpack.c.l.b16 %v463
    %v1405 = vunpack.c.h.b16 %v463
    %v1406 = vunpack.c.l.b16 %v464
    %v1407 = vunpack.c.h.b16 %v464
    %v1408 = vunpack.c.l.b16 %v465
    %v1409 = vunpack.c.h.b16 %v465
    %v1410 = vunpack.c.l.b16 %v466
    %v1411 = vunpack.c.h.b16 %v466
    %v1412 = vunpack.c.l.b16 %v467
    %v1413 = vunpack.c.h.b16 %v467
    %v1414 = vunpack.c.l.b16 %v468
    %v1415 = vunpack.c.h.b16 %v468
    %v1416 = vunpack.c.l.b16 %v469
    %v1417 = vunpack.c.h.b16 %v469
    %v1418 = vunpack.c.l.b16 %v470
    %v1419 = vunpack.c.h.b16 %v470
    %v1420 = vunpack.c.l.b16 %v471
    %v1421 = vunpack.c.h.b16 %v471
    %v1422 = vunpack.c.l.b16 %v472
    %v1423 = vunpack.c.h.b16 %v472
    %v1424 = vunpack.c.l.b16 %v473
    %v1425 = vunpack.c.h.b16 %v473
    %v1426 = vunpack.c.l.b16 %v474
    %v1427 = vunpack.c.h.b16 %v474
    %v1428 = vunpack.c.l.b16 %v475
    %v1429 = vunpack.c.h.b16 %v475
    %v1430 = vunpack.c.l.b16 %v476
    %v1431 = vunpack.c.h.b16 %v476
    %v1432 = vunpack.c.l.b16 %v477
    %v1433 = vunpack.c.h.b16 %v477
    %v1434 = vunpack.c.l.b16 %v478
    %v1435 = vunpack.c.h.b16 %v478
    %v1436 = vunpack.c.l.b16 %v479
    %v1437 = vunpack.c.h.b16 %v479
    %v1438 = vunpack.c.l.b16 %v480
    %v1439 = vunpack.c.h.b16 %v480
    %v1440 = vunpack.c.l.b16 %v481
    %v1441 = vunpack.c.h.b16 %v481
    %v1442 = vunpack.c.l.b16 %v482
    %v1443 = vunpack.c.h.b16 %v482
    %v1444 = vunpack.c.l.b16 %v483
    %v1445 = vunpack.c.h.b16 %v483
    %v1446 = vunpack.c.l.b16 %v484
    %v1447 = vunpack.c.h.b16 %v484
    %v1448 = vunpack.c.l.b16 %v485
    %v1449 = vunpack.c.h.b16 %v485
    %v1450 = vunpack.c.l.b16 %v486
    %v1451 = vunpack.c.h.b16 %v486
    %v1452 = vunpack.c.l.b16 %v487
    %v1453 = vunpack.c.h.b16 %v487
    %v1454 = vunpack.c.l.b16 %v488
    %v1455 = vunpack.c.h.b16 %v488
    %v1456 = vunpack.c.l.b16 %v489
    %v1457 = vunpack.c.h.b16 %v489
    %v1458 = vunpack.c.l.b16 %v490
    %v1459 = vunpack.c.h.b16 %v490
    %v1460 = vunpack.c.l.b16 %v491
    %v1461 = vunpack.c.h.b16 %v491
    %v1462 = vunpack.c.l.b16 %v492
    %v1463 = vunpack.c.h.b16 %v492
    %v1464 = vunpack.c.l.b16 %v493
    %v1465 = vunpack.c.h.b16 %v493
    %v1466 = vunpack.c.l.b16 %v494
    %v1467 = vunpack.c.h.b16 %v494
    %v1468 = vunpack.c.l.b16 %v495
    %v1469 = vunpack.c.h.b16 %v495
    %v1470 = vunpack.c.l.b16 %v496
    %v1471 = vunpack.c.h.b16 %v496
    %v1472 = vunpack.c.l.b16 %v497
    %v1473 = vunpack.c.h.b16 %v497
    %v1474 = vunpack.c.l.b16 %v498
    %v1475 = vunpack.c.h.b16 %v498
    %v1476 = vunpack.c.l.b16 %v499
    %v1477 = vunpack.c.h.b16 %v499
    %v1478 = vunpack.c.l.b16 %v500
    %v1479 = vunpack.c.h.b16 %v500
    %v1480 = vunpack.c.l.b16 %v501
    %v1481 = vunpack.c.h.b16 %v501
    %v1482 = vunpack.c.l.b16 %v502
    %v1483 = vunpack.c.h.b16 %v502
    %v1484 = vunpack.c.l.b16 %v503
    %v1485 = vunpack.c.h.b16 %v503
    %v1486 = vunpack.c.l.b16 %v504
    %v1487 = vunpack.c.h.b16 %v504
    %v1488 = vunpack.c.l.b16 %v505
    %v1489 = vunpack.c.h.b16 %v505
    %v1490 = vunpack.c.l.b16 %v506
    %v1491 = vunpack.c.h.b16 %v506
    %v1492 = vunpack.c.l.b16 %v507
    %v1493 = vunpack.c.h.b16 %v507
    %v1494 = vunpack.c.l.b16 %v508
    %v1495 = vunpack.c.h.b16 %v508
    %v1496 = vunpack.c.l.b16 %v509
    %v1497 = vunpack.c.h.b16 %v509
    %v1498 = vunpack.c.l.b16 %v510
    %v1499 = vunpack.c.h.b16 %v510
    %v1500 = vunpack.c.l.b16 %v511
    %v1501 = vunpack.c.h.b16 %v511
    %v1502 = vunpack.c.l.b16 %v512
    %v1503 = vunpack.c.h.b16 %v512
    %v1504 = vunpack.c.l.b16 %v513
    %v1505 = vunpack.c.h.b16 %v513
    %v1506 = vunpack.c.l.b16 %v514
    %v1507 = vunpack.c.h.b16 %v514
    %v1508 = vunpack.c.l.b16 %v515
    %v1509 = vunpack.c.h.b16 %v515
    %v1510 = vunpack.c.l.b16 %v516
    %v1511 = vunpack.c.h.b16 %v516
    %v1512 = vunpack.c.l.b16 %v517
    %v1513 = vunpack.c.h.b16 %v517
    %v1514 = vunpack.c.l.b16 %v518
    %v1515 = vunpack.c.h.b16 %v518
    %v1516 = vunpack.c.l.b16 %v519
    %v1517 = vunpack.c.h.b16 %v519
    %v1518 = vunpack.c.l.b16 %v520
    %v1519 = vunpack.c.h.b16 %v520
    %v1520 = vunpack.c.l.b16 %v521
    %v1521 = vunpack.c.h.b16 %v521
    %v1522 = vunpack.c.l.b16 %v522
    %v1523 = vunpack.c.h.b16 %v522
    %v1524 = vunpack.c.l.b16 %v523
    %v1525 = vunpack.c.h.b16 %v523
    %v1526 = vunpack.c.l.b16 %v524
    %v1527 = vunpack.c.h.b16 %v524
    %v1528 = vunpack.c.l.b16 %v525
    %v1529 = vunpack.c.h.b16 %v525
    %v1530 = vpack.c.b16 %v898, %v890
    %v1531 = vpack.c.b16 %v899, %v891
    %v1532 = vpack.c.b16 %v900, %v892
    %v1533 = vpack.c.b16 %v901, %v893
    %v1534 = vpack.c.b16 %v902, %v894
    %v1535 = vpack.c.b16 %v903, %v895
    %v1536 = vpack.c.b16 %v904, %v896
    %v1537 = vpack.c.b16 %v905, %v897
    %v1538 = vpack.c.b16 %v914, %v906
    %v1539 = vpack.c.b16 %v915, %v907
    %v1540 = vpack.c.b16 %v916, %v908
    %v1541 = vpack.c.b16 %v917, %v909
    %v1542 = vpack.c.b16 %v918, %v910
    %v1543 = vpack.c.b16 %v919, %v911
    %v1544 = vpack.c.b16 %v920, %v912
    %v1545 = vpack.c.b16 %v921, %v913
    %v1546 = vpack.c.b16 %v930, %v922
    %v1547 = vpack.c.b16 %v931, %v923
    %v1548 = vpack.c.b16 %v932, %v924
    %v1549 = vpack.c.b16 %v933, %v925
    %v1550 = vpack.c.b16 %v934, %v926
    %v1551 = vpack.c.b16 %v935, %v927
    %v1552 = vpack.c.b16 %v936, %v928
    %v1553 = vpack.c.b16 %v937, %v929
    %v1554 = vpack.c.b16 %v946, %v938
    %v1555 = vpack.c.b16 %v947, %v939
    %v1556 = vpack.c.b16 %v948, %v940
    %v1557 = vpack.c.b16 %v949, %v941
    %v1558 = vpack.c.b16 %v950, %v942
    %v1559 = vpack.c.b16 %v951, %v943
    %v1560 = vpack.c.b16 %v952, %v944
    %v1561 = vpack.c.b16 %v953, %v945
    %v1562 = vpack.c.b16 %v962, %v954
    %v1563 = vpack.c.b16 %v963, %v955
    %v1564 = vpack.c.b16 %v964, %v956
    %v1565 = vpack.c.b16 %v965, %v957
    %v1566 = vpack.c.b16 %v966, %v958
    %v1567 = vpack.c.b16 %v967, %v959
    %v1568 = vpack.c.b16 %v968, %v960
    %v1569 = vpack.c.b16 %v969, %v961
    %v1570 = vpack.c.b16 %v978, %v970
    %v1571 = vpack.c.b16 %v979, %v971
    %v1572 = vpack.c.b16 %v980, %v972
    %v1573 = vpack.c.b16 %v981, %v973
    %v1574 = vpack.c.b16 %v982, %v974
    %v1575 = vpack.c.b16 %v983, %v975
    %v1576 = vpack.c.b16 %v984, %v976
    %v1577 = vpack.c.b16 %v985, %v977
    %v1578 = vpack.c.b16 %v994, %v986
    %v1579 = vpack.c.b16 %v995, %v987
    %v1580 = vpack.c.b16 %v996, %v988
    %v1581 = vpack.c.b16 %v997, %v989
    %v1582 = vpack.c.b16 %v998, %v990
    %v1583 = vpack.c.b16 %v999, %v991
    %v1584 = vpack.c.b16 %v1000, %v992
    %v1585 = vpack.c.b16 %v1001, %v993
    %v1586 = vpack.c.b16 %v1010, %v1002
    %v1587 = vpack.c.b16 %v1011, %v1003
    %v1588 = vpack.c.b16 %v1012, %v1004
    %v1589 = vpack.c.b16 %v1013, %v1005
    %v1590 = vpack.c.b16 %v1014, %v1006
    %v1591 = vpack.c.b16 %v1015, %v1007
    %v1592 = vpack.c.b16 %v1016, %v1008
    %v1593 = vpack.c.b16 %v1017, %v1009
    %v1594 = vpack.c.b16 %v1026, %v1018
    %v1595 = vpack.c.b16 %v1027, %v1019
    %v1596 = vpack.c.b16 %v1028, %v1020
    %v1597 = vpack.c.b16 %v1029, %v1021
    %v1598 = vpack.c.b16 %v1030, %v1022
    %v1599 = vpack.c.b16 %v1031, %v1023
    %v1600 = vpack.c.b16 %v1032, %v1024
    %v1601 = vpack.c.b16 %v1033, %v1025
    %v1602 = vpack.c.b16 %v1042, %v1034
    %v1603 = vpack.c.b16 %v1043, %v1035
    %v1604 = vpack.c.b16 %v1044, %v1036
    %v1605 = vpack.c.b16 %v1045, %v1037
    %v1606 = vpack.c.b16 %v1046, %v1038
    %v1607 = vpack.c.b16 %v1047, %v1039
    %v1608 = vpack.c.b16 %v1048, %v1040
    %v1609 = vpack.c.b16 %v1049, %v1041
    %v1610 = vpack.c.b16 %v1058, %v1050
    %v1611 = vpack.c.b16 %v1059, %v1051
    %v1612 = vpack.c.b16 %v1060, %v1052
    %v1613 = vpack.c.b16 %v1061, %v1053
    %v1614 = vpack.c.b16 %v1062, %v1054
    %v1615 = vpack.c.b16 %v1063, %v1055
    %v1616 = vpack.c.b16 %v1064, %v1056
    %v1617 = vpack.c.b16 %v1065, %v1057
    %v1618 = vpack.c.b16 %v1074, %v1066
    %v1619 = vpack.c.b16 %v1075, %v1067
    %v1620 = vpack.c.b16 %v1076, %v1068
    %v1621 = vpack.c.b16 %v1077, %v1069
    %v1622 = vpack.c.b16 %v1078, %v1070
    %v1623 = vpack.c.b16 %v1079, %v1071
    %v1624 = vpack.c.b16 %v1080, %v1072
    %v1625 = vpack.c.b16 %v1081, %v1073
    %v1626 = vpack.c.b16 %v1090, %v1082
    %v1627 = vpack.c.b16 %v1091, %v1083
    %v1628 = vpack.c.b16 %v1092, %v1084
    %v1629 = vpack.c.b16 %v1093, %v1085
    %v1630 = vpack.c.b16 %v1094, %v1086
    %v1631 = vpack.c.b16 %v1095, %v1087
    %v1632 = vpack.c.b16 %v1096, %v1088
    %v1633 = vpack.c.b16 %v1097, %v1089
    %v1634 = vpack.c.b16 %v1106, %v1098
    %v1635 = vpack.c.b16 %v1107, %v1099
    %v1636 = vpack.c.b16 %v1108, %v1100
    %v1637 = vpack.c.b16 %v1109, %v1101
    %v1638 = vpack.c.b16 %v1110, %v1102
    %v1639 = vpack.c.b16 %v1111, %v1103
    %v1640 = vpack.c.b16 %v1112, %v1104
    %v1641 = vpack.c.b16 %v1113, %v1105
    %v1642 = vpack.c.b16 %v1122, %v1114
    %v1643 = vpack.c.b16 %v1123, %v1115
    %v1644 = vpack.c.b16 %v1124, %v1116
    %v1645 = vpack.c.b16 %v1125, %v1117
    %v1646 = vpack.c.b16 %v1126, %v1118
    %v1647 = vpack.c.b16 %v1127, %v1119
    %v1648 = vpack.c.b16 %v1128, %v1120
    %v1649 = vpack.c.b16 %v1129, %v1121
    %v1650 = vpack.c.b16 %v1138, %v1130
    %v1651 = vpack.c.b16 %v1139, %v1131
    %v1652 = vpack.c.b16 %v1140, %v1132
    %v1653 = vpack.c.b16 %v1141, %v1133
    %v1654 = vpack.c.b16 %v1142, %v1134
    %v1655 = vpack.c.b16 %v1143, %v1135
    %v1656 = vpack.c.b16 %v1144, %v1136
    %v1657 = vpack.c.b16 %v1145, %v1137
    %v1658 = vpack.c.b16 %v1154, %v1146
    %v1659 = vpack.c.b16 %v1155, %v1147
    %v1660 = vpack.c.b16 %v1156, %v1148
    %v1661 = vpack.c.b16 %v1157, %v1149
    %v1662 = vpack.c.b16 %v1158, %v1150
    %v1663 = vpack.c.b16 %v1159, %v1151
    %v1664 = vpack.c.b16 %v1160, %v1152
    %v1665 = vpack.c.b16 %v1161, %v1153
    %v1666 = vpack.c.b16 %v1170, %v1162
    %v1667 = vpack.c.b16 %v1171, %v1163
    %v1668 = vpack.c.b16 %v1172, %v1164
    %v1669 = vpack.c.b16 %v1173, %v1165
    %v1670 = vpack.c.b16 %v1174, %v1166
    %v1671 = vpack.c.b16 %v1175, %v1167
    %v1672 = vpack.c.b16 %v1176, %v1168
    %v1673 = vpack.c.b16 %v1177, %v1169
    %v1674 = vpack.c.b16 %v1186, %v1178
    %v1675 = vpack.c.b16 %v1187, %v1179
    %v1676 = vpack.c.b16 %v1188, %v1180
    %v1677 = vpack.c.b16 %v1189, %v1181
    %v1678 = vpack.c.b16 %v1190, %v1182
    %v1679 = vpack.c.b16 %v1191, %v1183
    %v1680 = vpack.c.b16 %v1192, %v1184
    %v1681 = vpack.c.b16 %v1193, %v1185
    %v1682 = vpack.c.b16 %v1202, %v1194
    %v1683 = vpack.c.b16 %v1203, %v1195
    %v1684 = vpack.c.b16 %v1204, %v1196
    %v1685 = vpack.c.b16 %v1205, %v1197
    %v1686 = vpack.c.b16 %v1206, %v1198
    %v1687 = vpack.c.b16 %v1207, %v1199
    %v1688 = vpack.c.b16 %v1208, %v1200
    %v1689 = vpack.c.b16 %v1209, %v1201
    %v1690 = vpack.c.b16 %v1218, %v1210
    %v1691 = vpack.c.b16 %v1219, %v1211
    %v1692 = vpack.c.b16 %v1220, %v1212
    %v1693 = vpack.c.b16 %v1221, %v1213
    %v1694 = vpack.c.b16 %v1222, %v1214
    %v1695 = vpack.c.b16 %v1223, %v1215
    %v1696 = vpack.c.b16 %v1224, %v1216
    %v1697 = vpack.c.b16 %v1225, %v1217
    %v1698 = vpack.c.b16 %v1234, %v1226
    %v1699 = vpack.c.b16 %v1235, %v1227
    %v1700 = vpack.c.b16 %v1236, %v1228
    %v1701 = vpack.c.b16 %v1237, %v1229
    %v1702 = vpack.c.b16 %v1238, %v1230
    %v1703 = vpack.c.b16 %v1239, %v1231
    %v1704 = vpack.c.b16 %v1240, %v1232
    %v1705 = vpack.c.b16 %v1241, %v1233
    %v1706 = vpack.c.b16 %v1250, %v1242
    %v1707 = vpack.c.b16 %v1251, %v1243
    %v1708 = vpack.c.b16 %v1252, %v1244
    %v1709 = vpack.c.b16 %v1253, %v1245
    %v1710 = vpack.c.b16 %v1254, %v1246
    %v1711 = vpack.c.b16 %v1255, %v1247
    %v1712 = vpack.c.b16 %v1256, %v1248
    %v1713 = vpack.c.b16 %v1257, %v1249
    %v1714 = vpack.c.b16 %v1266, %v1258
    %v1715 = vpack.c.b16 %v1267, %v1259
    %v1716 = vpack.c.b16 %v1268, %v1260
    %v1717 = vpack.c.b16 %v1269, %v1261
    %v1718 = vpack.c.b16 %v1270, %v1262
    %v1719 = vpack.c.b16 %v1271, %v1263
    %v1720 = vpack.c.b16 %v1272, %v1264
    %v1721 = vpack.c.b16 %v1273, %v1265
    %v1722 = vpack.c.b16 %v1282, %v1274
    %v1723 = vpack.c.b16 %v1283, %v1275
    %v1724 = vpack.c.b16 %v1284, %v1276
    %v1725 = vpack.c.b16 %v1285, %v1277
    %v1726 = vpack.c.b16 %v1286, %v1278
    %v1727 = vpack.c.b16 %v1287, %v1279
    %v1728 = vpack.c.b16 %v1288, %v1280
    %v1729 = vpack.c.b16 %v1289, %v1281
    %v1730 = vpack.c.b16 %v1298, %v1290
    %v1731 = vpack.c.b16 %v1299, %v1291
    %v1732 = vpack.c.b16 %v1300, %v1292
    %v1733 = vpack.c.b16 %v1301, %v1293
    %v1734 = vpack.c.b16 %v1302, %v1294
    %v1735 = vpack.c.b16 %v1303, %v1295
    %v1736 = vpack.c.b16 %v1304, %v1296
    %v1737 = vpack.c.b16 %v1305, %v1297
    %v1738 = vpack.c.b16 %v1314, %v1306
    %v1739 = vpack.c.b16 %v1315, %v1307
    %v1740 = vpack.c.b16 %v1316, %v1308
    %v1741 = vpack.c.b16 %v1317, %v1309
    %v1742 = vpack.c.b16 %v1318, %v1310
    %v1743 = vpack.c.b16 %v1319, %v1311
    %v1744 = vpack.c.b16 %v1320, %v1312
    %v1745 = vpack.c.b16 %v1321, %v1313
    %v1746 = vpack.c.b16 %v1330, %v1322
    %v1747 = vpack.c.b16 %v1331, %v1323
    %v1748 = vpack.c.b16 %v1332, %v1324
    %v1749 = vpack.c.b16 %v1333, %v1325
    %v1750 = vpack.c.b16 %v1334, %v1326
    %v1751 = vpack.c.b16 %v1335, %v1327
    %v1752 = vpack.c.b16 %v1336, %v1328
    %v1753 = vpack.c.b16 %v1337, %v1329
    %v1754 = vpack.c.b16 %v1346, %v1338
    %v1755 = vpack.c.b16 %v1347, %v1339
    %v1756 = vpack.c.b16 %v1348, %v1340
    %v1757 = vpack.c.b16 %v1349, %v1341
    %v1758 = vpack.c.b16 %v1350, %v1342
    %v1759 = vpack.c.b16 %v1351, %v1343
    %v1760 = vpack.c.b16 %v1352, %v1344
    %v1761 = vpack.c.b16 %v1353, %v1345
    %v1762 = vpack.c.b16 %v1362, %v1354
    %v1763 = vpack.c.b16 %v1363, %v1355
    %v1764 = vpack.c.b16 %v1364, %v1356
    %v1765 = vpack.c.b16 %v1365, %v1357
    %v1766 = vpack.c.b16 %v1366, %v1358
    %v1767 = vpack.c.b16 %v1367, %v1359
    %v1768 = vpack.c.b16 %v1368, %v1360
    %v1769 = vpack.c.b16 %v1369, %v1361
    %v1770 = vpack.c.b16 %v1378, %v1370
    %v1771 = vpack.c.b16 %v1379, %v1371
    %v1772 = vpack.c.b16 %v1380, %v1372
    %v1773 = vpack.c.b16 %v1381, %v1373
    %v1774 = vpack.c.b16 %v1382, %v1374
    %v1775 = vpack.c.b16 %v1383, %v1375
    %v1776 = vpack.c.b16 %v1384, %v1376
    %v1777 = vpack.c.b16 %v1385, %v1377
    %v1778 = vpack.c.b16 %v1394, %v1386
    %v1779 = vpack.c.b16 %v1395, %v1387
    %v1780 = vpack.c.b16 %v1396, %v1388
    %v1781 = vpack.c.b16 %v1397, %v1389
    %v1782 = vpack.c.b16 %v1398, %v1390
    %v1783 = vpack.c.b16 %v1399, %v1391
    %v1784 = vpack.c.b16 %v1400, %v1392
    %v1785 = vpack.c.b16 %v1401, %v1393
    %v1786 = vpack.c.b16 %v1410, %v1402
    %v1787 = vpack.c.b16 %v1411, %v1403
    %v1788 = vpack.c.b16 %v1412, %v1404
    %v1789 = vpack.c.b16 %v1413, %v1405
    %v1790 = vpack.c.b16 %v1414, %v1406
    %v1791 = vpack.c.b16 %v1415, %v1407
    %v1792 = vpack.c.b16 %v1416, %v1408
    %v1793 = vpack.c.b16 %v1417, %v1409
    %v1794 = vpack.c.b16 %v1426, %v1418
    %v1795 = vpack.c.b16 %v1427, %v1419
    %v1796 = vpack.c.b16 %v1428, %v1420
    %v1797 = vpack.c.b16 %v1429, %v1421
    %v1798 = vpack.c.b16 %v1430, %v1422
    %v1799 = vpack.c.b16 %v1431, %v1423
    %v1800 = vpack.c.b16 %v1432, %v1424
    %v1801 = vpack.c.b16 %v1433, %v1425
    %v1802 = vpack.c.b16 %v1442, %v1434
    %v1803 = vpack.c.b16 %v1443, %v1435
    %v1804 = vpack.c.b16 %v1444, %v1436
    %v1805 = vpack.c.b16 %v1445, %v1437
    %v1806 = vpack.c.b16 %v1446, %v1438
    %v1807 = vpack.c.b16 %v1447, %v1439
    %v1808 = vpack.c.b16 %v1448, %v1440
    %v1809 = vpack.c.b16 %v1449, %v1441
    %v1810 = vpack.c.b16 %v1458, %v1450
    %v1811 = vpack.c.b16 %v1459, %v1451
    %v1812 = vpack.c.b16 %v1460, %v1452
    %v1813 = vpack.c.b16 %v1461, %v1453
    %v1814 = vpack.c.b16 %v1462, %v1454
    %v1815 = vpack.c.b16 %v1463, %v1455
    %v1816 = vpack.c.b16 %v1464, %v1456
    %v1817 = vpack.c.b16 %v1465, %v1457
    %v1818 = vpack.c.b16 %v1474, %v1466
    %v1819 = vpack.c.b16 %v1475, %v1467
    %v1820 = vpack.c.b16 %v1476, %v1468
    %v1821 = vpack.c.b16 %v1477, %v1469
    %v1822 = vpack.c.b16 %v1478, %v1470
    %v1823 = vpack.c.b16 %v1479, %v1471
    %v1824 = vpack.c.b16 %v1480, %v1472
    %v1825 = vpack.c.b16 %v1481, %v1473
    %v1826 = vpack.c.b16 %v1490, %v1482
    %v1827 = vpack.c.b16 %v1491, %v1483
    %v1828 = vpack.c.b16 %v1492, %v1484
    %v1829 = vpack.c.b16 %v1493, %v1485
    %v1830 = vpack.c.b16 %v1494, %v1486
    %v1831 = vpack.c.b16 %v1495, %v1487
    %v1832 = vpack.c.b16 %v1496, %v1488
    %v1833 = vpack.c.b16 %v1497, %v1489
    %v1834 = vpack.c.b16 %v1506, %v1498
    %v1835 = vpack.c.b16 %v1507, %v1499
    %v1836 = vpack.c.b16 %v1508, %v1500
    %v1837 = vpack.c.b16 %v1509, %v1501
    %v1838 = vpack.c.b16 %v1510, %v1502
    %v1839 = vpack.c.b16 %v1511, %v1503
    %v1840 = vpack.c.b16 %v1512, %v1504
    %v1841 = vpack.c.b16 %v1513, %v1505
    %v1842 = vpack.c.b16 %v1522, %v1514
    %v1843 = vpack.c.b16 %v1523, %v1515
    %v1844 = vpack.c.b16 %v1524, %v1516
    %v1845 = vpack.c.b16 %v1525, %v1517
    %v1846 = vpack.c.b16 %v1526, %v1518
    %v1847 = vpack.c.b16 %v1527, %v1519
    %v1848 = vpack.c.b16 %v1528, %v1520
    %v1849 = vpack.c.b16 %v1529, %v1521
    %2170 = vmatpush.bf16.msra.mxu0 %v1586
    %2171 = vmatpush.bf16.msra.mxu0 %v1578
    %2172 = vmatpush.bf16.msra.mxu0 %v1570
    %2173 = vmatpush.bf16.msra.mxu0 %v1562
    %2174 = vmatpush.bf16.msra.mxu0 %v1554
    %2175 = vmatpush.bf16.msra.mxu0 %v1546
    %2176 = vmatpush.bf16.msra.mxu0 %v1538
    %2177 = vmatpush.bf16.msra.mxu0 %v1530
    %2178 = vmatmul.bf16.gmra.mxu0 %v560
    %v2179 = vpop.f32.mrf.mxu0
    %v2180 = vadd.f32 %v528, %v2179
    %v2181 = vpop.f32.mrf.mxu0
    %v2182 = vadd.f32 %v528, %v2181
    %2183 = vdwg.mxu0
    %2184 = vmatpush.bf16.msra.mxu0 %v1650
    %2185 = vmatpush.bf16.msra.mxu0 %v1642
    %2186 = vmatpush.bf16.msra.mxu0 %v1634
    %2187 = vmatpush.bf16.msra.mxu0 %v1626
    %2188 = vmatpush.bf16.msra.mxu0 %v1618
    %2189 = vmatpush.bf16.msra.mxu0 %v1610
    %2190 = vmatpush.bf16.msra.mxu0 %v1602
    %2191 = vmatpush.bf16.msra.mxu0 %v1594
    %2192 = vmatmul.bf16.gmra.mxu0 %v561
    %v2193 = vpop.f32.mrf.mxu0
    %v2194 = vadd.f32 %v2180, %v2193
    %v2195 = vpop.f32.mrf.mxu0
    %v2196 = vadd.f32 %v2182, %v2195
    %2197 = vdwg.mxu0
    %2198 = vmatpush.bf16.msra.mxu0 %v1714
    %2199 = vmatpush.bf16.msra.mxu0 %v1706
    %2200 = vmatpush.bf16.msra.mxu0 %v1698
    %2201 = vmatpush.bf16.msra.mxu0 %v1690
    %2202 = vmatpush.bf16.msra.mxu0 %v1682
    %2203 = vmatpush.bf16.msra.mxu0 %v1674
    %2204 = vmatpush.bf16.msra.mxu0 %v1666
    %2205 = vmatpush.bf16.msra.mxu0 %v1658
    %2206 = vmatmul.bf16.gmra.mxu0 %v562
    %v2207 = vpop.f32.mrf.mxu0
    %v2208 = vadd.f32 %v2194, %v2207
    %v2209 = vpop.f32.mrf.mxu0
    %v2210 = vadd.f32 %v2196, %v2209
    %2211 = vdwg.mxu0
    %2212 = vmatpush.bf16.msra.mxu0 %v1778
    %2213 = vmatpush.bf16.msra.mxu0 %v1770
    %2214 = vmatpush.bf16.msra.mxu0 %v1762
    %2215 = vmatpush.bf16.msra.mxu0 %v1754
    %2216 = vmatpush.bf16.msra.mxu0 %v1746
    %2217 = vmatpush.bf16.msra.mxu0 %v1738
    %2218 = vmatpush.bf16.msra.mxu0 %v1730
    %2219 = vmatpush.bf16.msra.mxu0 %v1722
    %2220 = vmatmul.bf16.gmra.mxu0 %v563
    %v2221 = vpop.f32.mrf.mxu0
    %v2222 = vadd.f32 %v2208, %v2221
    %v2223 = vpop.f32.mrf.mxu0
    %v2224 = vadd.f32 %v2210, %v2223
    %2225 = vdwg.mxu0
    %2226 = vmatpush.bf16.msra.mxu0 %v1842
    %2227 = vmatpush.bf16.msra.mxu0 %v1834
    %2228 = vmatpush.bf16.msra.mxu0 %v1826
    %2229 = vmatpush.bf16.msra.mxu0 %v1818
    %2230 = vmatpush.bf16.msra.mxu0 %v1810
    %2231 = vmatpush.bf16.msra.mxu0 %v1802
    %2232 = vmatpush.bf16.msra.mxu0 %v1794
    %2233 = vmatpush.bf16.msra.mxu0 %v1786
    %2234 = vmatmul.bf16.gmra.mxu0 %v564
    %v2235 = vpop.f32.mrf.mxu0
    %v2236 = vadd.f32 %v2222, %v2235
    %v2237 = vpop.f32.mrf.mxu0
    %v2238 = vadd.f32 %v2224, %v2237
    %2239 = vdwg.mxu0
    %2240 = vmatpush.bf16.msra.mxu0 %v1587
    %2241 = vmatpush.bf16.msra.mxu0 %v1579
    %2242 = vmatpush.bf16.msra.mxu0 %v1571
    %2243 = vmatpush.bf16.msra.mxu0 %v1563
    %2244 = vmatpush.bf16.msra.mxu0 %v1555
    %2245 = vmatpush.bf16.msra.mxu0 %v1547
    %2246 = vmatpush.bf16.msra.mxu0 %v1539
    %2247 = vmatpush.bf16.msra.mxu0 %v1531
    %2248 = vmatmul.bf16.gmra.mxu0 %v560
    %v2249 = vpop.f32.mrf.mxu0
    %v2250 = vadd.f32 %v529, %v2249
    %v2251 = vpop.f32.mrf.mxu0
    %v2252 = vadd.f32 %v529, %v2251
    %2253 = vdwg.mxu0
    %2254 = vmatpush.bf16.msra.mxu0 %v1651
    %2255 = vmatpush.bf16.msra.mxu0 %v1643
    %2256 = vmatpush.bf16.msra.mxu0 %v1635
    %2257 = vmatpush.bf16.msra.mxu0 %v1627
    %2258 = vmatpush.bf16.msra.mxu0 %v1619
    %2259 = vmatpush.bf16.msra.mxu0 %v1611
    %2260 = vmatpush.bf16.msra.mxu0 %v1603
    %2261 = vmatpush.bf16.msra.mxu0 %v1595
    %2262 = vmatmul.bf16.gmra.mxu0 %v561
    %v2263 = vpop.f32.mrf.mxu0
    %v2264 = vadd.f32 %v2250, %v2263
    %v2265 = vpop.f32.mrf.mxu0
    %v2266 = vadd.f32 %v2252, %v2265
    %2267 = vdwg.mxu0
    %2268 = vmatpush.bf16.msra.mxu0 %v1715
    %2269 = vmatpush.bf16.msra.mxu0 %v1707
    %2270 = vmatpush.bf16.msra.mxu0 %v1699
    %2271 = vmatpush.bf16.msra.mxu0 %v1691
    %2272 = vmatpush.bf16.msra.mxu0 %v1683
    %2273 = vmatpush.bf16.msra.mxu0 %v1675
    %2274 = vmatpush.bf16.msra.mxu0 %v1667
    %2275 = vmatpush.bf16.msra.mxu0 %v1659
    %2276 = vmatmul.bf16.gmra.mxu0 %v562
    %v2277 = vpop.f32.mrf.mxu0
    %v2278 = vadd.f32 %v2264, %v2277
    %v2279 = vpop.f32.mrf.mxu0
    %v2280 = vadd.f32 %v2266, %v2279
    %2281 = vdwg.mxu0
    %2282 = vmatpush.bf16.msra.mxu0 %v1779
    %2283 = vmatpush.bf16.msra.mxu0 %v1771
    %2284 = vmatpush.bf16.msra.mxu0 %v1763
    %2285 = vmatpush.bf16.msra.mxu0 %v1755
    %2286 = vmatpush.bf16.msra.mxu0 %v1747
    %2287 = vmatpush.bf16.msra.mxu0 %v1739
    %2288 = vmatpush.bf16.msra.mxu0 %v1731
    %2289 = vmatpush.bf16.msra.mxu0 %v1723
    %2290 = vmatmul.bf16.gmra.mxu0 %v563
    %v2291 = vpop.f32.mrf.mxu0
    %v2292 = vadd.f32 %v2278, %v2291
    %v2293 = vpop.f32.mrf.mxu0
    %v2294 = vadd.f32 %v2280, %v2293
    %2295 = vdwg.mxu0
    %2296 = vmatpush.bf16.msra.mxu0 %v1843
    %2297 = vmatpush.bf16.msra.mxu0 %v1835
    %2298 = vmatpush.bf16.msra.mxu0 %v1827
    %2299 = vmatpush.bf16.msra.mxu0 %v1819
    %2300 = vmatpush.bf16.msra.mxu0 %v1811
    %2301 = vmatpush.bf16.msra.mxu0 %v1803
    %2302 = vmatpush.bf16.msra.mxu0 %v1795
    %2303 = vmatpush.bf16.msra.mxu0 %v1787
    %2304 = vmatmul.bf16.gmra.mxu0 %v564
    %v2305 = vpop.f32.mrf.mxu0
    %v2306 = vadd.f32 %v2292, %v2305
    %v2307 = vpop.f32.mrf.mxu0
    %v2308 = vadd.f32 %v2294, %v2307
    %2309 = vdwg.mxu0
    %2310 = vmatpush.bf16.msra.mxu0 %v1588
    %2311 = vmatpush.bf16.msra.mxu0 %v1580
    %2312 = vmatpush.bf16.msra.mxu0 %v1572
    %2313 = vmatpush.bf16.msra.mxu0 %v1564
    %2314 = vmatpush.bf16.msra.mxu0 %v1556
    %2315 = vmatpush.bf16.msra.mxu0 %v1548
    %2316 = vmatpush.bf16.msra.mxu0 %v1540
    %2317 = vmatpush.bf16.msra.mxu0 %v1532
    %2318 = vmatmul.bf16.gmra.mxu0 %v560
    %v2319 = vpop.f32.mrf.mxu0
    %v2320 = vadd.f32 %v530, %v2319
    %v2321 = vpop.f32.mrf.mxu0
    %v2322 = vadd.f32 %v530, %v2321
    %2323 = vdwg.mxu0
    %2324 = vmatpush.bf16.msra.mxu0 %v1652
    %2325 = vmatpush.bf16.msra.mxu0 %v1644
    %2326 = vmatpush.bf16.msra.mxu0 %v1636
    %2327 = vmatpush.bf16.msra.mxu0 %v1628
    %2328 = vmatpush.bf16.msra.mxu0 %v1620
    %2329 = vmatpush.bf16.msra.mxu0 %v1612
    %2330 = vmatpush.bf16.msra.mxu0 %v1604
    %2331 = vmatpush.bf16.msra.mxu0 %v1596
    %2332 = vmatmul.bf16.gmra.mxu0 %v561
    %v2333 = vpop.f32.mrf.mxu0
    %v2334 = vadd.f32 %v2320, %v2333
    %v2335 = vpop.f32.mrf.mxu0
    %v2336 = vadd.f32 %v2322, %v2335
    %2337 = vdwg.mxu0
    %2338 = vmatpush.bf16.msra.mxu0 %v1716
    %2339 = vmatpush.bf16.msra.mxu0 %v1708
    %2340 = vmatpush.bf16.msra.mxu0 %v1700
    %2341 = vmatpush.bf16.msra.mxu0 %v1692
    %2342 = vmatpush.bf16.msra.mxu0 %v1684
    %2343 = vmatpush.bf16.msra.mxu0 %v1676
    %2344 = vmatpush.bf16.msra.mxu0 %v1668
    %2345 = vmatpush.bf16.msra.mxu0 %v1660
    %2346 = vmatmul.bf16.gmra.mxu0 %v562
    %v2347 = vpop.f32.mrf.mxu0
    %v2348 = vadd.f32 %v2334, %v2347
    %v2349 = vpop.f32.mrf.mxu0
    %v2350 = vadd.f32 %v2336, %v2349
    %2351 = vdwg.mxu0
    %2352 = vmatpush.bf16.msra.mxu0 %v1780
    %2353 = vmatpush.bf16.msra.mxu0 %v1772
    %2354 = vmatpush.bf16.msra.mxu0 %v1764
    %2355 = vmatpush.bf16.msra.mxu0 %v1756
    %2356 = vmatpush.bf16.msra.mxu0 %v1748
    %2357 = vmatpush.bf16.msra.mxu0 %v1740
    %2358 = vmatpush.bf16.msra.mxu0 %v1732
    %2359 = vmatpush.bf16.msra.mxu0 %v1724
    %2360 = vmatmul.bf16.gmra.mxu0 %v563
    %v2361 = vpop.f32.mrf.mxu0
    %v2362 = vadd.f32 %v2348, %v2361
    %v2363 = vpop.f32.mrf.mxu0
    %v2364 = vadd.f32 %v2350, %v2363
    %2365 = vdwg.mxu0
    %2366 = vmatpush.bf16.msra.mxu0 %v1844
    %2367 = vmatpush.bf16.msra.mxu0 %v1836
    %2368 = vmatpush.bf16.msra.mxu0 %v1828
    %2369 = vmatpush.bf16.msra.mxu0 %v1820
    %2370 = vmatpush.bf16.msra.mxu0 %v1812
    %2371 = vmatpush.bf16.msra.mxu0 %v1804
    %2372 = vmatpush.bf16.msra.mxu0 %v1796
    %2373 = vmatpush.bf16.msra.mxu0 %v1788
    %2374 = vmatmul.bf16.gmra.mxu0 %v564
    %v2375 = vpop.f32.mrf.mxu0
    %v2376 = vadd.f32 %v2362, %v2375
    %v2377 = vpop.f32.mrf.mxu0
    %v2378 = vadd.f32 %v2364, %v2377
    %2379 = vdwg.mxu0
    %2380 = vmatpush.bf16.msra.mxu0 %v1589
    %2381 = vmatpush.bf16.msra.mxu0 %v1581
    %2382 = vmatpush.bf16.msra.mxu0 %v1573
    %2383 = vmatpush.bf16.msra.mxu0 %v1565
    %2384 = vmatpush.bf16.msra.mxu0 %v1557
    %2385 = vmatpush.bf16.msra.mxu0 %v1549
    %2386 = vmatpush.bf16.msra.mxu0 %v1541
    %2387 = vmatpush.bf16.msra.mxu0 %v1533
    %2388 = vmatmul.bf16.gmra.mxu0 %v560
    %v2389 = vpop.f32.mrf.mxu0
    %v2390 = vadd.f32 %v531, %v2389
    %v2391 = vpop.f32.mrf.mxu0
    %v2392 = vadd.f32 %v531, %v2391
    %2393 = vdwg.mxu0
    %2394 = vmatpush.bf16.msra.mxu0 %v1653
    %2395 = vmatpush.bf16.msra.mxu0 %v1645
    %2396 = vmatpush.bf16.msra.mxu0 %v1637
    %2397 = vmatpush.bf16.msra.mxu0 %v1629
    %2398 = vmatpush.bf16.msra.mxu0 %v1621
    %2399 = vmatpush.bf16.msra.mxu0 %v1613
    %2400 = vmatpush.bf16.msra.mxu0 %v1605
    %2401 = vmatpush.bf16.msra.mxu0 %v1597
    %2402 = vmatmul.bf16.gmra.mxu0 %v561
    %v2403 = vpop.f32.mrf.mxu0
    %v2404 = vadd.f32 %v2390, %v2403
    %v2405 = vpop.f32.mrf.mxu0
    %v2406 = vadd.f32 %v2392, %v2405
    %2407 = vdwg.mxu0
    %2408 = vmatpush.bf16.msra.mxu0 %v1717
    %2409 = vmatpush.bf16.msra.mxu0 %v1709
    %2410 = vmatpush.bf16.msra.mxu0 %v1701
    %2411 = vmatpush.bf16.msra.mxu0 %v1693
    %2412 = vmatpush.bf16.msra.mxu0 %v1685
    %2413 = vmatpush.bf16.msra.mxu0 %v1677
    %2414 = vmatpush.bf16.msra.mxu0 %v1669
    %2415 = vmatpush.bf16.msra.mxu0 %v1661
    %2416 = vmatmul.bf16.gmra.mxu0 %v562
    %v2417 = vpop.f32.mrf.mxu0
    %v2418 = vadd.f32 %v2404, %v2417
    %v2419 = vpop.f32.mrf.mxu0
    %v2420 = vadd.f32 %v2406, %v2419
    %2421 = vdwg.mxu0
    %2422 = vmatpush.bf16.msra.mxu0 %v1781
    %2423 = vmatpush.bf16.msra.mxu0 %v1773
    %2424 = vmatpush.bf16.msra.mxu0 %v1765
    %2425 = vmatpush.bf16.msra.mxu0 %v1757
    %2426 = vmatpush.bf16.msra.mxu0 %v1749
    %2427 = vmatpush.bf16.msra.mxu0 %v1741
    %2428 = vmatpush.bf16.msra.mxu0 %v1733
    %2429 = vmatpush.bf16.msra.mxu0 %v1725
    %2430 = vmatmul.bf16.gmra.mxu0 %v563
    %v2431 = vpop.f32.mrf.mxu0
    %v2432 = vadd.f32 %v2418, %v2431
    %v2433 = vpop.f32.mrf.mxu0
    %v2434 = vadd.f32 %v2420, %v2433
    %2435 = vdwg.mxu0
    %2436 = vmatpush.bf16.msra.mxu0 %v1845
    %2437 = vmatpush.bf16.msra.mxu0 %v1837
    %2438 = vmatpush.bf16.msra.mxu0 %v1829
    %2439 = vmatpush.bf16.msra.mxu0 %v1821
    %2440 = vmatpush.bf16.msra.mxu0 %v1813
    %2441 = vmatpush.bf16.msra.mxu0 %v1805
    %2442 = vmatpush.bf16.msra.mxu0 %v1797
    %2443 = vmatpush.bf16.msra.mxu0 %v1789
    %2444 = vmatmul.bf16.gmra.mxu0 %v564
    %v2445 = vpop.f32.mrf.mxu0
    %v2446 = vadd.f32 %v2432, %v2445
    %v2447 = vpop.f32.mrf.mxu0
    %v2448 = vadd.f32 %v2434, %v2447
    %2449 = vdwg.mxu0
    %2450 = vmatpush.bf16.msra.mxu0 %v1590
    %2451 = vmatpush.bf16.msra.mxu0 %v1582
    %2452 = vmatpush.bf16.msra.mxu0 %v1574
    %2453 = vmatpush.bf16.msra.mxu0 %v1566
    %2454 = vmatpush.bf16.msra.mxu0 %v1558
    %2455 = vmatpush.bf16.msra.mxu0 %v1550
    %2456 = vmatpush.bf16.msra.mxu0 %v1542
    %2457 = vmatpush.bf16.msra.mxu0 %v1534
    %2458 = vmatmul.bf16.gmra.mxu0 %v560
    %v2459 = vpop.f32.mrf.mxu0
    %v2460 = vadd.f32 %v532, %v2459
    %v2461 = vpop.f32.mrf.mxu0
    %v2462 = vadd.f32 %v532, %v2461
    %2463 = vdwg.mxu0
    %2464 = vmatpush.bf16.msra.mxu0 %v1654
    %2465 = vmatpush.bf16.msra.mxu0 %v1646
    %2466 = vmatpush.bf16.msra.mxu0 %v1638
    %2467 = vmatpush.bf16.msra.mxu0 %v1630
    %2468 = vmatpush.bf16.msra.mxu0 %v1622
    %2469 = vmatpush.bf16.msra.mxu0 %v1614
    %2470 = vmatpush.bf16.msra.mxu0 %v1606
    %2471 = vmatpush.bf16.msra.mxu0 %v1598
    %2472 = vmatmul.bf16.gmra.mxu0 %v561
    %v2473 = vpop.f32.mrf.mxu0
    %v2474 = vadd.f32 %v2460, %v2473
    %v2475 = vpop.f32.mrf.mxu0
    %v2476 = vadd.f32 %v2462, %v2475
    %2477 = vdwg.mxu0
    %2478 = vmatpush.bf16.msra.mxu0 %v1718
    %2479 = vmatpush.bf16.msra.mxu0 %v1710
    %2480 = vmatpush.bf16.msra.mxu0 %v1702
    %2481 = vmatpush.bf16.msra.mxu0 %v1694
    %2482 = vmatpush.bf16.msra.mxu0 %v1686
    %2483 = vmatpush.bf16.msra.mxu0 %v1678
    %2484 = vmatpush.bf16.msra.mxu0 %v1670
    %2485 = vmatpush.bf16.msra.mxu0 %v1662
    %2486 = vmatmul.bf16.gmra.mxu0 %v562
    %v2487 = vpop.f32.mrf.mxu0
    %v2488 = vadd.f32 %v2474, %v2487
    %v2489 = vpop.f32.mrf.mxu0
    %v2490 = vadd.f32 %v2476, %v2489
    %2491 = vdwg.mxu0
    %2492 = vmatpush.bf16.msra.mxu0 %v1782
    %2493 = vmatpush.bf16.msra.mxu0 %v1774
    %2494 = vmatpush.bf16.msra.mxu0 %v1766
    %2495 = vmatpush.bf16.msra.mxu0 %v1758
    %2496 = vmatpush.bf16.msra.mxu0 %v1750
    %2497 = vmatpush.bf16.msra.mxu0 %v1742
    %2498 = vmatpush.bf16.msra.mxu0 %v1734
    %2499 = vmatpush.bf16.msra.mxu0 %v1726
    %2500 = vmatmul.bf16.gmra.mxu0 %v563
    %v2501 = vpop.f32.mrf.mxu0
    %v2502 = vadd.f32 %v2488, %v2501
    %v2503 = vpop.f32.mrf.mxu0
    %v2504 = vadd.f32 %v2490, %v2503
    %2505 = vdwg.mxu0
    %2506 = vmatpush.bf16.msra.mxu0 %v1846
    %2507 = vmatpush.bf16.msra.mxu0 %v1838
    %2508 = vmatpush.bf16.msra.mxu0 %v1830
    %2509 = vmatpush.bf16.msra.mxu0 %v1822
    %2510 = vmatpush.bf16.msra.mxu0 %v1814
    %2511 = vmatpush.bf16.msra.mxu0 %v1806
    %2512 = vmatpush.bf16.msra.mxu0 %v1798
    %2513 = vmatpush.bf16.msra.mxu0 %v1790
    %2514 = vmatmul.bf16.gmra.mxu0 %v564
    %v2515 = vpop.f32.mrf.mxu0
    %v2516 = vadd.f32 %v2502, %v2515
    %v2517 = vpop.f32.mrf.mxu0
    %v2518 = vadd.f32 %v2504, %v2517
    %2519 = vdwg.mxu0
    %2520 = vmatpush.bf16.msra.mxu0 %v1591
    %2521 = vmatpush.bf16.msra.mxu0 %v1583
    %2522 = vmatpush.bf16.msra.mxu0 %v1575
    %2523 = vmatpush.bf16.msra.mxu0 %v1567
    %2524 = vmatpush.bf16.msra.mxu0 %v1559
    %2525 = vmatpush.bf16.msra.mxu0 %v1551
    %2526 = vmatpush.bf16.msra.mxu0 %v1543
    %2527 = vmatpush.bf16.msra.mxu0 %v1535
    %2528 = vmatmul.bf16.gmra.mxu0 %v560
    %v2529 = vpop.f32.mrf.mxu0
    %v2530 = vadd.f32 %v533, %v2529
    %v2531 = vpop.f32.mrf.mxu0
    %v2532 = vadd.f32 %v533, %v2531
    %2533 = vdwg.mxu0
    %2534 = vmatpush.bf16.msra.mxu0 %v1655
    %2535 = vmatpush.bf16.msra.mxu0 %v1647
    %2536 = vmatpush.bf16.msra.mxu0 %v1639
    %2537 = vmatpush.bf16.msra.mxu0 %v1631
    %2538 = vmatpush.bf16.msra.mxu0 %v1623
    %2539 = vmatpush.bf16.msra.mxu0 %v1615
    %2540 = vmatpush.bf16.msra.mxu0 %v1607
    %2541 = vmatpush.bf16.msra.mxu0 %v1599
    %2542 = vmatmul.bf16.gmra.mxu0 %v561
    %v2543 = vpop.f32.mrf.mxu0
    %v2544 = vadd.f32 %v2530, %v2543
    %v2545 = vpop.f32.mrf.mxu0
    %v2546 = vadd.f32 %v2532, %v2545
    %2547 = vdwg.mxu0
    %2548 = vmatpush.bf16.msra.mxu0 %v1719
    %2549 = vmatpush.bf16.msra.mxu0 %v1711
    %2550 = vmatpush.bf16.msra.mxu0 %v1703
    %2551 = vmatpush.bf16.msra.mxu0 %v1695
    %2552 = vmatpush.bf16.msra.mxu0 %v1687
    %2553 = vmatpush.bf16.msra.mxu0 %v1679
    %2554 = vmatpush.bf16.msra.mxu0 %v1671
    %2555 = vmatpush.bf16.msra.mxu0 %v1663
    %2556 = vmatmul.bf16.gmra.mxu0 %v562
    %v2557 = vpop.f32.mrf.mxu0
    %v2558 = vadd.f32 %v2544, %v2557
    %v2559 = vpop.f32.mrf.mxu0
    %v2560 = vadd.f32 %v2546, %v2559
    %2561 = vdwg.mxu0
    %2562 = vmatpush.bf16.msra.mxu0 %v1783
    %2563 = vmatpush.bf16.msra.mxu0 %v1775
    %2564 = vmatpush.bf16.msra.mxu0 %v1767
    %2565 = vmatpush.bf16.msra.mxu0 %v1759
    %2566 = vmatpush.bf16.msra.mxu0 %v1751
    %2567 = vmatpush.bf16.msra.mxu0 %v1743
    %2568 = vmatpush.bf16.msra.mxu0 %v1735
    %2569 = vmatpush.bf16.msra.mxu0 %v1727
    %2570 = vmatmul.bf16.gmra.mxu0 %v563
    %v2571 = vpop.f32.mrf.mxu0
    %v2572 = vadd.f32 %v2558, %v2571
    %v2573 = vpop.f32.mrf.mxu0
    %v2574 = vadd.f32 %v2560, %v2573
    %2575 = vdwg.mxu0
    %2576 = vmatpush.bf16.msra.mxu0 %v1847
    %2577 = vmatpush.bf16.msra.mxu0 %v1839
    %2578 = vmatpush.bf16.msra.mxu0 %v1831
    %2579 = vmatpush.bf16.msra.mxu0 %v1823
    %2580 = vmatpush.bf16.msra.mxu0 %v1815
    %2581 = vmatpush.bf16.msra.mxu0 %v1807
    %2582 = vmatpush.bf16.msra.mxu0 %v1799
    %2583 = vmatpush.bf16.msra.mxu0 %v1791
    %2584 = vmatmul.bf16.gmra.mxu0 %v564
    %v2585 = vpop.f32.mrf.mxu0
    %v2586 = vadd.f32 %v2572, %v2585
    %v2587 = vpop.f32.mrf.mxu0
    %v2588 = vadd.f32 %v2574, %v2587
    %2589 = vdwg.mxu0
    %2590 = vmatpush.bf16.msra.mxu0 %v1592
    %2591 = vmatpush.bf16.msra.mxu0 %v1584
    %2592 = vmatpush.bf16.msra.mxu0 %v1576
    %2593 = vmatpush.bf16.msra.mxu0 %v1568
    %2594 = vmatpush.bf16.msra.mxu0 %v1560
    %2595 = vmatpush.bf16.msra.mxu0 %v1552
    %2596 = vmatpush.bf16.msra.mxu0 %v1544
    %2597 = vmatpush.bf16.msra.mxu0 %v1536
    %2598 = vmatmul.bf16.gmra.mxu0 %v560
    %v2599 = vpop.f32.mrf.mxu0
    %v2600 = vadd.f32 %v534, %v2599
    %v2601 = vpop.f32.mrf.mxu0
    %v2602 = vadd.f32 %v534, %v2601
    %2603 = vdwg.mxu0
    %2604 = vmatpush.bf16.msra.mxu0 %v1656
    %2605 = vmatpush.bf16.msra.mxu0 %v1648
    %2606 = vmatpush.bf16.msra.mxu0 %v1640
    %2607 = vmatpush.bf16.msra.mxu0 %v1632
    %2608 = vmatpush.bf16.msra.mxu0 %v1624
    %2609 = vmatpush.bf16.msra.mxu0 %v1616
    %2610 = vmatpush.bf16.msra.mxu0 %v1608
    %2611 = vmatpush.bf16.msra.mxu0 %v1600
    %2612 = vmatmul.bf16.gmra.mxu0 %v561
    %v2613 = vpop.f32.mrf.mxu0
    %v2614 = vadd.f32 %v2600, %v2613
    %v2615 = vpop.f32.mrf.mxu0
    %v2616 = vadd.f32 %v2602, %v2615
    %2617 = vdwg.mxu0
    %2618 = vmatpush.bf16.msra.mxu0 %v1720
    %2619 = vmatpush.bf16.msra.mxu0 %v1712
    %2620 = vmatpush.bf16.msra.mxu0 %v1704
    %2621 = vmatpush.bf16.msra.mxu0 %v1696
    %2622 = vmatpush.bf16.msra.mxu0 %v1688
    %2623 = vmatpush.bf16.msra.mxu0 %v1680
    %2624 = vmatpush.bf16.msra.mxu0 %v1672
    %2625 = vmatpush.bf16.msra.mxu0 %v1664
    %2626 = vmatmul.bf16.gmra.mxu0 %v562
    %v2627 = vpop.f32.mrf.mxu0
    %v2628 = vadd.f32 %v2614, %v2627
    %v2629 = vpop.f32.mrf.mxu0
    %v2630 = vadd.f32 %v2616, %v2629
    %2631 = vdwg.mxu0
    %2632 = vmatpush.bf16.msra.mxu0 %v1784
    %2633 = vmatpush.bf16.msra.mxu0 %v1776
    %2634 = vmatpush.bf16.msra.mxu0 %v1768
    %2635 = vmatpush.bf16.msra.mxu0 %v1760
    %2636 = vmatpush.bf16.msra.mxu0 %v1752
    %2637 = vmatpush.bf16.msra.mxu0 %v1744
    %2638 = vmatpush.bf16.msra.mxu0 %v1736
    %2639 = vmatpush.bf16.msra.mxu0 %v1728
    %2640 = vmatmul.bf16.gmra.mxu0 %v563
    %v2641 = vpop.f32.mrf.mxu0
    %v2642 = vadd.f32 %v2628, %v2641
    %v2643 = vpop.f32.mrf.mxu0
    %v2644 = vadd.f32 %v2630, %v2643
    %2645 = vdwg.mxu0
    %2646 = vmatpush.bf16.msra.mxu0 %v1848
    %2647 = vmatpush.bf16.msra.mxu0 %v1840
    %2648 = vmatpush.bf16.msra.mxu0 %v1832
    %2649 = vmatpush.bf16.msra.mxu0 %v1824
    %2650 = vmatpush.bf16.msra.mxu0 %v1816
    %2651 = vmatpush.bf16.msra.mxu0 %v1808
    %2652 = vmatpush.bf16.msra.mxu0 %v1800
    %2653 = vmatpush.bf16.msra.mxu0 %v1792
    %2654 = vmatmul.bf16.gmra.mxu0 %v564
    %v2655 = vpop.f32.mrf.mxu0
    %v2656 = vadd.f32 %v2642, %v2655
    %v2657 = vpop.f32.mrf.mxu0
    %v2658 = vadd.f32 %v2644, %v2657
    %2659 = vdwg.mxu0
    %2660 = vmatpush.bf16.msra.mxu0 %v1593
    %2661 = vmatpush.bf16.msra.mxu0 %v1585
    %2662 = vmatpush.bf16.msra.mxu0 %v1577
    %2663 = vmatpush.bf16.msra.mxu0 %v1569
    %2664 = vmatpush.bf16.msra.mxu0 %v1561
    %2665 = vmatpush.bf16.msra.mxu0 %v1553
    %2666 = vmatpush.bf16.msra.mxu0 %v1545
    %2667 = vmatpush.bf16.msra.mxu0 %v1537
    %2668 = vmatmul.bf16.gmra.mxu0 %v560
    %v2669 = vpop.f32.mrf.mxu0
    %v2670 = vadd.f32 %v535, %v2669
    %v2671 = vpop.f32.mrf.mxu0
    %v2672 = vadd.f32 %v535, %v2671
    %2673 = vdwg.mxu0
    %2674 = vmatpush.bf16.msra.mxu0 %v1657
    %2675 = vmatpush.bf16.msra.mxu0 %v1649
    %2676 = vmatpush.bf16.msra.mxu0 %v1641
    %2677 = vmatpush.bf16.msra.mxu0 %v1633
    %2678 = vmatpush.bf16.msra.mxu0 %v1625
    %2679 = vmatpush.bf16.msra.mxu0 %v1617
    %2680 = vmatpush.bf16.msra.mxu0 %v1609
    %2681 = vmatpush.bf16.msra.mxu0 %v1601
    %2682 = vmatmul.bf16.gmra.mxu0 %v561
    %v2683 = vpop.f32.mrf.mxu0
    %v2684 = vadd.f32 %v2670, %v2683
    %v2685 = vpop.f32.mrf.mxu0
    %v2686 = vadd.f32 %v2672, %v2685
    %2687 = vdwg.mxu0
    %2688 = vmatpush.bf16.msra.mxu0 %v1721
    %2689 = vmatpush.bf16.msra.mxu0 %v1713
    %2690 = vmatpush.bf16.msra.mxu0 %v1705
    %2691 = vmatpush.bf16.msra.mxu0 %v1697
    %2692 = vmatpush.bf16.msra.mxu0 %v1689
    %2693 = vmatpush.bf16.msra.mxu0 %v1681
    %2694 = vmatpush.bf16.msra.mxu0 %v1673
    %2695 = vmatpush.bf16.msra.mxu0 %v1665
    %2696 = vmatmul.bf16.gmra.mxu0 %v562
    %v2697 = vpop.f32.mrf.mxu0
    %v2698 = vadd.f32 %v2684, %v2697
    %v2699 = vpop.f32.mrf.mxu0
    %v2700 = vadd.f32 %v2686, %v2699
    %2701 = vdwg.mxu0
    %2702 = vmatpush.bf16.msra.mxu0 %v1785
    %2703 = vmatpush.bf16.msra.mxu0 %v1777
    %2704 = vmatpush.bf16.msra.mxu0 %v1769
    %2705 = vmatpush.bf16.msra.mxu0 %v1761
    %2706 = vmatpush.bf16.msra.mxu0 %v1753
    %2707 = vmatpush.bf16.msra.mxu0 %v1745
    %2708 = vmatpush.bf16.msra.mxu0 %v1737
    %2709 = vmatpush.bf16.msra.mxu0 %v1729
    %2710 = vmatmul.bf16.gmra.mxu0 %v563
    %v2711 = vpop.f32.mrf.mxu0
    %v2712 = vadd.f32 %v2698, %v2711
    %v2713 = vpop.f32.mrf.mxu0
    %v2714 = vadd.f32 %v2700, %v2713
    %2715 = vdwg.mxu0
    %2716 = vmatpush.bf16.msra.mxu0 %v1849
    %2717 = vmatpush.bf16.msra.mxu0 %v1841
    %2718 = vmatpush.bf16.msra.mxu0 %v1833
    %2719 = vmatpush.bf16.msra.mxu0 %v1825
    %2720 = vmatpush.bf16.msra.mxu0 %v1817
    %2721 = vmatpush.bf16.msra.mxu0 %v1809
    %2722 = vmatpush.bf16.msra.mxu0 %v1801
    %2723 = vmatpush.bf16.msra.mxu0 %v1793
    %2724 = vmatmul.bf16.gmra.mxu0 %v564
    %v2725 = vpop.f32.mrf.mxu0
    %v2726 = vadd.f32 %v2712, %v2725
    %v2727 = vpop.f32.mrf.mxu0
    %v2728 = vadd.f32 %v2714, %v2727
    %2729 = vdwg.mxu0
    %v2730 = vpack.c.bf16 %v2238, %v2236
    %v2731 = vpack.c.bf16 %v2308, %v2306
    %v2732 = vpack.c.bf16 %v2378, %v2376
    %v2733 = vpack.c.bf16 %v2448, %v2446
    %v2734 = vpack.c.bf16 %v2518, %v2516
    %v2735 = vpack.c.bf16 %v2588, %v2586
    %v2736 = vpack.c.bf16 %v2658, %v2656
    %v2737 = vpack.c.bf16 %v2728, %v2726
    %v2738 = vunpack.c.l.bf16 %v2730
    %v2739 = vunpack.c.l.bf16 %v2731
    %v2740 = vunpack.c.l.bf16 %v2732
    %v2741 = vunpack.c.l.bf16 %v2733
    %v2742 = vunpack.c.l.bf16 %v2734
    %v2743 = vunpack.c.l.bf16 %v2735
    %v2744 = vunpack.c.l.bf16 %v2736
    %v2745 = vunpack.c.l.bf16 %v2737
    %v2746 = vunpack.c.h.bf16 %v2730
    %v2747 = vunpack.c.h.bf16 %v2731
    %v2748 = vunpack.c.h.bf16 %v2732
    %v2749 = vunpack.c.h.bf16 %v2733
    %v2750 = vunpack.c.h.bf16 %v2734
    %v2751 = vunpack.c.h.bf16 %v2735
    %v2752 = vunpack.c.h.bf16 %v2736
    %v2753 = vunpack.c.h.bf16 %v2737
    %v2754 = vtanh.pop %v2738
    %v2755 = vtanh.pop %v2739
    %v2756 = vtanh.pop %v2740
    %v2757 = vtanh.pop %v2741
    %v2758 = vtanh.pop %v2742
    %v2759 = vtanh.pop %v2743
    %v2760 = vtanh.pop %v2744
    %v2761 = vtanh.pop %v2745
    %v2762 = vtanh.pop %v2746
    %v2763 = vtanh.pop %v2747
    %v2764 = vtanh.pop %v2748
    %v2765 = vtanh.pop %v2749
    %v2766 = vtanh.pop %v2750
    %v2767 = vtanh.pop %v2751
    %v2768 = vtanh.pop %v2752
    %v2769 = vtanh.pop %v2753
    %v2770 = vpack.c.bf16 %v2762, %v2754
    %v2771 = vpack.c.bf16 %v2763, %v2755
    %v2772 = vpack.c.bf16 %v2764, %v2756
    %v2773 = vpack.c.bf16 %v2765, %v2757
    %v2774 = vpack.c.bf16 %v2766, %v2758
    %v2775 = vpack.c.bf16 %v2767, %v2759
    %v2776 = vpack.c.bf16 %v2768, %v2760
    %v2777 = vpack.c.bf16 %v2769, %v2761
    %v2778 = vld [vmem:[#allocation8] sm:$0xff]
    %v2779 = vld [vmem:[#allocation8 + $0x8] sm:$0xff]
    %v2780 = vld [vmem:[#allocation8 + $0x10] sm:$0xff]
    %v2781 = vld [vmem:[#allocation8 + $0x18] sm:$0xff]
    %v2782 = vld [vmem:[#allocation8 + $0x20] sm:$0xff]
    %v2783 = vld [vmem:[#allocation8 + $0x28] sm:$0xff]
    %v2784 = vld [vmem:[#allocation8 + $0x30] sm:$0xff]
    %v2785 = vld [vmem:[#allocation8 + $0x38] sm:$0xff]
    %v2786 = vld [vmem:[#allocation8 + $0x40] sm:$0xff]
    %v2787 = vld [vmem:[#allocation8 + $0x48] sm:$0xff]
    %v2788 = vld [vmem:[#allocation8 + $0x50] sm:$0xff]
    %v2789 = vld [vmem:[#allocation8 + $0x58] sm:$0xff]
    %v2790 = vld [vmem:[#allocation8 + $0x60] sm:$0xff]
    %v2791 = vld [vmem:[#allocation8 + $0x68] sm:$0xff]
    %v2792 = vld [vmem:[#allocation8 + $0x70] sm:$0xff]
    %v2793 = vld [vmem:[#allocation8 + $0x78] sm:$0xff]
    %v2794 = vld [vmem:[#allocation8 + $0x80] sm:$0xff]
    %v2795 = vld [vmem:[#allocation8 + $0x88] sm:$0xff]
    %v2796 = vld [vmem:[#allocation8 + $0x90] sm:$0xff]
    %v2797 = vld [vmem:[#allocation8 + $0x98] sm:$0xff]
    %v2798 = vld [vmem:[#allocation8 + $0xa0] sm:$0xff]
    %v2799 = vld [vmem:[#allocation8 + $0xa8] sm:$0xff]
    %v2800 = vld [vmem:[#allocation8 + $0xb0] sm:$0xff]
    %v2801 = vld [vmem:[#allocation8 + $0xb8] sm:$0xff]
    %v2802 = vld [vmem:[#allocation8 + $0xc0] sm:$0xff]
    %v2803 = vld [vmem:[#allocation8 + $0xc8] sm:$0xff]
    %v2804 = vld [vmem:[#allocation8 + $0xd0] sm:$0xff]
    %v2805 = vld [vmem:[#allocation8 + $0xd8] sm:$0xff]
    %v2806 = vld [vmem:[#allocation8 + $0xe0] sm:$0xff]
    %v2807 = vld [vmem:[#allocation8 + $0xe8] sm:$0xff]
    %v2808 = vld [vmem:[#allocation8 + $0xf0] sm:$0xff]
    %v2809 = vld [vmem:[#allocation8 + $0xf8] sm:$0xff]
    %v2810 = vld [vmem:[#allocation8 + $0x100] sm:$0xff]
    %v2811 = vld [vmem:[#allocation8 + $0x108] sm:$0xff]
    %v2812 = vld [vmem:[#allocation8 + $0x110] sm:$0xff]
    %v2813 = vld [vmem:[#allocation8 + $0x118] sm:$0xff]
    %v2814 = vld [vmem:[#allocation8 + $0x120] sm:$0xff]
    %v2815 = vld [vmem:[#allocation8 + $0x128] sm:$0xff]
    %v2816 = vld [vmem:[#allocation8 + $0x130] sm:$0xff]
    %v2817 = vld [vmem:[#allocation8 + $0x138] sm:$0xff]
    %v2818 = vld [vmem:[#allocation8 + $0x140] sm:$0xff]
    %v2819 = vld [vmem:[#allocation8 + $0x148] sm:$0xff]
    %v2820 = vld [vmem:[#allocation8 + $0x150] sm:$0xff]
    %v2821 = vld [vmem:[#allocation8 + $0x158] sm:$0xff]
    %v2822 = vld [vmem:[#allocation8 + $0x160] sm:$0xff]
    %v2823 = vld [vmem:[#allocation8 + $0x168] sm:$0xff]
    %v2824 = vld [vmem:[#allocation8 + $0x170] sm:$0xff]
    %v2825 = vld [vmem:[#allocation8 + $0x178] sm:$0xff]
    %v2826 = vld [vmem:[#allocation8 + $0x180] sm:$0xff]
    %v2827 = vld [vmem:[#allocation8 + $0x188] sm:$0xff]
    %v2828 = vld [vmem:[#allocation8 + $0x190] sm:$0xff]
    %v2829 = vld [vmem:[#allocation8 + $0x198] sm:$0xff]
    %v2830 = vld [vmem:[#allocation8 + $0x1a0] sm:$0xff]
    %v2831 = vld [vmem:[#allocation8 + $0x1a8] sm:$0xff]
    %v2832 = vld [vmem:[#allocation8 + $0x1b0] sm:$0xff]
    %v2833 = vld [vmem:[#allocation8 + $0x1b8] sm:$0xff]
    %v2834 = vld [vmem:[#allocation8 + $0x1c0] sm:$0xff]
    %v2835 = vld [vmem:[#allocation8 + $0x1c8] sm:$0xff]
    %v2836 = vld [vmem:[#allocation8 + $0x1d0] sm:$0xff]
    %v2837 = vld [vmem:[#allocation8 + $0x1d8] sm:$0xff]
    %v2838 = vld [vmem:[#allocation8 + $0x1e0] sm:$0xff]
    %v2839 = vld [vmem:[#allocation8 + $0x1e8] sm:$0xff]
    %v2840 = vld [vmem:[#allocation8 + $0x1f0] sm:$0xff]
    %v2841 = vld [vmem:[#allocation8 + $0x1f8] sm:$0xff]
    %v2842 = vld [vmem:[#allocation8 + $0x200] sm:$0xff]
    %v2843 = vld [vmem:[#allocation8 + $0x208] sm:$0xff]
    %v2844 = vld [vmem:[#allocation8 + $0x210] sm:$0xff]
    %v2845 = vld [vmem:[#allocation8 + $0x218] sm:$0xff]
    %v2846 = vld [vmem:[#allocation8 + $0x220] sm:$0xff]
    %v2847 = vld [vmem:[#allocation8 + $0x228] sm:$0xff]
    %v2848 = vld [vmem:[#allocation8 + $0x230] sm:$0xff]
    %v2849 = vld [vmem:[#allocation8 + $0x238] sm:$0xff]
    %v2850 = vld [vmem:[#allocation8 + $0x240] sm:$0xff]
    %v2851 = vld [vmem:[#allocation8 + $0x248] sm:$0xff]
    %v2852 = vld [vmem:[#allocation8 + $0x250] sm:$0xff]
    %v2853 = vld [vmem:[#allocation8 + $0x258] sm:$0xff]
    %v2854 = vld [vmem:[#allocation8 + $0x260] sm:$0xff]
    %v2855 = vld [vmem:[#allocation8 + $0x268] sm:$0xff]
    %v2856 = vld [vmem:[#allocation8 + $0x270] sm:$0xff]
    %v2857 = vld [vmem:[#allocation8 + $0x278] sm:$0xff]
    %v2858 = vld [vmem:[#allocation8 + $0x280] sm:$0xff]
    %v2859 = vld [vmem:[#allocation8 + $0x288] sm:$0xff]
    %v2860 = vld [vmem:[#allocation8 + $0x290] sm:$0xff]
    %v2861 = vld [vmem:[#allocation8 + $0x298] sm:$0xff]
    %v2862 = vld [vmem:[#allocation8 + $0x2a0] sm:$0xff]
    %v2863 = vld [vmem:[#allocation8 + $0x2a8] sm:$0xff]
    %v2864 = vld [vmem:[#allocation8 + $0x2b0] sm:$0xff]
    %v2865 = vld [vmem:[#allocation8 + $0x2b8] sm:$0xff]
    %v2866 = vld [vmem:[#allocation8 + $0x2c0] sm:$0xff]
    %v2867 = vld [vmem:[#allocation8 + $0x2c8] sm:$0xff]
    %v2868 = vld [vmem:[#allocation8 + $0x2d0] sm:$0xff]
    %v2869 = vld [vmem:[#allocation8 + $0x2d8] sm:$0xff]
    %v2870 = vld [vmem:[#allocation8 + $0x2e0] sm:$0xff]
    %v2871 = vld [vmem:[#allocation8 + $0x2e8] sm:$0xff]
    %v2872 = vld [vmem:[#allocation8 + $0x2f0] sm:$0xff]
    %v2873 = vld [vmem:[#allocation8 + $0x2f8] sm:$0xff]
    %v2874 = vld [vmem:[#allocation8 + $0x300] sm:$0xff]
    %v2875 = vld [vmem:[#allocation8 + $0x308] sm:$0xff]
    %v2876 = vld [vmem:[#allocation8 + $0x310] sm:$0xff]
    %v2877 = vld [vmem:[#allocation8 + $0x318] sm:$0xff]
    %v2878 = vld [vmem:[#allocation8 + $0x320] sm:$0xff]
    %v2879 = vld [vmem:[#allocation8 + $0x328] sm:$0xff]
    %v2880 = vld [vmem:[#allocation8 + $0x330] sm:$0xff]
    %v2881 = vld [vmem:[#allocation8 + $0x338] sm:$0xff]
    %v2882 = vld [vmem:[#allocation8 + $0x340] sm:$0xff]
    %v2883 = vld [vmem:[#allocation8 + $0x348] sm:$0xff]
    %v2884 = vld [vmem:[#allocation8 + $0x350] sm:$0xff]
    %v2885 = vld [vmem:[#allocation8 + $0x358] sm:$0xff]
    %v2886 = vld [vmem:[#allocation8 + $0x360] sm:$0xff]
    %v2887 = vld [vmem:[#allocation8 + $0x368] sm:$0xff]
    %v2888 = vld [vmem:[#allocation8 + $0x370] sm:$0xff]
    %v2889 = vld [vmem:[#allocation8 + $0x378] sm:$0xff]
    %v2890 = vld [vmem:[#allocation8 + $0x380] sm:$0xff]
    %v2891 = vld [vmem:[#allocation8 + $0x388] sm:$0xff]
    %v2892 = vld [vmem:[#allocation8 + $0x390] sm:$0xff]
    %v2893 = vld [vmem:[#allocation8 + $0x398] sm:$0xff]
    %v2894 = vld [vmem:[#allocation8 + $0x3a0] sm:$0xff]
    %v2895 = vld [vmem:[#allocation8 + $0x3a8] sm:$0xff]
    %v2896 = vld [vmem:[#allocation8 + $0x3b0] sm:$0xff]
    %v2897 = vld [vmem:[#allocation8 + $0x3b8] sm:$0xff]
    %v2898 = vld [vmem:[#allocation8 + $0x3c0] sm:$0xff]
    %v2899 = vld [vmem:[#allocation8 + $0x3c8] sm:$0xff]
    %v2900 = vld [vmem:[#allocation8 + $0x3d0] sm:$0xff]
    %v2901 = vld [vmem:[#allocation8 + $0x3d8] sm:$0xff]
    %v2902 = vld [vmem:[#allocation8 + $0x3e0] sm:$0xff]
    %v2903 = vld [vmem:[#allocation8 + $0x3e8] sm:$0xff]
    %v2904 = vld [vmem:[#allocation8 + $0x3f0] sm:$0xff]
    %v2905 = vld [vmem:[#allocation8 + $0x3f8] sm:$0xff]
    %v2906 = vld [vmem:[#allocation8 + $0x400] sm:$0xff]
    %v2907 = vld [vmem:[#allocation8 + $0x408] sm:$0xff]
    %v2908 = vld [vmem:[#allocation8 + $0x410] sm:$0xff]
    %v2909 = vld [vmem:[#allocation8 + $0x418] sm:$0xff]
    %v2910 = vld [vmem:[#allocation8 + $0x420] sm:$0xff]
    %v2911 = vld [vmem:[#allocation8 + $0x428] sm:$0xff]
    %v2912 = vld [vmem:[#allocation8 + $0x430] sm:$0xff]
    %v2913 = vld [vmem:[#allocation8 + $0x438] sm:$0xff]
    %v2914 = vld [vmem:[#allocation8 + $0x440] sm:$0xff]
    %v2915 = vld [vmem:[#allocation8 + $0x448] sm:$0xff]
    %v2916 = vld [vmem:[#allocation8 + $0x450] sm:$0xff]
    %v2917 = vld [vmem:[#allocation8 + $0x458] sm:$0xff]
    %v2918 = vld [vmem:[#allocation8 + $0x460] sm:$0xff]
    %v2919 = vld [vmem:[#allocation8 + $0x468] sm:$0xff]
    %v2920 = vld [vmem:[#allocation8 + $0x470] sm:$0xff]
    %v2921 = vld [vmem:[#allocation8 + $0x478] sm:$0xff]
    %v2922 = vld [vmem:[#allocation8 + $0x480] sm:$0xff]
    %v2923 = vld [vmem:[#allocation8 + $0x488] sm:$0xff]
    %v2924 = vld [vmem:[#allocation8 + $0x490] sm:$0xff]
    %v2925 = vld [vmem:[#allocation8 + $0x498] sm:$0xff]
    %v2926 = vld [vmem:[#allocation8 + $0x4a0] sm:$0xff]
    %v2927 = vld [vmem:[#allocation8 + $0x4a8] sm:$0xff]
    %v2928 = vld [vmem:[#allocation8 + $0x4b0] sm:$0xff]
    %v2929 = vld [vmem:[#allocation8 + $0x4b8] sm:$0xff]
    %v2930 = vld [vmem:[#allocation8 + $0x4c0] sm:$0xff]
    %v2931 = vld [vmem:[#allocation8 + $0x4c8] sm:$0xff]
    %v2932 = vld [vmem:[#allocation8 + $0x4d0] sm:$0xff]
    %v2933 = vld [vmem:[#allocation8 + $0x4d8] sm:$0xff]
    %v2934 = vld [vmem:[#allocation8 + $0x4e0] sm:$0xff]
    %v2935 = vld [vmem:[#allocation8 + $0x4e8] sm:$0xff]
    %v2936 = vld [vmem:[#allocation8 + $0x4f0] sm:$0xff]
    %v2937 = vld [vmem:[#allocation8 + $0x4f8] sm:$0xff]
    %v2938 = vld [vmem:[#allocation8 + $0x500] sm:$0xff]
    %v2939 = vld [vmem:[#allocation8 + $0x508] sm:$0xff]
    %v2940 = vld [vmem:[#allocation8 + $0x510] sm:$0xff]
    %v2941 = vld [vmem:[#allocation8 + $0x518] sm:$0xff]
    %v2942 = vld [vmem:[#allocation8 + $0x520] sm:$0xff]
    %v2943 = vld [vmem:[#allocation8 + $0x528] sm:$0xff]
    %v2944 = vld [vmem:[#allocation8 + $0x530] sm:$0xff]
    %v2945 = vld [vmem:[#allocation8 + $0x538] sm:$0xff]
    %v2946 = vld [vmem:[#allocation8 + $0x540] sm:$0xff]
    %v2947 = vld [vmem:[#allocation8 + $0x548] sm:$0xff]
    %v2948 = vld [vmem:[#allocation8 + $0x550] sm:$0xff]
    %v2949 = vld [vmem:[#allocation8 + $0x558] sm:$0xff]
    %v2950 = vld [vmem:[#allocation8 + $0x560] sm:$0xff]
    %v2951 = vld [vmem:[#allocation8 + $0x568] sm:$0xff]
    %v2952 = vld [vmem:[#allocation8 + $0x570] sm:$0xff]
    %v2953 = vld [vmem:[#allocation8 + $0x578] sm:$0xff]
    %v2954 = vld [vmem:[#allocation8 + $0x580] sm:$0xff]
    %v2955 = vld [vmem:[#allocation8 + $0x588] sm:$0xff]
    %v2956 = vld [vmem:[#allocation8 + $0x590] sm:$0xff]
    %v2957 = vld [vmem:[#allocation8 + $0x598] sm:$0xff]
    %v2958 = vld [vmem:[#allocation8 + $0x5a0] sm:$0xff]
    %v2959 = vld [vmem:[#allocation8 + $0x5a8] sm:$0xff]
    %v2960 = vld [vmem:[#allocation8 + $0x5b0] sm:$0xff]
    %v2961 = vld [vmem:[#allocation8 + $0x5b8] sm:$0xff]
    %v2962 = vld [vmem:[#allocation8 + $0x5c0] sm:$0xff]
    %v2963 = vld [vmem:[#allocation8 + $0x5c8] sm:$0xff]
    %v2964 = vld [vmem:[#allocation8 + $0x5d0] sm:$0xff]
    %v2965 = vld [vmem:[#allocation8 + $0x5d8] sm:$0xff]
    %v2966 = vld [vmem:[#allocation8 + $0x5e0] sm:$0xff]
    %v2967 = vld [vmem:[#allocation8 + $0x5e8] sm:$0xff]
    %v2968 = vld [vmem:[#allocation8 + $0x5f0] sm:$0xff]
    %v2969 = vld [vmem:[#allocation8 + $0x5f8] sm:$0xff]
    %v2970 = vld [vmem:[#allocation8 + $0x600] sm:$0xff]
    %v2971 = vld [vmem:[#allocation8 + $0x608] sm:$0xff]
    %v2972 = vld [vmem:[#allocation8 + $0x610] sm:$0xff]
    %v2973 = vld [vmem:[#allocation8 + $0x618] sm:$0xff]
    %v2974 = vld [vmem:[#allocation8 + $0x620] sm:$0xff]
    %v2975 = vld [vmem:[#allocation8 + $0x628] sm:$0xff]
    %v2976 = vld [vmem:[#allocation8 + $0x630] sm:$0xff]
    %v2977 = vld [vmem:[#allocation8 + $0x638] sm:$0xff]
    %v2978 = vld [vmem:[#allocation8 + $0x640] sm:$0xff]
    %v2979 = vld [vmem:[#allocation8 + $0x648] sm:$0xff]
    %v2980 = vld [vmem:[#allocation8 + $0x650] sm:$0xff]
    %v2981 = vld [vmem:[#allocation8 + $0x658] sm:$0xff]
    %v2982 = vld [vmem:[#allocation8 + $0x660] sm:$0xff]
    %v2983 = vld [vmem:[#allocation8 + $0x668] sm:$0xff]
    %v2984 = vld [vmem:[#allocation8 + $0x670] sm:$0xff]
    %v2985 = vld [vmem:[#allocation8 + $0x678] sm:$0xff]
    %v2986 = vld [vmem:[#allocation8 + $0x680] sm:$0xff]
    %v2987 = vld [vmem:[#allocation8 + $0x688] sm:$0xff]
    %v2988 = vld [vmem:[#allocation8 + $0x690] sm:$0xff]
    %v2989 = vld [vmem:[#allocation8 + $0x698] sm:$0xff]
    %v2990 = vld [vmem:[#allocation8 + $0x6a0] sm:$0xff]
    %v2991 = vld [vmem:[#allocation8 + $0x6a8] sm:$0xff]
    %v2992 = vld [vmem:[#allocation8 + $0x6b0] sm:$0xff]
    %v2993 = vld [vmem:[#allocation8 + $0x6b8] sm:$0xff]
    %v2994 = vld [vmem:[#allocation8 + $0x6c0] sm:$0xff]
    %v2995 = vld [vmem:[#allocation8 + $0x6c8] sm:$0xff]
    %v2996 = vld [vmem:[#allocation8 + $0x6d0] sm:$0xff]
    %v2997 = vld [vmem:[#allocation8 + $0x6d8] sm:$0xff]
    %v2998 = vld [vmem:[#allocation8 + $0x6e0] sm:$0xff]
    %v2999 = vld [vmem:[#allocation8 + $0x6e8] sm:$0xff]
    %v3000 = vld [vmem:[#allocation8 + $0x6f0] sm:$0xff]
    %v3001 = vld [vmem:[#allocation8 + $0x6f8] sm:$0xff]
    %v3002 = vld [vmem:[#allocation8 + $0x700] sm:$0xff]
    %v3003 = vld [vmem:[#allocation8 + $0x708] sm:$0xff]
    %v3004 = vld [vmem:[#allocation8 + $0x710] sm:$0xff]
    %v3005 = vld [vmem:[#allocation8 + $0x718] sm:$0xff]
    %v3006 = vld [vmem:[#allocation8 + $0x720] sm:$0xff]
    %v3007 = vld [vmem:[#allocation8 + $0x728] sm:$0xff]
    %v3008 = vld [vmem:[#allocation8 + $0x730] sm:$0xff]
    %v3009 = vld [vmem:[#allocation8 + $0x738] sm:$0xff]
    %v3010 = vld [vmem:[#allocation8 + $0x740] sm:$0xff]
    %v3011 = vld [vmem:[#allocation8 + $0x748] sm:$0xff]
    %v3012 = vld [vmem:[#allocation8 + $0x750] sm:$0xff]
    %v3013 = vld [vmem:[#allocation8 + $0x758] sm:$0xff]
    %v3014 = vld [vmem:[#allocation8 + $0x760] sm:$0xff]
    %v3015 = vld [vmem:[#allocation8 + $0x768] sm:$0xff]
    %v3016 = vld [vmem:[#allocation8 + $0x770] sm:$0xff]
    %v3017 = vld [vmem:[#allocation8 + $0x778] sm:$0xff]
    %v3018 = vld [vmem:[#allocation8 + $0x780] sm:$0xff]
    %v3019 = vld [vmem:[#allocation8 + $0x788] sm:$0xff]
    %v3020 = vld [vmem:[#allocation8 + $0x790] sm:$0xff]
    %v3021 = vld [vmem:[#allocation8 + $0x798] sm:$0xff]
    %v3022 = vld [vmem:[#allocation8 + $0x7a0] sm:$0xff]
    %v3023 = vld [vmem:[#allocation8 + $0x7a8] sm:$0xff]
    %v3024 = vld [vmem:[#allocation8 + $0x7b0] sm:$0xff]
    %v3025 = vld [vmem:[#allocation8 + $0x7b8] sm:$0xff]
    %v3026 = vld [vmem:[#allocation8 + $0x7c0] sm:$0xff]
    %v3027 = vld [vmem:[#allocation8 + $0x7c8] sm:$0xff]
    %v3028 = vld [vmem:[#allocation8 + $0x7d0] sm:$0xff]
    %v3029 = vld [vmem:[#allocation8 + $0x7d8] sm:$0xff]
    %v3030 = vld [vmem:[#allocation8 + $0x7e0] sm:$0xff]
    %v3031 = vld [vmem:[#allocation8 + $0x7e8] sm:$0xff]
    %v3032 = vld [vmem:[#allocation8 + $0x7f0] sm:$0xff]
    %v3033 = vld [vmem:[#allocation8 + $0x7f8] sm:$0xff]
    %v3034 = vld [vmem:[#allocation10] sm:$0xf]
    %v3036 = vperm.slane %v3034, 0
    %v3037 = vperm.slane %v3034, 1
    %v3038 = vperm.slane %v3034, 2
    %v3039 = vperm.slane %v3034, 3
    %v3300 = vunpack.c.l.b16 %v2778
    %v3301 = vunpack.c.h.b16 %v2778
    %v3302 = vunpack.c.l.b16 %v2779
    %v3303 = vunpack.c.h.b16 %v2779
    %v3304 = vunpack.c.l.b16 %v2780
    %v3305 = vunpack.c.h.b16 %v2780
    %v3306 = vunpack.c.l.b16 %v2781
    %v3307 = vunpack.c.h.b16 %v2781
    %v3308 = vunpack.c.l.b16 %v2782
    %v3309 = vunpack.c.h.b16 %v2782
    %v3310 = vunpack.c.l.b16 %v2783
    %v3311 = vunpack.c.h.b16 %v2783
    %v3312 = vunpack.c.l.b16 %v2784
    %v3313 = vunpack.c.h.b16 %v2784
    %v3314 = vunpack.c.l.b16 %v2785
    %v3315 = vunpack.c.h.b16 %v2785
    %v3316 = vunpack.c.l.b16 %v2786
    %v3317 = vunpack.c.h.b16 %v2786
    %v3318 = vunpack.c.l.b16 %v2787
    %v3319 = vunpack.c.h.b16 %v2787
    %v3320 = vunpack.c.l.b16 %v2788
    %v3321 = vunpack.c.h.b16 %v2788
    %v3322 = vunpack.c.l.b16 %v2789
    %v3323 = vunpack.c.h.b16 %v2789
    %v3324 = vunpack.c.l.b16 %v2790
    %v3325 = vunpack.c.h.b16 %v2790
    %v3326 = vunpack.c.l.b16 %v2791
    %v3327 = vunpack.c.h.b16 %v2791
    %v3328 = vunpack.c.l.b16 %v2792
    %v3329 = vunpack.c.h.b16 %v2792
    %v3330 = vunpack.c.l.b16 %v2793
    %v3331 = vunpack.c.h.b16 %v2793
    %v3332 = vunpack.c.l.b16 %v2794
    %v3333 = vunpack.c.h.b16 %v2794
    %v3334 = vunpack.c.l.b16 %v2795
    %v3335 = vunpack.c.h.b16 %v2795
    %v3336 = vunpack.c.l.b16 %v2796
    %v3337 = vunpack.c.h.b16 %v2796
    %v3338 = vunpack.c.l.b16 %v2797
    %v3339 = vunpack.c.h.b16 %v2797
    %v3340 = vunpack.c.l.b16 %v2798
    %v3341 = vunpack.c.h.b16 %v2798
    %v3342 = vunpack.c.l.b16 %v2799
    %v3343 = vunpack.c.h.b16 %v2799
    %v3344 = vunpack.c.l.b16 %v2800
    %v3345 = vunpack.c.h.b16 %v2800
    %v3346 = vunpack.c.l.b16 %v2801
    %v3347 = vunpack.c.h.b16 %v2801
    %v3348 = vunpack.c.l.b16 %v2802
    %v3349 = vunpack.c.h.b16 %v2802
    %v3350 = vunpack.c.l.b16 %v2803
    %v3351 = vunpack.c.h.b16 %v2803
    %v3352 = vunpack.c.l.b16 %v2804
    %v3353 = vunpack.c.h.b16 %v2804
    %v3354 = vunpack.c.l.b16 %v2805
    %v3355 = vunpack.c.h.b16 %v2805
    %v3356 = vunpack.c.l.b16 %v2806
    %v3357 = vunpack.c.h.b16 %v2806
    %v3358 = vunpack.c.l.b16 %v2807
    %v3359 = vunpack.c.h.b16 %v2807
    %v3360 = vunpack.c.l.b16 %v2808
    %v3361 = vunpack.c.h.b16 %v2808
    %v3362 = vunpack.c.l.b16 %v2809
    %v3363 = vunpack.c.h.b16 %v2809
    %v3364 = vunpack.c.l.b16 %v2810
    %v3365 = vunpack.c.h.b16 %v2810
    %v3366 = vunpack.c.l.b16 %v2811
    %v3367 = vunpack.c.h.b16 %v2811
    %v3368 = vunpack.c.l.b16 %v2812
    %v3369 = vunpack.c.h.b16 %v2812
    %v3370 = vunpack.c.l.b16 %v2813
    %v3371 = vunpack.c.h.b16 %v2813
    %v3372 = vunpack.c.l.b16 %v2814
    %v3373 = vunpack.c.h.b16 %v2814
    %v3374 = vunpack.c.l.b16 %v2815
    %v3375 = vunpack.c.h.b16 %v2815
    %v3376 = vunpack.c.l.b16 %v2816
    %v3377 = vunpack.c.h.b16 %v2816
    %v3378 = vunpack.c.l.b16 %v2817
    %v3379 = vunpack.c.h.b16 %v2817
    %v3380 = vunpack.c.l.b16 %v2818
    %v3381 = vunpack.c.h.b16 %v2818
    %v3382 = vunpack.c.l.b16 %v2819
    %v3383 = vunpack.c.h.b16 %v2819
    %v3384 = vunpack.c.l.b16 %v2820
    %v3385 = vunpack.c.h.b16 %v2820
    %v3386 = vunpack.c.l.b16 %v2821
    %v3387 = vunpack.c.h.b16 %v2821
    %v3388 = vunpack.c.l.b16 %v2822
    %v3389 = vunpack.c.h.b16 %v2822
    %v3390 = vunpack.c.l.b16 %v2823
    %v3391 = vunpack.c.h.b16 %v2823
    %v3392 = vunpack.c.l.b16 %v2824
    %v3393 = vunpack.c.h.b16 %v2824
    %v3394 = vunpack.c.l.b16 %v2825
    %v3395 = vunpack.c.h.b16 %v2825
    %v3396 = vunpack.c.l.b16 %v2826
    %v3397 = vunpack.c.h.b16 %v2826
    %v3398 = vunpack.c.l.b16 %v2827
    %v3399 = vunpack.c.h.b16 %v2827
    %v3400 = vunpack.c.l.b16 %v2828
    %v3401 = vunpack.c.h.b16 %v2828
    %v3402 = vunpack.c.l.b16 %v2829
    %v3403 = vunpack.c.h.b16 %v2829
    %v3404 = vunpack.c.l.b16 %v2830
    %v3405 = vunpack.c.h.b16 %v2830
    %v3406 = vunpack.c.l.b16 %v2831
    %v3407 = vunpack.c.h.b16 %v2831
    %v3408 = vunpack.c.l.b16 %v2832
    %v3409 = vunpack.c.h.b16 %v2832
    %v3410 = vunpack.c.l.b16 %v2833
    %v3411 = vunpack.c.h.b16 %v2833
    %v3412 = vunpack.c.l.b16 %v2834
    %v3413 = vunpack.c.h.b16 %v2834
    %v3414 = vunpack.c.l.b16 %v2835
    %v3415 = vunpack.c.h.b16 %v2835
    %v3416 = vunpack.c.l.b16 %v2836
    %v3417 = vunpack.c.h.b16 %v2836
    %v3418 = vunpack.c.l.b16 %v2837
    %v3419 = vunpack.c.h.b16 %v2837
    %v3420 = vunpack.c.l.b16 %v2838
    %v3421 = vunpack.c.h.b16 %v2838
    %v3422 = vunpack.c.l.b16 %v2839
    %v3423 = vunpack.c.h.b16 %v2839
    %v3424 = vunpack.c.l.b16 %v2840
    %v3425 = vunpack.c.h.b16 %v2840
    %v3426 = vunpack.c.l.b16 %v2841
    %v3427 = vunpack.c.h.b16 %v2841
    %v3428 = vunpack.c.l.b16 %v2842
    %v3429 = vunpack.c.h.b16 %v2842
    %v3430 = vunpack.c.l.b16 %v2843
    %v3431 = vunpack.c.h.b16 %v2843
    %v3432 = vunpack.c.l.b16 %v2844
    %v3433 = vunpack.c.h.b16 %v2844
    %v3434 = vunpack.c.l.b16 %v2845
    %v3435 = vunpack.c.h.b16 %v2845
    %v3436 = vunpack.c.l.b16 %v2846
    %v3437 = vunpack.c.h.b16 %v2846
    %v3438 = vunpack.c.l.b16 %v2847
    %v3439 = vunpack.c.h.b16 %v2847
    %v3440 = vunpack.c.l.b16 %v2848
    %v3441 = vunpack.c.h.b16 %v2848
    %v3442 = vunpack.c.l.b16 %v2849
    %v3443 = vunpack.c.h.b16 %v2849
    %v3444 = vunpack.c.l.b16 %v2850
    %v3445 = vunpack.c.h.b16 %v2850
    %v3446 = vunpack.c.l.b16 %v2851
    %v3447 = vunpack.c.h.b16 %v2851
    %v3448 = vunpack.c.l.b16 %v2852
    %v3449 = vunpack.c.h.b16 %v2852
    %v3450 = vunpack.c.l.b16 %v2853
    %v3451 = vunpack.c.h.b16 %v2853
    %v3452 = vunpack.c.l.b16 %v2854
    %v3453 = vunpack.c.h.b16 %v2854
    %v3454 = vunpack.c.l.b16 %v2855
    %v3455 = vunpack.c.h.b16 %v2855
    %v3456 = vunpack.c.l.b16 %v2856
    %v3457 = vunpack.c.h.b16 %v2856
    %v3458 = vunpack.c.l.b16 %v2857
    %v3459 = vunpack.c.h.b16 %v2857
    %v3460 = vunpack.c.l.b16 %v2858
    %v3461 = vunpack.c.h.b16 %v2858
    %v3462 = vunpack.c.l.b16 %v2859
    %v3463 = vunpack.c.h.b16 %v2859
    %v3464 = vunpack.c.l.b16 %v2860
    %v3465 = vunpack.c.h.b16 %v2860
    %v3466 = vunpack.c.l.b16 %v2861
    %v3467 = vunpack.c.h.b16 %v2861
    %v3468 = vunpack.c.l.b16 %v2862
    %v3469 = vunpack.c.h.b16 %v2862
    %v3470 = vunpack.c.l.b16 %v2863
    %v3471 = vunpack.c.h.b16 %v2863
    %v3472 = vunpack.c.l.b16 %v2864
    %v3473 = vunpack.c.h.b16 %v2864
    %v3474 = vunpack.c.l.b16 %v2865
    %v3475 = vunpack.c.h.b16 %v2865
    %v3476 = vunpack.c.l.b16 %v2866
    %v3477 = vunpack.c.h.b16 %v2866
    %v3478 = vunpack.c.l.b16 %v2867
    %v3479 = vunpack.c.h.b16 %v2867
    %v3480 = vunpack.c.l.b16 %v2868
    %v3481 = vunpack.c.h.b16 %v2868
    %v3482 = vunpack.c.l.b16 %v2869
    %v3483 = vunpack.c.h.b16 %v2869
    %v3484 = vunpack.c.l.b16 %v2870
    %v3485 = vunpack.c.h.b16 %v2870
    %v3486 = vunpack.c.l.b16 %v2871
    %v3487 = vunpack.c.h.b16 %v2871
    %v3488 = vunpack.c.l.b16 %v2872
    %v3489 = vunpack.c.h.b16 %v2872
    %v3490 = vunpack.c.l.b16 %v2873
    %v3491 = vunpack.c.h.b16 %v2873
    %v3492 = vunpack.c.l.b16 %v2874
    %v3493 = vunpack.c.h.b16 %v2874
    %v3494 = vunpack.c.l.b16 %v2875
    %v3495 = vunpack.c.h.b16 %v2875
    %v3496 = vunpack.c.l.b16 %v2876
    %v3497 = vunpack.c.h.b16 %v2876
    %v3498 = vunpack.c.l.b16 %v2877
    %v3499 = vunpack.c.h.b16 %v2877
    %v3500 = vunpack.c.l.b16 %v2878
    %v3501 = vunpack.c.h.b16 %v2878
    %v3502 = vunpack.c.l.b16 %v2879
    %v3503 = vunpack.c.h.b16 %v2879
    %v3504 = vunpack.c.l.b16 %v2880
    %v3505 = vunpack.c.h.b16 %v2880
    %v3506 = vunpack.c.l.b16 %v2881
    %v3507 = vunpack.c.h.b16 %v2881
    %v3508 = vunpack.c.l.b16 %v2882
    %v3509 = vunpack.c.h.b16 %v2882
    %v3510 = vunpack.c.l.b16 %v2883
    %v3511 = vunpack.c.h.b16 %v2883
    %v3512 = vunpack.c.l.b16 %v2884
    %v3513 = vunpack.c.h.b16 %v2884
    %v3514 = vunpack.c.l.b16 %v2885
    %v3515 = vunpack.c.h.b16 %v2885
    %v3516 = vunpack.c.l.b16 %v2886
    %v3517 = vunpack.c.h.b16 %v2886
    %v3518 = vunpack.c.l.b16 %v2887
    %v3519 = vunpack.c.h.b16 %v2887
    %v3520 = vunpack.c.l.b16 %v2888
    %v3521 = vunpack.c.h.b16 %v2888
    %v3522 = vunpack.c.l.b16 %v2889
    %v3523 = vunpack.c.h.b16 %v2889
    %v3524 = vunpack.c.l.b16 %v2890
    %v3525 = vunpack.c.h.b16 %v2890
    %v3526 = vunpack.c.l.b16 %v2891
    %v3527 = vunpack.c.h.b16 %v2891
    %v3528 = vunpack.c.l.b16 %v2892
    %v3529 = vunpack.c.h.b16 %v2892
    %v3530 = vunpack.c.l.b16 %v2893
    %v3531 = vunpack.c.h.b16 %v2893
    %v3532 = vunpack.c.l.b16 %v2894
    %v3533 = vunpack.c.h.b16 %v2894
    %v3534 = vunpack.c.l.b16 %v2895
    %v3535 = vunpack.c.h.b16 %v2895
    %v3536 = vunpack.c.l.b16 %v2896
    %v3537 = vunpack.c.h.b16 %v2896
    %v3538 = vunpack.c.l.b16 %v2897
    %v3539 = vunpack.c.h.b16 %v2897
    %v3540 = vunpack.c.l.b16 %v2898
    %v3541 = vunpack.c.h.b16 %v2898
    %v3542 = vunpack.c.l.b16 %v2899
    %v3543 = vunpack.c.h.b16 %v2899
    %v3544 = vunpack.c.l.b16 %v2900
    %v3545 = vunpack.c.h.b16 %v2900
    %v3546 = vunpack.c.l.b16 %v2901
    %v3547 = vunpack.c.h.b16 %v2901
    %v3548 = vunpack.c.l.b16 %v2902
    %v3549 = vunpack.c.h.b16 %v2902
    %v3550 = vunpack.c.l.b16 %v2903
    %v3551 = vunpack.c.h.b16 %v2903
    %v3552 = vunpack.c.l.b16 %v2904
    %v3553 = vunpack.c.h.b16 %v2904
    %v3554 = vunpack.c.l.b16 %v2905
    %v3555 = vunpack.c.h.b16 %v2905
    %v3556 = vunpack.c.l.b16 %v2906
    %v3557 = vunpack.c.h.b16 %v2906
    %v3558 = vunpack.c.l.b16 %v2907
    %v3559 = vunpack.c.h.b16 %v2907
    %v3560 = vunpack.c.l.b16 %v2908
    %v3561 = vunpack.c.h.b16 %v2908
    %v3562 = vunpack.c.l.b16 %v2909
    %v3563 = vunpack.c.h.b16 %v2909
    %v3564 = vunpack.c.l.b16 %v2910
    %v3565 = vunpack.c.h.b16 %v2910
    %v3566 = vunpack.c.l.b16 %v2911
    %v3567 = vunpack.c.h.b16 %v2911
    %v3568 = vunpack.c.l.b16 %v2912
    %v3569 = vunpack.c.h.b16 %v2912
    %v3570 = vunpack.c.l.b16 %v2913
    %v3571 = vunpack.c.h.b16 %v2913
    %v3572 = vunpack.c.l.b16 %v2914
    %v3573 = vunpack.c.h.b16 %v2914
    %v3574 = vunpack.c.l.b16 %v2915
    %v3575 = vunpack.c.h.b16 %v2915
    %v3576 = vunpack.c.l.b16 %v2916
    %v3577 = vunpack.c.h.b16 %v2916
    %v3578 = vunpack.c.l.b16 %v2917
    %v3579 = vunpack.c.h.b16 %v2917
    %v3580 = vunpack.c.l.b16 %v2918
    %v3581 = vunpack.c.h.b16 %v2918
    %v3582 = vunpack.c.l.b16 %v2919
    %v3583 = vunpack.c.h.b16 %v2919
    %v3584 = vunpack.c.l.b16 %v2920
    %v3585 = vunpack.c.h.b16 %v2920
    %v3586 = vunpack.c.l.b16 %v2921
    %v3587 = vunpack.c.h.b16 %v2921
    %v3588 = vunpack.c.l.b16 %v2922
    %v3589 = vunpack.c.h.b16 %v2922
    %v3590 = vunpack.c.l.b16 %v2923
    %v3591 = vunpack.c.h.b16 %v2923
    %v3592 = vunpack.c.l.b16 %v2924
    %v3593 = vunpack.c.h.b16 %v2924
    %v3594 = vunpack.c.l.b16 %v2925
    %v3595 = vunpack.c.h.b16 %v2925
    %v3596 = vunpack.c.l.b16 %v2926
    %v3597 = vunpack.c.h.b16 %v2926
    %v3598 = vunpack.c.l.b16 %v2927
    %v3599 = vunpack.c.h.b16 %v2927
    %v3600 = vunpack.c.l.b16 %v2928
    %v3601 = vunpack.c.h.b16 %v2928
    %v3602 = vunpack.c.l.b16 %v2929
    %v3603 = vunpack.c.h.b16 %v2929
    %v3604 = vunpack.c.l.b16 %v2930
    %v3605 = vunpack.c.h.b16 %v2930
    %v3606 = vunpack.c.l.b16 %v2931
    %v3607 = vunpack.c.h.b16 %v2931
    %v3608 = vunpack.c.l.b16 %v2932
    %v3609 = vunpack.c.h.b16 %v2932
    %v3610 = vunpack.c.l.b16 %v2933
    %v3611 = vunpack.c.h.b16 %v2933
    %v3612 = vunpack.c.l.b16 %v2934
    %v3613 = vunpack.c.h.b16 %v2934
    %v3614 = vunpack.c.l.b16 %v2935
    %v3615 = vunpack.c.h.b16 %v2935
    %v3616 = vunpack.c.l.b16 %v2936
    %v3617 = vunpack.c.h.b16 %v2936
    %v3618 = vunpack.c.l.b16 %v2937
    %v3619 = vunpack.c.h.b16 %v2937
    %v3620 = vunpack.c.l.b16 %v2938
    %v3621 = vunpack.c.h.b16 %v2938
    %v3622 = vunpack.c.l.b16 %v2939
    %v3623 = vunpack.c.h.b16 %v2939
    %v3624 = vunpack.c.l.b16 %v2940
    %v3625 = vunpack.c.h.b16 %v2940
    %v3626 = vunpack.c.l.b16 %v2941
    %v3627 = vunpack.c.h.b16 %v2941
    %v3628 = vunpack.c.l.b16 %v2942
    %v3629 = vunpack.c.h.b16 %v2942
    %v3630 = vunpack.c.l.b16 %v2943
    %v3631 = vunpack.c.h.b16 %v2943
    %v3632 = vunpack.c.l.b16 %v2944
    %v3633 = vunpack.c.h.b16 %v2944
    %v3634 = vunpack.c.l.b16 %v2945
    %v3635 = vunpack.c.h.b16 %v2945
    %v3636 = vunpack.c.l.b16 %v2946
    %v3637 = vunpack.c.h.b16 %v2946
    %v3638 = vunpack.c.l.b16 %v2947
    %v3639 = vunpack.c.h.b16 %v2947
    %v3640 = vunpack.c.l.b16 %v2948
    %v3641 = vunpack.c.h.b16 %v2948
    %v3642 = vunpack.c.l.b16 %v2949
    %v3643 = vunpack.c.h.b16 %v2949
    %v3644 = vunpack.c.l.b16 %v2950
    %v3645 = vunpack.c.h.b16 %v2950
    %v3646 = vunpack.c.l.b16 %v2951
    %v3647 = vunpack.c.h.b16 %v2951
    %v3648 = vunpack.c.l.b16 %v2952
    %v3649 = vunpack.c.h.b16 %v2952
    %v3650 = vunpack.c.l.b16 %v2953
    %v3651 = vunpack.c.h.b16 %v2953
    %v3652 = vunpack.c.l.b16 %v2954
    %v3653 = vunpack.c.h.b16 %v2954
    %v3654 = vunpack.c.l.b16 %v2955
    %v3655 = vunpack.c.h.b16 %v2955
    %v3656 = vunpack.c.l.b16 %v2956
    %v3657 = vunpack.c.h.b16 %v2956
    %v3658 = vunpack.c.l.b16 %v2957
    %v3659 = vunpack.c.h.b16 %v2957
    %v3660 = vunpack.c.l.b16 %v2958
    %v3661 = vunpack.c.h.b16 %v2958
    %v3662 = vunpack.c.l.b16 %v2959
    %v3663 = vunpack.c.h.b16 %v2959
    %v3664 = vunpack.c.l.b16 %v2960
    %v3665 = vunpack.c.h.b16 %v2960
    %v3666 = vunpack.c.l.b16 %v2961
    %v3667 = vunpack.c.h.b16 %v2961
    %v3668 = vunpack.c.l.b16 %v2962
    %v3669 = vunpack.c.h.b16 %v2962
    %v3670 = vunpack.c.l.b16 %v2963
    %v3671 = vunpack.c.h.b16 %v2963
    %v3672 = vunpack.c.l.b16 %v2964
    %v3673 = vunpack.c.h.b16 %v2964
    %v3674 = vunpack.c.l.b16 %v2965
    %v3675 = vunpack.c.h.b16 %v2965
    %v3676 = vunpack.c.l.b16 %v2966
    %v3677 = vunpack.c.h.b16 %v2966
    %v3678 = vunpack.c.l.b16 %v2967
    %v3679 = vunpack.c.h.b16 %v2967
    %v3680 = vunpack.c.l.b16 %v2968
    %v3681 = vunpack.c.h.b16 %v2968
    %v3682 = vunpack.c.l.b16 %v2969
    %v3683 = vunpack.c.h.b16 %v2969
    %v3684 = vunpack.c.l.b16 %v2970
    %v3685 = vunpack.c.h.b16 %v2970
    %v3686 = vunpack.c.l.b16 %v2971
    %v3687 = vunpack.c.h.b16 %v2971
    %v3688 = vunpack.c.l.b16 %v2972
    %v3689 = vunpack.c.h.b16 %v2972
    %v3690 = vunpack.c.l.b16 %v2973
    %v3691 = vunpack.c.h.b16 %v2973
    %v3692 = vunpack.c.l.b16 %v2974
    %v3693 = vunpack.c.h.b16 %v2974
    %v3694 = vunpack.c.l.b16 %v2975
    %v3695 = vunpack.c.h.b16 %v2975
    %v3696 = vunpack.c.l.b16 %v2976
    %v3697 = vunpack.c.h.b16 %v2976
    %v3698 = vunpack.c.l.b16 %v2977
    %v3699 = vunpack.c.h.b16 %v2977
    %v3700 = vunpack.c.l.b16 %v2978
    %v3701 = vunpack.c.h.b16 %v2978
    %v3702 = vunpack.c.l.b16 %v2979
    %v3703 = vunpack.c.h.b16 %v2979
    %v3704 = vunpack.c.l.b16 %v2980
    %v3705 = vunpack.c.h.b16 %v2980
    %v3706 = vunpack.c.l.b16 %v2981
    %v3707 = vunpack.c.h.b16 %v2981
    %v3708 = vunpack.c.l.b16 %v2982
    %v3709 = vunpack.c.h.b16 %v2982
    %v3710 = vunpack.c.l.b16 %v2983
    %v3711 = vunpack.c.h.b16 %v2983
    %v3712 = vunpack.c.l.b16 %v2984
    %v3713 = vunpack.c.h.b16 %v2984
    %v3714 = vunpack.c.l.b16 %v2985
    %v3715 = vunpack.c.h.b16 %v2985
    %v3716 = vunpack.c.l.b16 %v2986
    %v3717 = vunpack.c.h.b16 %v2986
    %v3718 = vunpack.c.l.b16 %v2987
    %v3719 = vunpack.c.h.b16 %v2987
    %v3720 = vunpack.c.l.b16 %v2988
    %v3721 = vunpack.c.h.b16 %v2988
    %v3722 = vunpack.c.l.b16 %v2989
    %v3723 = vunpack.c.h.b16 %v2989
    %v3724 = vunpack.c.l.b16 %v2990
    %v3725 = vunpack.c.h.b16 %v2990
    %v3726 = vunpack.c.l.b16 %v2991
    %v3727 = vunpack.c.h.b16 %v2991
    %v3728 = vunpack.c.l.b16 %v2992
    %v3729 = vunpack.c.h.b16 %v2992
    %v3730 = vunpack.c.l.b16 %v2993
    %v3731 = vunpack.c.h.b16 %v2993
    %v3732 = vunpack.c.l.b16 %v2994
    %v3733 = vunpack.c.h.b16 %v2994
    %v3734 = vunpack.c.l.b16 %v2995
    %v3735 = vunpack.c.h.b16 %v2995
    %v3736 = vunpack.c.l.b16 %v2996
    %v3737 = vunpack.c.h.b16 %v2996
    %v3738 = vunpack.c.l.b16 %v2997
    %v3739 = vunpack.c.h.b16 %v2997
    %v3740 = vunpack.c.l.b16 %v2998
    %v3741 = vunpack.c.h.b16 %v2998
    %v3742 = vunpack.c.l.b16 %v2999
    %v3743 = vunpack.c.h.b16 %v2999
    %v3744 = vunpack.c.l.b16 %v3000
    %v3745 = vunpack.c.h.b16 %v3000
    %v3746 = vunpack.c.l.b16 %v3001
    %v3747 = vunpack.c.h.b16 %v3001
    %v3748 = vunpack.c.l.b16 %v3002
    %v3749 = vunpack.c.h.b16 %v3002
    %v3750 = vunpack.c.l.b16 %v3003
    %v3751 = vunpack.c.h.b16 %v3003
    %v3752 = vunpack.c.l.b16 %v3004
    %v3753 = vunpack.c.h.b16 %v3004
    %v3754 = vunpack.c.l.b16 %v3005
    %v3755 = vunpack.c.h.b16 %v3005
    %v3756 = vunpack.c.l.b16 %v3006
    %v3757 = vunpack.c.h.b16 %v3006
    %v3758 = vunpack.c.l.b16 %v3007
    %v3759 = vunpack.c.h.b16 %v3007
    %v3760 = vunpack.c.l.b16 %v3008
    %v3761 = vunpack.c.h.b16 %v3008
    %v3762 = vunpack.c.l.b16 %v3009
    %v3763 = vunpack.c.h.b16 %v3009
    %v3764 = vunpack.c.l.b16 %v3010
    %v3765 = vunpack.c.h.b16 %v3010
    %v3766 = vunpack.c.l.b16 %v3011
    %v3767 = vunpack.c.h.b16 %v3011
    %v3768 = vunpack.c.l.b16 %v3012
    %v3769 = vunpack.c.h.b16 %v3012
    %v3770 = vunpack.c.l.b16 %v3013
    %v3771 = vunpack.c.h.b16 %v3013
    %v3772 = vunpack.c.l.b16 %v3014
    %v3773 = vunpack.c.h.b16 %v3014
    %v3774 = vunpack.c.l.b16 %v3015
    %v3775 = vunpack.c.h.b16 %v3015
    %v3776 = vunpack.c.l.b16 %v3016
    %v3777 = vunpack.c.h.b16 %v3016
    %v3778 = vunpack.c.l.b16 %v3017
    %v3779 = vunpack.c.h.b16 %v3017
    %v3780 = vunpack.c.l.b16 %v3018
    %v3781 = vunpack.c.h.b16 %v3018
    %v3782 = vunpack.c.l.b16 %v3019
    %v3783 = vunpack.c.h.b16 %v3019
    %v3784 = vunpack.c.l.b16 %v3020
    %v3785 = vunpack.c.h.b16 %v3020
    %v3786 = vunpack.c.l.b16 %v3021
    %v3787 = vunpack.c.h.b16 %v3021
    %v3788 = vunpack.c.l.b16 %v3022
    %v3789 = vunpack.c.h.b16 %v3022
    %v3790 = vunpack.c.l.b16 %v3023
    %v3791 = vunpack.c.h.b16 %v3023
    %v3792 = vunpack.c.l.b16 %v3024
    %v3793 = vunpack.c.h.b16 %v3024
    %v3794 = vunpack.c.l.b16 %v3025
    %v3795 = vunpack.c.h.b16 %v3025
    %v3796 = vunpack.c.l.b16 %v3026
    %v3797 = vunpack.c.h.b16 %v3026
    %v3798 = vunpack.c.l.b16 %v3027
    %v3799 = vunpack.c.h.b16 %v3027
    %v3800 = vunpack.c.l.b16 %v3028
    %v3801 = vunpack.c.h.b16 %v3028
    %v3802 = vunpack.c.l.b16 %v3029
    %v3803 = vunpack.c.h.b16 %v3029
    %v3804 = vunpack.c.l.b16 %v3030
    %v3805 = vunpack.c.h.b16 %v3030
    %v3806 = vunpack.c.l.b16 %v3031
    %v3807 = vunpack.c.h.b16 %v3031
    %v3808 = vunpack.c.l.b16 %v3032
    %v3809 = vunpack.c.h.b16 %v3032
    %v3810 = vunpack.c.l.b16 %v3033
    %v3811 = vunpack.c.h.b16 %v3033
    %v3812 = vpack.c.b16 %v3304, %v3300
    %v3813 = vpack.c.b16 %v3305, %v3301
    %v3814 = vpack.c.b16 %v3306, %v3302
    %v3815 = vpack.c.b16 %v3307, %v3303
    %v3816 = vpack.c.b16 %v3312, %v3308
    %v3817 = vpack.c.b16 %v3313, %v3309
    %v3818 = vpack.c.b16 %v3314, %v3310
    %v3819 = vpack.c.b16 %v3315, %v3311
    %v3820 = vpack.c.b16 %v3320, %v3316
    %v3821 = vpack.c.b16 %v3321, %v3317
    %v3822 = vpack.c.b16 %v3322, %v3318
    %v3823 = vpack.c.b16 %v3323, %v3319
    %v3824 = vpack.c.b16 %v3328, %v3324
    %v3825 = vpack.c.b16 %v3329, %v3325
    %v3826 = vpack.c.b16 %v3330, %v3326
    %v3827 = vpack.c.b16 %v3331, %v3327
    %v3828 = vpack.c.b16 %v3336, %v3332
    %v3829 = vpack.c.b16 %v3337, %v3333
    %v3830 = vpack.c.b16 %v3338, %v3334
    %v3831 = vpack.c.b16 %v3339, %v3335
    %v3832 = vpack.c.b16 %v3344, %v3340
    %v3833 = vpack.c.b16 %v3345, %v3341
    %v3834 = vpack.c.b16 %v3346, %v3342
    %v3835 = vpack.c.b16 %v3347, %v3343
    %v3836 = vpack.c.b16 %v3352, %v3348
    %v3837 = vpack.c.b16 %v3353, %v3349
    %v3838 = vpack.c.b16 %v3354, %v3350
    %v3839 = vpack.c.b16 %v3355, %v3351
    %v3840 = vpack.c.b16 %v3360, %v3356
    %v3841 = vpack.c.b16 %v3361, %v3357
    %v3842 = vpack.c.b16 %v3362, %v3358
    %v3843 = vpack.c.b16 %v3363, %v3359
    %v3844 = vpack.c.b16 %v3368, %v3364
    %v3845 = vpack.c.b16 %v3369, %v3365
    %v3846 = vpack.c.b16 %v3370, %v3366
    %v3847 = vpack.c.b16 %v3371, %v3367
    %v3848 = vpack.c.b16 %v3376, %v3372
    %v3849 = vpack.c.b16 %v3377, %v3373
    %v3850 = vpack.c.b16 %v3378, %v3374
    %v3851 = vpack.c.b16 %v3379, %v3375
    %v3852 = vpack.c.b16 %v3384, %v3380
    %v3853 = vpack.c.b16 %v3385, %v3381
    %v3854 = vpack.c.b16 %v3386, %v3382
    %v3855 = vpack.c.b16 %v3387, %v3383
    %v3856 = vpack.c.b16 %v3392, %v3388
    %v3857 = vpack.c.b16 %v3393, %v3389
    %v3858 = vpack.c.b16 %v3394, %v3390
    %v3859 = vpack.c.b16 %v3395, %v3391
    %v3860 = vpack.c.b16 %v3400, %v3396
    %v3861 = vpack.c.b16 %v3401, %v3397
    %v3862 = vpack.c.b16 %v3402, %v3398
    %v3863 = vpack.c.b16 %v3403, %v3399
    %v3864 = vpack.c.b16 %v3408, %v3404
    %v3865 = vpack.c.b16 %v3409, %v3405
    %v3866 = vpack.c.b16 %v3410, %v3406
    %v3867 = vpack.c.b16 %v3411, %v3407
    %v3868 = vpack.c.b16 %v3416, %v3412
    %v3869 = vpack.c.b16 %v3417, %v3413
    %v3870 = vpack.c.b16 %v3418, %v3414
    %v3871 = vpack.c.b16 %v3419, %v3415
    %v3872 = vpack.c.b16 %v3424, %v3420
    %v3873 = vpack.c.b16 %v3425, %v3421
    %v3874 = vpack.c.b16 %v3426, %v3422
    %v3875 = vpack.c.b16 %v3427, %v3423
    %v3876 = vpack.c.b16 %v3432, %v3428
    %v3877 = vpack.c.b16 %v3433, %v3429
    %v3878 = vpack.c.b16 %v3434, %v3430
    %v3879 = vpack.c.b16 %v3435, %v3431
    %v3880 = vpack.c.b16 %v3440, %v3436
    %v3881 = vpack.c.b16 %v3441, %v3437
    %v3882 = vpack.c.b16 %v3442, %v3438
    %v3883 = vpack.c.b16 %v3443, %v3439
    %v3884 = vpack.c.b16 %v3448, %v3444
    %v3885 = vpack.c.b16 %v3449, %v3445
    %v3886 = vpack.c.b16 %v3450, %v3446
    %v3887 = vpack.c.b16 %v3451, %v3447
    %v3888 = vpack.c.b16 %v3456, %v3452
    %v3889 = vpack.c.b16 %v3457, %v3453
    %v3890 = vpack.c.b16 %v3458, %v3454
    %v3891 = vpack.c.b16 %v3459, %v3455
    %v3892 = vpack.c.b16 %v3464, %v3460
    %v3893 = vpack.c.b16 %v3465, %v3461
    %v3894 = vpack.c.b16 %v3466, %v3462
    %v3895 = vpack.c.b16 %v3467, %v3463
    %v3896 = vpack.c.b16 %v3472, %v3468
    %v3897 = vpack.c.b16 %v3473, %v3469
    %v3898 = vpack.c.b16 %v3474, %v3470
    %v3899 = vpack.c.b16 %v3475, %v3471
    %v3900 = vpack.c.b16 %v3480, %v3476
    %v3901 = vpack.c.b16 %v3481, %v3477
    %v3902 = vpack.c.b16 %v3482, %v3478
    %v3903 = vpack.c.b16 %v3483, %v3479
    %v3904 = vpack.c.b16 %v3488, %v3484
    %v3905 = vpack.c.b16 %v3489, %v3485
    %v3906 = vpack.c.b16 %v3490, %v3486
    %v3907 = vpack.c.b16 %v3491, %v3487
    %v3908 = vpack.c.b16 %v3496, %v3492
    %v3909 = vpack.c.b16 %v3497, %v3493
    %v3910 = vpack.c.b16 %v3498, %v3494
    %v3911 = vpack.c.b16 %v3499, %v3495
    %v3912 = vpack.c.b16 %v3504, %v3500
    %v3913 = vpack.c.b16 %v3505, %v3501
    %v3914 = vpack.c.b16 %v3506, %v3502
    %v3915 = vpack.c.b16 %v3507, %v3503
    %v3916 = vpack.c.b16 %v3512, %v3508
    %v3917 = vpack.c.b16 %v3513, %v3509
    %v3918 = vpack.c.b16 %v3514, %v3510
    %v3919 = vpack.c.b16 %v3515, %v3511
    %v3920 = vpack.c.b16 %v3520, %v3516
    %v3921 = vpack.c.b16 %v3521, %v3517
    %v3922 = vpack.c.b16 %v3522, %v3518
    %v3923 = vpack.c.b16 %v3523, %v3519
    %v3924 = vpack.c.b16 %v3528, %v3524
    %v3925 = vpack.c.b16 %v3529, %v3525
    %v3926 = vpack.c.b16 %v3530, %v3526
    %v3927 = vpack.c.b16 %v3531, %v3527
    %v3928 = vpack.c.b16 %v3536, %v3532
    %v3929 = vpack.c.b16 %v3537, %v3533
    %v3930 = vpack.c.b16 %v3538, %v3534
    %v3931 = vpack.c.b16 %v3539, %v3535
    %v3932 = vpack.c.b16 %v3544, %v3540
    %v3933 = vpack.c.b16 %v3545, %v3541
    %v3934 = vpack.c.b16 %v3546, %v3542
    %v3935 = vpack.c.b16 %v3547, %v3543
    %v3936 = vpack.c.b16 %v3552, %v3548
    %v3937 = vpack.c.b16 %v3553, %v3549
    %v3938 = vpack.c.b16 %v3554, %v3550
    %v3939 = vpack.c.b16 %v3555, %v3551
    %v3940 = vpack.c.b16 %v3560, %v3556
    %v3941 = vpack.c.b16 %v3561, %v3557
    %v3942 = vpack.c.b16 %v3562, %v3558
    %v3943 = vpack.c.b16 %v3563, %v3559
    %v3944 = vpack.c.b16 %v3568, %v3564
    %v3945 = vpack.c.b16 %v3569, %v3565
    %v3946 = vpack.c.b16 %v3570, %v3566
    %v3947 = vpack.c.b16 %v3571, %v3567
    %v3948 = vpack.c.b16 %v3576, %v3572
    %v3949 = vpack.c.b16 %v3577, %v3573
    %v3950 = vpack.c.b16 %v3578, %v3574
    %v3951 = vpack.c.b16 %v3579, %v3575
    %v3952 = vpack.c.b16 %v3584, %v3580
    %v3953 = vpack.c.b16 %v3585, %v3581
    %v3954 = vpack.c.b16 %v3586, %v3582
    %v3955 = vpack.c.b16 %v3587, %v3583
    %v3956 = vpack.c.b16 %v3592, %v3588
    %v3957 = vpack.c.b16 %v3593, %v3589
    %v3958 = vpack.c.b16 %v3594, %v3590
    %v3959 = vpack.c.b16 %v3595, %v3591
    %v3960 = vpack.c.b16 %v3600, %v3596
    %v3961 = vpack.c.b16 %v3601, %v3597
    %v3962 = vpack.c.b16 %v3602, %v3598
    %v3963 = vpack.c.b16 %v3603, %v3599
    %v3964 = vpack.c.b16 %v3608, %v3604
    %v3965 = vpack.c.b16 %v3609, %v3605
    %v3966 = vpack.c.b16 %v3610, %v3606
    %v3967 = vpack.c.b16 %v3611, %v3607
    %v3968 = vpack.c.b16 %v3616, %v3612
    %v3969 = vpack.c.b16 %v3617, %v3613
    %v3970 = vpack.c.b16 %v3618, %v3614
    %v3971 = vpack.c.b16 %v3619, %v3615
    %v3972 = vpack.c.b16 %v3624, %v3620
    %v3973 = vpack.c.b16 %v3625, %v3621
    %v3974 = vpack.c.b16 %v3626, %v3622
    %v3975 = vpack.c.b16 %v3627, %v3623
    %v3976 = vpack.c.b16 %v3632, %v3628
    %v3977 = vpack.c.b16 %v3633, %v3629
    %v3978 = vpack.c.b16 %v3634, %v3630
    %v3979 = vpack.c.b16 %v3635, %v3631
    %v3980 = vpack.c.b16 %v3640, %v3636
    %v3981 = vpack.c.b16 %v3641, %v3637
    %v3982 = vpack.c.b16 %v3642, %v3638
    %v3983 = vpack.c.b16 %v3643, %v3639
    %v3984 = vpack.c.b16 %v3648, %v3644
    %v3985 = vpack.c.b16 %v3649, %v3645
    %v3986 = vpack.c.b16 %v3650, %v3646
    %v3987 = vpack.c.b16 %v3651, %v3647
    %v3988 = vpack.c.b16 %v3656, %v3652
    %v3989 = vpack.c.b16 %v3657, %v3653
    %v3990 = vpack.c.b16 %v3658, %v3654
    %v3991 = vpack.c.b16 %v3659, %v3655
    %v3992 = vpack.c.b16 %v3664, %v3660
    %v3993 = vpack.c.b16 %v3665, %v3661
    %v3994 = vpack.c.b16 %v3666, %v3662
    %v3995 = vpack.c.b16 %v3667, %v3663
    %v3996 = vpack.c.b16 %v3672, %v3668
    %v3997 = vpack.c.b16 %v3673, %v3669
    %v3998 = vpack.c.b16 %v3674, %v3670
    %v3999 = vpack.c.b16 %v3675, %v3671
    %v4000 = vpack.c.b16 %v3680, %v3676
    %v4001 = vpack.c.b16 %v3681, %v3677
    %v4002 = vpack.c.b16 %v3682, %v3678
    %v4003 = vpack.c.b16 %v3683, %v3679
    %v4004 = vpack.c.b16 %v3688, %v3684
    %v4005 = vpack.c.b16 %v3689, %v3685
    %v4006 = vpack.c.b16 %v3690, %v3686
    %v4007 = vpack.c.b16 %v3691, %v3687
    %v4008 = vpack.c.b16 %v3696, %v3692
    %v4009 = vpack.c.b16 %v3697, %v3693
    %v4010 = vpack.c.b16 %v3698, %v3694
    %v4011 = vpack.c.b16 %v3699, %v3695
    %v4012 = vpack.c.b16 %v3704, %v3700
    %v4013 = vpack.c.b16 %v3705, %v3701
    %v4014 = vpack.c.b16 %v3706, %v3702
    %v4015 = vpack.c.b16 %v3707, %v3703
    %v4016 = vpack.c.b16 %v3712, %v3708
    %v4017 = vpack.c.b16 %v3713, %v3709
    %v4018 = vpack.c.b16 %v3714, %v3710
    %v4019 = vpack.c.b16 %v3715, %v3711
    %v4020 = vpack.c.b16 %v3720, %v3716
    %v4021 = vpack.c.b16 %v3721, %v3717
    %v4022 = vpack.c.b16 %v3722, %v3718
    %v4023 = vpack.c.b16 %v3723, %v3719
    %v4024 = vpack.c.b16 %v3728, %v3724
    %v4025 = vpack.c.b16 %v3729, %v3725
    %v4026 = vpack.c.b16 %v3730, %v3726
    %v4027 = vpack.c.b16 %v3731, %v3727
    %v4028 = vpack.c.b16 %v3736, %v3732
    %v4029 = vpack.c.b16 %v3737, %v3733
    %v4030 = vpack.c.b16 %v3738, %v3734
    %v4031 = vpack.c.b16 %v3739, %v3735
    %v4032 = vpack.c.b16 %v3744, %v3740
    %v4033 = vpack.c.b16 %v3745, %v3741
    %v4034 = vpack.c.b16 %v3746, %v3742
    %v4035 = vpack.c.b16 %v3747, %v3743
    %v4036 = vpack.c.b16 %v3752, %v3748
    %v4037 = vpack.c.b16 %v3753, %v3749
    %v4038 = vpack.c.b16 %v3754, %v3750
    %v4039 = vpack.c.b16 %v3755, %v3751
    %v4040 = vpack.c.b16 %v3760, %v3756
    %v4041 = vpack.c.b16 %v3761, %v3757
    %v4042 = vpack.c.b16 %v3762, %v3758
    %v4043 = vpack.c.b16 %v3763, %v3759
    %v4044 = vpack.c.b16 %v3768, %v3764
    %v4045 = vpack.c.b16 %v3769, %v3765
    %v4046 = vpack.c.b16 %v3770, %v3766
    %v4047 = vpack.c.b16 %v3771, %v3767
    %v4048 = vpack.c.b16 %v3776, %v3772
    %v4049 = vpack.c.b16 %v3777, %v3773
    %v4050 = vpack.c.b16 %v3778, %v3774
    %v4051 = vpack.c.b16 %v3779, %v3775
    %v4052 = vpack.c.b16 %v3784, %v3780
    %v4053 = vpack.c.b16 %v3785, %v3781
    %v4054 = vpack.c.b16 %v3786, %v3782
    %v4055 = vpack.c.b16 %v3787, %v3783
    %v4056 = vpack.c.b16 %v3792, %v3788
    %v4057 = vpack.c.b16 %v3793, %v3789
    %v4058 = vpack.c.b16 %v3794, %v3790
    %v4059 = vpack.c.b16 %v3795, %v3791
    %v4060 = vpack.c.b16 %v3800, %v3796
    %v4061 = vpack.c.b16 %v3801, %v3797
    %v4062 = vpack.c.b16 %v3802, %v3798
    %v4063 = vpack.c.b16 %v3803, %v3799
    %v4064 = vpack.c.b16 %v3808, %v3804
    %v4065 = vpack.c.b16 %v3809, %v3805
    %v4066 = vpack.c.b16 %v3810, %v3806
    %v4067 = vpack.c.b16 %v3811, %v3807
    %4324 = vmatpush.bf16.msra.mxu0 %v3840
    %4325 = vmatpush.bf16.msra.mxu0 %v3836
    %4326 = vmatpush.bf16.msra.mxu0 %v3832
    %4327 = vmatpush.bf16.msra.mxu0 %v3828
    %4328 = vmatpush.bf16.msra.mxu0 %v3824
    %4329 = vmatpush.bf16.msra.mxu0 %v3820
    %4330 = vmatpush.bf16.msra.mxu0 %v3816
    %4331 = vmatpush.bf16.msra.mxu0 %v3812
    %4332 = vmatmul.bf16.gmra.mxu0 %v2770
    %v4333 = vpop.f32.mrf.mxu0
    %v4334 = vadd.f32 %v3036, %v4333
    %v4335 = vpop.f32.mrf.mxu0
    %v4336 = vadd.f32 %v3036, %v4335
    %4337 = vdwg.mxu0
    %4338 = vmatpush.bf16.msra.mxu0 %v3872
    %4339 = vmatpush.bf16.msra.mxu0 %v3868
    %4340 = vmatpush.bf16.msra.mxu0 %v3864
    %4341 = vmatpush.bf16.msra.mxu0 %v3860
    %4342 = vmatpush.bf16.msra.mxu0 %v3856
    %4343 = vmatpush.bf16.msra.mxu0 %v3852
    %4344 = vmatpush.bf16.msra.mxu0 %v3848
    %4345 = vmatpush.bf16.msra.mxu0 %v3844
    %4346 = vmatmul.bf16.gmra.mxu0 %v2771
    %v4347 = vpop.f32.mrf.mxu0
    %v4348 = vadd.f32 %v4334, %v4347
    %v4349 = vpop.f32.mrf.mxu0
    %v4350 = vadd.f32 %v4336, %v4349
    %4351 = vdwg.mxu0
    %4352 = vmatpush.bf16.msra.mxu0 %v3904
    %4353 = vmatpush.bf16.msra.mxu0 %v3900
    %4354 = vmatpush.bf16.msra.mxu0 %v3896
    %4355 = vmatpush.bf16.msra.mxu0 %v3892
    %4356 = vmatpush.bf16.msra.mxu0 %v3888
    %4357 = vmatpush.bf16.msra.mxu0 %v3884
    %4358 = vmatpush.bf16.msra.mxu0 %v3880
    %4359 = vmatpush.bf16.msra.mxu0 %v3876
    %4360 = vmatmul.bf16.gmra.mxu0 %v2772
    %v4361 = vpop.f32.mrf.mxu0
    %v4362 = vadd.f32 %v4348, %v4361
    %v4363 = vpop.f32.mrf.mxu0
    %v4364 = vadd.f32 %v4350, %v4363
    %4365 = vdwg.mxu0
    %4366 = vmatpush.bf16.msra.mxu0 %v3936
    %4367 = vmatpush.bf16.msra.mxu0 %v3932
    %4368 = vmatpush.bf16.msra.mxu0 %v3928
    %4369 = vmatpush.bf16.msra.mxu0 %v3924
    %4370 = vmatpush.bf16.msra.mxu0 %v3920
    %4371 = vmatpush.bf16.msra.mxu0 %v3916
    %4372 = vmatpush.bf16.msra.mxu0 %v3912
    %4373 = vmatpush.bf16.msra.mxu0 %v3908
    %4374 = vmatmul.bf16.gmra.mxu0 %v2773
    %v4375 = vpop.f32.mrf.mxu0
    %v4376 = vadd.f32 %v4362, %v4375
    %v4377 = vpop.f32.mrf.mxu0
    %v4378 = vadd.f32 %v4364, %v4377
    %4379 = vdwg.mxu0
    %4380 = vmatpush.bf16.msra.mxu0 %v3968
    %4381 = vmatpush.bf16.msra.mxu0 %v3964
    %4382 = vmatpush.bf16.msra.mxu0 %v3960
    %4383 = vmatpush.bf16.msra.mxu0 %v3956
    %4384 = vmatpush.bf16.msra.mxu0 %v3952
    %4385 = vmatpush.bf16.msra.mxu0 %v3948
    %4386 = vmatpush.bf16.msra.mxu0 %v3944
    %4387 = vmatpush.bf16.msra.mxu0 %v3940
    %4388 = vmatmul.bf16.gmra.mxu0 %v2774
    %v4389 = vpop.f32.mrf.mxu0
    %v4390 = vadd.f32 %v4376, %v4389
    %v4391 = vpop.f32.mrf.mxu0
    %v4392 = vadd.f32 %v4378, %v4391
    %4393 = vdwg.mxu0
    %4394 = vmatpush.bf16.msra.mxu0 %v4000
    %4395 = vmatpush.bf16.msra.mxu0 %v3996
    %4396 = vmatpush.bf16.msra.mxu0 %v3992
    %4397 = vmatpush.bf16.msra.mxu0 %v3988
    %4398 = vmatpush.bf16.msra.mxu0 %v3984
    %4399 = vmatpush.bf16.msra.mxu0 %v3980
    %4400 = vmatpush.bf16.msra.mxu0 %v3976
    %4401 = vmatpush.bf16.msra.mxu0 %v3972
    %4402 = vmatmul.bf16.gmra.mxu0 %v2775
    %v4403 = vpop.f32.mrf.mxu0
    %v4404 = vadd.f32 %v4390, %v4403
    %v4405 = vpop.f32.mrf.mxu0
    %v4406 = vadd.f32 %v4392, %v4405
    %4407 = vdwg.mxu0
    %4408 = vmatpush.bf16.msra.mxu0 %v4032
    %4409 = vmatpush.bf16.msra.mxu0 %v4028
    %4410 = vmatpush.bf16.msra.mxu0 %v4024
    %4411 = vmatpush.bf16.msra.mxu0 %v4020
    %4412 = vmatpush.bf16.msra.mxu0 %v4016
    %4413 = vmatpush.bf16.msra.mxu0 %v4012
    %4414 = vmatpush.bf16.msra.mxu0 %v4008
    %4415 = vmatpush.bf16.msra.mxu0 %v4004
    %4416 = vmatmul.bf16.gmra.mxu0 %v2776
    %v4417 = vpop.f32.mrf.mxu0
    %v4418 = vadd.f32 %v4404, %v4417
    %v4419 = vpop.f32.mrf.mxu0
    %v4420 = vadd.f32 %v4406, %v4419
    %4421 = vdwg.mxu0
    %4422 = vmatpush.bf16.msra.mxu0 %v4064
    %4423 = vmatpush.bf16.msra.mxu0 %v4060
    %4424 = vmatpush.bf16.msra.mxu0 %v4056
    %4425 = vmatpush.bf16.msra.mxu0 %v4052
    %4426 = vmatpush.bf16.msra.mxu0 %v4048
    %4427 = vmatpush.bf16.msra.mxu0 %v4044
    %4428 = vmatpush.bf16.msra.mxu0 %v4040
    %4429 = vmatpush.bf16.msra.mxu0 %v4036
    %4430 = vmatmul.bf16.gmra.mxu0 %v2777
    %v4431 = vpop.f32.mrf.mxu0
    %v4432 = vadd.f32 %v4418, %v4431
    %v4433 = vpop.f32.mrf.mxu0
    %v4434 = vadd.f32 %v4420, %v4433
    %4435 = vdwg.mxu0
    %4436 = vmatpush.bf16.msra.mxu0 %v3841
    %4437 = vmatpush.bf16.msra.mxu0 %v3837
    %4438 = vmatpush.bf16.msra.mxu0 %v3833
    %4439 = vmatpush.bf16.msra.mxu0 %v3829
    %4440 = vmatpush.bf16.msra.mxu0 %v3825
    %4441 = vmatpush.bf16.msra.mxu0 %v3821
    %4442 = vmatpush.bf16.msra.mxu0 %v3817
    %4443 = vmatpush.bf16.msra.mxu0 %v3813
    %4444 = vmatmul.bf16.gmra.mxu0 %v2770
    %v4445 = vpop.f32.mrf.mxu0
    %v4446 = vadd.f32 %v3037, %v4445
    %v4447 = vpop.f32.mrf.mxu0
    %v4448 = vadd.f32 %v3037, %v4447
    %4449 = vdwg.mxu0
    %4450 = vmatpush.bf16.msra.mxu0 %v3873
    %4451 = vmatpush.bf16.msra.mxu0 %v3869
    %4452 = vmatpush.bf16.msra.mxu0 %v3865
    %4453 = vmatpush.bf16.msra.mxu0 %v3861
    %4454 = vmatpush.bf16.msra.mxu0 %v3857
    %4455 = vmatpush.bf16.msra.mxu0 %v3853
    %4456 = vmatpush.bf16.msra.mxu0 %v3849
    %4457 = vmatpush.bf16.msra.mxu0 %v3845
    %4458 = vmatmul.bf16.gmra.mxu0 %v2771
    %v4459 = vpop.f32.mrf.mxu0
    %v4460 = vadd.f32 %v4446, %v4459
    %v4461 = vpop.f32.mrf.mxu0
    %v4462 = vadd.f32 %v4448, %v4461
    %4463 = vdwg.mxu0
    %4464 = vmatpush.bf16.msra.mxu0 %v3905
    %4465 = vmatpush.bf16.msra.mxu0 %v3901
    %4466 = vmatpush.bf16.msra.mxu0 %v3897
    %4467 = vmatpush.bf16.msra.mxu0 %v3893
    %4468 = vmatpush.bf16.msra.mxu0 %v3889
    %4469 = vmatpush.bf16.msra.mxu0 %v3885
    %4470 = vmatpush.bf16.msra.mxu0 %v3881
    %4471 = vmatpush.bf16.msra.mxu0 %v3877
    %4472 = vmatmul.bf16.gmra.mxu0 %v2772
    %v4473 = vpop.f32.mrf.mxu0
    %v4474 = vadd.f32 %v4460, %v4473
    %v4475 = vpop.f32.mrf.mxu0
    %v4476 = vadd.f32 %v4462, %v4475
    %4477 = vdwg.mxu0
    %4478 = vmatpush.bf16.msra.mxu0 %v3937
    %4479 = vmatpush.bf16.msra.mxu0 %v3933
    %4480 = vmatpush.bf16.msra.mxu0 %v3929
    %4481 = vmatpush.bf16.msra.mxu0 %v3925
    %4482 = vmatpush.bf16.msra.mxu0 %v3921
    %4483 = vmatpush.bf16.msra.mxu0 %v3917
    %4484 = vmatpush.bf16.msra.mxu0 %v3913
    %4485 = vmatpush.bf16.msra.mxu0 %v3909
    %4486 = vmatmul.bf16.gmra.mxu0 %v2773
    %v4487 = vpop.f32.mrf.mxu0
    %v4488 = vadd.f32 %v4474, %v4487
    %v4489 = vpop.f32.mrf.mxu0
    %v4490 = vadd.f32 %v4476, %v4489
    %4491 = vdwg.mxu0
    %4492 = vmatpush.bf16.msra.mxu0 %v3969
    %4493 = vmatpush.bf16.msra.mxu0 %v3965
    %4494 = vmatpush.bf16.msra.mxu0 %v3961
    %4495 = vmatpush.bf16.msra.mxu0 %v3957
    %4496 = vmatpush.bf16.msra.mxu0 %v3953
    %4497 = vmatpush.bf16.msra.mxu0 %v3949
    %4498 = vmatpush.bf16.msra.mxu0 %v3945
    %4499 = vmatpush.bf16.msra.mxu0 %v3941
    %4500 = vmatmul.bf16.gmra.mxu0 %v2774
    %v4501 = vpop.f32.mrf.mxu0
    %v4502 = vadd.f32 %v4488, %v4501
    %v4503 = vpop.f32.mrf.mxu0
    %v4504 = vadd.f32 %v4490, %v4503
    %4505 = vdwg.mxu0
    %4506 = vmatpush.bf16.msra.mxu0 %v4001
    %4507 = vmatpush.bf16.msra.mxu0 %v3997
    %4508 = vmatpush.bf16.msra.mxu0 %v3993
    %4509 = vmatpush.bf16.msra.mxu0 %v3989
    %4510 = vmatpush.bf16.msra.mxu0 %v3985
    %4511 = vmatpush.bf16.msra.mxu0 %v3981
    %4512 = vmatpush.bf16.msra.mxu0 %v3977
    %4513 = vmatpush.bf16.msra.mxu0 %v3973
    %4514 = vmatmul.bf16.gmra.mxu0 %v2775
    %v4515 = vpop.f32.mrf.mxu0
    %v4516 = vadd.f32 %v4502, %v4515
    %v4517 = vpop.f32.mrf.mxu0
    %v4518 = vadd.f32 %v4504, %v4517
    %4519 = vdwg.mxu0
    %4520 = vmatpush.bf16.msra.mxu0 %v4033
    %4521 = vmatpush.bf16.msra.mxu0 %v4029
    %4522 = vmatpush.bf16.msra.mxu0 %v4025
    %4523 = vmatpush.bf16.msra.mxu0 %v4021
    %4524 = vmatpush.bf16.msra.mxu0 %v4017
    %4525 = vmatpush.bf16.msra.mxu0 %v4013
    %4526 = vmatpush.bf16.msra.mxu0 %v4009
    %4527 = vmatpush.bf16.msra.mxu0 %v4005
    %4528 = vmatmul.bf16.gmra.mxu0 %v2776
    %v4529 = vpop.f32.mrf.mxu0
    %v4530 = vadd.f32 %v4516, %v4529
    %v4531 = vpop.f32.mrf.mxu0
    %v4532 = vadd.f32 %v4518, %v4531
    %4533 = vdwg.mxu0
    %4534 = vmatpush.bf16.msra.mxu0 %v4065
    %4535 = vmatpush.bf16.msra.mxu0 %v4061
    %4536 = vmatpush.bf16.msra.mxu0 %v4057
    %4537 = vmatpush.bf16.msra.mxu0 %v4053
    %4538 = vmatpush.bf16.msra.mxu0 %v4049
    %4539 = vmatpush.bf16.msra.mxu0 %v4045
    %4540 = vmatpush.bf16.msra.mxu0 %v4041
    %4541 = vmatpush.bf16.msra.mxu0 %v4037
    %4542 = vmatmul.bf16.gmra.mxu0 %v2777
    %v4543 = vpop.f32.mrf.mxu0
    %v4544 = vadd.f32 %v4530, %v4543
    %v4545 = vpop.f32.mrf.mxu0
    %v4546 = vadd.f32 %v4532, %v4545
    %4547 = vdwg.mxu0
    %4548 = vmatpush.bf16.msra.mxu0 %v3842
    %4549 = vmatpush.bf16.msra.mxu0 %v3838
    %4550 = vmatpush.bf16.msra.mxu0 %v3834
    %4551 = vmatpush.bf16.msra.mxu0 %v3830
    %4552 = vmatpush.bf16.msra.mxu0 %v3826
    %4553 = vmatpush.bf16.msra.mxu0 %v3822
    %4554 = vmatpush.bf16.msra.mxu0 %v3818
    %4555 = vmatpush.bf16.msra.mxu0 %v3814
    %4556 = vmatmul.bf16.gmra.mxu0 %v2770
    %v4557 = vpop.f32.mrf.mxu0
    %v4558 = vadd.f32 %v3038, %v4557
    %v4559 = vpop.f32.mrf.mxu0
    %v4560 = vadd.f32 %v3038, %v4559
    %4561 = vdwg.mxu0
    %4562 = vmatpush.bf16.msra.mxu0 %v3874
    %4563 = vmatpush.bf16.msra.mxu0 %v3870
    %4564 = vmatpush.bf16.msra.mxu0 %v3866
    %4565 = vmatpush.bf16.msra.mxu0 %v3862
    %4566 = vmatpush.bf16.msra.mxu0 %v3858
    %4567 = vmatpush.bf16.msra.mxu0 %v3854
    %4568 = vmatpush.bf16.msra.mxu0 %v3850
    %4569 = vmatpush.bf16.msra.mxu0 %v3846
    %4570 = vmatmul.bf16.gmra.mxu0 %v2771
    %v4571 = vpop.f32.mrf.mxu0
    %v4572 = vadd.f32 %v4558, %v4571
    %v4573 = vpop.f32.mrf.mxu0
    %v4574 = vadd.f32 %v4560, %v4573
    %4575 = vdwg.mxu0
    %4576 = vmatpush.bf16.msra.mxu0 %v3906
    %4577 = vmatpush.bf16.msra.mxu0 %v3902
    %4578 = vmatpush.bf16.msra.mxu0 %v3898
    %4579 = vmatpush.bf16.msra.mxu0 %v3894
    %4580 = vmatpush.bf16.msra.mxu0 %v3890
    %4581 = vmatpush.bf16.msra.mxu0 %v3886
    %4582 = vmatpush.bf16.msra.mxu0 %v3882
    %4583 = vmatpush.bf16.msra.mxu0 %v3878
    %4584 = vmatmul.bf16.gmra.mxu0 %v2772
    %v4585 = vpop.f32.mrf.mxu0
    %v4586 = vadd.f32 %v4572, %v4585
    %v4587 = vpop.f32.mrf.mxu0
    %v4588 = vadd.f32 %v4574, %v4587
    %4589 = vdwg.mxu0
    %4590 = vmatpush.bf16.msra.mxu0 %v3938
    %4591 = vmatpush.bf16.msra.mxu0 %v3934
    %4592 = vmatpush.bf16.msra.mxu0 %v3930
    %4593 = vmatpush.bf16.msra.mxu0 %v3926
    %4594 = vmatpush.bf16.msra.mxu0 %v3922
    %4595 = vmatpush.bf16.msra.mxu0 %v3918
    %4596 = vmatpush.bf16.msra.mxu0 %v3914
    %4597 = vmatpush.bf16.msra.mxu0 %v3910
    %4598 = vmatmul.bf16.gmra.mxu0 %v2773
    %v4599 = vpop.f32.mrf.mxu0
    %v4600 = vadd.f32 %v4586, %v4599
    %v4601 = vpop.f32.mrf.mxu0
    %v4602 = vadd.f32 %v4588, %v4601
    %4603 = vdwg.mxu0
    %4604 = vmatpush.bf16.msra.mxu0 %v3970
    %4605 = vmatpush.bf16.msra.mxu0 %v3966
    %4606 = vmatpush.bf16.msra.mxu0 %v3962
    %4607 = vmatpush.bf16.msra.mxu0 %v3958
    %4608 = vmatpush.bf16.msra.mxu0 %v3954
    %4609 = vmatpush.bf16.msra.mxu0 %v3950
    %4610 = vmatpush.bf16.msra.mxu0 %v3946
    %4611 = vmatpush.bf16.msra.mxu0 %v3942
    %4612 = vmatmul.bf16.gmra.mxu0 %v2774
    %v4613 = vpop.f32.mrf.mxu0
    %v4614 = vadd.f32 %v4600, %v4613
    %v4615 = vpop.f32.mrf.mxu0
    %v4616 = vadd.f32 %v4602, %v4615
    %4617 = vdwg.mxu0
    %4618 = vmatpush.bf16.msra.mxu0 %v4002
    %4619 = vmatpush.bf16.msra.mxu0 %v3998
    %4620 = vmatpush.bf16.msra.mxu0 %v3994
    %4621 = vmatpush.bf16.msra.mxu0 %v3990
    %4622 = vmatpush.bf16.msra.mxu0 %v3986
    %4623 = vmatpush.bf16.msra.mxu0 %v3982
    %4624 = vmatpush.bf16.msra.mxu0 %v3978
    %4625 = vmatpush.bf16.msra.mxu0 %v3974
    %4626 = vmatmul.bf16.gmra.mxu0 %v2775
    %v4627 = vpop.f32.mrf.mxu0
    %v4628 = vadd.f32 %v4614, %v4627
    %v4629 = vpop.f32.mrf.mxu0
    %v4630 = vadd.f32 %v4616, %v4629
    %4631 = vdwg.mxu0
    %4632 = vmatpush.bf16.msra.mxu0 %v4034
    %4633 = vmatpush.bf16.msra.mxu0 %v4030
    %4634 = vmatpush.bf16.msra.mxu0 %v4026
    %4635 = vmatpush.bf16.msra.mxu0 %v4022
    %4636 = vmatpush.bf16.msra.mxu0 %v4018
    %4637 = vmatpush.bf16.msra.mxu0 %v4014
    %4638 = vmatpush.bf16.msra.mxu0 %v4010
    %4639 = vmatpush.bf16.msra.mxu0 %v4006
    %4640 = vmatmul.bf16.gmra.mxu0 %v2776
    %v4641 = vpop.f32.mrf.mxu0
    %v4642 = vadd.f32 %v4628, %v4641
    %v4643 = vpop.f32.mrf.mxu0
    %v4644 = vadd.f32 %v4630, %v4643
    %4645 = vdwg.mxu0
    %4646 = vmatpush.bf16.msra.mxu0 %v4066
    %4647 = vmatpush.bf16.msra.mxu0 %v4062
    %4648 = vmatpush.bf16.msra.mxu0 %v4058
    %4649 = vmatpush.bf16.msra.mxu0 %v4054
    %4650 = vmatpush.bf16.msra.mxu0 %v4050
    %4651 = vmatpush.bf16.msra.mxu0 %v4046
    %4652 = vmatpush.bf16.msra.mxu0 %v4042
    %4653 = vmatpush.bf16.msra.mxu0 %v4038
    %4654 = vmatmul.bf16.gmra.mxu0 %v2777
    %v4655 = vpop.f32.mrf.mxu0
    %v4656 = vadd.f32 %v4642, %v4655
    %v4657 = vpop.f32.mrf.mxu0
    %v4658 = vadd.f32 %v4644, %v4657
    %4659 = vdwg.mxu0
    %4660 = vmatpush.bf16.msra.mxu0 %v3843
    %4661 = vmatpush.bf16.msra.mxu0 %v3839
    %4662 = vmatpush.bf16.msra.mxu0 %v3835
    %4663 = vmatpush.bf16.msra.mxu0 %v3831
    %4664 = vmatpush.bf16.msra.mxu0 %v3827
    %4665 = vmatpush.bf16.msra.mxu0 %v3823
    %4666 = vmatpush.bf16.msra.mxu0 %v3819
    %4667 = vmatpush.bf16.msra.mxu0 %v3815
    %4668 = vmatmul.bf16.gmra.mxu0 %v2770
    %v4669 = vpop.f32.mrf.mxu0
    %v4670 = vadd.f32 %v3039, %v4669
    %v4671 = vpop.f32.mrf.mxu0
    %v4672 = vadd.f32 %v3039, %v4671
    %4673 = vdwg.mxu0
    %4674 = vmatpush.bf16.msra.mxu0 %v3875
    %4675 = vmatpush.bf16.msra.mxu0 %v3871
    %4676 = vmatpush.bf16.msra.mxu0 %v3867
    %4677 = vmatpush.bf16.msra.mxu0 %v3863
    %4678 = vmatpush.bf16.msra.mxu0 %v3859
    %4679 = vmatpush.bf16.msra.mxu0 %v3855
    %4680 = vmatpush.bf16.msra.mxu0 %v3851
    %4681 = vmatpush.bf16.msra.mxu0 %v3847
    %4682 = vmatmul.bf16.gmra.mxu0 %v2771
    %v4683 = vpop.f32.mrf.mxu0
    %v4684 = vadd.f32 %v4670, %v4683
    %v4685 = vpop.f32.mrf.mxu0
    %v4686 = vadd.f32 %v4672, %v4685
    %4687 = vdwg.mxu0
    %4688 = vmatpush.bf16.msra.mxu0 %v3907
    %4689 = vmatpush.bf16.msra.mxu0 %v3903
    %4690 = vmatpush.bf16.msra.mxu0 %v3899
    %4691 = vmatpush.bf16.msra.mxu0 %v3895
    %4692 = vmatpush.bf16.msra.mxu0 %v3891
    %4693 = vmatpush.bf16.msra.mxu0 %v3887
    %4694 = vmatpush.bf16.msra.mxu0 %v3883
    %4695 = vmatpush.bf16.msra.mxu0 %v3879
    %4696 = vmatmul.bf16.gmra.mxu0 %v2772
    %v4697 = vpop.f32.mrf.mxu0
    %v4698 = vadd.f32 %v4684, %v4697
    %v4699 = vpop.f32.mrf.mxu0
    %v4700 = vadd.f32 %v4686, %v4699
    %4701 = vdwg.mxu0
    %4702 = vmatpush.bf16.msra.mxu0 %v3939
    %4703 = vmatpush.bf16.msra.mxu0 %v3935
    %4704 = vmatpush.bf16.msra.mxu0 %v3931
    %4705 = vmatpush.bf16.msra.mxu0 %v3927
    %4706 = vmatpush.bf16.msra.mxu0 %v3923
    %4707 = vmatpush.bf16.msra.mxu0 %v3919
    %4708 = vmatpush.bf16.msra.mxu0 %v3915
    %4709 = vmatpush.bf16.msra.mxu0 %v3911
    %4710 = vmatmul.bf16.gmra.mxu0 %v2773
    %v4711 = vpop.f32.mrf.mxu0
    %v4712 = vadd.f32 %v4698, %v4711
    %v4713 = vpop.f32.mrf.mxu0
    %v4714 = vadd.f32 %v4700, %v4713
    %4715 = vdwg.mxu0
    %4716 = vmatpush.bf16.msra.mxu0 %v3971
    %4717 = vmatpush.bf16.msra.mxu0 %v3967
    %4718 = vmatpush.bf16.msra.mxu0 %v3963
    %4719 = vmatpush.bf16.msra.mxu0 %v3959
    %4720 = vmatpush.bf16.msra.mxu0 %v3955
    %4721 = vmatpush.bf16.msra.mxu0 %v3951
    %4722 = vmatpush.bf16.msra.mxu0 %v3947
    %4723 = vmatpush.bf16.msra.mxu0 %v3943
    %4724 = vmatmul.bf16.gmra.mxu0 %v2774
    %v4725 = vpop.f32.mrf.mxu0
    %v4726 = vadd.f32 %v4712, %v4725
    %v4727 = vpop.f32.mrf.mxu0
    %v4728 = vadd.f32 %v4714, %v4727
    %4729 = vdwg.mxu0
    %4730 = vmatpush.bf16.msra.mxu0 %v4003
    %4731 = vmatpush.bf16.msra.mxu0 %v3999
    %4732 = vmatpush.bf16.msra.mxu0 %v3995
    %4733 = vmatpush.bf16.msra.mxu0 %v3991
    %4734 = vmatpush.bf16.msra.mxu0 %v3987
    %4735 = vmatpush.bf16.msra.mxu0 %v3983
    %4736 = vmatpush.bf16.msra.mxu0 %v3979
    %4737 = vmatpush.bf16.msra.mxu0 %v3975
    %4738 = vmatmul.bf16.gmra.mxu0 %v2775
    %v4739 = vpop.f32.mrf.mxu0
    %v4740 = vadd.f32 %v4726, %v4739
    %v4741 = vpop.f32.mrf.mxu0
    %v4742 = vadd.f32 %v4728, %v4741
    %4743 = vdwg.mxu0
    %4744 = vmatpush.bf16.msra.mxu0 %v4035
    %4745 = vmatpush.bf16.msra.mxu0 %v4031
    %4746 = vmatpush.bf16.msra.mxu0 %v4027
    %4747 = vmatpush.bf16.msra.mxu0 %v4023
    %4748 = vmatpush.bf16.msra.mxu0 %v4019
    %4749 = vmatpush.bf16.msra.mxu0 %v4015
    %4750 = vmatpush.bf16.msra.mxu0 %v4011
    %4751 = vmatpush.bf16.msra.mxu0 %v4007
    %4752 = vmatmul.bf16.gmra.mxu0 %v2776
    %v4753 = vpop.f32.mrf.mxu0
    %v4754 = vadd.f32 %v4740, %v4753
    %v4755 = vpop.f32.mrf.mxu0
    %v4756 = vadd.f32 %v4742, %v4755
    %4757 = vdwg.mxu0
    %4758 = vmatpush.bf16.msra.mxu0 %v4067
    %4759 = vmatpush.bf16.msra.mxu0 %v4063
    %4760 = vmatpush.bf16.msra.mxu0 %v4059
    %4761 = vmatpush.bf16.msra.mxu0 %v4055
    %4762 = vmatpush.bf16.msra.mxu0 %v4051
    %4763 = vmatpush.bf16.msra.mxu0 %v4047
    %4764 = vmatpush.bf16.msra.mxu0 %v4043
    %4765 = vmatpush.bf16.msra.mxu0 %v4039
    %4766 = vmatmul.bf16.gmra.mxu0 %v2777
    %v4767 = vpop.f32.mrf.mxu0
    %v4768 = vadd.f32 %v4754, %v4767
    %v4769 = vpop.f32.mrf.mxu0
    %v4770 = vadd.f32 %v4756, %v4769
    %4771 = vdwg.mxu0
    %v4772 = vpack.c.bf16 %v4434, %v4432
    %v4773 = vpack.c.bf16 %v4546, %v4544
    %v4774 = vpack.c.bf16 %v4658, %v4656
    %v4775 = vpack.c.bf16 %v4770, %v4768
    %v4776 = vunpack.c.l.bf16 %v4772
    %v4777 = vunpack.c.l.bf16 %v4773
    %v4778 = vunpack.c.l.bf16 %v4774
    %v4779 = vunpack.c.l.bf16 %v4775
    %v4780 = vunpack.c.h.bf16 %v4772
    %v4781 = vunpack.c.h.bf16 %v4773
    %v4782 = vunpack.c.h.bf16 %v4774
    %v4783 = vunpack.c.h.bf16 %v4775
    %v4784 = vtanh.pop %v4776
    %v4785 = vtanh.pop %v4777
    %v4786 = vtanh.pop %v4778
    %v4787 = vtanh.pop %v4779
    %v4788 = vtanh.pop %v4780
    %v4789 = vtanh.pop %v4781
    %v4790 = vtanh.pop %v4782
    %v4791 = vtanh.pop %v4783
    %v4792 = vpack.c.bf16 %v4788, %v4784
    %v4793 = vpack.c.bf16 %v4789, %v4785
    %v4794 = vpack.c.bf16 %v4790, %v4786
    %v4795 = vpack.c.bf16 %v4791, %v4787
    %v4796 = vld [vmem:[#allocation11] sm:$0xff]
    %v4797 = vld [vmem:[#allocation11 + $0x8] sm:$0xff]
    %v4798 = vld [vmem:[#allocation11 + $0x10] sm:$0xff]
    %v4799 = vld [vmem:[#allocation11 + $0x18] sm:$0xff]
    %v4800 = vld [vmem:[#allocation11 + $0x20] sm:$0xff]
    %v4801 = vld [vmem:[#allocation11 + $0x28] sm:$0xff]
    %v4802 = vld [vmem:[#allocation11 + $0x30] sm:$0xff]
    %v4803 = vld [vmem:[#allocation11 + $0x38] sm:$0xff]
    %v4804 = vld [vmem:[#allocation11 + $0x40] sm:$0xff]
    %v4805 = vld [vmem:[#allocation11 + $0x48] sm:$0xff]
    %v4806 = vld [vmem:[#allocation11 + $0x50] sm:$0xff]
    %v4807 = vld [vmem:[#allocation11 + $0x58] sm:$0xff]
    %v4808 = vld [vmem:[#allocation11 + $0x60] sm:$0xff]
    %v4809 = vld [vmem:[#allocation11 + $0x68] sm:$0xff]
    %v4810 = vld [vmem:[#allocation11 + $0x70] sm:$0xff]
    %v4811 = vld [vmem:[#allocation11 + $0x78] sm:$0xff]
    %v4812 = vld [vmem:[#allocation11 + $0x80] sm:$0xff]
    %v4813 = vld [vmem:[#allocation11 + $0x88] sm:$0xff]
    %v4814 = vld [vmem:[#allocation11 + $0x90] sm:$0xff]
    %v4815 = vld [vmem:[#allocation11 + $0x98] sm:$0xff]
    %v4816 = vld [vmem:[#allocation11 + $0xa0] sm:$0xff]
    %v4817 = vld [vmem:[#allocation11 + $0xa8] sm:$0xff]
    %v4818 = vld [vmem:[#allocation11 + $0xb0] sm:$0xff]
    %v4819 = vld [vmem:[#allocation11 + $0xb8] sm:$0xff]
    %v4820 = vld [vmem:[#allocation11 + $0xc0] sm:$0xff]
    %v4821 = vld [vmem:[#allocation11 + $0xc8] sm:$0xff]
    %v4822 = vld [vmem:[#allocation11 + $0xd0] sm:$0xff]
    %v4823 = vld [vmem:[#allocation11 + $0xd8] sm:$0xff]
    %v4824 = vld [vmem:[#allocation11 + $0xe0] sm:$0xff]
    %v4825 = vld [vmem:[#allocation11 + $0xe8] sm:$0xff]
    %v4826 = vld [vmem:[#allocation11 + $0xf0] sm:$0xff]
    %v4827 = vld [vmem:[#allocation11 + $0xf8] sm:$0xff]
    %v4828 = vld [vmem:[#allocation11 + $0x100] sm:$0xff]
    %v4829 = vld [vmem:[#allocation11 + $0x108] sm:$0xff]
    %v4830 = vld [vmem:[#allocation11 + $0x110] sm:$0xff]
    %v4831 = vld [vmem:[#allocation11 + $0x118] sm:$0xff]
    %v4832 = vld [vmem:[#allocation11 + $0x120] sm:$0xff]
    %v4833 = vld [vmem:[#allocation11 + $0x128] sm:$0xff]
    %v4834 = vld [vmem:[#allocation11 + $0x130] sm:$0xff]
    %v4835 = vld [vmem:[#allocation11 + $0x138] sm:$0xff]
    %v4836 = vld [vmem:[#allocation11 + $0x140] sm:$0xff]
    %v4837 = vld [vmem:[#allocation11 + $0x148] sm:$0xff]
    %v4838 = vld [vmem:[#allocation11 + $0x150] sm:$0xff]
    %v4839 = vld [vmem:[#allocation11 + $0x158] sm:$0xff]
    %v4840 = vld [vmem:[#allocation11 + $0x160] sm:$0xff]
    %v4841 = vld [vmem:[#allocation11 + $0x168] sm:$0xff]
    %v4842 = vld [vmem:[#allocation11 + $0x170] sm:$0xff]
    %v4843 = vld [vmem:[#allocation11 + $0x178] sm:$0xff]
    %v4844 = vld [vmem:[#allocation11 + $0x180] sm:$0xff]
    %v4845 = vld [vmem:[#allocation11 + $0x188] sm:$0xff]
    %v4846 = vld [vmem:[#allocation11 + $0x190] sm:$0xff]
    %v4847 = vld [vmem:[#allocation11 + $0x198] sm:$0xff]
    %v4848 = vld [vmem:[#allocation11 + $0x1a0] sm:$0xff]
    %v4849 = vld [vmem:[#allocation11 + $0x1a8] sm:$0xff]
    %v4850 = vld [vmem:[#allocation11 + $0x1b0] sm:$0xff]
    %v4851 = vld [vmem:[#allocation11 + $0x1b8] sm:$0xff]
    %v4852 = vld [vmem:[#allocation11 + $0x1c0] sm:$0xff]
    %v4853 = vld [vmem:[#allocation11 + $0x1c8] sm:$0xff]
    %v4854 = vld [vmem:[#allocation11 + $0x1d0] sm:$0xff]
    %v4855 = vld [vmem:[#allocation11 + $0x1d8] sm:$0xff]
    %v4856 = vld [vmem:[#allocation11 + $0x1e0] sm:$0xff]
    %v4857 = vld [vmem:[#allocation11 + $0x1e8] sm:$0xff]
    %v4858 = vld [vmem:[#allocation11 + $0x1f0] sm:$0xff]
    %v4859 = vld [vmem:[#allocation11 + $0x1f8] sm:$0xff]
    %v4860 = vld [vmem:[#allocation13] sm:$0x3]
    %v4862 = vperm.slane %v4860, 0
    %v4863 = vperm.slane %v4860, 1
    %v4930 = vunpack.c.l.b16 %v4796
    %v4931 = vunpack.c.h.b16 %v4796
    %v4932 = vunpack.c.l.b16 %v4797
    %v4933 = vunpack.c.h.b16 %v4797
    %v4934 = vunpack.c.l.b16 %v4798
    %v4935 = vunpack.c.h.b16 %v4798
    %v4936 = vunpack.c.l.b16 %v4799
    %v4937 = vunpack.c.h.b16 %v4799
    %v4938 = vunpack.c.l.b16 %v4800
    %v4939 = vunpack.c.h.b16 %v4800
    %v4940 = vunpack.c.l.b16 %v4801
    %v4941 = vunpack.c.h.b16 %v4801
    %v4942 = vunpack.c.l.b16 %v4802
    %v4943 = vunpack.c.h.b16 %v4802
    %v4944 = vunpack.c.l.b16 %v4803
    %v4945 = vunpack.c.h.b16 %v4803
    %v4946 = vunpack.c.l.b16 %v4804
    %v4947 = vunpack.c.h.b16 %v4804
    %v4948 = vunpack.c.l.b16 %v4805
    %v4949 = vunpack.c.h.b16 %v4805
    %v4950 = vunpack.c.l.b16 %v4806
    %v4951 = vunpack.c.h.b16 %v4806
    %v4952 = vunpack.c.l.b16 %v4807
    %v4953 = vunpack.c.h.b16 %v4807
    %v4954 = vunpack.c.l.b16 %v4808
    %v4955 = vunpack.c.h.b16 %v4808
    %v4956 = vunpack.c.l.b16 %v4809
    %v4957 = vunpack.c.h.b16 %v4809
    %v4958 = vunpack.c.l.b16 %v4810
    %v4959 = vunpack.c.h.b16 %v4810
    %v4960 = vunpack.c.l.b16 %v4811
    %v4961 = vunpack.c.h.b16 %v4811
    %v4962 = vunpack.c.l.b16 %v4812
    %v4963 = vunpack.c.h.b16 %v4812
    %v4964 = vunpack.c.l.b16 %v4813
    %v4965 = vunpack.c.h.b16 %v4813
    %v4966 = vunpack.c.l.b16 %v4814
    %v4967 = vunpack.c.h.b16 %v4814
    %v4968 = vunpack.c.l.b16 %v4815
    %v4969 = vunpack.c.h.b16 %v4815
    %v4970 = vunpack.c.l.b16 %v4816
    %v4971 = vunpack.c.h.b16 %v4816
    %v4972 = vunpack.c.l.b16 %v4817
    %v4973 = vunpack.c.h.b16 %v4817
    %v4974 = vunpack.c.l.b16 %v4818
    %v4975 = vunpack.c.h.b16 %v4818
    %v4976 = vunpack.c.l.b16 %v4819
    %v4977 = vunpack.c.h.b16 %v4819
    %v4978 = vunpack.c.l.b16 %v4820
    %v4979 = vunpack.c.h.b16 %v4820
    %v4980 = vunpack.c.l.b16 %v4821
    %v4981 = vunpack.c.h.b16 %v4821
    %v4982 = vunpack.c.l.b16 %v4822
    %v4983 = vunpack.c.h.b16 %v4822
    %v4984 = vunpack.c.l.b16 %v4823
    %v4985 = vunpack.c.h.b16 %v4823
    %v4986 = vunpack.c.l.b16 %v4824
    %v4987 = vunpack.c.h.b16 %v4824
    %v4988 = vunpack.c.l.b16 %v4825
    %v4989 = vunpack.c.h.b16 %v4825
    %v4990 = vunpack.c.l.b16 %v4826
    %v4991 = vunpack.c.h.b16 %v4826
    %v4992 = vunpack.c.l.b16 %v4827
    %v4993 = vunpack.c.h.b16 %v4827
    %v4994 = vunpack.c.l.b16 %v4828
    %v4995 = vunpack.c.h.b16 %v4828
    %v4996 = vunpack.c.l.b16 %v4829
    %v4997 = vunpack.c.h.b16 %v4829
    %v4998 = vunpack.c.l.b16 %v4830
    %v4999 = vunpack.c.h.b16 %v4830
    %v5000 = vunpack.c.l.b16 %v4831
    %v5001 = vunpack.c.h.b16 %v4831
    %v5002 = vunpack.c.l.b16 %v4832
    %v5003 = vunpack.c.h.b16 %v4832
    %v5004 = vunpack.c.l.b16 %v4833
    %v5005 = vunpack.c.h.b16 %v4833
    %v5006 = vunpack.c.l.b16 %v4834
    %v5007 = vunpack.c.h.b16 %v4834
    %v5008 = vunpack.c.l.b16 %v4835
    %v5009 = vunpack.c.h.b16 %v4835
    %v5010 = vunpack.c.l.b16 %v4836
    %v5011 = vunpack.c.h.b16 %v4836
    %v5012 = vunpack.c.l.b16 %v4837
    %v5013 = vunpack.c.h.b16 %v4837
    %v5014 = vunpack.c.l.b16 %v4838
    %v5015 = vunpack.c.h.b16 %v4838
    %v5016 = vunpack.c.l.b16 %v4839
    %v5017 = vunpack.c.h.b16 %v4839
    %v5018 = vunpack.c.l.b16 %v4840
    %v5019 = vunpack.c.h.b16 %v4840
    %v5020 = vunpack.c.l.b16 %v4841
    %v5021 = vunpack.c.h.b16 %v4841
    %v5022 = vunpack.c.l.b16 %v4842
    %v5023 = vunpack.c.h.b16 %v4842
    %v5024 = vunpack.c.l.b16 %v4843
    %v5025 = vunpack.c.h.b16 %v4843
    %v5026 = vunpack.c.l.b16 %v4844
    %v5027 = vunpack.c.h.b16 %v4844
    %v5028 = vunpack.c.l.b16 %v4845
    %v5029 = vunpack.c.h.b16 %v4845
    %v5030 = vunpack.c.l.b16 %v4846
    %v5031 = vunpack.c.h.b16 %v4846
    %v5032 = vunpack.c.l.b16 %v4847
    %v5033 = vunpack.c.h.b16 %v4847
    %v5034 = vunpack.c.l.b16 %v4848
    %v5035 = vunpack.c.h.b16 %v4848
    %v5036 = vunpack.c.l.b16 %v4849
    %v5037 = vunpack.c.h.b16 %v4849
    %v5038 = vunpack.c.l.b16 %v4850
    %v5039 = vunpack.c.h.b16 %v4850
    %v5040 = vunpack.c.l.b16 %v4851
    %v5041 = vunpack.c.h.b16 %v4851
    %v5042 = vunpack.c.l.b16 %v4852
    %v5043 = vunpack.c.h.b16 %v4852
    %v5044 = vunpack.c.l.b16 %v4853
    %v5045 = vunpack.c.h.b16 %v4853
    %v5046 = vunpack.c.l.b16 %v4854
    %v5047 = vunpack.c.h.b16 %v4854
    %v5048 = vunpack.c.l.b16 %v4855
    %v5049 = vunpack.c.h.b16 %v4855
    %v5050 = vunpack.c.l.b16 %v4856
    %v5051 = vunpack.c.h.b16 %v4856
    %v5052 = vunpack.c.l.b16 %v4857
    %v5053 = vunpack.c.h.b16 %v4857
    %v5054 = vunpack.c.l.b16 %v4858
    %v5055 = vunpack.c.h.b16 %v4858
    %v5056 = vunpack.c.l.b16 %v4859
    %v5057 = vunpack.c.h.b16 %v4859
    %v5058 = vpack.c.b16 %v4932, %v4930
    %v5059 = vpack.c.b16 %v4933, %v4931
    %v5060 = vpack.c.b16 %v4936, %v4934
    %v5061 = vpack.c.b16 %v4937, %v4935
    %v5062 = vpack.c.b16 %v4940, %v4938
    %v5063 = vpack.c.b16 %v4941, %v4939
    %v5064 = vpack.c.b16 %v4944, %v4942
    %v5065 = vpack.c.b16 %v4945, %v4943
    %v5066 = vpack.c.b16 %v4948, %v4946
    %v5067 = vpack.c.b16 %v4949, %v4947
    %v5068 = vpack.c.b16 %v4952, %v4950
    %v5069 = vpack.c.b16 %v4953, %v4951
    %v5070 = vpack.c.b16 %v4956, %v4954
    %v5071 = vpack.c.b16 %v4957, %v4955
    %v5072 = vpack.c.b16 %v4960, %v4958
    %v5073 = vpack.c.b16 %v4961, %v4959
    %v5074 = vpack.c.b16 %v4964, %v4962
    %v5075 = vpack.c.b16 %v4965, %v4963
    %v5076 = vpack.c.b16 %v4968, %v4966
    %v5077 = vpack.c.b16 %v4969, %v4967
    %v5078 = vpack.c.b16 %v4972, %v4970
    %v5079 = vpack.c.b16 %v4973, %v4971
    %v5080 = vpack.c.b16 %v4976, %v4974
    %v5081 = vpack.c.b16 %v4977, %v4975
    %v5082 = vpack.c.b16 %v4980, %v4978
    %v5083 = vpack.c.b16 %v4981, %v4979
    %v5084 = vpack.c.b16 %v4984, %v4982
    %v5085 = vpack.c.b16 %v4985, %v4983
    %v5086 = vpack.c.b16 %v4988, %v4986
    %v5087 = vpack.c.b16 %v4989, %v4987
    %v5088 = vpack.c.b16 %v4992, %v4990
    %v5089 = vpack.c.b16 %v4993, %v4991
    %v5090 = vpack.c.b16 %v4996, %v4994
    %v5091 = vpack.c.b16 %v4997, %v4995
    %v5092 = vpack.c.b16 %v5000, %v4998
    %v5093 = vpack.c.b16 %v5001, %v4999
    %v5094 = vpack.c.b16 %v5004, %v5002
    %v5095 = vpack.c.b16 %v5005, %v5003
    %v5096 = vpack.c.b16 %v5008, %v5006
    %v5097 = vpack.c.b16 %v5009, %v5007
    %v5098 = vpack.c.b16 %v5012, %v5010
    %v5099 = vpack.c.b16 %v5013, %v5011
    %v5100 = vpack.c.b16 %v5016, %v5014
    %v5101 = vpack.c.b16 %v5017, %v5015
    %v5102 = vpack.c.b16 %v5020, %v5018
    %v5103 = vpack.c.b16 %v5021, %v5019
    %v5104 = vpack.c.b16 %v5024, %v5022
    %v5105 = vpack.c.b16 %v5025, %v5023
    %v5106 = vpack.c.b16 %v5028, %v5026
    %v5107 = vpack.c.b16 %v5029, %v5027
    %v5108 = vpack.c.b16 %v5032, %v5030
    %v5109 = vpack.c.b16 %v5033, %v5031
    %v5110 = vpack.c.b16 %v5036, %v5034
    %v5111 = vpack.c.b16 %v5037, %v5035
    %v5112 = vpack.c.b16 %v5040, %v5038
    %v5113 = vpack.c.b16 %v5041, %v5039
    %v5114 = vpack.c.b16 %v5044, %v5042
    %v5115 = vpack.c.b16 %v5045, %v5043
    %v5116 = vpack.c.b16 %v5048, %v5046
    %v5117 = vpack.c.b16 %v5049, %v5047
    %v5118 = vpack.c.b16 %v5052, %v5050
    %v5119 = vpack.c.b16 %v5053, %v5051
    %v5120 = vpack.c.b16 %v5056, %v5054
    %v5121 = vpack.c.b16 %v5057, %v5055
    %5186 = vmatpush.bf16.msra.mxu0 %v5072
    %5187 = vmatpush.bf16.msra.mxu0 %v5070
    %5188 = vmatpush.bf16.msra.mxu0 %v5068
    %5189 = vmatpush.bf16.msra.mxu0 %v5066
    %5190 = vmatpush.bf16.msra.mxu0 %v5064
    %5191 = vmatpush.bf16.msra.mxu0 %v5062
    %5192 = vmatpush.bf16.msra.mxu0 %v5060
    %5193 = vmatpush.bf16.msra.mxu0 %v5058
    %5194 = vmatmul.bf16.gmra.mxu0 %v4792
    %v5195 = vpop.f32.mrf.mxu0
    %v5196 = vadd.f32 %v4862, %v5195
    %v5197 = vpop.f32.mrf.mxu0
    %v5198 = vadd.f32 %v4862, %v5197
    %5199 = vdwg.mxu0
    %5200 = vmatpush.bf16.msra.mxu0 %v5088
    %5201 = vmatpush.bf16.msra.mxu0 %v5086
    %5202 = vmatpush.bf16.msra.mxu0 %v5084
    %5203 = vmatpush.bf16.msra.mxu0 %v5082
    %5204 = vmatpush.bf16.msra.mxu0 %v5080
    %5205 = vmatpush.bf16.msra.mxu0 %v5078
    %5206 = vmatpush.bf16.msra.mxu0 %v5076
    %5207 = vmatpush.bf16.msra.mxu0 %v5074
    %5208 = vmatmul.bf16.gmra.mxu0 %v4793
    %v5209 = vpop.f32.mrf.mxu0
    %v5210 = vadd.f32 %v5196, %v5209
    %v5211 = vpop.f32.mrf.mxu0
    %v5212 = vadd.f32 %v5198, %v5211
    %5213 = vdwg.mxu0
    %5214 = vmatpush.bf16.msra.mxu0 %v5104
    %5215 = vmatpush.bf16.msra.mxu0 %v5102
    %5216 = vmatpush.bf16.msra.mxu0 %v5100
    %5217 = vmatpush.bf16.msra.mxu0 %v5098
    %5218 = vmatpush.bf16.msra.mxu0 %v5096
    %5219 = vmatpush.bf16.msra.mxu0 %v5094
    %5220 = vmatpush.bf16.msra.mxu0 %v5092
    %5221 = vmatpush.bf16.msra.mxu0 %v5090
    %5222 = vmatmul.bf16.gmra.mxu0 %v4794
    %v5223 = vpop.f32.mrf.mxu0
    %v5224 = vadd.f32 %v5210, %v5223
    %v5225 = vpop.f32.mrf.mxu0
    %v5226 = vadd.f32 %v5212, %v5225
    %5227 = vdwg.mxu0
    %5228 = vmatpush.bf16.msra.mxu0 %v5120
    %5229 = vmatpush.bf16.msra.mxu0 %v5118
    %5230 = vmatpush.bf16.msra.mxu0 %v5116
    %5231 = vmatpush.bf16.msra.mxu0 %v5114
    %5232 = vmatpush.bf16.msra.mxu0 %v5112
    %5233 = vmatpush.bf16.msra.mxu0 %v5110
    %5234 = vmatpush.bf16.msra.mxu0 %v5108
    %5235 = vmatpush.bf16.msra.mxu0 %v5106
    %5236 = vmatmul.bf16.gmra.mxu0 %v4795
    %v5237 = vpop.f32.mrf.mxu0
    %v5238 = vadd.f32 %v5224, %v5237
    %v5239 = vpop.f32.mrf.mxu0
    %v5240 = vadd.f32 %v5226, %v5239
    %5241 = vdwg.mxu0
    %5242 = vmatpush.bf16.msra.mxu0 %v5073
    %5243 = vmatpush.bf16.msra.mxu0 %v5071
    %5244 = vmatpush.bf16.msra.mxu0 %v5069
    %5245 = vmatpush.bf16.msra.mxu0 %v5067
    %5246 = vmatpush.bf16.msra.mxu0 %v5065
    %5247 = vmatpush.bf16.msra.mxu0 %v5063
    %5248 = vmatpush.bf16.msra.mxu0 %v5061
    %5249 = vmatpush.bf16.msra.mxu0 %v5059
    %5250 = vmatmul.bf16.gmra.mxu0 %v4792
    %v5251 = vpop.f32.mrf.mxu0
    %v5252 = vadd.f32 %v4863, %v5251
    %v5253 = vpop.f32.mrf.mxu0
    %v5254 = vadd.f32 %v4863, %v5253
    %5255 = vdwg.mxu0
    %5256 = vmatpush.bf16.msra.mxu0 %v5089
    %5257 = vmatpush.bf16.msra.mxu0 %v5087
    %5258 = vmatpush.bf16.msra.mxu0 %v5085
    %5259 = vmatpush.bf16.msra.mxu0 %v5083
    %5260 = vmatpush.bf16.msra.mxu0 %v5081
    %5261 = vmatpush.bf16.msra.mxu0 %v5079
    %5262 = vmatpush.bf16.msra.mxu0 %v5077
    %5263 = vmatpush.bf16.msra.mxu0 %v5075
    %5264 = vmatmul.bf16.gmra.mxu0 %v4793
    %v5265 = vpop.f32.mrf.mxu0
    %v5266 = vadd.f32 %v5252, %v5265
    %v5267 = vpop.f32.mrf.mxu0
    %v5268 = vadd.f32 %v5254, %v5267
    %5269 = vdwg.mxu0
    %5270 = vmatpush.bf16.msra.mxu0 %v5105
    %5271 = vmatpush.bf16.msra.mxu0 %v5103
    %5272 = vmatpush.bf16.msra.mxu0 %v5101
    %5273 = vmatpush.bf16.msra.mxu0 %v5099
    %5274 = vmatpush.bf16.msra.mxu0 %v5097
    %5275 = vmatpush.bf16.msra.mxu0 %v5095
    %5276 = vmatpush.bf16.msra.mxu0 %v5093
    %5277 = vmatpush.bf16.msra.mxu0 %v5091
    %5278 = vmatmul.bf16.gmra.mxu0 %v4794
    %v5279 = vpop.f32.mrf.mxu0
    %v5280 = vadd.f32 %v5266, %v5279
    %v5281 = vpop.f32.mrf.mxu0
    %v5282 = vadd.f32 %v5268, %v5281
    %5283 = vdwg.mxu0
    %5284 = vmatpush.bf16.msra.mxu0 %v5121
    %5285 = vmatpush.bf16.msra.mxu0 %v5119
    %5286 = vmatpush.bf16.msra.mxu0 %v5117
    %5287 = vmatpush.bf16.msra.mxu0 %v5115
    %5288 = vmatpush.bf16.msra.mxu0 %v5113
    %5289 = vmatpush.bf16.msra.mxu0 %v5111
    %5290 = vmatpush.bf16.msra.mxu0 %v5109
    %5291 = vmatpush.bf16.msra.mxu0 %v5107
    %5292 = vmatmul.bf16.gmra.mxu0 %v4795
    %v5293 = vpop.f32.mrf.mxu0
    %v5294 = vadd.f32 %v5280, %v5293
    %v5295 = vpop.f32.mrf.mxu0
    %v5296 = vadd.f32 %v5282, %v5295
    %5297 = vdwg.mxu0
    %v5298 = vpack.c.bf16 %v5240, %v5238
    %v5299 = vpack.c.bf16 %v5296, %v5294
    %v5300 = vunpack.c.l.bf16 %v5298
    %v5301 = vunpack.c.l.bf16 %v5299
    %v5302 = vunpack.c.h.bf16 %v5298
    %v5303 = vunpack.c.h.bf16 %v5299
    %v5304 = vtanh.pop %v5300
    %v5305 = vtanh.pop %v5301
    %v5306 = vtanh.pop %v5302
    %v5307 = vtanh.pop %v5303
    %v5308 = vpack.c.bf16 %v5306, %v5304
    %v5309 = vpack.c.bf16 %v5307, %v5305
    %v5310 = vld [vmem:[#allocation14] sm:$0xf]
    %v5311 = vld [vmem:[#allocation14 + $0x4] sm:$0xf]
    %v5312 = vld [vmem:[#allocation14 + $0x8] sm:$0xf]
    %v5313 = vld [vmem:[#allocation14 + $0xc] sm:$0xf]
    %v5314 = vld [vmem:[#allocation14 + $0x10] sm:$0xf]
    %v5315 = vld [vmem:[#allocation14 + $0x14] sm:$0xf]
    %v5316 = vld [vmem:[#allocation14 + $0x18] sm:$0xf]
    %v5317 = vld [vmem:[#allocation14 + $0x1c] sm:$0xf]
    %v5318 = vld [vmem:[#allocation14 + $0x20] sm:$0xf]
    %v5319 = vld [vmem:[#allocation14 + $0x24] sm:$0xf]
    %v5320 = vld [vmem:[#allocation14 + $0x28] sm:$0xf]
    %v5321 = vld [vmem:[#allocation14 + $0x2c] sm:$0xf]
    %v5322 = vld [vmem:[#allocation14 + $0x30] sm:$0xf]
    %v5323 = vld [vmem:[#allocation14 + $0x34] sm:$0xf]
    %v5324 = vld [vmem:[#allocation14 + $0x38] sm:$0xf]
    %v5325 = vld [vmem:[#allocation14 + $0x3c] sm:$0xf]
    %v5326 = vld [vmem:[#allocation14 + $0x40] sm:$0xf]
    %v5327 = vld [vmem:[#allocation14 + $0x44] sm:$0xf]
    %v5328 = vld [vmem:[#allocation14 + $0x48] sm:$0xf]
    %v5329 = vld [vmem:[#allocation14 + $0x4c] sm:$0xf]
    %v5330 = vld [vmem:[#allocation14 + $0x50] sm:$0xf]
    %v5331 = vld [vmem:[#allocation14 + $0x54] sm:$0xf]
    %v5332 = vld [vmem:[#allocation14 + $0x58] sm:$0xf]
    %v5333 = vld [vmem:[#allocation14 + $0x5c] sm:$0xf]
    %v5334 = vld [vmem:[#allocation14 + $0x60] sm:$0xf]
    %v5335 = vld [vmem:[#allocation14 + $0x64] sm:$0xf]
    %v5336 = vld [vmem:[#allocation14 + $0x68] sm:$0xf]
    %v5337 = vld [vmem:[#allocation14 + $0x6c] sm:$0xf]
    %v5338 = vld [vmem:[#allocation14 + $0x70] sm:$0xf]
    %v5339 = vld [vmem:[#allocation14 + $0x74] sm:$0xf]
    %v5340 = vld [vmem:[#allocation14 + $0x78] sm:$0xf]
    %v5341 = vld [vmem:[#allocation14 + $0x7c] sm:$0xf]
    %v5342 = vld [vmem:[#allocation16] sm:$0x1]
    %v5344 = vperm.slane %v5342, 0
    %v5378 = vunpack.c.l.b16 %v5310
    %v5379 = vunpack.c.l.b16 %v5311
    %v5380 = vunpack.c.l.b16 %v5312
    %v5381 = vunpack.c.l.b16 %v5313
    %v5382 = vunpack.c.l.b16 %v5314
    %v5383 = vunpack.c.l.b16 %v5315
    %v5384 = vunpack.c.l.b16 %v5316
    %v5385 = vunpack.c.l.b16 %v5317
    %v5386 = vunpack.c.l.b16 %v5318
    %v5387 = vunpack.c.l.b16 %v5319
    %v5388 = vunpack.c.l.b16 %v5320
    %v5389 = vunpack.c.l.b16 %v5321
    %v5390 = vunpack.c.l.b16 %v5322
    %v5391 = vunpack.c.l.b16 %v5323
    %v5392 = vunpack.c.l.b16 %v5324
    %v5393 = vunpack.c.l.b16 %v5325
    %v5394 = vunpack.c.l.b16 %v5326
    %v5395 = vunpack.c.l.b16 %v5327
    %v5396 = vunpack.c.l.b16 %v5328
    %v5397 = vunpack.c.l.b16 %v5329
    %v5398 = vunpack.c.l.b16 %v5330
    %v5399 = vunpack.c.l.b16 %v5331
    %v5400 = vunpack.c.l.b16 %v5332
    %v5401 = vunpack.c.l.b16 %v5333
    %v5402 = vunpack.c.l.b16 %v5334
    %v5403 = vunpack.c.l.b16 %v5335
    %v5404 = vunpack.c.l.b16 %v5336
    %v5405 = vunpack.c.l.b16 %v5337
    %v5406 = vunpack.c.l.b16 %v5338
    %v5407 = vunpack.c.l.b16 %v5339
    %v5408 = vunpack.c.l.b16 %v5340
    %v5409 = vunpack.c.l.b16 %v5341
    %v5410 = vpack.c.b16 %v5379, %v5378
    %v5411 = vpack.c.b16 %v5381, %v5380
    %v5412 = vpack.c.b16 %v5383, %v5382
    %v5413 = vpack.c.b16 %v5385, %v5384
    %v5414 = vpack.c.b16 %v5387, %v5386
    %v5415 = vpack.c.b16 %v5389, %v5388
    %v5416 = vpack.c.b16 %v5391, %v5390
    %v5417 = vpack.c.b16 %v5393, %v5392
    %v5418 = vpack.c.b16 %v5395, %v5394
    %v5419 = vpack.c.b16 %v5397, %v5396
    %v5420 = vpack.c.b16 %v5399, %v5398
    %v5421 = vpack.c.b16 %v5401, %v5400
    %v5422 = vpack.c.b16 %v5403, %v5402
    %v5423 = vpack.c.b16 %v5405, %v5404
    %v5424 = vpack.c.b16 %v5407, %v5406
    %v5425 = vpack.c.b16 %v5409, %v5408
    %5442 = vmatpush.bf16.msra.mxu0 %v5417
    %5443 = vmatpush.bf16.msra.mxu0 %v5416
    %5444 = vmatpush.bf16.msra.mxu0 %v5415
    %5445 = vmatpush.bf16.msra.mxu0 %v5414
    %5446 = vmatpush.bf16.msra.mxu0 %v5413
    %5447 = vmatpush.bf16.msra.mxu0 %v5412
    %5448 = vmatpush.bf16.msra.mxu0 %v5411
    %5449 = vmatpush.bf16.msra.mxu0 %v5410
    %5450 = vmatmul.bf16.gmra.mxu0 %v5308
    %v5451 = vpop.f32.mrf.mxu0
    %v5452 = vadd.f32 %v5344, %v5451
    %v5453 = vpop.f32.mrf.mxu0
    %v5454 = vadd.f32 %v5344, %v5453
    %5455 = vdwg.mxu0
    %5456 = vmatpush.bf16.msra.mxu0 %v5425
    %5457 = vmatpush.bf16.msra.mxu0 %v5424
    %5458 = vmatpush.bf16.msra.mxu0 %v5423
    %5459 = vmatpush.bf16.msra.mxu0 %v5422
    %5460 = vmatpush.bf16.msra.mxu0 %v5421
    %5461 = vmatpush.bf16.msra.mxu0 %v5420
    %5462 = vmatpush.bf16.msra.mxu0 %v5419
    %5463 = vmatpush.bf16.msra.mxu0 %v5418
    %5464 = vmatmul.bf16.gmra.mxu0 %v5309
    %v5465 = vpop.f32.mrf.mxu0
    %v5466 = vadd.f32 %v5452, %v5465
    %v5467 = vpop.f32.mrf.mxu0
    %v5468 = vadd.f32 %v5454, %v5467
    %5469 = vdwg.mxu0
    %v5470 = vpack.c.bf16 %v5468, %v5466
    %v5471 = vunpack.c.l.bf16 %v5470
    %v5472 = vunpack.c.h.bf16 %v5470
    %v5473 = vtanh.pop %v5471
    %v5474 = vtanh.pop %v5472
    %v5475 = vpack.c.bf16 %v5474, %v5473
    %v5476 = vld [vmem:[#allocation17] sm:$0xf]
    %v5477 = vld [vmem:[#allocation17 + $0x4] sm:$0xf]
    %v5478 = vld [vmem:[#allocation17 + $0x8] sm:$0xf]
    %v5479 = vld [vmem:[#allocation17 + $0xc] sm:$0xf]
    %v5480 = vld [vmem:[#allocation17 + $0x10] sm:$0xf]
    %v5481 = vld [vmem:[#allocation17 + $0x14] sm:$0xf]
    %v5482 = vld [vmem:[#allocation17 + $0x18] sm:$0xf]
    %v5483 = vld [vmem:[#allocation17 + $0x1c] sm:$0xf]
    %v5484 = vld [vmem:[#allocation17 + $0x20] sm:$0xf]
    %v5485 = vld [vmem:[#allocation17 + $0x24] sm:$0xf]
    %v5486 = vld [vmem:[#allocation17 + $0x28] sm:$0xf]
    %v5487 = vld [vmem:[#allocation17 + $0x2c] sm:$0xf]
    %v5488 = vld [vmem:[#allocation17 + $0x30] sm:$0xf]
    %v5489 = vld [vmem:[#allocation17 + $0x34] sm:$0xf]
    %v5490 = vld [vmem:[#allocation17 + $0x38] sm:$0xf]
    %v5491 = vld [vmem:[#allocation17 + $0x3c] sm:$0xf]
    %v5492 = vld [vmem:[#allocation19] sm:$0x1]
    %v5494 = vperm.slane %v5492, 0
    %v5512 = vunpack.c.l.b16 %v5476
    %v5513 = vunpack.c.l.b16 %v5477
    %v5514 = vunpack.c.l.b16 %v5478
    %v5515 = vunpack.c.l.b16 %v5479
    %v5516 = vunpack.c.l.b16 %v5480
    %v5517 = vunpack.c.l.b16 %v5481
    %v5518 = vunpack.c.l.b16 %v5482
    %v5519 = vunpack.c.l.b16 %v5483
    %v5520 = vunpack.c.l.b16 %v5484
    %v5521 = vunpack.c.l.b16 %v5485
    %v5522 = vunpack.c.l.b16 %v5486
    %v5523 = vunpack.c.l.b16 %v5487
    %v5524 = vunpack.c.l.b16 %v5488
    %v5525 = vunpack.c.l.b16 %v5489
    %v5526 = vunpack.c.l.b16 %v5490
    %v5527 = vunpack.c.l.b16 %v5491
    %v5528 = vpack.c.b16 %v5513, %v5512
    %v5529 = vpack.c.b16 %v5515, %v5514
    %v5530 = vpack.c.b16 %v5517, %v5516
    %v5531 = vpack.c.b16 %v5519, %v5518
    %v5532 = vpack.c.b16 %v5521, %v5520
    %v5533 = vpack.c.b16 %v5523, %v5522
    %v5534 = vpack.c.b16 %v5525, %v5524
    %v5535 = vpack.c.b16 %v5527, %v5526
    %5544 = vmatpush.bf16.msra.mxu0 %v5535
    %5545 = vmatpush.bf16.msra.mxu0 %v5534
    %5546 = vmatpush.bf16.msra.mxu0 %v5533
    %5547 = vmatpush.bf16.msra.mxu0 %v5532
    %5548 = vmatpush.bf16.msra.mxu0 %v5531
    %5549 = vmatpush.bf16.msra.mxu0 %v5530
    %5550 = vmatpush.bf16.msra.mxu0 %v5529
    %5551 = vmatpush.bf16.msra.mxu0 %v5528
    %5552 = vmatmul.bf16.gmra.mxu0 %v5475
    %v5553 = vpop.f32.mrf.mxu0
    %v5554 = vadd.f32 %v5494, %v5553
    %v5555 = vpop.f32.mrf.mxu0
    %v5556 = vadd.f32 %v5494, %v5555
    %5557 = vdwg.mxu0
    %5558 = vst [vmem:[#allocation20] sm:$0xff] %v5554
    %5559 = vst [vmem:[#allocation20 + $0x8] sm:$0xff] %v5556
    // Predicated region
    $region90: #{tpu_custom_call.1} parent=1 // pred_check
      _
    $region91: #{tpu_custom_call.1} parent=1 // pred_check_branch
      %5561 = sbr.rel (0) target = $region93
    $region92: #{tpu_custom_call.1} parent=1 // pred_region
      %5563 = vsyncadd [#allocation4], 0
      %s5564 = sshll.u32 [#allocation20], 4
      %s5565 = int_to_ptr.vmem [resolvable:$true] %s5564
      %s5566 = sshll.u32 %s11, 4
      %s5567 = int_to_ptr.hbm [resolvable:$true] %s5566
      %5572 = dma.vmem_to_hbm [thread:$0]  %s5565, 256, %s5567, [#allocation4], 128, 128, 8
    $region93: #{tpu_custom_call.1} parent=1 // pred_fallthru
      _
    // Predicated region
    $region94: #{tpu_custom_call.1} parent=1 // pred_check
      _
    $region95: #{tpu_custom_call.1} parent=1 // pred_check_branch
      %5574 = sbr.rel (0) target = $region97
    $region96: #{tpu_custom_call.1} parent=1 // pred_region
      %5576 = dma.done [#allocation4], 256
    $region97: #{tpu_custom_call.1} parent=1 // pred_fallthru
      _
    %5577 = vsyncpa [#allocation3], 1
    %5578 = vsyncpa [#allocation6], 1
    %5579 = vsyncpa [#allocation9], 1
    %5580 = vsyncpa [#allocation12], 1
    %5581 = vsyncpa [#allocation15], 1
    %5582 = vsyncpa [#allocation18], 1
    %5583 = vsyncpa [#allocation4], 1

</llo_original>
